<compile_context>
chip_gen: v7x
topology: tpu7x:2x2x1
jax: 0.10.0
libtpu: 0.0.40
codegen_flags: <defaults>
</compile_context>

<pallas_src>
import math

import jax
import jax.numpy as jnp
from jax.experimental import pallas as pl
from jax.experimental.pallas import tpu as pltpu


MODEL_DIM = 128
_D = MODEL_DIM

# Lane layout of the packed "small heads" output slab (B, 128):
#   [0:5)  quality_scores (sigmoid) | [5:15) strategy_probs (softmax) | [15:16) confidence
_Q_LO, _Q_HI = 0, 5
_S_LO, _S_HI = 5, 15
_C_LO, _C_HI = 15, 16
_SLAB = 128

_BATCH_TILE = 128          # batch rows per grid step (weights stay resident across steps)
_WGROUP_WIDTHS = (1280, 1024, 512, 256, 128)   # one packed bf16 weight slab per width

# Canonical matmul weights (name, K_rows, N_cols) -- already pre-split per concat input,
# fused along the output dim when two layers share the same LHS, and zero-padded so every
# matmul is lane-dense.  Both the packer and the kernel derive offsets from this table.
_WEIGHT_ENTRIES = [
    ("w_cs_se_conf", _D, 1280),   # cs -> [state_encoder L1 cs-part (1024) | confidence L1 (256)]
    ("w_cs_ana_str", _D, 1280),   # cs -> [thought_analyzer L1 (768) | strategy L1 (512)]
    ("w_tr_ana_str", _D, 1280),   # tr -> [thought_analyzer L1 (768) | strategy L1 (512)]
    ("w_ph_se", _D, 1024),        # ph -> state_encoder L1 ph-part
    ("w_tr_se", _D, 1024),        # tr -> state_encoder L1 tr-part
    ("w_sr_cap_lim", _D, 1024),   # self_repr -> [capability L1 (512) | limitation L1 sr-part (512)]
    ("w_se2", 1024, 512),
    ("w_se3", 512, 128),
    ("w_cap2", 512, 256),
    ("w_cap3", 256, 128),
    ("w_lim1_cap", 128, 512),     # capabilities-part of limitation_detector L1
    ("w_lim2", 512, 256),
    ("w_lim3", 256, 128),
    ("w_ana2", 768, 512),
    ("w_ana3", 512, 256),
    ("w_ana_q_imp", 256, 256),    # analysis -> [quality L1 (128) | improvement L1 analysis-part (128)]
    ("w_q2", 128, 128),           # quality L2, zero-padded 64 -> 128 outputs
    ("w_str2", 512, 256),
    ("w_conf2", 256, 128),
    ("w_slab_q", 128, 128),       # quality final -> slab lanes [0:5)   (K zero-padded 64 -> 128)
    ("w_slab_s", 256, 128),       # strategy final -> slab lanes [5:15)
    ("w_slab_c", 128, 128),       # confidence final -> slab lane [15:16)
    ("w_imp_slab", 128, 128),     # improvement L1 quality-part (rows 0:5 real, rest zero)
    ("w_imp2", 128, 128),
]

_BIAS_ENTRIES = [                 # one f32 bias slab; all widths are multiples of 128
    ("b_se1", 1024), ("b_conf1", 256), ("b_se2", 512), ("b_se3", 128),
    ("b_cap1", 512), ("b_cap2", 256), ("b_cap3", 128),
    ("b_lim1", 512), ("b_lim2", 256), ("b_lim3", 128),
    ("b_ana1", 768), ("b_str1", 512), ("b_ana2", 512), ("b_ana3", 256),
    ("b_q1", 128), ("b_q2", 128), ("b_str2", 256), ("b_conf2", 128),
    ("b_slab", 128), ("b_imp1", 128), ("b_imp2", 128),
]


def _round_up(x, m):
    return (x + m - 1) // m * m


def _layout():
    """Static name -> (slab width, row offset, K) and name -> (lane offset, N) maps."""
    wmeta, grows = {}, {n: 0 for n in _WGROUP_WIDTHS}
    for name, k, n in _WEIGHT_ENTRIES:
        wmeta[name] = (n, grows[n], k)
        grows[n] += k
    bmeta, boff = {}, 0
    for name, n in _BIAS_ENTRIES:
        bmeta[name] = (boff, n)
        boff += n
    return wmeta, bmeta, grows, boff


# ----------------------------------------------------------------------------
# Fused kernel: the entire MetaCognition forward for one batch tile.
# ----------------------------------------------------------------------------
def _fused_metacognition_kernel(cs_ref, ph_ref, tr_ref,
                                w1280_ref, w1024_ref, w512_ref, w256_ref, w128_ref,
                                bias_ref,
                                sr_ref, cap_ref, lim_ref, ana_ref, imp_ref, slab_ref):
    wmeta, bmeta, _, _ = _layout()
    wrefs = {1280: w1280_ref, 1024: w1024_ref, 512: w512_ref,
             256: w256_ref, 128: w128_ref}

    def mm(x_bf, name):                      # bf16 x bf16 -> f32 on the MXU
        width, off, k = wmeta[name]
        return jnp.dot(x_bf, wrefs[width][off:off + k, :],
                       preferred_element_type=jnp.float32)

    def bias(name):                          # (1, N) f32 view of the bias slab
        off, n = bmeta[name]
        return bias_ref[:, off:off + n]

    relu = lambda x: jnp.maximum(x, 0.0)
    bf16 = lambda x: x.astype(jnp.bfloat16)

    # bf16 casts hoisted: every reused activation is cast exactly once.
    cs = bf16(cs_ref[...])
    ph = bf16(ph_ref[...])
    tr = bf16(tr_ref[...])

    # ---- SelfAwareness.state_encoder L1 (Dropout=identity) fused with confidence L1 ----
    t_cs = mm(cs, "w_cs_se_conf")                                        # (B, 1024 | 256)
    h = bf16(relu(t_cs[:, :1024] + mm(ph, "w_ph_se") + mm(tr, "w_tr_se") + bias("b_se1")))
    hc = bf16(relu(t_cs[:, 1024:] + bias("b_conf1")))                    # confidence L1

    h = bf16(relu(mm(h, "w_se2") + bias("b_se2")))                       # state_encoder L2
    self_repr = mm(h, "w_se3") + bias("b_se3")                           # state_encoder L3
    sr_bf = bf16(self_repr)

    # ---- capability_assessor L1 fused with limitation_detector L1 (self_repr part) ----
    t_sr = mm(sr_bf, "w_sr_cap_lim")                                     # (B, 512 | 512)
    h = bf16(relu(t_sr[:, :512] + bias("b_cap1")))
    h = bf16(relu(mm(h, "w_cap2") + bias("b_cap2")))
    capabilities = jax.nn.sigmoid(mm(h, "w_cap3") + bias("b_cap3"))
    h = bf16(relu(t_sr[:, 512:] + mm(bf16(capabilities), "w_lim1_cap") + bias("b_lim1")))
    h = bf16(relu(mm(h, "w_lim2") + bias("b_lim2")))
    limitations = jnp.tanh(mm(h, "w_lim3") + bias("b_lim3"))

    # ---- thought_analyzer L1 fused with strategy_selector L1 (both consume [cs, tr]) ----
    t_ct = mm(cs, "w_cs_ana_str") + mm(tr, "w_tr_ana_str")               # (B, 768 | 512)
    ha = bf16(relu(t_ct[:, :768] + bias("b_ana1")))                      # (Dropout=identity)
    hs = bf16(relu(t_ct[:, 768:] + bias("b_str1")))
    ha = bf16(relu(mm(ha, "w_ana2") + bias("b_ana2")))
    analysis = mm(ha, "w_ana3") + bias("b_ana3")
    ana_bf = bf16(analysis)

    # ---- quality L1 fused with improvement L1 (analysis part); small-head penultimates ----
    t_ana = mm(ana_bf, "w_ana_q_imp")                                    # (B, 128 | 128)
    hq = bf16(relu(t_ana[:, :128] + bias("b_q1")))
    hq = bf16(relu(mm(hq, "w_q2") + bias("b_q2")))                       # lanes 64:128 stay 0
    hs = bf16(relu(mm(hs, "w_str2") + bias("b_str2")))
    hc = bf16(relu(mm(hc, "w_conf2") + bias("b_conf2")))

    # ---- packed tiny-head slab: quality | strategy | confidence in one 128-lane row ----
    pre = mm(hq, "w_slab_q") + mm(hs, "w_slab_s") + mm(hc, "w_slab_c") + bias("b_slab")
    lane = jax.lax.broadcasted_iota(jnp.int32, pre.shape, 1)
    in_strat = jnp.logical_and(lane >= _S_LO, lane < _S_HI)
    logits = jnp.where(in_strat, pre, -1e30)
    m = jnp.max(logits, axis=-1, keepdims=True)
    e = jnp.where(in_strat, jnp.exp(logits - m), 0.0)
    soft = e / jnp.sum(e, axis=-1, keepdims=True)        # softmax over 10 strategy lanes
    slab = jnp.where(in_strat, soft, jax.nn.sigmoid(pre))
    slab = jnp.where(lane < _C_HI, slab, 0.0)            # zero unused lanes

    # ---- improvement_suggester (quality enters via slab lanes [0:5); zero rows elsewhere) ----
    h = bf16(relu(t_ana[:, 128:] + mm(bf16(slab), "w_imp_slab") + bias("b_imp1")))
    improvements = jnp.tanh(mm(h, "w_imp2") + bias("b_imp2"))

    sr_ref[...] = self_repr
    cap_ref[...] = capabilities
    lim_ref[...] = limitations
    ana_ref[...] = analysis
    imp_ref[...] = improvements
    slab_ref[...] = slab


# ----------------------------------------------------------------------------
# Parameter init (mimics torch.nn.Linear default: U(-1/sqrt(in), 1/sqrt(in)))
# ----------------------------------------------------------------------------
def _linear_params(key, in_dim, out_dim):
    kw, kb = jax.random.split(key)
    bound = 1.0 / math.sqrt(in_dim)
    w = jax.random.uniform(kw, (in_dim, out_dim), jnp.float32, -bound, bound)
    b = jax.random.uniform(kb, (1, out_dim), jnp.float32, -bound, bound)
    return w, b


def init_metacognition_params(key, model_dim=MODEL_DIM):
    D = model_dim
    dims = {
        "sa_state_encoder": [3 * D, 1024, 512, D],
        "sa_capability":    [D, 512, 256, 128],
        "sa_limitation":    [D + 128, 512, 256, 128],   # == 2*D for D=128 (torch spec)
        "rt_analyzer":      [2 * D, 768, 512, 256],
        "rt_quality":       [256, 128, 64, 5],
        "rt_improve":       [256 + 5, 128, D],
        "mc_strategy":      [2 * D, 512, 256, 10],
        "mc_confidence":    [D, 256, 128, 1],
    }
    keys = jax.random.split(key, len(dims))
    params = {}
    for k, (name, ds) in zip(keys, dims.items()):
        lk = jax.random.split(k, len(ds) - 1)
        params[name] = [_linear_params(lk[i], ds[i], ds[i + 1]) for i in range(len(ds) - 1)]
    return params


# ----------------------------------------------------------------------------
# Pack parameters into 5 bf16 weight slabs (grouped by output width) + 1 f32 bias slab.
# ----------------------------------------------------------------------------
def pack_params_for_kernel(params, model_dim=MODEL_DIM):
    D = model_dim
    se, ca, li = params["sa_state_encoder"], params["sa_capability"], params["sa_limitation"]
    an, q, im = params["rt_analyzer"], params["rt_quality"], params["rt_improve"]
    st, cf = params["mc_strategy"], params["mc_confidence"]

    qw3, qb3 = q[2]          # (64, 5)
    sw3, sb3 = st[2]         # (256, 10)
    cw3, cb3 = cf[2]         # (128, 1)
    im_w1, im_b1 = im[0]     # (261, 128)

    w = {
        "w_cs_se_conf": jnp.concatenate([se[0][0][:D], cf[0][0]], axis=1),
        "w_cs_ana_str": jnp.concatenate([an[0][0][:D], st[0][0][:D]], axis=1),
        "w_tr_ana_str": jnp.concatenate([an[0][0][D:], st[0][0][D:]], axis=1),
        "w_ph_se": se[0][0][D:2 * D],
        "w_tr_se": se[0][0][2 * D:],
        "w_sr_cap_lim": jnp.concatenate([ca[0][0], li[0][0][:D]], axis=1),
        "w_se2": se[1][0], "w_se3": se[2][0],
        "w_cap2": ca[1][0], "w_cap3": ca[2][0],
        "w_lim1_cap": li[0][0][D:], "w_lim2": li[1][0], "w_lim3": li[2][0],
        "w_ana2": an[1][0], "w_ana3": an[2][0],
        "w_ana_q_imp": jnp.concatenate([q[0][0], im_w1[:256]], axis=1),
        "w_q2": jnp.pad(q[1][0], ((0, 0), (0, _SLAB - q[1][0].shape[1]))),
        "w_str2": st[1][0], "w_conf2": cf[1][0],
        "w_slab_q": jnp.zeros((_SLAB, _SLAB), jnp.float32)
                       .at[:qw3.shape[0], _Q_LO:_Q_HI].set(qw3),
        "w_slab_s": jnp.zeros((sw3.shape[0], _SLAB), jnp.float32)
                       .at[:, _S_LO:_S_HI].set(sw3),
        "w_slab_c": jnp.zeros((cw3.shape[0], _SLAB), jnp.float32)
                       .at[:, _C_LO:_C_HI].set(cw3),
        "w_imp_slab": jnp.zeros((_SLAB, im_w1.shape[1]), jnp.float32)
                         .at[_Q_LO:_Q_HI, :].set(im_w1[256:]),
        "w_imp2": im[1][0],
    }
    b = {
        "b_se1": se[0][1], "b_conf1": cf[0][1], "b_se2": se[1][1], "b_se3": se[2][1],
        "b_cap1": ca[0][1], "b_cap2": ca[1][1], "b_cap3": ca[2][1],
        "b_lim1": li[0][1], "b_lim2": li[1][1], "b_lim3": li[2][1],
        "b_ana1": an[0][1], "b_str1": st[0][1], "b_ana2": an[1][1], "b_ana3": an[2][1],
        "b_q1": q[0][1],
        "b_q2": jnp.pad(q[1][1], ((0, 0), (0, _SLAB - q[1][1].shape[1]))),
        "b_str2": st[1][1], "b_conf2": cf[1][1],
        "b_slab": (jnp.zeros((1, _SLAB), jnp.float32)
                   .at[:, _Q_LO:_Q_HI].set(qb3)
                   .at[:, _S_LO:_S_HI].set(sb3)
                   .at[:, _C_LO:_C_HI].set(cb3)),
        "b_imp1": im_b1, "b_imp2": im[1][1],
    }

    slabs = []
    for width in _WGROUP_WIDTHS:
        parts = []
        for name, k, n in _WEIGHT_ENTRIES:
            if n != width:
                continue
            assert w[name].shape == (k, n), (name, w[name].shape, (k, n))
            parts.append(w[name].astype(jnp.bfloat16))
        slabs.append(jnp.concatenate(parts, axis=0))

    bias_parts = []
    for name, n in _BIAS_ENTRIES:
        bb = jnp.reshape(b[name], (1, -1)).astype(jnp.float32)
        assert bb.shape == (1, n), (name, bb.shape, n)
        bias_parts.append(bb)
    bias_slab = jnp.concatenate(bias_parts, axis=1)
    return tuple(slabs), bias_slab


# ----------------------------------------------------------------------------
# Forward wrapper: one pallas_call with a batch grid; weights/biases VMEM-resident.
# ----------------------------------------------------------------------------
def metacognition_forward(weight_slabs, bias_slab, cognitive_state, task_representation,
                          performance_history=None):
    if performance_history is None:
        performance_history = jnp.zeros_like(cognitive_state)
    B, D = cognitive_state.shape
    TB = _BATCH_TILE if B >= _BATCH_TILE else _round_up(max(B, 1), 8)
    Bp = _round_up(B, TB)

    def pad(x):
        return x if Bp == B else jnp.pad(x, ((0, Bp - B), (0, 0)))

    cs, ph, tr = pad(cognitive_state), pad(performance_history), pad(task_representation)
    grid = (Bp // TB,)

    def tile_spec(n):                         # activations / outputs: tiled over batch axis
        return pl.BlockSpec((TB, n), lambda i: (i, 0))

    def resident_spec(shape):                 # weights / biases: constant block -> resident
        return pl.BlockSpec(shape, lambda i: (0, 0))

    in_specs = ([tile_spec(D)] * 3
                + [resident_spec(w.shape) for w in weight_slabs]
                + [resident_spec(bias_slab.shape)])
    out_widths = (D, 128, 128, 256, D, _SLAB)
    out_shape = tuple(jax.ShapeDtypeStruct((Bp, n), jnp.float32) for n in out_widths)
    out_specs = tuple(tile_spec(n) for n in out_widths)

    weight_bytes = (sum(int(w.size) * w.dtype.itemsize for w in weight_slabs)
                    + int(bias_slab.size) * 4)
    weight_elems = sum(int(w.size) for w in weight_slabs)
    act_bytes = 4 * Bp * (3 * D + sum(out_widths))
    flops = 2 * Bp * weight_elems
    transcendentals = Bp * 6 * 128            # sigmoid/tanh/exp lanes (approx)

    outs = pl.pallas_call(
        _fused_metacognition_kernel,
        grid=grid,
        out_shape=out_shape,
        in_specs=in_specs,
        out_specs=out_specs,
        compiler_params=pltpu.CompilerParams(
            # batch axis can shard across v7x's two TensorCores; harmless elsewhere
            dimension_semantics=("parallel",),
            # ~5.5 MiB bf16 weights (x2 pipeline buffers) + bias + activation tiles:
            # comfortably inside 24 MiB and well under v7x's 64 MiB/TC physical VMEM.
            vmem_limit_bytes=24 * 1024 * 1024,
        ),
        cost_estimate=pl.CostEstimate(flops=flops, transcendentals=transcendentals,
                                      bytes_accessed=weight_bytes + act_bytes),
    )(cs, ph, tr, *weight_slabs, bias_slab)

    self_repr, capabilities, limitations, analysis, improvements, slab = (o[:B] for o in outs)
    return {
        "self_representation": self_repr,
        "capabilities": capabilities,
        "limitations": limitations,
        "thought_analysis": analysis,
        "quality_scores": slab[:, _Q_LO:_Q_HI],
        "improvement_suggestions": improvements,
        "strategy_probs": slab[:, _S_LO:_S_HI],
        "confidence": slab[:, _C_LO:_C_HI],
    }


# ----------------------------------------------------------------------------
# Pure-JAX reference (original concat structure, same bf16-weight numerics).
# ----------------------------------------------------------------------------
def _ref_mlp(x, layers, acts):
    h = x
    for (w, b), a in zip(layers, acts):
        h = jnp.dot(h.astype(jnp.bfloat16), w.astype(jnp.bfloat16),
                    preferred_element_type=jnp.float32) + b
        if a == "relu":
            h = jnp.maximum(h, 0.0)
        elif a == "sigmoid":
            h = jax.nn.sigmoid(h)
        elif a == "tanh":
            h = jnp.tanh(h)
        elif a == "softmax":
            h = jax.nn.softmax(h, axis=-1)
    return h


def reference_forward(params, cs, tr, ph=None):
    if ph is None:
        ph = jnp.zeros_like(cs)
    si = jnp.concatenate([cs, ph, tr], -1)
    sr = _ref_mlp(si, params["sa_state_encoder"], ["relu", "relu", "none"])
    cap = _ref_mlp(sr, params["sa_capability"], ["relu", "relu", "sigmoid"])
    lim = _ref_mlp(jnp.concatenate([sr, cap], -1), params["sa_limitation"],
                   ["relu", "relu", "tanh"])
    ana = _ref_mlp(jnp.concatenate([cs, tr], -1), params["rt_analyzer"],
                   ["relu", "relu", "none"])
    qs = _ref_mlp(ana, params["rt_quality"], ["relu", "relu", "sigmoid"])
    imp = _ref_mlp(jnp.concatenate([ana, qs], -1), params["rt_improve"], ["relu", "tanh"])
    sp = _ref_mlp(jnp.concatenate([cs, tr], -1), params["mc_strategy"],
                  ["relu", "relu", "softmax"])
    conf = _ref_mlp(cs, params["mc_confidence"], ["relu", "relu", "sigmoid"])
    return {"self_representation": sr, "capabilities": cap, "limitations": lim,
            "thought_analysis": ana, "quality_scores": qs,
            "improvement_suggestions": imp, "strategy_probs": sp, "confidence": conf}


if __name__ == "__main__":
    BATCH = 8   # small demo batch (>=8 rows fills the sublane dim); row 0 reproduces the
                # original module's batch-1 use-case.

    key = jax.random.PRNGKey(0)
    k_cs, k_tr = jax.random.split(key)
    cognitive_state = jax.random.normal(k_cs, (BATCH, MODEL_DIM), jnp.float32)
    task_representation = jax.random.normal(k_tr, (BATCH, MODEL_DIM), jnp.float32)

    params = init_metacognition_params(jax.random.PRNGKey(42), MODEL_DIM)
    weight_slabs, bias_slab = pack_params_for_kernel(params, MODEL_DIM)

    fwd = jax.jit(metacognition_forward)
    out = fwd(weight_slabs, bias_slab, cognitive_state, task_representation, None)
    out = jax.tree_util.tree_map(jax.block_until_ready, out)

    # Verify the fused Pallas kernel against the concat-structured JAX reference
    # (both use bf16 weights with f32 accumulation; split/fused-matmul reordering only).
    ref = reference_forward(params, cognitive_state, task_representation, None)
    for name in out:
        assert out[name].shape == ref[name].shape, (name, out[name].shape, ref[name].shape)
        err = float(jnp.max(jnp.abs(out[name] - ref[name])))
        assert jnp.allclose(out[name], ref[name], atol=2e-3, rtol=2e-3), (name, err)

    # Host-side interpretation glue (matches the module's dict outputs, batch row 0).
    strategy_names = ["analytical", "holistic", "creative", "critical", "systematic",
                      "intuitive", "collaborative", "experimental", "reflective", "adaptive"]
    probs = out["strategy_probs"][0]
    selected_strategy = strategy_names[int(jnp.argmax(probs))]
    confidence = float(out["confidence"][0, 0])
    quality_dims = ["clarity", "depth", "coherence", "relevance", "creativity"]
    quality = {d: float(v) for d, v in zip(quality_dims, out["quality_scores"][0])}
    # TODO(synk): MetaCognitiveInsight objects, datetime timestamps, self_knowledge dict
    # mutation, and text guidance generation are host-side Python bookkeeping with no
    # tensor compute; not kernelized.
    _ = (selected_strategy, confidence, quality)

    print("KERNEL_OK")
</pallas_src>

<mosaic_0001>
module attributes {stable_mosaic.version = 11 : i64} {
  func.func @_fused_metacognition_kernel(%arg0: i32, %arg1: memref<8x128xf32, #tpu.memory_space<vmem>>, %arg2: memref<8x128xf32, #tpu.memory_space<vmem>>, %arg3: memref<8x128xf32, #tpu.memory_space<vmem>>, %arg4: memref<384x1280xbf16, #tpu.memory_space<vmem>>, %arg5: memref<384x1024xbf16, #tpu.memory_space<vmem>>, %arg6: memref<1920x512xbf16, #tpu.memory_space<vmem>>, %arg7: memref<2304x256xbf16, #tpu.memory_space<vmem>>, %arg8: memref<2176x128xbf16, #tpu.memory_space<vmem>>, %arg9: memref<1x6784xf32, #tpu.memory_space<vmem>>, %arg10: memref<8x128xf32, #tpu.memory_space<vmem>>, %arg11: memref<8x128xf32, #tpu.memory_space<vmem>>, %arg12: memref<8x128xf32, #tpu.memory_space<vmem>>, %arg13: memref<8x256xf32, #tpu.memory_space<vmem>>, %arg14: memref<8x128xf32, #tpu.memory_space<vmem>>, %arg15: memref<8x128xf32, #tpu.memory_space<vmem>>) attributes {dimension_semantics = [#tpu.dimension_semantics<parallel>], iteration_bounds = array<i64: 1>, scalar_prefetch = 0 : i64, scratch_operands = 0 : i64, tpu.core_type = #tpu.core_type<tc>, window_params = [{transform_indices = @transform_0, window_bounds = array<i64: 8, 128>}, {transform_indices = @transform_1, window_bounds = array<i64: 8, 128>}, {transform_indices = @transform_2, window_bounds = array<i64: 8, 128>}, {pipeline_mode = #tpu.pipeline_mode<synchronous>, transform_indices = @transform_3, window_bounds = array<i64: 384, 1280>}, {pipeline_mode = #tpu.pipeline_mode<synchronous>, transform_indices = @transform_4, window_bounds = array<i64: 384, 1024>}, {pipeline_mode = #tpu.pipeline_mode<synchronous>, transform_indices = @transform_5, window_bounds = array<i64: 1920, 512>}, {pipeline_mode = #tpu.pipeline_mode<synchronous>, transform_indices = @transform_6, window_bounds = array<i64: 2304, 256>}, {pipeline_mode = #tpu.pipeline_mode<synchronous>, transform_indices = @transform_7, window_bounds = array<i64: 2176, 128>}, {pipeline_mode = #tpu.pipeline_mode<synchronous>, transform_indices = @transform_8, window_bounds = array<i64: 1, 6784>}, {transform_indices = @transform_9, window_bounds = array<i64: 8, 128>}, {transform_indices = @transform_10, window_bounds = array<i64: 8, 128>}, {transform_indices = @transform_11, window_bounds = array<i64: 8, 128>}, {transform_indices = @transform_12, window_bounds = array<i64: 8, 256>}, {transform_indices = @transform_13, window_bounds = array<i64: 8, 128>}, {transform_indices = @transform_14, window_bounds = array<i64: 8, 128>}]} {
    %c0 = arith.constant 0 : index
    %c0_0 = arith.constant 0 : index
    %0 = vector.load %arg1[%c0, %c0_0] : memref<8x128xf32, #tpu.memory_space<vmem>>, vector<8x128xf32>
    %1 = arith.truncf %0 : vector<8x128xf32> to vector<8x128xbf16>
    %c0_1 = arith.constant 0 : index
    %c0_2 = arith.constant 0 : index
    %2 = vector.load %arg2[%c0_1, %c0_2] : memref<8x128xf32, #tpu.memory_space<vmem>>, vector<8x128xf32>
    %3 = arith.truncf %2 : vector<8x128xf32> to vector<8x128xbf16>
    %c0_3 = arith.constant 0 : index
    %c0_4 = arith.constant 0 : index
    %4 = vector.load %arg3[%c0_3, %c0_4] : memref<8x128xf32, #tpu.memory_space<vmem>>, vector<8x128xf32>
    %5 = arith.truncf %4 : vector<8x128xf32> to vector<8x128xbf16>
    %c0_5 = arith.constant 0 : index
    %c0_6 = arith.constant 0 : index
    %6 = vector.load %arg4[%c0_5, %c0_6] : memref<384x1280xbf16, #tpu.memory_space<vmem>>, vector<128x1280xbf16>
    %cst = arith.constant dense<0.000000e+00> : vector<8x1280xf32>
    %7 = tpu.matmul %1, %6, %cst {dimension_numbers = #tpu.dot_dimension_numbers<[1], [0], [0], [1], [0, 0, 1, 1], [], []>} : vector<8x128xbf16>, vector<128x1280xbf16>, vector<8x1280xf32> -> vector<8x1280xf32>
    %8 = vector.extract_strided_slice %7 {offsets = [0, 0], sizes = [8, 1024], strides = [1, 1]} : vector<8x1280xf32> to vector<8x1024xf32>
    %c0_7 = arith.constant 0 : index
    %c0_8 = arith.constant 0 : index
    %9 = vector.load %arg5[%c0_7, %c0_8] : memref<384x1024xbf16, #tpu.memory_space<vmem>>, vector<128x1024xbf16>
    %cst_9 = arith.constant dense<0.000000e+00> : vector<8x1024xf32>
    %10 = tpu.matmul %3, %9, %cst_9 {dimension_numbers = #tpu.dot_dimension_numbers<[1], [0], [0], [1], [0, 0, 1, 1], [], []>} : vector<8x128xbf16>, vector<128x1024xbf16>, vector<8x1024xf32> -> vector<8x1024xf32>
    %11 = arith.addf %8, %10 : vector<8x1024xf32>
    %c128 = arith.constant 128 : index
    %c0_10 = arith.constant 0 : index
    %12 = vector.load %arg5[%c128, %c0_10] : memref<384x1024xbf16, #tpu.memory_space<vmem>>, vector<128x1024xbf16>
    %cst_11 = arith.constant dense<0.000000e+00> : vector<8x1024xf32>
    %13 = tpu.matmul %5, %12, %cst_11 {dimension_numbers = #tpu.dot_dimension_numbers<[1], [0], [0], [1], [0, 0, 1, 1], [], []>} : vector<8x128xbf16>, vector<128x1024xbf16>, vector<8x1024xf32> -> vector<8x1024xf32>
    %14 = arith.addf %11, %13 : vector<8x1024xf32>
    %c0_12 = arith.constant 0 : index
    %c0_13 = arith.constant 0 : index
    %15 = vector.load %arg9[%c0_12, %c0_13] : memref<1x6784xf32, #tpu.memory_space<vmem>>, vector<1x1024xf32>
    %16 = vector.broadcast %15 : vector<1x1024xf32> to vector<8x1024xf32>
    %17 = arith.addf %14, %16 : vector<8x1024xf32>
    %cst_14 = arith.constant 0.000000e+00 : f32
    %18 = vector.broadcast %cst_14 : f32 to vector<8x1024xf32>
    %19 = arith.maximumf %17, %18 : vector<8x1024xf32>
    %20 = arith.truncf %19 : vector<8x1024xf32> to vector<8x1024xbf16>
    %21 = vector.extract_strided_slice %7 {offsets = [0, 1024], sizes = [8, 256], strides = [1, 1]} : vector<8x1280xf32> to vector<8x256xf32>
    %c0_15 = arith.constant 0 : index
    %c1024 = arith.constant 1024 : index
    %22 = vector.load %arg9[%c0_15, %c1024] : memref<1x6784xf32, #tpu.memory_space<vmem>>, vector<1x256xf32>
    %23 = vector.broadcast %22 : vector<1x256xf32> to vector<8x256xf32>
    %24 = arith.addf %21, %23 : vector<8x256xf32>
    %cst_16 = arith.constant 0.000000e+00 : f32
    %25 = vector.broadcast %cst_16 : f32 to vector<8x256xf32>
    %26 = arith.maximumf %24, %25 : vector<8x256xf32>
    %27 = arith.truncf %26 : vector<8x256xf32> to vector<8x256xbf16>
    %c0_17 = arith.constant 0 : index
    %c0_18 = arith.constant 0 : index
    %28 = vector.load %arg6[%c0_17, %c0_18] : memref<1920x512xbf16, #tpu.memory_space<vmem>>, vector<1024x512xbf16>
    %cst_19 = arith.constant dense<0.000000e+00> : vector<8x512xf32>
    %29 = tpu.matmul %20, %28, %cst_19 {dimension_numbers = #tpu.dot_dimension_numbers<[1], [0], [0], [1], [0, 0, 1, 1], [], []>} : vector<8x1024xbf16>, vector<1024x512xbf16>, vector<8x512xf32> -> vector<8x512xf32>
    %c0_20 = arith.constant 0 : index
    %c1280 = arith.constant 1280 : index
    %30 = vector.load %arg9[%c0_20, %c1280] : memref<1x6784xf32, #tpu.memory_space<vmem>>, vector<1x512xf32>
    %31 = vector.broadcast %30 : vector<1x512xf32> to vector<8x512xf32>
    %32 = arith.addf %29, %31 : vector<8x512xf32>
    %cst_21 = arith.constant 0.000000e+00 : f32
    %33 = vector.broadcast %cst_21 : f32 to vector<8x512xf32>
    %34 = arith.maximumf %32, %33 : vector<8x512xf32>
    %35 = arith.truncf %34 : vector<8x512xf32> to vector<8x512xbf16>
    %c0_22 = arith.constant 0 : index
    %c0_23 = arith.constant 0 : index
    %36 = vector.load %arg8[%c0_22, %c0_23] : memref<2176x128xbf16, #tpu.memory_space<vmem>>, vector<512x128xbf16>
    %cst_24 = arith.constant dense<0.000000e+00> : vector<8x128xf32>
    %37 = tpu.matmul %35, %36, %cst_24 {dimension_numbers = #tpu.dot_dimension_numbers<[1], [0], [0], [1], [0, 0, 1, 1], [], []>} : vector<8x512xbf16>, vector<512x128xbf16>, vector<8x128xf32> -> vector<8x128xf32>
    %c0_25 = arith.constant 0 : index
    %c1792 = arith.constant 1792 : index
    %38 = vector.load %arg9[%c0_25, %c1792] : memref<1x6784xf32, #tpu.memory_space<vmem>>, vector<1x128xf32>
    %39 = vector.broadcast %38 : vector<1x128xf32> to vector<8x128xf32>
    %40 = arith.addf %37, %39 : vector<8x128xf32>
    %41 = arith.truncf %40 : vector<8x128xf32> to vector<8x128xbf16>
    %c256 = arith.constant 256 : index
    %c0_26 = arith.constant 0 : index
    %42 = vector.load %arg5[%c256, %c0_26] : memref<384x1024xbf16, #tpu.memory_space<vmem>>, vector<128x1024xbf16>
    %cst_27 = arith.constant dense<0.000000e+00> : vector<8x1024xf32>
    %43 = tpu.matmul %41, %42, %cst_27 {dimension_numbers = #tpu.dot_dimension_numbers<[1], [0], [0], [1], [0, 0, 1, 1], [], []>} : vector<8x128xbf16>, vector<128x1024xbf16>, vector<8x1024xf32> -> vector<8x1024xf32>
    %44 = vector.extract_strided_slice %43 {offsets = [0, 0], sizes = [8, 512], strides = [1, 1]} : vector<8x1024xf32> to vector<8x512xf32>
    %c0_28 = arith.constant 0 : index
    %c1920 = arith.constant 1920 : index
    %45 = vector.load %arg9[%c0_28, %c1920] : memref<1x6784xf32, #tpu.memory_space<vmem>>, vector<1x512xf32>
    %46 = vector.broadcast %45 : vector<1x512xf32> to vector<8x512xf32>
    %47 = arith.addf %44, %46 : vector<8x512xf32>
    %cst_29 = arith.constant 0.000000e+00 : f32
    %48 = vector.broadcast %cst_29 : f32 to vector<8x512xf32>
    %49 = arith.maximumf %47, %48 : vector<8x512xf32>
    %50 = arith.truncf %49 : vector<8x512xf32> to vector<8x512xbf16>
    %c0_30 = arith.constant 0 : index
    %c0_31 = arith.constant 0 : index
    %51 = vector.load %arg7[%c0_30, %c0_31] : memref<2304x256xbf16, #tpu.memory_space<vmem>>, vector<512x256xbf16>
    %cst_32 = arith.constant dense<0.000000e+00> : vector<8x256xf32>
    %52 = tpu.matmul %50, %51, %cst_32 {dimension_numbers = #tpu.dot_dimension_numbers<[1], [0], [0], [1], [0, 0, 1, 1], [], []>} : vector<8x512xbf16>, vector<512x256xbf16>, vector<8x256xf32> -> vector<8x256xf32>
    %c0_33 = arith.constant 0 : index
    %c2432 = arith.constant 2432 : index
    %53 = vector.load %arg9[%c0_33, %c2432] : memref<1x6784xf32, #tpu.memory_space<vmem>>, vector<1x256xf32>
    %54 = vector.broadcast %53 : vector<1x256xf32> to vector<8x256xf32>
    %55 = arith.addf %52, %54 : vector<8x256xf32>
    %cst_34 = arith.constant 0.000000e+00 : f32
    %56 = vector.broadcast %cst_34 : f32 to vector<8x256xf32>
    %57 = arith.maximumf %55, %56 : vector<8x256xf32>
    %58 = arith.truncf %57 : vector<8x256xf32> to vector<8x256xbf16>
    %c512 = arith.constant 512 : index
    %c0_35 = arith.constant 0 : index
    %59 = vector.load %arg8[%c512, %c0_35] : memref<2176x128xbf16, #tpu.memory_space<vmem>>, vector<256x128xbf16>
    %cst_36 = arith.constant dense<0.000000e+00> : vector<8x128xf32>
    %60 = tpu.matmul %58, %59, %cst_36 {dimension_numbers = #tpu.dot_dimension_numbers<[1], [0], [0], [1], [0, 0, 1, 1], [], []>} : vector<8x256xbf16>, vector<256x128xbf16>, vector<8x128xf32> -> vector<8x128xf32>
    %c0_37 = arith.constant 0 : index
    %c2688 = arith.constant 2688 : index
    %61 = vector.load %arg9[%c0_37, %c2688] : memref<1x6784xf32, #tpu.memory_space<vmem>>, vector<1x128xf32>
    %62 = vector.broadcast %61 : vector<1x128xf32> to vector<8x128xf32>
    %63 = arith.addf %60, %62 : vector<8x128xf32>
    %64 = arith.negf %63 : vector<8x128xf32>
    %65 = math.exp %64 : vector<8x128xf32>
    %cst_38 = arith.constant 1.000000e+00 : f32
    %66 = vector.broadcast %cst_38 : f32 to vector<8x128xf32>
    %67 = arith.addf %66, %65 : vector<8x128xf32>
    %68 = arith.divf %66, %67 : vector<8x128xf32>
    %69 = vector.extract_strided_slice %43 {offsets = [0, 512], sizes = [8, 512], strides = [1, 1]} : vector<8x1024xf32> to vector<8x512xf32>
    %70 = arith.truncf %68 : vector<8x128xf32> to vector<8x128xbf16>
    %c1024_39 = arith.constant 1024 : index
    %c0_40 = arith.constant 0 : index
    %71 = vector.load %arg6[%c1024_39, %c0_40] : memref<1920x512xbf16, #tpu.memory_space<vmem>>, vector<128x512xbf16>
    %cst_41 = arith.constant dense<0.000000e+00> : vector<8x512xf32>
    %72 = tpu.matmul %70, %71, %cst_41 {dimension_numbers = #tpu.dot_dimension_numbers<[1], [0], [0], [1], [0, 0, 1, 1], [], []>} : vector<8x128xbf16>, vector<128x512xbf16>, vector<8x512xf32> -> vector<8x512xf32>
    %73 = arith.addf %69, %72 : vector<8x512xf32>
    %c0_42 = arith.constant 0 : index
    %c2816 = arith.constant 2816 : index
    %74 = vector.load %arg9[%c0_42, %c2816] : memref<1x6784xf32, #tpu.memory_space<vmem>>, vector<1x512xf32>
    %75 = vector.broadcast %74 : vector<1x512xf32> to vector<8x512xf32>
    %76 = arith.addf %73, %75 : vector<8x512xf32>
    %cst_43 = arith.constant 0.000000e+00 : f32
    %77 = vector.broadcast %cst_43 : f32 to vector<8x512xf32>
    %78 = arith.maximumf %76, %77 : vector<8x512xf32>
    %79 = arith.truncf %78 : vector<8x512xf32> to vector<8x512xbf16>
    %c512_44 = arith.constant 512 : index
    %c0_45 = arith.constant 0 : index
    %80 = vector.load %arg7[%c512_44, %c0_45] : memref<2304x256xbf16, #tpu.memory_space<vmem>>, vector<512x256xbf16>
    %cst_46 = arith.constant dense<0.000000e+00> : vector<8x256xf32>
    %81 = tpu.matmul %79, %80, %cst_46 {dimension_numbers = #tpu.dot_dimension_numbers<[1], [0], [0], [1], [0, 0, 1, 1], [], []>} : vector<8x512xbf16>, vector<512x256xbf16>, vector<8x256xf32> -> vector<8x256xf32>
    %c0_47 = arith.constant 0 : index
    %c3328 = arith.constant 3328 : index
    %82 = vector.load %arg9[%c0_47, %c3328] : memref<1x6784xf32, #tpu.memory_space<vmem>>, vector<1x256xf32>
    %83 = vector.broadcast %82 : vector<1x256xf32> to vector<8x256xf32>
    %84 = arith.addf %81, %83 : vector<8x256xf32>
    %cst_48 = arith.constant 0.000000e+00 : f32
    %85 = vector.broadcast %cst_48 : f32 to vector<8x256xf32>
    %86 = arith.maximumf %84, %85 : vector<8x256xf32>
    %87 = arith.truncf %86 : vector<8x256xf32> to vector<8x256xbf16>
    %c768 = arith.constant 768 : index
    %c0_49 = arith.constant 0 : index
    %88 = vector.load %arg8[%c768, %c0_49] : memref<2176x128xbf16, #tpu.memory_space<vmem>>, vector<256x128xbf16>
    %cst_50 = arith.constant dense<0.000000e+00> : vector<8x128xf32>
    %89 = tpu.matmul %87, %88, %cst_50 {dimension_numbers = #tpu.dot_dimension_numbers<[1], [0], [0], [1], [0, 0, 1, 1], [], []>} : vector<8x256xbf16>, vector<256x128xbf16>, vector<8x128xf32> -> vector<8x128xf32>
    %c0_51 = arith.constant 0 : index
    %c3584 = arith.constant 3584 : index
    %90 = vector.load %arg9[%c0_51, %c3584] : memref<1x6784xf32, #tpu.memory_space<vmem>>, vector<1x128xf32>
    %91 = vector.broadcast %90 : vector<1x128xf32> to vector<8x128xf32>
    %92 = arith.addf %89, %91 : vector<8x128xf32>
    %93 = math.tanh %92 : vector<8x128xf32>
    %c128_52 = arith.constant 128 : index
    %c0_53 = arith.constant 0 : index
    %94 = vector.load %arg4[%c128_52, %c0_53] : memref<384x1280xbf16, #tpu.memory_space<vmem>>, vector<128x1280xbf16>
    %cst_54 = arith.constant dense<0.000000e+00> : vector<8x1280xf32>
    %95 = tpu.matmul %1, %94, %cst_54 {dimension_numbers = #tpu.dot_dimension_numbers<[1], [0], [0], [1], [0, 0, 1, 1], [], []>} : vector<8x128xbf16>, vector<128x1280xbf16>, vector<8x1280xf32> -> vector<8x1280xf32>
    %c256_55 = arith.constant 256 : index
    %c0_56 = arith.constant 0 : index
    %96 = vector.load %arg4[%c256_55, %c0_56] : memref<384x1280xbf16, #tpu.memory_space<vmem>>, vector<128x1280xbf16>
    %cst_57 = arith.constant dense<0.000000e+00> : vector<8x1280xf32>
    %97 = tpu.matmul %5, %96, %cst_57 {dimension_numbers = #tpu.dot_dimension_numbers<[1], [0], [0], [1], [0, 0, 1, 1], [], []>} : vector<8x128xbf16>, vector<128x1280xbf16>, vector<8x1280xf32> -> vector<8x1280xf32>
    %98 = arith.addf %95, %97 : vector<8x1280xf32>
    %99 = vector.extract_strided_slice %98 {offsets = [0, 0], sizes = [8, 768], strides = [1, 1]} : vector<8x1280xf32> to vector<8x768xf32>
    %c0_58 = arith.constant 0 : index
    %c3712 = arith.constant 3712 : index
    %100 = vector.load %arg9[%c0_58, %c3712] : memref<1x6784xf32, #tpu.memory_space<vmem>>, vector<1x768xf32>
    %101 = vector.broadcast %100 : vector<1x768xf32> to vector<8x768xf32>
    %102 = arith.addf %99, %101 : vector<8x768xf32>
    %cst_59 = arith.constant 0.000000e+00 : f32
    %103 = vector.broadcast %cst_59 : f32 to vector<8x768xf32>
    %104 = arith.maximumf %102, %103 : vector<8x768xf32>
    %105 = arith.truncf %104 : vector<8x768xf32> to vector<8x768xbf16>
    %106 = vector.extract_strided_slice %98 {offsets = [0, 768], sizes = [8, 512], strides = [1, 1]} : vector<8x1280xf32> to vector<8x512xf32>
    %c0_60 = arith.constant 0 : index
    %c4480 = arith.constant 4480 : index
    %107 = vector.load %arg9[%c0_60, %c4480] : memref<1x6784xf32, #tpu.memory_space<vmem>>, vector<1x512xf32>
    %108 = vector.broadcast %107 : vector<1x512xf32> to vector<8x512xf32>
    %109 = arith.addf %106, %108 : vector<8x512xf32>
    %cst_61 = arith.constant 0.000000e+00 : f32
    %110 = vector.broadcast %cst_61 : f32 to vector<8x512xf32>
    %111 = arith.maximumf %109, %110 : vector<8x512xf32>
    %112 = arith.truncf %111 : vector<8x512xf32> to vector<8x512xbf16>
    %c1152 = arith.constant 1152 : index
    %c0_62 = arith.constant 0 : index
    %113 = vector.load %arg6[%c1152, %c0_62] : memref<1920x512xbf16, #tpu.memory_space<vmem>>, vector<768x512xbf16>
    %cst_63 = arith.constant dense<0.000000e+00> : vector<8x512xf32>
    %114 = tpu.matmul %105, %113, %cst_63 {dimension_numbers = #tpu.dot_dimension_numbers<[1], [0], [0], [1], [0, 0, 1, 1], [], []>} : vector<8x768xbf16>, vector<768x512xbf16>, vector<8x512xf32> -> vector<8x512xf32>
    %c0_64 = arith.constant 0 : index
    %c4992 = arith.constant 4992 : index
    %115 = vector.load %arg9[%c0_64, %c4992] : memref<1x6784xf32, #tpu.memory_space<vmem>>, vector<1x512xf32>
    %116 = vector.broadcast %115 : vector<1x512xf32> to vector<8x512xf32>
    %117 = arith.addf %114, %116 : vector<8x512xf32>
    %cst_65 = arith.constant 0.000000e+00 : f32
    %118 = vector.broadcast %cst_65 : f32 to vector<8x512xf32>
    %119 = arith.maximumf %117, %118 : vector<8x512xf32>
    %120 = arith.truncf %119 : vector<8x512xf32> to vector<8x512xbf16>
    %c1024_66 = arith.constant 1024 : index
    %c0_67 = arith.constant 0 : index
    %121 = vector.load %arg7[%c1024_66, %c0_67] : memref<2304x256xbf16, #tpu.memory_space<vmem>>, vector<512x256xbf16>
    %cst_68 = arith.constant dense<0.000000e+00> : vector<8x256xf32>
    %122 = tpu.matmul %120, %121, %cst_68 {dimension_numbers = #tpu.dot_dimension_numbers<[1], [0], [0], [1], [0, 0, 1, 1], [], []>} : vector<8x512xbf16>, vector<512x256xbf16>, vector<8x256xf32> -> vector<8x256xf32>
    %c0_69 = arith.constant 0 : index
    %c5504 = arith.constant 5504 : index
    %123 = vector.load %arg9[%c0_69, %c5504] : memref<1x6784xf32, #tpu.memory_space<vmem>>, vector<1x256xf32>
    %124 = vector.broadcast %123 : vector<1x256xf32> to vector<8x256xf32>
    %125 = arith.addf %122, %124 : vector<8x256xf32>
    %126 = arith.truncf %125 : vector<8x256xf32> to vector<8x256xbf16>
    %c1536 = arith.constant 1536 : index
    %c0_70 = arith.constant 0 : index
    %127 = vector.load %arg7[%c1536, %c0_70] : memref<2304x256xbf16, #tpu.memory_space<vmem>>, vector<256x256xbf16>
    %cst_71 = arith.constant dense<0.000000e+00> : vector<8x256xf32>
    %128 = tpu.matmul %126, %127, %cst_71 {dimension_numbers = #tpu.dot_dimension_numbers<[1], [0], [0], [1], [0, 0, 1, 1], [], []>} : vector<8x256xbf16>, vector<256x256xbf16>, vector<8x256xf32> -> vector<8x256xf32>
    %129 = vector.extract_strided_slice %128 {offsets = [0, 0], sizes = [8, 128], strides = [1, 1]} : vector<8x256xf32> to vector<8x128xf32>
    %c0_72 = arith.constant 0 : index
    %c5760 = arith.constant 5760 : index
    %130 = vector.load %arg9[%c0_72, %c5760] : memref<1x6784xf32, #tpu.memory_space<vmem>>, vector<1x128xf32>
    %131 = vector.broadcast %130 : vector<1x128xf32> to vector<8x128xf32>
    %132 = arith.addf %129, %131 : vector<8x128xf32>
    %cst_73 = arith.constant 0.000000e+00 : f32
    %133 = vector.broadcast %cst_73 : f32 to vector<8x128xf32>
    %134 = arith.maximumf %132, %133 : vector<8x128xf32>
    %135 = arith.truncf %134 : vector<8x128xf32> to vector<8x128xbf16>
    %c1024_74 = arith.constant 1024 : index
    %c0_75 = arith.constant 0 : index
    %136 = vector.load %arg8[%c1024_74, %c0_75] : memref<2176x128xbf16, #tpu.memory_space<vmem>>, vector<128x128xbf16>
    %cst_76 = arith.constant dense<0.000000e+00> : vector<8x128xf32>
    %137 = tpu.matmul %135, %136, %cst_76 {dimension_numbers = #tpu.dot_dimension_numbers<[1], [0], [0], [1], [0, 0, 1, 1], [], []>} : vector<8x128xbf16>, vector<128x128xbf16>, vector<8x128xf32> -> vector<8x128xf32>
    %c0_77 = arith.constant 0 : index
    %c5888 = arith.constant 5888 : index
    %138 = vector.load %arg9[%c0_77, %c5888] : memref<1x6784xf32, #tpu.memory_space<vmem>>, vector<1x128xf32>
    %139 = vector.broadcast %138 : vector<1x128xf32> to vector<8x128xf32>
    %140 = arith.addf %137, %139 : vector<8x128xf32>
    %cst_78 = arith.constant 0.000000e+00 : f32
    %141 = vector.broadcast %cst_78 : f32 to vector<8x128xf32>
    %142 = arith.maximumf %140, %141 : vector<8x128xf32>
    %143 = arith.truncf %142 : vector<8x128xf32> to vector<8x128xbf16>
    %c1792_79 = arith.constant 1792 : index
    %c0_80 = arith.constant 0 : index
    %144 = vector.load %arg7[%c1792_79, %c0_80] : memref<2304x256xbf16, #tpu.memory_space<vmem>>, vector<512x256xbf16>
    %cst_81 = arith.constant dense<0.000000e+00> : vector<8x256xf32>
    %145 = tpu.matmul %112, %144, %cst_81 {dimension_numbers = #tpu.dot_dimension_numbers<[1], [0], [0], [1], [0, 0, 1, 1], [], []>} : vector<8x512xbf16>, vector<512x256xbf16>, vector<8x256xf32> -> vector<8x256xf32>
    %c0_82 = arith.constant 0 : index
    %c6016 = arith.constant 6016 : index
    %146 = vector.load %arg9[%c0_82, %c6016] : memref<1x6784xf32, #tpu.memory_space<vmem>>, vector<1x256xf32>
    %147 = vector.broadcast %146 : vector<1x256xf32> to vector<8x256xf32>
    %148 = arith.addf %145, %147 : vector<8x256xf32>
    %cst_83 = arith.constant 0.000000e+00 : f32
    %149 = vector.broadcast %cst_83 : f32 to vector<8x256xf32>
    %150 = arith.maximumf %148, %149 : vector<8x256xf32>
    %151 = arith.truncf %150 : vector<8x256xf32> to vector<8x256xbf16>
    %c1152_84 = arith.constant 1152 : index
    %c0_85 = arith.constant 0 : index
    %152 = vector.load %arg8[%c1152_84, %c0_85] : memref<2176x128xbf16, #tpu.memory_space<vmem>>, vector<256x128xbf16>
    %cst_86 = arith.constant dense<0.000000e+00> : vector<8x128xf32>
    %153 = tpu.matmul %27, %152, %cst_86 {dimension_numbers = #tpu.dot_dimension_numbers<[1], [0], [0], [1], [0, 0, 1, 1], [], []>} : vector<8x256xbf16>, vector<256x128xbf16>, vector<8x128xf32> -> vector<8x128xf32>
    %c0_87 = arith.constant 0 : index
    %c6272 = arith.constant 6272 : index
    %154 = vector.load %arg9[%c0_87, %c6272] : memref<1x6784xf32, #tpu.memory_space<vmem>>, vector<1x128xf32>
    %155 = vector.broadcast %154 : vector<1x128xf32> to vector<8x128xf32>
    %156 = arith.addf %153, %155 : vector<8x128xf32>
    %cst_88 = arith.constant 0.000000e+00 : f32
    %157 = vector.broadcast %cst_88 : f32 to vector<8x128xf32>
    %158 = arith.maximumf %156, %157 : vector<8x128xf32>
    %159 = arith.truncf %158 : vector<8x128xf32> to vector<8x128xbf16>
    %c1408 = arith.constant 1408 : index
    %c0_89 = arith.constant 0 : index
    %160 = vector.load %arg8[%c1408, %c0_89] : memref<2176x128xbf16, #tpu.memory_space<vmem>>, vector<128x128xbf16>
    %cst_90 = arith.constant dense<0.000000e+00> : vector<8x128xf32>
    %161 = tpu.matmul %143, %160, %cst_90 {dimension_numbers = #tpu.dot_dimension_numbers<[1], [0], [0], [1], [0, 0, 1, 1], [], []>} : vector<8x128xbf16>, vector<128x128xbf16>, vector<8x128xf32> -> vector<8x128xf32>
    %c1536_91 = arith.constant 1536 : index
    %c0_92 = arith.constant 0 : index
    %162 = vector.load %arg8[%c1536_91, %c0_92] : memref<2176x128xbf16, #tpu.memory_space<vmem>>, vector<256x128xbf16>
    %cst_93 = arith.constant dense<0.000000e+00> : vector<8x128xf32>
    %163 = tpu.matmul %151, %162, %cst_93 {dimension_numbers = #tpu.dot_dimension_numbers<[1], [0], [0], [1], [0, 0, 1, 1], [], []>} : vector<8x256xbf16>, vector<256x128xbf16>, vector<8x128xf32> -> vector<8x128xf32>
    %164 = arith.addf %161, %163 : vector<8x128xf32>
    %c1792_94 = arith.constant 1792 : index
    %c0_95 = arith.constant 0 : index
    %165 = vector.load %arg8[%c1792_94, %c0_95] : memref<2176x128xbf16, #tpu.memory_space<vmem>>, vector<128x128xbf16>
    %cst_96 = arith.constant dense<0.000000e+00> : vector<8x128xf32>
    %166 = tpu.matmul %159, %165, %cst_96 {dimension_numbers = #tpu.dot_dimension_numbers<[1], [0], [0], [1], [0, 0, 1, 1], [], []>} : vector<8x128xbf16>, vector<128x128xbf16>, vector<8x128xf32> -> vector<8x128xf32>
    %167 = arith.addf %164, %166 : vector<8x128xf32>
    %c0_97 = arith.constant 0 : index
    %c6400 = arith.constant 6400 : index
    %168 = vector.load %arg9[%c0_97, %c6400] : memref<1x6784xf32, #tpu.memory_space<vmem>>, vector<1x128xf32>
    %169 = vector.broadcast %168 : vector<1x128xf32> to vector<8x128xf32>
    %170 = arith.addf %167, %169 : vector<8x128xf32>
    %171 = tpu.iota {dimensions = array<i32: 1>} : vector<8x128xi32>
    %c5_i32 = arith.constant 5 : i32
    %172 = vector.broadcast %c5_i32 : i32 to vector<8x128xi32>
    %173 = arith.cmpi sge, %171, %172 : vector<8x128xi32>
    %c15_i32 = arith.constant 15 : i32
    %174 = vector.broadcast %c15_i32 : i32 to vector<8x128xi32>
    %175 = arith.cmpi slt, %171, %174 : vector<8x128xi32>
    %176 = arith.andi %173, %175 : vector<8x128xi1>
    %cst_98 = arith.constant -1.000000e+30 : f32
    %177 = vector.broadcast %cst_98 : f32 to vector<8x128xf32>
    %178 = arith.select %176, %170, %177 : vector<8x128xi1>, vector<8x128xf32>
    %cst_99 = arith.constant dense<0xFF800000> : vector<8xf32>
    %179 = vector.multi_reduction <maximumf>, %178, %cst_99 [1] : vector<8x128xf32> to vector<8xf32>
    %180 = vector.shape_cast %179 : vector<8xf32> to vector<8x1xf32>
    %181 = vector.broadcast %180 : vector<8x1xf32> to vector<8x128xf32>
    %182 = arith.subf %178, %181 : vector<8x128xf32>
    %183 = math.exp %182 : vector<8x128xf32>
    %cst_100 = arith.constant 0.000000e+00 : f32
    %184 = vector.broadcast %cst_100 : f32 to vector<8x128xf32>
    %185 = arith.select %176, %183, %184 : vector<8x128xi1>, vector<8x128xf32>
    %cst_101 = arith.constant dense<0.000000e+00> : vector<8xf32>
    %186 = vector.multi_reduction <add>, %185, %cst_101 [1] : vector<8x128xf32> to vector<8xf32>
    %187 = vector.shape_cast %186 : vector<8xf32> to vector<8x1xf32>
    %188 = vector.broadcast %187 : vector<8x1xf32> to vector<8x128xf32>
    %189 = arith.divf %185, %188 : vector<8x128xf32>
    %190 = arith.negf %170 : vector<8x128xf32>
    %191 = math.exp %190 : vector<8x128xf32>
    %cst_102 = arith.constant 1.000000e+00 : f32
    %192 = vector.broadcast %cst_102 : f32 to vector<8x128xf32>
    %193 = arith.addf %192, %191 : vector<8x128xf32>
    %194 = arith.divf %192, %193 : vector<8x128xf32>
    %195 = arith.select %176, %189, %194 : vector<8x128xi1>, vector<8x128xf32>
    %c16_i32 = arith.constant 16 : i32
    %196 = vector.broadcast %c16_i32 : i32 to vector<8x128xi32>
    %197 = arith.cmpi slt, %171, %196 : vector<8x128xi32>
    %cst_103 = arith.constant 0.000000e+00 : f32
    %198 = vector.broadcast %cst_103 : f32 to vector<8x128xf32>
    %199 = arith.select %197, %195, %198 : vector<8x128xi1>, vector<8x128xf32>
    %200 = vector.extract_strided_slice %128 {offsets = [0, 128], sizes = [8, 128], strides = [1, 1]} : vector<8x256xf32> to vector<8x128xf32>
    %201 = arith.truncf %199 : vector<8x128xf32> to vector<8x128xbf16>
    %c1920_104 = arith.constant 1920 : index
    %c0_105 = arith.constant 0 : index
    %202 = vector.load %arg8[%c1920_104, %c0_105] : memref<2176x128xbf16, #tpu.memory_space<vmem>>, vector<128x128xbf16>
    %cst_106 = arith.constant dense<0.000000e+00> : vector<8x128xf32>
    %203 = tpu.matmul %201, %202, %cst_106 {dimension_numbers = #tpu.dot_dimension_numbers<[1], [0], [0], [1], [0, 0, 1, 1], [], []>} : vector<8x128xbf16>, vector<128x128xbf16>, vector<8x128xf32> -> vector<8x128xf32>
    %204 = arith.addf %200, %203 : vector<8x128xf32>
    %c0_107 = arith.constant 0 : index
    %c6528 = arith.constant 6528 : index
    %205 = vector.load %arg9[%c0_107, %c6528] : memref<1x6784xf32, #tpu.memory_space<vmem>>, vector<1x128xf32>
    %206 = vector.broadcast %205 : vector<1x128xf32> to vector<8x128xf32>
    %207 = arith.addf %204, %206 : vector<8x128xf32>
    %cst_108 = arith.constant 0.000000e+00 : f32
    %208 = vector.broadcast %cst_108 : f32 to vector<8x128xf32>
    %209 = arith.maximumf %207, %208 : vector<8x128xf32>
    %210 = arith.truncf %209 : vector<8x128xf32> to vector<8x128xbf16>
    %c2048 = arith.constant 2048 : index
    %c0_109 = arith.constant 0 : index
    %211 = vector.load %arg8[%c2048, %c0_109] : memref<2176x128xbf16, #tpu.memory_space<vmem>>, vector<128x128xbf16>
    %cst_110 = arith.constant dense<0.000000e+00> : vector<8x128xf32>
    %212 = tpu.matmul %210, %211, %cst_110 {dimension_numbers = #tpu.dot_dimension_numbers<[1], [0], [0], [1], [0, 0, 1, 1], [], []>} : vector<8x128xbf16>, vector<128x128xbf16>, vector<8x128xf32> -> vector<8x128xf32>
    %c0_111 = arith.constant 0 : index
    %c6656 = arith.constant 6656 : index
    %213 = vector.load %arg9[%c0_111, %c6656] : memref<1x6784xf32, #tpu.memory_space<vmem>>, vector<1x128xf32>
    %214 = vector.broadcast %213 : vector<1x128xf32> to vector<8x128xf32>
    %215 = arith.addf %212, %214 : vector<8x128xf32>
    %216 = math.tanh %215 : vector<8x128xf32>
    %c0_112 = arith.constant 0 : index
    %c0_113 = arith.constant 0 : index
    %217 = vector.load %arg10[%c0_112, %c0_113] : memref<8x128xf32, #tpu.memory_space<vmem>>, vector<8x128xf32>
    tpu.vector_store %arg10[%c0_112, %c0_113], %40 {strides = array<i32>} : memref<8x128xf32, #tpu.memory_space<vmem>>, vector<8x128xf32>,
    %c0_114 = arith.constant 0 : index
    %c0_115 = arith.constant 0 : index
    %218 = vector.load %arg11[%c0_114, %c0_115] : memref<8x128xf32, #tpu.memory_space<vmem>>, vector<8x128xf32>
    tpu.vector_store %arg11[%c0_114, %c0_115], %68 {strides = array<i32>} : memref<8x128xf32, #tpu.memory_space<vmem>>, vector<8x128xf32>,
    %c0_116 = arith.constant 0 : index
    %c0_117 = arith.constant 0 : index
    %219 = vector.load %arg12[%c0_116, %c0_117] : memref<8x128xf32, #tpu.memory_space<vmem>>, vector<8x128xf32>
    tpu.vector_store %arg12[%c0_116, %c0_117], %93 {strides = array<i32>} : memref<8x128xf32, #tpu.memory_space<vmem>>, vector<8x128xf32>,
    %c0_118 = arith.constant 0 : index
    %c0_119 = arith.constant 0 : index
    %220 = vector.load %arg13[%c0_118, %c0_119] : memref<8x256xf32, #tpu.memory_space<vmem>>, vector<8x256xf32>
    tpu.vector_store %arg13[%c0_118, %c0_119], %125 {strides = array<i32>} : memref<8x256xf32, #tpu.memory_space<vmem>>, vector<8x256xf32>,
    %c0_120 = arith.constant 0 : index
    %c0_121 = arith.constant 0 : index
    %221 = vector.load %arg14[%c0_120, %c0_121] : memref<8x128xf32, #tpu.memory_space<vmem>>, vector<8x128xf32>
    tpu.vector_store %arg14[%c0_120, %c0_121], %216 {strides = array<i32>} : memref<8x128xf32, #tpu.memory_space<vmem>>, vector<8x128xf32>,
    %c0_122 = arith.constant 0 : index
    %c0_123 = arith.constant 0 : index
    %222 = vector.load %arg15[%c0_122, %c0_123] : memref<8x128xf32, #tpu.memory_space<vmem>>, vector<8x128xf32>
    tpu.vector_store %arg15[%c0_122, %c0_123], %199 {strides = array<i32>} : memref<8x128xf32, #tpu.memory_space<vmem>>, vector<8x128xf32>,
    return
  }
  func.func @transform_0(%arg0: i32) -> (i32, i32) {
    %c0_i32 = arith.constant 0 : i32
    %c0_i32_0 = arith.constant 0 : i32
    return %arg0, %c0_i32 : i32, i32
  }
  func.func @transform_1(%arg0: i32) -> (i32, i32) {
    %c0_i32 = arith.constant 0 : i32
    %c0_i32_0 = arith.constant 0 : i32
    return %arg0, %c0_i32 : i32, i32
  }
  func.func @transform_2(%arg0: i32) -> (i32, i32) {
    %c0_i32 = arith.constant 0 : i32
    %c0_i32_0 = arith.constant 0 : i32
    return %arg0, %c0_i32 : i32, i32
  }
  func.func @transform_3(%arg0: i32) -> (i32, i32) {
    %c0_i32 = arith.constant 0 : i32
    %c0_i32_0 = arith.constant 0 : i32
    %c0_i32_1 = arith.constant 0 : i32
    return %c0_i32, %c0_i32_0 : i32, i32
  }
  func.func @transform_4(%arg0: i32) -> (i32, i32) {
    %c0_i32 = arith.constant 0 : i32
    %c0_i32_0 = arith.constant 0 : i32
    %c0_i32_1 = arith.constant 0 : i32
    return %c0_i32, %c0_i32_0 : i32, i32
  }
  func.func @transform_5(%arg0: i32) -> (i32, i32) {
    %c0_i32 = arith.constant 0 : i32
    %c0_i32_0 = arith.constant 0 : i32
    %c0_i32_1 = arith.constant 0 : i32
    return %c0_i32, %c0_i32_0 : i32, i32
  }
  func.func @transform_6(%arg0: i32) -> (i32, i32) {
    %c0_i32 = arith.constant 0 : i32
    %c0_i32_0 = arith.constant 0 : i32
    %c0_i32_1 = arith.constant 0 : i32
    return %c0_i32, %c0_i32_0 : i32, i32
  }
  func.func @transform_7(%arg0: i32) -> (i32, i32) {
    %c0_i32 = arith.constant 0 : i32
    %c0_i32_0 = arith.constant 0 : i32
    %c0_i32_1 = arith.constant 0 : i32
    return %c0_i32, %c0_i32_0 : i32, i32
  }
  func.func @transform_8(%arg0: i32) -> (i32, i32) {
    %c0_i32 = arith.constant 0 : i32
    %c0_i32_0 = arith.constant 0 : i32
    %c0_i32_1 = arith.constant 0 : i32
    return %c0_i32, %c0_i32_0 : i32, i32
  }
  func.func @transform_9(%arg0: i32) -> (i32, i32) {
    %c0_i32 = arith.constant 0 : i32
    %c0_i32_0 = arith.constant 0 : i32
    return %arg0, %c0_i32 : i32, i32
  }
  func.func @transform_10(%arg0: i32) -> (i32, i32) {
    %c0_i32 = arith.constant 0 : i32
    %c0_i32_0 = arith.constant 0 : i32
    return %arg0, %c0_i32 : i32, i32
  }
  func.func @transform_11(%arg0: i32) -> (i32, i32) {
    %c0_i32 = arith.constant 0 : i32
    %c0_i32_0 = arith.constant 0 : i32
    return %arg0, %c0_i32 : i32, i32
  }
  func.func @transform_12(%arg0: i32) -> (i32, i32) {
    %c0_i32 = arith.constant 0 : i32
    %c0_i32_0 = arith.constant 0 : i32
    return %arg0, %c0_i32 : i32, i32
  }
  func.func @transform_13(%arg0: i32) -> (i32, i32) {
    %c0_i32 = arith.constant 0 : i32
    %c0_i32_0 = arith.constant 0 : i32
    return %arg0, %c0_i32 : i32, i32
  }
  func.func @transform_14(%arg0: i32) -> (i32, i32) {
    %c0_i32 = arith.constant 0 : i32
    %c0_i32_0 = arith.constant 0 : i32
    return %arg0, %c0_i32 : i32, i32
  }
}

</mosaic_0001>

<llo_original>
// kernel: metacognition_forward.1
$region0: #{metacognition_forward.1}
  #allocation0 [shape = 'u32[]', space=smem, size = 0x4, offset = 0x4, fixed_abs, tag = 'smem constant byte address 0x4 - core index']
  #allocation1 [shape = 'u32[144,128]{1,0:T(1,128)}', space=vmem, size = 0x12000, scoped, tag = 'internal scratch']
  %s0 = inlined_call_operand.hbm [shape: f32[8,128], index: 0, kind: input, shape index: {}]
  %s1 = inlined_call_operand.vmem [shape: f32[8,128], index: 1, kind: input, shape index: {}]
  %s2 = inlined_call_operand.hbm [shape: f32[8,128], index: 2, kind: input, shape index: {}]
  %s3 = inlined_call_operand.hbm [shape: bf16[384,1280], index: 3, kind: input, shape index: {}]
  %s4 = inlined_call_operand.hbm [shape: bf16[384,1024], index: 4, kind: input, shape index: {}]
  %s5 = inlined_call_operand.hbm [shape: bf16[1920,512], index: 5, kind: input, shape index: {}]
  %s6 = inlined_call_operand.hbm [shape: bf16[2304,256], index: 6, kind: input, shape index: {}]
  %s7 = inlined_call_operand.hbm [shape: bf16[2176,128], index: 7, kind: input, shape index: {}]
  %s8 = inlined_call_operand.hbm [shape: f32[1,6784], index: 8, kind: input, shape index: {}]
  %s9 = inlined_call_operand.hbm [shape: f32[8,128], index: 9, kind: output, shape index: {0}]
  %s10 = inlined_call_operand.hbm [shape: f32[8,128], index: 10, kind: output, shape index: {1}]
  %s11 = inlined_call_operand.hbm [shape: f32[8,128], index: 11, kind: output, shape index: {2}]
  %s12 = inlined_call_operand.hbm [shape: f32[8,256], index: 12, kind: output, shape index: {3}]
  %s13 = inlined_call_operand.hbm [shape: f32[8,128], index: 13, kind: output, shape index: {4}]
  %s14 = inlined_call_operand.vmem [shape: f32[8,128], index: 14, kind: output, shape index: {5}]
  %15 = xla_tuple %s9, %s10, %s11, %s12, %s13, %s14
  %s16 = sld [smem:[#allocation0]]
  $region118: #{metacognition_forward.1} parent=0
    _
  %s18 = ssub.s32 1, %s16
  %s19 = scalar_select 0, %s18, %s16
  $region1: #{metacognition_forward.1} parent=0
    #allocation2 [shape = 'u8[4096]{0}', space=vmem, size = 0x1000, scoped, tag = 'input window, operand 0, single buffered']
    #allocation3 [shape = 's32[1]{0}', space=sflag, size = 0x4, scoped, tag = 'scoped memory for metacognition_forward.1']
    #allocation4 [shape = 's32[1]{0}', space=sflag, size = 0x4, scoped, tag = 'scoped memory for metacognition_forward.1']
    #allocation5 [shape = 'u8[4096]{0}', space=vmem, size = 0x1000, scoped, tag = 'input window, operand 2, single buffered']
    #allocation6 [shape = 's32[1]{0}', space=sflag, size = 0x4, scoped, tag = 'scoped memory for metacognition_forward.1']
    #allocation7 [shape = 'u8[983040]{0}', space=vmem, size = 0xf0000, scoped, tag = 'input window, operand 3, single buffered']
    #allocation8 [shape = 'u8[786432]{0}', space=vmem, size = 0xc0000, scoped, tag = 'input window, operand 4, single buffered']
    #allocation9 [shape = 's32[1]{0}', space=sflag, size = 0x4, scoped, tag = 'scoped memory for metacognition_forward.1']
    #allocation10 [shape = 'u8[1966080]{0}', space=vmem, size = 0x1e0000, scoped, tag = 'input window, operand 5, single buffered']
    #allocation11 [shape = 'u8[1179648]{0}', space=vmem, size = 0x120000, scoped, tag = 'input window, operand 6, single buffered']
    #allocation12 [shape = 's32[1]{0}', space=sflag, size = 0x4, scoped, tag = 'scoped memory for metacognition_forward.1']
    #allocation13 [shape = 'u8[557056]{0}', space=vmem, size = 0x88000, scoped, tag = 'input window, operand 7, single buffered']
    #allocation14 [shape = 'u8[27136]{0}', space=vmem, size = 0x6c00, scoped, tag = 'input window, operand 8, single buffered']
    #allocation15 [shape = 's32[1]{0}', space=sflag, size = 0x4, scoped, tag = 'scoped memory for metacognition_forward.1']
    #allocation16 [shape = 'u8[4096]{0}', space=vmem, size = 0x1000, scoped, tag = 'output window, operand 0, single buffered']
    #allocation17 [shape = 'u8[4096]{0}', space=vmem, size = 0x1000, scoped, tag = 'output window, operand 1, single buffered']
    #allocation18 [shape = 's32[1]{0}', space=sflag, size = 0x4, scoped, tag = 'scoped memory for metacognition_forward.1']
    #allocation19 [shape = 'u8[4096]{0}', space=vmem, size = 0x1000, scoped, tag = 'output window, operand 2, single buffered']
    #allocation20 [shape = 'u8[8192]{0}', space=vmem, size = 0x2000, scoped, tag = 'output window, operand 3, single buffered']
    #allocation21 [shape = 's32[1]{0}', space=sflag, size = 0x4, scoped, tag = 'scoped memory for metacognition_forward.1']
    #allocation22 [shape = 'u8[4096]{0}', space=vmem, size = 0x1000, scoped, tag = 'output window, operand 4, single buffered']
    %20 = vsyncpa [#allocation3], 0
    %21 = vsyncpa [#allocation6], 0
    %22 = vsyncpa [#allocation9], 0
    %23 = vsyncpa [#allocation12], 0
    %24 = vsyncpa [#allocation15], 0
    %25 = vsyncpa [#allocation4], 0
    %26 = vsyncpa [#allocation18], 0
    %27 = vsyncpa [#allocation21], 0
    // Predicated region
    $region2: #{metacognition_forward.1} parent=1 // pred_check
      _
    $region3: #{metacognition_forward.1} parent=1 // pred_check_branch
      %29 = sbr.rel (0) target = $region5
    $region4: #{metacognition_forward.1} parent=1 // pred_region
      %s31 = ssub.s32 128, 128
      %32 = vsyncadd [#allocation3], %s31
      %s34 = sshll.u32 [#allocation2], 4
      %s35 = int_to_ptr.vmem [resolvable:$true] %s34
      %37 = dma.hbm_to_vmem [thread:$0]  %s0, 128, %s35, [#allocation3]
    $region5: #{metacognition_forward.1} parent=1 // pred_fallthru
      _
    // Predicated region
    $region6: #{metacognition_forward.1} parent=1 // pred_check
      _
    $region7: #{metacognition_forward.1} parent=1 // pred_check_branch
      %39 = sbr.rel (0) target = $region9
    $region8: #{metacognition_forward.1} parent=1 // pred_region
      _
    $region9: #{metacognition_forward.1} parent=1 // pred_fallthru
      _
    // Predicated region
    $region10: #{metacognition_forward.1} parent=1 // pred_check
      _
    $region11: #{metacognition_forward.1} parent=1 // pred_check_branch
      %41 = sbr.rel (0) target = $region13
    $region12: #{metacognition_forward.1} parent=1 // pred_region
      %s43 = ssub.s32 128, 128
      %44 = vsyncadd [#allocation6], %s43
      %s46 = sshll.u32 [#allocation5], 4
      %s47 = int_to_ptr.vmem [resolvable:$true] %s46
      %49 = dma.hbm_to_vmem [thread:$0]  %s2, 128, %s47, [#allocation6]
    $region13: #{metacognition_forward.1} parent=1 // pred_fallthru
      _
    // Predicated region
    $region14: #{metacognition_forward.1} parent=1 // pred_check
      _
    $region15: #{metacognition_forward.1} parent=1 // pred_check_branch
      %51 = sbr.rel (0) target = $region17
    $region16: #{metacognition_forward.1} parent=1 // pred_region
      %s53 = ssub.s32 30720, 30720
      %54 = vsyncadd [#allocation6], %s53
      %s55 = sshll.u32 [#allocation7], 4
      %s56 = int_to_ptr.vmem [resolvable:$true] %s55
      %61 = dma.hbm_to_vmem [thread:$0]  %s3, 30720, %s56, [#allocation6], 640, 640, 40
    $region17: #{metacognition_forward.1} parent=1 // pred_fallthru
      _
    // Predicated region
    $region18: #{metacognition_forward.1} parent=1 // pred_check
      _
    $region19: #{metacognition_forward.1} parent=1 // pred_check_branch
      %63 = sbr.rel (0) target = $region21
    $region20: #{metacognition_forward.1} parent=1 // pred_region
      %s65 = ssub.s32 24576, 24576
      %66 = vsyncadd [#allocation9], %s65
      %s67 = sshll.u32 [#allocation8], 4
      %s68 = int_to_ptr.vmem [resolvable:$true] %s67
      %73 = dma.hbm_to_vmem [thread:$0]  %s4, 24576, %s68, [#allocation9], 512, 512, 32
    $region21: #{metacognition_forward.1} parent=1 // pred_fallthru
      _
    // Predicated region
    $region22: #{metacognition_forward.1} parent=1 // pred_check
      _
    $region23: #{metacognition_forward.1} parent=1 // pred_check_branch
      %75 = sbr.rel (0) target = $region25
    $region24: #{metacognition_forward.1} parent=1 // pred_region
      %s77 = ssub.s32 61440, 61440
      %78 = vsyncadd [#allocation9], %s77
      %s79 = sshll.u32 [#allocation10], 4
      %s80 = int_to_ptr.vmem [resolvable:$true] %s79
      %85 = dma.hbm_to_vmem [thread:$0]  %s5, 61440, %s80, [#allocation9], 256, 256, 16
    $region25: #{metacognition_forward.1} parent=1 // pred_fallthru
      _
    // Predicated region
    $region26: #{metacognition_forward.1} parent=1 // pred_check
      _
    $region27: #{metacognition_forward.1} parent=1 // pred_check_branch
      %87 = sbr.rel (0) target = $region29
    $region28: #{metacognition_forward.1} parent=1 // pred_region
      %s89 = ssub.s32 36864, 36864
      %90 = vsyncadd [#allocation12], %s89
      %s91 = sshll.u32 [#allocation11], 4
      %s92 = int_to_ptr.vmem [resolvable:$true] %s91
      %97 = dma.hbm_to_vmem [thread:$0]  %s6, 36864, %s92, [#allocation12], 128, 128, 8
    $region29: #{metacognition_forward.1} parent=1 // pred_fallthru
      _
    // Predicated region
    $region30: #{metacognition_forward.1} parent=1 // pred_check
      _
    $region31: #{metacognition_forward.1} parent=1 // pred_check_branch
      %99 = sbr.rel (0) target = $region33
    $region32: #{metacognition_forward.1} parent=1 // pred_region
      %s101 = ssub.s32 17408, 17408
      %102 = vsyncadd [#allocation12], %s101
      %s103 = sshll.u32 [#allocation13], 4
      %s104 = int_to_ptr.vmem [resolvable:$true] %s103
      %109 = dma.hbm_to_vmem [thread:$0]  %s7, 17408, %s104, [#allocation12], 64, 64, 4
    $region33: #{metacognition_forward.1} parent=1 // pred_fallthru
      _
    // Predicated region
    $region34: #{metacognition_forward.1} parent=1 // pred_check
      _
    $region35: #{metacognition_forward.1} parent=1 // pred_check_branch
      %111 = sbr.rel (0) target = $region37
    $region36: #{metacognition_forward.1} parent=1 // pred_region
      %s113 = ssub.s32 848, 848
      %114 = vsyncadd [#allocation15], %s113
      %s116 = sshll.u32 [#allocation14], 4
      %s117 = int_to_ptr.vmem [resolvable:$true] %s116
      %119 = dma.hbm_to_vmem [thread:$0]  %s8, 848, %s117, [#allocation15]
    $region37: #{metacognition_forward.1} parent=1 // pred_fallthru
      _
    // Predicated region
    $region38: #{metacognition_forward.1} parent=1 // pred_check
      _
    $region39: #{metacognition_forward.1} parent=1 // pred_check_branch
      %121 = sbr.rel (0) target = $region41
    $region40: #{metacognition_forward.1} parent=1 // pred_region
      %122 = dma.done [#allocation3], 128
    $region41: #{metacognition_forward.1} parent=1 // pred_fallthru
      _
    // Predicated region
    $region42: #{metacognition_forward.1} parent=1 // pred_check
      _
    $region43: #{metacognition_forward.1} parent=1 // pred_check_branch
      %124 = sbr.rel (0) target = $region45
    $region44: #{metacognition_forward.1} parent=1 // pred_region
      %125 = dma.done [#allocation6], 128
    $region45: #{metacognition_forward.1} parent=1 // pred_fallthru
      _
    // Predicated region
    $region46: #{metacognition_forward.1} parent=1 // pred_check
      _
    $region47: #{metacognition_forward.1} parent=1 // pred_check_branch
      %127 = sbr.rel (0) target = $region49
    $region48: #{metacognition_forward.1} parent=1 // pred_region
      %128 = dma.done [#allocation6], 30720
    $region49: #{metacognition_forward.1} parent=1 // pred_fallthru
      _
    // Predicated region
    $region50: #{metacognition_forward.1} parent=1 // pred_check
      _
    $region51: #{metacognition_forward.1} parent=1 // pred_check_branch
      %130 = sbr.rel (0) target = $region53
    $region52: #{metacognition_forward.1} parent=1 // pred_region
      %131 = dma.done [#allocation9], 24576
    $region53: #{metacognition_forward.1} parent=1 // pred_fallthru
      _
    // Predicated region
    $region54: #{metacognition_forward.1} parent=1 // pred_check
      _
    $region55: #{metacognition_forward.1} parent=1 // pred_check_branch
      %133 = sbr.rel (0) target = $region57
    $region56: #{metacognition_forward.1} parent=1 // pred_region
      %134 = dma.done [#allocation9], 61440
    $region57: #{metacognition_forward.1} parent=1 // pred_fallthru
      _
    // Predicated region
    $region58: #{metacognition_forward.1} parent=1 // pred_check
      _
    $region59: #{metacognition_forward.1} parent=1 // pred_check_branch
      %136 = sbr.rel (0) target = $region61
    $region60: #{metacognition_forward.1} parent=1 // pred_region
      %137 = dma.done [#allocation12], 36864
    $region61: #{metacognition_forward.1} parent=1 // pred_fallthru
      _
    // Predicated region
    $region62: #{metacognition_forward.1} parent=1 // pred_check
      _
    $region63: #{metacognition_forward.1} parent=1 // pred_check_branch
      %139 = sbr.rel (0) target = $region65
    $region64: #{metacognition_forward.1} parent=1 // pred_region
      %140 = dma.done [#allocation12], 17408
    $region65: #{metacognition_forward.1} parent=1 // pred_fallthru
      _
    // Predicated region
    $region66: #{metacognition_forward.1} parent=1 // pred_check
      _
    $region67: #{metacognition_forward.1} parent=1 // pred_check_branch
      %142 = sbr.rel (0) target = $region69
    $region68: #{metacognition_forward.1} parent=1 // pred_region
      %143 = dma.done [#allocation15], 848
    $region69: #{metacognition_forward.1} parent=1 // pred_fallthru
      _
    %v145 = vld [vmem:[#allocation2] sm:$0xff]
    %v146 = vpack.c.bf16 %v145, %v145
    %v147 = vld [vmem:[%s1] sm:$0xff]
    %v148 = vpack.c.bf16 %v147, %v147
    %v149 = vld [vmem:[#allocation5] sm:$0xff]
    %v150 = vpack.c.bf16 %v149, %v149
    %v151 = vld [vmem:[#allocation7] sm:$0xff]
    %v152 = vld [vmem:[#allocation7 + $0x8] sm:$0xff]
    %v153 = vld [vmem:[#allocation7 + $0x10] sm:$0xff]
    %v154 = vld [vmem:[#allocation7 + $0x18] sm:$0xff]
    %v155 = vld [vmem:[#allocation7 + $0x20] sm:$0xff]
    %v156 = vld [vmem:[#allocation7 + $0x28] sm:$0xff]
    %v157 = vld [vmem:[#allocation7 + $0x30] sm:$0xff]
    %v158 = vld [vmem:[#allocation7 + $0x38] sm:$0xff]
    %v159 = vld [vmem:[#allocation7 + $0x40] sm:$0xff]
    %v160 = vld [vmem:[#allocation7 + $0x48] sm:$0xff]
    %v161 = vld [vmem:[#allocation7 + $0x50] sm:$0xff]
    %v162 = vld [vmem:[#allocation7 + $0x58] sm:$0xff]
    %v163 = vld [vmem:[#allocation7 + $0x60] sm:$0xff]
    %v164 = vld [vmem:[#allocation7 + $0x68] sm:$0xff]
    %v165 = vld [vmem:[#allocation7 + $0x70] sm:$0xff]
    %v166 = vld [vmem:[#allocation7 + $0x78] sm:$0xff]
    %v167 = vld [vmem:[#allocation7 + $0x80] sm:$0xff]
    %v168 = vld [vmem:[#allocation7 + $0x88] sm:$0xff]
    %v169 = vld [vmem:[#allocation7 + $0x90] sm:$0xff]
    %v170 = vld [vmem:[#allocation7 + $0x98] sm:$0xff]
    %v171 = vld [vmem:[#allocation7 + $0xa0] sm:$0xff]
    %v172 = vld [vmem:[#allocation7 + $0xa8] sm:$0xff]
    %v173 = vld [vmem:[#allocation7 + $0xb0] sm:$0xff]
    %v174 = vld [vmem:[#allocation7 + $0xb8] sm:$0xff]
    %v175 = vld [vmem:[#allocation7 + $0xc0] sm:$0xff]
    %v176 = vld [vmem:[#allocation7 + $0xc8] sm:$0xff]
    %v177 = vld [vmem:[#allocation7 + $0xd0] sm:$0xff]
    %v178 = vld [vmem:[#allocation7 + $0xd8] sm:$0xff]
    %v179 = vld [vmem:[#allocation7 + $0xe0] sm:$0xff]
    %v180 = vld [vmem:[#allocation7 + $0xe8] sm:$0xff]
    %v181 = vld [vmem:[#allocation7 + $0xf0] sm:$0xff]
    %v182 = vld [vmem:[#allocation7 + $0xf8] sm:$0xff]
    %v183 = vld [vmem:[#allocation7 + $0x100] sm:$0xff]
    %v184 = vld [vmem:[#allocation7 + $0x108] sm:$0xff]
    %v185 = vld [vmem:[#allocation7 + $0x110] sm:$0xff]
    %v186 = vld [vmem:[#allocation7 + $0x118] sm:$0xff]
    %v187 = vld [vmem:[#allocation7 + $0x120] sm:$0xff]
    %v188 = vld [vmem:[#allocation7 + $0x128] sm:$0xff]
    %v189 = vld [vmem:[#allocation7 + $0x130] sm:$0xff]
    %v190 = vld [vmem:[#allocation7 + $0x138] sm:$0xff]
    %v191 = vld [vmem:[#allocation7 + $0x140] sm:$0xff]
    %v192 = vld [vmem:[#allocation7 + $0x148] sm:$0xff]
    %v193 = vld [vmem:[#allocation7 + $0x150] sm:$0xff]
    %v194 = vld [vmem:[#allocation7 + $0x158] sm:$0xff]
    %v195 = vld [vmem:[#allocation7 + $0x160] sm:$0xff]
    %v196 = vld [vmem:[#allocation7 + $0x168] sm:$0xff]
    %v197 = vld [vmem:[#allocation7 + $0x170] sm:$0xff]
    %v198 = vld [vmem:[#allocation7 + $0x178] sm:$0xff]
    %v199 = vld [vmem:[#allocation7 + $0x180] sm:$0xff]
    %v200 = vld [vmem:[#allocation7 + $0x188] sm:$0xff]
    %v201 = vld [vmem:[#allocation7 + $0x190] sm:$0xff]
    %v202 = vld [vmem:[#allocation7 + $0x198] sm:$0xff]
    %v203 = vld [vmem:[#allocation7 + $0x1a0] sm:$0xff]
    %v204 = vld [vmem:[#allocation7 + $0x1a8] sm:$0xff]
    %v205 = vld [vmem:[#allocation7 + $0x1b0] sm:$0xff]
    %v206 = vld [vmem:[#allocation7 + $0x1b8] sm:$0xff]
    %v207 = vld [vmem:[#allocation7 + $0x1c0] sm:$0xff]
    %v208 = vld [vmem:[#allocation7 + $0x1c8] sm:$0xff]
    %v209 = vld [vmem:[#allocation7 + $0x1d0] sm:$0xff]
    %v210 = vld [vmem:[#allocation7 + $0x1d8] sm:$0xff]
    %v211 = vld [vmem:[#allocation7 + $0x1e0] sm:$0xff]
    %v212 = vld [vmem:[#allocation7 + $0x1e8] sm:$0xff]
    %v213 = vld [vmem:[#allocation7 + $0x1f0] sm:$0xff]
    %v214 = vld [vmem:[#allocation7 + $0x1f8] sm:$0xff]
    %v215 = vld [vmem:[#allocation7 + $0x200] sm:$0xff]
    %v216 = vld [vmem:[#allocation7 + $0x208] sm:$0xff]
    %v217 = vld [vmem:[#allocation7 + $0x210] sm:$0xff]
    %v218 = vld [vmem:[#allocation7 + $0x218] sm:$0xff]
    %v219 = vld [vmem:[#allocation7 + $0x220] sm:$0xff]
    %v220 = vld [vmem:[#allocation7 + $0x228] sm:$0xff]
    %v221 = vld [vmem:[#allocation7 + $0x230] sm:$0xff]
    %v222 = vld [vmem:[#allocation7 + $0x238] sm:$0xff]
    %v223 = vld [vmem:[#allocation7 + $0x240] sm:$0xff]
    %v224 = vld [vmem:[#allocation7 + $0x248] sm:$0xff]
    %v225 = vld [vmem:[#allocation7 + $0x250] sm:$0xff]
    %v226 = vld [vmem:[#allocation7 + $0x258] sm:$0xff]
    %v227 = vld [vmem:[#allocation7 + $0x260] sm:$0xff]
    %v228 = vld [vmem:[#allocation7 + $0x268] sm:$0xff]
    %v229 = vld [vmem:[#allocation7 + $0x270] sm:$0xff]
    %v230 = vld [vmem:[#allocation7 + $0x278] sm:$0xff]
    %v311 = vunpack.c.l.b16 %v151
    %v312 = vunpack.c.h.b16 %v151
    %v313 = vunpack.c.l.b16 %v152
    %v314 = vunpack.c.h.b16 %v152
    %v315 = vunpack.c.l.b16 %v153
    %v316 = vunpack.c.h.b16 %v153
    %v317 = vunpack.c.l.b16 %v154
    %v318 = vunpack.c.h.b16 %v154
    %v319 = vunpack.c.l.b16 %v155
    %v320 = vunpack.c.h.b16 %v155
    %v321 = vunpack.c.l.b16 %v156
    %v322 = vunpack.c.h.b16 %v156
    %v323 = vunpack.c.l.b16 %v157
    %v324 = vunpack.c.h.b16 %v157
    %v325 = vunpack.c.l.b16 %v158
    %v326 = vunpack.c.h.b16 %v158
    %v327 = vunpack.c.l.b16 %v159
    %v328 = vunpack.c.h.b16 %v159
    %v329 = vunpack.c.l.b16 %v160
    %v330 = vunpack.c.h.b16 %v160
    %v331 = vunpack.c.l.b16 %v161
    %v332 = vunpack.c.h.b16 %v161
    %v333 = vunpack.c.l.b16 %v162
    %v334 = vunpack.c.h.b16 %v162
    %v335 = vunpack.c.l.b16 %v163
    %v336 = vunpack.c.h.b16 %v163
    %v337 = vunpack.c.l.b16 %v164
    %v338 = vunpack.c.h.b16 %v164
    %v339 = vunpack.c.l.b16 %v165
    %v340 = vunpack.c.h.b16 %v165
    %v341 = vunpack.c.l.b16 %v166
    %v342 = vunpack.c.h.b16 %v166
    %v343 = vunpack.c.l.b16 %v167
    %v344 = vunpack.c.h.b16 %v167
    %v345 = vunpack.c.l.b16 %v168
    %v346 = vunpack.c.h.b16 %v168
    %v347 = vunpack.c.l.b16 %v169
    %v348 = vunpack.c.h.b16 %v169
    %v349 = vunpack.c.l.b16 %v170
    %v350 = vunpack.c.h.b16 %v170
    %v351 = vunpack.c.l.b16 %v171
    %v352 = vunpack.c.h.b16 %v171
    %v353 = vunpack.c.l.b16 %v172
    %v354 = vunpack.c.h.b16 %v172
    %v355 = vunpack.c.l.b16 %v173
    %v356 = vunpack.c.h.b16 %v173
    %v357 = vunpack.c.l.b16 %v174
    %v358 = vunpack.c.h.b16 %v174
    %v359 = vunpack.c.l.b16 %v175
    %v360 = vunpack.c.h.b16 %v175
    %v361 = vunpack.c.l.b16 %v176
    %v362 = vunpack.c.h.b16 %v176
    %v363 = vunpack.c.l.b16 %v177
    %v364 = vunpack.c.h.b16 %v177
    %v365 = vunpack.c.l.b16 %v178
    %v366 = vunpack.c.h.b16 %v178
    %v367 = vunpack.c.l.b16 %v179
    %v368 = vunpack.c.h.b16 %v179
    %v369 = vunpack.c.l.b16 %v180
    %v370 = vunpack.c.h.b16 %v180
    %v371 = vunpack.c.l.b16 %v181
    %v372 = vunpack.c.h.b16 %v181
    %v373 = vunpack.c.l.b16 %v182
    %v374 = vunpack.c.h.b16 %v182
    %v375 = vunpack.c.l.b16 %v183
    %v376 = vunpack.c.h.b16 %v183
    %v377 = vunpack.c.l.b16 %v184
    %v378 = vunpack.c.h.b16 %v184
    %v379 = vunpack.c.l.b16 %v185
    %v380 = vunpack.c.h.b16 %v185
    %v381 = vunpack.c.l.b16 %v186
    %v382 = vunpack.c.h.b16 %v186
    %v383 = vunpack.c.l.b16 %v187
    %v384 = vunpack.c.h.b16 %v187
    %v385 = vunpack.c.l.b16 %v188
    %v386 = vunpack.c.h.b16 %v188
    %v387 = vunpack.c.l.b16 %v189
    %v388 = vunpack.c.h.b16 %v189
    %v389 = vunpack.c.l.b16 %v190
    %v390 = vunpack.c.h.b16 %v190
    %v391 = vunpack.c.l.b16 %v191
    %v392 = vunpack.c.h.b16 %v191
    %v393 = vunpack.c.l.b16 %v192
    %v394 = vunpack.c.h.b16 %v192
    %v395 = vunpack.c.l.b16 %v193
    %v396 = vunpack.c.h.b16 %v193
    %v397 = vunpack.c.l.b16 %v194
    %v398 = vunpack.c.h.b16 %v194
    %v399 = vunpack.c.l.b16 %v195
    %v400 = vunpack.c.h.b16 %v195
    %v401 = vunpack.c.l.b16 %v196
    %v402 = vunpack.c.h.b16 %v196
    %v403 = vunpack.c.l.b16 %v197
    %v404 = vunpack.c.h.b16 %v197
    %v405 = vunpack.c.l.b16 %v198
    %v406 = vunpack.c.h.b16 %v198
    %v407 = vunpack.c.l.b16 %v199
    %v408 = vunpack.c.h.b16 %v199
    %v409 = vunpack.c.l.b16 %v200
    %v410 = vunpack.c.h.b16 %v200
    %v411 = vunpack.c.l.b16 %v201
    %v412 = vunpack.c.h.b16 %v201
    %v413 = vunpack.c.l.b16 %v202
    %v414 = vunpack.c.h.b16 %v202
    %v415 = vunpack.c.l.b16 %v203
    %v416 = vunpack.c.h.b16 %v203
    %v417 = vunpack.c.l.b16 %v204
    %v418 = vunpack.c.h.b16 %v204
    %v419 = vunpack.c.l.b16 %v205
    %v420 = vunpack.c.h.b16 %v205
    %v421 = vunpack.c.l.b16 %v206
    %v422 = vunpack.c.h.b16 %v206
    %v423 = vunpack.c.l.b16 %v207
    %v424 = vunpack.c.h.b16 %v207
    %v425 = vunpack.c.l.b16 %v208
    %v426 = vunpack.c.h.b16 %v208
    %v427 = vunpack.c.l.b16 %v209
    %v428 = vunpack.c.h.b16 %v209
    %v429 = vunpack.c.l.b16 %v210
    %v430 = vunpack.c.h.b16 %v210
    %v431 = vunpack.c.l.b16 %v211
    %v432 = vunpack.c.h.b16 %v211
    %v433 = vunpack.c.l.b16 %v212
    %v434 = vunpack.c.h.b16 %v212
    %v435 = vunpack.c.l.b16 %v213
    %v436 = vunpack.c.h.b16 %v213
    %v437 = vunpack.c.l.b16 %v214
    %v438 = vunpack.c.h.b16 %v214
    %v439 = vunpack.c.l.b16 %v215
    %v440 = vunpack.c.h.b16 %v215
    %v441 = vunpack.c.l.b16 %v216
    %v442 = vunpack.c.h.b16 %v216
    %v443 = vunpack.c.l.b16 %v217
    %v444 = vunpack.c.h.b16 %v217
    %v445 = vunpack.c.l.b16 %v218
    %v446 = vunpack.c.h.b16 %v218
    %v447 = vunpack.c.l.b16 %v219
    %v448 = vunpack.c.h.b16 %v219
    %v449 = vunpack.c.l.b16 %v220
    %v450 = vunpack.c.h.b16 %v220
    %v451 = vunpack.c.l.b16 %v221
    %v452 = vunpack.c.h.b16 %v221
    %v453 = vunpack.c.l.b16 %v222
    %v454 = vunpack.c.h.b16 %v222
    %v455 = vunpack.c.l.b16 %v223
    %v456 = vunpack.c.h.b16 %v223
    %v457 = vunpack.c.l.b16 %v224
    %v458 = vunpack.c.h.b16 %v224
    %v459 = vunpack.c.l.b16 %v225
    %v460 = vunpack.c.h.b16 %v225
    %v461 = vunpack.c.l.b16 %v226
    %v462 = vunpack.c.h.b16 %v226
    %v463 = vunpack.c.l.b16 %v227
    %v464 = vunpack.c.h.b16 %v227
    %v465 = vunpack.c.l.b16 %v228
    %v466 = vunpack.c.h.b16 %v228
    %v467 = vunpack.c.l.b16 %v229
    %v468 = vunpack.c.h.b16 %v229
    %v469 = vunpack.c.l.b16 %v230
    %v470 = vunpack.c.h.b16 %v230
    %v471 = vpack.c.b16 %v321, %v311
    %v472 = vpack.c.b16 %v322, %v312
    %v473 = vpack.c.b16 %v323, %v313
    %v474 = vpack.c.b16 %v324, %v314
    %v475 = vpack.c.b16 %v325, %v315
    %v476 = vpack.c.b16 %v326, %v316
    %v477 = vpack.c.b16 %v327, %v317
    %v478 = vpack.c.b16 %v328, %v318
    %v479 = vpack.c.b16 %v329, %v319
    %v480 = vpack.c.b16 %v330, %v320
    %v481 = vpack.c.b16 %v341, %v331
    %v482 = vpack.c.b16 %v342, %v332
    %v483 = vpack.c.b16 %v343, %v333
    %v484 = vpack.c.b16 %v344, %v334
    %v485 = vpack.c.b16 %v345, %v335
    %v486 = vpack.c.b16 %v346, %v336
    %v487 = vpack.c.b16 %v347, %v337
    %v488 = vpack.c.b16 %v348, %v338
    %v489 = vpack.c.b16 %v349, %v339
    %v490 = vpack.c.b16 %v350, %v340
    %v491 = vpack.c.b16 %v361, %v351
    %v492 = vpack.c.b16 %v362, %v352
    %v493 = vpack.c.b16 %v363, %v353
    %v494 = vpack.c.b16 %v364, %v354
    %v495 = vpack.c.b16 %v365, %v355
    %v496 = vpack.c.b16 %v366, %v356
    %v497 = vpack.c.b16 %v367, %v357
    %v498 = vpack.c.b16 %v368, %v358
    %v499 = vpack.c.b16 %v369, %v359
    %v500 = vpack.c.b16 %v370, %v360
    %v501 = vpack.c.b16 %v381, %v371
    %v502 = vpack.c.b16 %v382, %v372
    %v503 = vpack.c.b16 %v383, %v373
    %v504 = vpack.c.b16 %v384, %v374
    %v505 = vpack.c.b16 %v385, %v375
    %v506 = vpack.c.b16 %v386, %v376
    %v507 = vpack.c.b16 %v387, %v377
    %v508 = vpack.c.b16 %v388, %v378
    %v509 = vpack.c.b16 %v389, %v379
    %v510 = vpack.c.b16 %v390, %v380
    %v511 = vpack.c.b16 %v401, %v391
    %v512 = vpack.c.b16 %v402, %v392
    %v513 = vpack.c.b16 %v403, %v393
    %v514 = vpack.c.b16 %v404, %v394
    %v515 = vpack.c.b16 %v405, %v395
    %v516 = vpack.c.b16 %v406, %v396
    %v517 = vpack.c.b16 %v407, %v397
    %v518 = vpack.c.b16 %v408, %v398
    %v519 = vpack.c.b16 %v409, %v399
    %v520 = vpack.c.b16 %v410, %v400
    %v521 = vpack.c.b16 %v421, %v411
    %v522 = vpack.c.b16 %v422, %v412
    %v523 = vpack.c.b16 %v423, %v413
    %v524 = vpack.c.b16 %v424, %v414
    %v525 = vpack.c.b16 %v425, %v415
    %v526 = vpack.c.b16 %v426, %v416
    %v527 = vpack.c.b16 %v427, %v417
    %v528 = vpack.c.b16 %v428, %v418
    %v529 = vpack.c.b16 %v429, %v419
    %v530 = vpack.c.b16 %v430, %v420
    %v531 = vpack.c.b16 %v441, %v431
    %v532 = vpack.c.b16 %v442, %v432
    %v533 = vpack.c.b16 %v443, %v433
    %v534 = vpack.c.b16 %v444, %v434
    %v535 = vpack.c.b16 %v445, %v435
    %v536 = vpack.c.b16 %v446, %v436
    %v537 = vpack.c.b16 %v447, %v437
    %v538 = vpack.c.b16 %v448, %v438
    %v539 = vpack.c.b16 %v449, %v439
    %v540 = vpack.c.b16 %v450, %v440
    %v541 = vpack.c.b16 %v461, %v451
    %v542 = vpack.c.b16 %v462, %v452
    %v543 = vpack.c.b16 %v463, %v453
    %v544 = vpack.c.b16 %v464, %v454
    %v545 = vpack.c.b16 %v465, %v455
    %v546 = vpack.c.b16 %v466, %v456
    %v547 = vpack.c.b16 %v467, %v457
    %v548 = vpack.c.b16 %v468, %v458
    %v549 = vpack.c.b16 %v469, %v459
    %v550 = vpack.c.b16 %v470, %v460
    %631 = vmatprep.subr.bf16.mxu0 %v472
    %632 = vmatpush1.bf16.msra.mxu0 %v471
    %633 = vmatprep.subr.bf16.mxu0 %v482
    %634 = vmatpush1.bf16.msra.mxu0 %v481
    %635 = vmatprep.subr.bf16.mxu0 %v492
    %636 = vmatpush1.bf16.msra.mxu0 %v491
    %637 = vmatprep.subr.bf16.mxu0 %v502
    %638 = vmatpush1.bf16.msra.mxu0 %v501
    %639 = vmatprep.subr.bf16.mxu0 %v512
    %640 = vmatpush1.bf16.msra.mxu0 %v511
    %641 = vmatprep.subr.bf16.mxu0 %v522
    %642 = vmatpush1.bf16.msra.mxu0 %v521
    %643 = vmatprep.subr.bf16.mxu0 %v532
    %644 = vmatpush1.bf16.msra.mxu0 %v531
    %645 = vmatprep.subr.bf16.mxu0 %v542
    %646 = vmatpush1.bf16.msra.mxu0 %v541
    %647 = vmatprep.subr.bf16.mxu0 0
    %648 = vmatpush1.bf16.msra.mxu0 0
    %649 = vmatprep.subr.bf16.mxu0 0
    %650 = vmatpush1.bf16.msra.mxu0 0
    %651 = vmatprep.subr.bf16.mxu0 0
    %652 = vmatpush1.bf16.msra.mxu0 0
    %653 = vmatprep.subr.bf16.mxu0 0
    %654 = vmatpush1.bf16.msra.mxu0 0
    %655 = vmatprep.subr.bf16.mxu0 0
    %656 = vmatpush1.bf16.msra.mxu0 0
    %657 = vmatprep.subr.bf16.mxu0 0
    %658 = vmatpush1.bf16.msra.mxu0 0
    %659 = vmatprep.subr.bf16.mxu0 0
    %660 = vmatpush1.bf16.msra.mxu0 0
    %661 = vmatprep.subr.bf16.mxu0 0
    %662 = vmatpush1.bf16.msra.mxu0 0
    %663 = vmatprep.mubr.bf16.mxu0 0
    %664 = vmatmul.mubr.bf16.gmra.mrb[0].mxu0 %v146
    %v665 = vpop.f32.mrb[0].mxu0
    %v666 = vadd.f32 0.0, %v665
    %v667 = vpop.f32.mrb[0].mxu0
    %v668 = vadd.f32 0.0, %v667
    %v669 = vpop.f32.mrb[0].mxu0
    %v670 = vpop.f32.mrb[0].mxu0
    %671 = vdwg.mxu0
    %672 = vmatprep.subr.bf16.mxu0 %v474
    %673 = vmatpush1.bf16.msra.mxu0 %v473
    %674 = vmatprep.subr.bf16.mxu0 %v484
    %675 = vmatpush1.bf16.msra.mxu0 %v483
    %676 = vmatprep.subr.bf16.mxu0 %v494
    %677 = vmatpush1.bf16.msra.mxu0 %v493
    %678 = vmatprep.subr.bf16.mxu0 %v504
    %679 = vmatpush1.bf16.msra.mxu0 %v503
    %680 = vmatprep.subr.bf16.mxu0 %v514
    %681 = vmatpush1.bf16.msra.mxu0 %v513
    %682 = vmatprep.subr.bf16.mxu0 %v524
    %683 = vmatpush1.bf16.msra.mxu0 %v523
    %684 = vmatprep.subr.bf16.mxu0 %v534
    %685 = vmatpush1.bf16.msra.mxu0 %v533
    %686 = vmatprep.subr.bf16.mxu0 %v544
    %687 = vmatpush1.bf16.msra.mxu0 %v543
    %688 = vmatprep.subr.bf16.mxu0 0
    %689 = vmatpush1.bf16.msra.mxu0 0
    %690 = vmatprep.subr.bf16.mxu0 0
    %691 = vmatpush1.bf16.msra.mxu0 0
    %692 = vmatprep.subr.bf16.mxu0 0
    %693 = vmatpush1.bf16.msra.mxu0 0
    %694 = vmatprep.subr.bf16.mxu0 0
    %695 = vmatpush1.bf16.msra.mxu0 0
    %696 = vmatprep.subr.bf16.mxu0 0
    %697 = vmatpush1.bf16.msra.mxu0 0
    %698 = vmatprep.subr.bf16.mxu0 0
    %699 = vmatpush1.bf16.msra.mxu0 0
    %700 = vmatprep.subr.bf16.mxu0 0
    %701 = vmatpush1.bf16.msra.mxu0 0
    %702 = vmatprep.subr.bf16.mxu0 0
    %703 = vmatpush1.bf16.msra.mxu0 0
    %704 = vmatprep.mubr.bf16.mxu0 0
    %705 = vmatmul.mubr.bf16.gmra.mrb[0].mxu0 %v146
    %v706 = vpop.f32.mrb[0].mxu0
    %v707 = vadd.f32 0.0, %v706
    %v708 = vpop.f32.mrb[0].mxu0
    %v709 = vadd.f32 0.0, %v708
    %v710 = vpop.f32.mrb[0].mxu0
    %v711 = vpop.f32.mrb[0].mxu0
    %712 = vdwg.mxu0
    %713 = vmatprep.subr.bf16.mxu0 %v476
    %714 = vmatpush1.bf16.msra.mxu0 %v475
    %715 = vmatprep.subr.bf16.mxu0 %v486
    %716 = vmatpush1.bf16.msra.mxu0 %v485
    %717 = vmatprep.subr.bf16.mxu0 %v496
    %718 = vmatpush1.bf16.msra.mxu0 %v495
    %719 = vmatprep.subr.bf16.mxu0 %v506
    %720 = vmatpush1.bf16.msra.mxu0 %v505
    %721 = vmatprep.subr.bf16.mxu0 %v516
    %722 = vmatpush1.bf16.msra.mxu0 %v515
    %723 = vmatprep.subr.bf16.mxu0 %v526
    %724 = vmatpush1.bf16.msra.mxu0 %v525
    %725 = vmatprep.subr.bf16.mxu0 %v536
    %726 = vmatpush1.bf16.msra.mxu0 %v535
    %727 = vmatprep.subr.bf16.mxu0 %v546
    %728 = vmatpush1.bf16.msra.mxu0 %v545
    %729 = vmatprep.subr.bf16.mxu0 0
    %730 = vmatpush1.bf16.msra.mxu0 0
    %731 = vmatprep.subr.bf16.mxu0 0
    %732 = vmatpush1.bf16.msra.mxu0 0
    %733 = vmatprep.subr.bf16.mxu0 0
    %734 = vmatpush1.bf16.msra.mxu0 0
    %735 = vmatprep.subr.bf16.mxu0 0
    %736 = vmatpush1.bf16.msra.mxu0 0
    %737 = vmatprep.subr.bf16.mxu0 0
    %738 = vmatpush1.bf16.msra.mxu0 0
    %739 = vmatprep.subr.bf16.mxu0 0
    %740 = vmatpush1.bf16.msra.mxu0 0
    %741 = vmatprep.subr.bf16.mxu0 0
    %742 = vmatpush1.bf16.msra.mxu0 0
    %743 = vmatprep.subr.bf16.mxu0 0
    %744 = vmatpush1.bf16.msra.mxu0 0
    %745 = vmatprep.mubr.bf16.mxu0 0
    %746 = vmatmul.mubr.bf16.gmra.mrb[0].mxu0 %v146
    %v747 = vpop.f32.mrb[0].mxu0
    %v748 = vadd.f32 0.0, %v747
    %v749 = vpop.f32.mrb[0].mxu0
    %v750 = vadd.f32 0.0, %v749
    %v751 = vpop.f32.mrb[0].mxu0
    %v752 = vpop.f32.mrb[0].mxu0
    %753 = vdwg.mxu0
    %754 = vmatprep.subr.bf16.mxu0 %v478
    %755 = vmatpush1.bf16.msra.mxu0 %v477
    %756 = vmatprep.subr.bf16.mxu0 %v488
    %757 = vmatpush1.bf16.msra.mxu0 %v487
    %758 = vmatprep.subr.bf16.mxu0 %v498
    %759 = vmatpush1.bf16.msra.mxu0 %v497
    %760 = vmatprep.subr.bf16.mxu0 %v508
    %761 = vmatpush1.bf16.msra.mxu0 %v507
    %762 = vmatprep.subr.bf16.mxu0 %v518
    %763 = vmatpush1.bf16.msra.mxu0 %v517
    %764 = vmatprep.subr.bf16.mxu0 %v528
    %765 = vmatpush1.bf16.msra.mxu0 %v527
    %766 = vmatprep.subr.bf16.mxu0 %v538
    %767 = vmatpush1.bf16.msra.mxu0 %v537
    %768 = vmatprep.subr.bf16.mxu0 %v548
    %769 = vmatpush1.bf16.msra.mxu0 %v547
    %770 = vmatprep.subr.bf16.mxu0 0
    %771 = vmatpush1.bf16.msra.mxu0 0
    %772 = vmatprep.subr.bf16.mxu0 0
    %773 = vmatpush1.bf16.msra.mxu0 0
    %774 = vmatprep.subr.bf16.mxu0 0
    %775 = vmatpush1.bf16.msra.mxu0 0
    %776 = vmatprep.subr.bf16.mxu0 0
    %777 = vmatpush1.bf16.msra.mxu0 0
    %778 = vmatprep.subr.bf16.mxu0 0
    %779 = vmatpush1.bf16.msra.mxu0 0
    %780 = vmatprep.subr.bf16.mxu0 0
    %781 = vmatpush1.bf16.msra.mxu0 0
    %782 = vmatprep.subr.bf16.mxu0 0
    %783 = vmatpush1.bf16.msra.mxu0 0
    %784 = vmatprep.subr.bf16.mxu0 0
    %785 = vmatpush1.bf16.msra.mxu0 0
    %786 = vmatprep.mubr.bf16.mxu0 0
    %787 = vmatmul.mubr.bf16.gmra.mrb[0].mxu0 %v146
    %v788 = vpop.f32.mrb[0].mxu0
    %v789 = vadd.f32 0.0, %v788
    %v790 = vpop.f32.mrb[0].mxu0
    %v791 = vadd.f32 0.0, %v790
    %v792 = vpop.f32.mrb[0].mxu0
    %v793 = vpop.f32.mrb[0].mxu0
    %794 = vdwg.mxu0
    %795 = vmatprep.subr.bf16.mxu0 %v480
    %796 = vmatpush1.bf16.msra.mxu0 %v479
    %797 = vmatprep.subr.bf16.mxu0 %v490
    %798 = vmatpush1.bf16.msra.mxu0 %v489
    %799 = vmatprep.subr.bf16.mxu0 %v500
    %800 = vmatpush1.bf16.msra.mxu0 %v499
    %801 = vmatprep.subr.bf16.mxu0 %v510
    %802 = vmatpush1.bf16.msra.mxu0 %v509
    %803 = vmatprep.subr.bf16.mxu0 %v520
    %804 = vmatpush1.bf16.msra.mxu0 %v519
    %805 = vmatprep.subr.bf16.mxu0 %v530
    %806 = vmatpush1.bf16.msra.mxu0 %v529
    %807 = vmatprep.subr.bf16.mxu0 %v540
    %808 = vmatpush1.bf16.msra.mxu0 %v539
    %809 = vmatprep.subr.bf16.mxu0 %v550
    %810 = vmatpush1.bf16.msra.mxu0 %v549
    %811 = vmatprep.subr.bf16.mxu0 0
    %812 = vmatpush1.bf16.msra.mxu0 0
    %813 = vmatprep.subr.bf16.mxu0 0
    %814 = vmatpush1.bf16.msra.mxu0 0
    %815 = vmatprep.subr.bf16.mxu0 0
    %816 = vmatpush1.bf16.msra.mxu0 0
    %817 = vmatprep.subr.bf16.mxu0 0
    %818 = vmatpush1.bf16.msra.mxu0 0
    %819 = vmatprep.subr.bf16.mxu0 0
    %820 = vmatpush1.bf16.msra.mxu0 0
    %821 = vmatprep.subr.bf16.mxu0 0
    %822 = vmatpush1.bf16.msra.mxu0 0
    %823 = vmatprep.subr.bf16.mxu0 0
    %824 = vmatpush1.bf16.msra.mxu0 0
    %825 = vmatprep.subr.bf16.mxu0 0
    %826 = vmatpush1.bf16.msra.mxu0 0
    %827 = vmatprep.mubr.bf16.mxu0 0
    %828 = vmatmul.mubr.bf16.gmra.mrb[0].mxu0 %v146
    %v829 = vpop.f32.mrb[0].mxu0
    %v830 = vadd.f32 0.0, %v829
    %v831 = vpop.f32.mrb[0].mxu0
    %v832 = vadd.f32 0.0, %v831
    %v833 = vpop.f32.mrb[0].mxu0
    %v834 = vpop.f32.mrb[0].mxu0
    %835 = vdwg.mxu0
    %v836 = vld [vmem:[#allocation8] sm:$0xff]
    %v837 = vld [vmem:[#allocation8 + $0x8] sm:$0xff]
    %v838 = vld [vmem:[#allocation8 + $0x10] sm:$0xff]
    %v839 = vld [vmem:[#allocation8 + $0x18] sm:$0xff]
    %v840 = vld [vmem:[#allocation8 + $0x20] sm:$0xff]
    %v841 = vld [vmem:[#allocation8 + $0x28] sm:$0xff]
    %v842 = vld [vmem:[#allocation8 + $0x30] sm:$0xff]
    %v843 = vld [vmem:[#allocation8 + $0x38] sm:$0xff]
    %v844 = vld [vmem:[#allocation8 + $0x40] sm:$0xff]
    %v845 = vld [vmem:[#allocation8 + $0x48] sm:$0xff]
    %v846 = vld [vmem:[#allocation8 + $0x50] sm:$0xff]
    %v847 = vld [vmem:[#allocation8 + $0x58] sm:$0xff]
    %v848 = vld [vmem:[#allocation8 + $0x60] sm:$0xff]
    %v849 = vld [vmem:[#allocation8 + $0x68] sm:$0xff]
    %v850 = vld [vmem:[#allocation8 + $0x70] sm:$0xff]
    %v851 = vld [vmem:[#allocation8 + $0x78] sm:$0xff]
    %v852 = vld [vmem:[#allocation8 + $0x80] sm:$0xff]
    %v853 = vld [vmem:[#allocation8 + $0x88] sm:$0xff]
    %v854 = vld [vmem:[#allocation8 + $0x90] sm:$0xff]
    %v855 = vld [vmem:[#allocation8 + $0x98] sm:$0xff]
    %v856 = vld [vmem:[#allocation8 + $0xa0] sm:$0xff]
    %v857 = vld [vmem:[#allocation8 + $0xa8] sm:$0xff]
    %v858 = vld [vmem:[#allocation8 + $0xb0] sm:$0xff]
    %v859 = vld [vmem:[#allocation8 + $0xb8] sm:$0xff]
    %v860 = vld [vmem:[#allocation8 + $0xc0] sm:$0xff]
    %v861 = vld [vmem:[#allocation8 + $0xc8] sm:$0xff]
    %v862 = vld [vmem:[#allocation8 + $0xd0] sm:$0xff]
    %v863 = vld [vmem:[#allocation8 + $0xd8] sm:$0xff]
    %v864 = vld [vmem:[#allocation8 + $0xe0] sm:$0xff]
    %v865 = vld [vmem:[#allocation8 + $0xe8] sm:$0xff]
    %v866 = vld [vmem:[#allocation8 + $0xf0] sm:$0xff]
    %v867 = vld [vmem:[#allocation8 + $0xf8] sm:$0xff]
    %v868 = vld [vmem:[#allocation8 + $0x100] sm:$0xff]
    %v869 = vld [vmem:[#allocation8 + $0x108] sm:$0xff]
    %v870 = vld [vmem:[#allocation8 + $0x110] sm:$0xff]
    %v871 = vld [vmem:[#allocation8 + $0x118] sm:$0xff]
    %v872 = vld [vmem:[#allocation8 + $0x120] sm:$0xff]
    %v873 = vld [vmem:[#allocation8 + $0x128] sm:$0xff]
    %v874 = vld [vmem:[#allocation8 + $0x130] sm:$0xff]
    %v875 = vld [vmem:[#allocation8 + $0x138] sm:$0xff]
    %v876 = vld [vmem:[#allocation8 + $0x140] sm:$0xff]
    %v877 = vld [vmem:[#allocation8 + $0x148] sm:$0xff]
    %v878 = vld [vmem:[#allocation8 + $0x150] sm:$0xff]
    %v879 = vld [vmem:[#allocation8 + $0x158] sm:$0xff]
    %v880 = vld [vmem:[#allocation8 + $0x160] sm:$0xff]
    %v881 = vld [vmem:[#allocation8 + $0x168] sm:$0xff]
    %v882 = vld [vmem:[#allocation8 + $0x170] sm:$0xff]
    %v883 = vld [vmem:[#allocation8 + $0x178] sm:$0xff]
    %v884 = vld [vmem:[#allocation8 + $0x180] sm:$0xff]
    %v885 = vld [vmem:[#allocation8 + $0x188] sm:$0xff]
    %v886 = vld [vmem:[#allocation8 + $0x190] sm:$0xff]
    %v887 = vld [vmem:[#allocation8 + $0x198] sm:$0xff]
    %v888 = vld [vmem:[#allocation8 + $0x1a0] sm:$0xff]
    %v889 = vld [vmem:[#allocation8 + $0x1a8] sm:$0xff]
    %v890 = vld [vmem:[#allocation8 + $0x1b0] sm:$0xff]
    %v891 = vld [vmem:[#allocation8 + $0x1b8] sm:$0xff]
    %v892 = vld [vmem:[#allocation8 + $0x1c0] sm:$0xff]
    %v893 = vld [vmem:[#allocation8 + $0x1c8] sm:$0xff]
    %v894 = vld [vmem:[#allocation8 + $0x1d0] sm:$0xff]
    %v895 = vld [vmem:[#allocation8 + $0x1d8] sm:$0xff]
    %v896 = vld [vmem:[#allocation8 + $0x1e0] sm:$0xff]
    %v897 = vld [vmem:[#allocation8 + $0x1e8] sm:$0xff]
    %v898 = vld [vmem:[#allocation8 + $0x1f0] sm:$0xff]
    %v899 = vld [vmem:[#allocation8 + $0x1f8] sm:$0xff]
    %v964 = vunpack.c.l.b16 %v836
    %v965 = vunpack.c.h.b16 %v836
    %v966 = vunpack.c.l.b16 %v837
    %v967 = vunpack.c.h.b16 %v837
    %v968 = vunpack.c.l.b16 %v838
    %v969 = vunpack.c.h.b16 %v838
    %v970 = vunpack.c.l.b16 %v839
    %v971 = vunpack.c.h.b16 %v839
    %v972 = vunpack.c.l.b16 %v840
    %v973 = vunpack.c.h.b16 %v840
    %v974 = vunpack.c.l.b16 %v841
    %v975 = vunpack.c.h.b16 %v841
    %v976 = vunpack.c.l.b16 %v842
    %v977 = vunpack.c.h.b16 %v842
    %v978 = vunpack.c.l.b16 %v843
    %v979 = vunpack.c.h.b16 %v843
    %v980 = vunpack.c.l.b16 %v844
    %v981 = vunpack.c.h.b16 %v844
    %v982 = vunpack.c.l.b16 %v845
    %v983 = vunpack.c.h.b16 %v845
    %v984 = vunpack.c.l.b16 %v846
    %v985 = vunpack.c.h.b16 %v846
    %v986 = vunpack.c.l.b16 %v847
    %v987 = vunpack.c.h.b16 %v847
    %v988 = vunpack.c.l.b16 %v848
    %v989 = vunpack.c.h.b16 %v848
    %v990 = vunpack.c.l.b16 %v849
    %v991 = vunpack.c.h.b16 %v849
    %v992 = vunpack.c.l.b16 %v850
    %v993 = vunpack.c.h.b16 %v850
    %v994 = vunpack.c.l.b16 %v851
    %v995 = vunpack.c.h.b16 %v851
    %v996 = vunpack.c.l.b16 %v852
    %v997 = vunpack.c.h.b16 %v852
    %v998 = vunpack.c.l.b16 %v853
    %v999 = vunpack.c.h.b16 %v853
    %v1000 = vunpack.c.l.b16 %v854
    %v1001 = vunpack.c.h.b16 %v854
    %v1002 = vunpack.c.l.b16 %v855
    %v1003 = vunpack.c.h.b16 %v855
    %v1004 = vunpack.c.l.b16 %v856
    %v1005 = vunpack.c.h.b16 %v856
    %v1006 = vunpack.c.l.b16 %v857
    %v1007 = vunpack.c.h.b16 %v857
    %v1008 = vunpack.c.l.b16 %v858
    %v1009 = vunpack.c.h.b16 %v858
    %v1010 = vunpack.c.l.b16 %v859
    %v1011 = vunpack.c.h.b16 %v859
    %v1012 = vunpack.c.l.b16 %v860
    %v1013 = vunpack.c.h.b16 %v860
    %v1014 = vunpack.c.l.b16 %v861
    %v1015 = vunpack.c.h.b16 %v861
    %v1016 = vunpack.c.l.b16 %v862
    %v1017 = vunpack.c.h.b16 %v862
    %v1018 = vunpack.c.l.b16 %v863
    %v1019 = vunpack.c.h.b16 %v863
    %v1020 = vunpack.c.l.b16 %v864
    %v1021 = vunpack.c.h.b16 %v864
    %v1022 = vunpack.c.l.b16 %v865
    %v1023 = vunpack.c.h.b16 %v865
    %v1024 = vunpack.c.l.b16 %v866
    %v1025 = vunpack.c.h.b16 %v866
    %v1026 = vunpack.c.l.b16 %v867
    %v1027 = vunpack.c.h.b16 %v867
    %v1028 = vunpack.c.l.b16 %v868
    %v1029 = vunpack.c.h.b16 %v868
    %v1030 = vunpack.c.l.b16 %v869
    %v1031 = vunpack.c.h.b16 %v869
    %v1032 = vunpack.c.l.b16 %v870
    %v1033 = vunpack.c.h.b16 %v870
    %v1034 = vunpack.c.l.b16 %v871
    %v1035 = vunpack.c.h.b16 %v871
    %v1036 = vunpack.c.l.b16 %v872
    %v1037 = vunpack.c.h.b16 %v872
    %v1038 = vunpack.c.l.b16 %v873
    %v1039 = vunpack.c.h.b16 %v873
    %v1040 = vunpack.c.l.b16 %v874
    %v1041 = vunpack.c.h.b16 %v874
    %v1042 = vunpack.c.l.b16 %v875
    %v1043 = vunpack.c.h.b16 %v875
    %v1044 = vunpack.c.l.b16 %v876
    %v1045 = vunpack.c.h.b16 %v876
    %v1046 = vunpack.c.l.b16 %v877
    %v1047 = vunpack.c.h.b16 %v877
    %v1048 = vunpack.c.l.b16 %v878
    %v1049 = vunpack.c.h.b16 %v878
    %v1050 = vunpack.c.l.b16 %v879
    %v1051 = vunpack.c.h.b16 %v879
    %v1052 = vunpack.c.l.b16 %v880
    %v1053 = vunpack.c.h.b16 %v880
    %v1054 = vunpack.c.l.b16 %v881
    %v1055 = vunpack.c.h.b16 %v881
    %v1056 = vunpack.c.l.b16 %v882
    %v1057 = vunpack.c.h.b16 %v882
    %v1058 = vunpack.c.l.b16 %v883
    %v1059 = vunpack.c.h.b16 %v883
    %v1060 = vunpack.c.l.b16 %v884
    %v1061 = vunpack.c.h.b16 %v884
    %v1062 = vunpack.c.l.b16 %v885
    %v1063 = vunpack.c.h.b16 %v885
    %v1064 = vunpack.c.l.b16 %v886
    %v1065 = vunpack.c.h.b16 %v886
    %v1066 = vunpack.c.l.b16 %v887
    %v1067 = vunpack.c.h.b16 %v887
    %v1068 = vunpack.c.l.b16 %v888
    %v1069 = vunpack.c.h.b16 %v888
    %v1070 = vunpack.c.l.b16 %v889
    %v1071 = vunpack.c.h.b16 %v889
    %v1072 = vunpack.c.l.b16 %v890
    %v1073 = vunpack.c.h.b16 %v890
    %v1074 = vunpack.c.l.b16 %v891
    %v1075 = vunpack.c.h.b16 %v891
    %v1076 = vunpack.c.l.b16 %v892
    %v1077 = vunpack.c.h.b16 %v892
    %v1078 = vunpack.c.l.b16 %v893
    %v1079 = vunpack.c.h.b16 %v893
    %v1080 = vunpack.c.l.b16 %v894
    %v1081 = vunpack.c.h.b16 %v894
    %v1082 = vunpack.c.l.b16 %v895
    %v1083 = vunpack.c.h.b16 %v895
    %v1084 = vunpack.c.l.b16 %v896
    %v1085 = vunpack.c.h.b16 %v896
    %v1086 = vunpack.c.l.b16 %v897
    %v1087 = vunpack.c.h.b16 %v897
    %v1088 = vunpack.c.l.b16 %v898
    %v1089 = vunpack.c.h.b16 %v898
    %v1090 = vunpack.c.l.b16 %v899
    %v1091 = vunpack.c.h.b16 %v899
    %v1092 = vpack.c.b16 %v972, %v964
    %v1093 = vpack.c.b16 %v973, %v965
    %v1094 = vpack.c.b16 %v974, %v966
    %v1095 = vpack.c.b16 %v975, %v967
    %v1096 = vpack.c.b16 %v976, %v968
    %v1097 = vpack.c.b16 %v977, %v969
    %v1098 = vpack.c.b16 %v978, %v970
    %v1099 = vpack.c.b16 %v979, %v971
    %v1100 = vpack.c.b16 %v988, %v980
    %v1101 = vpack.c.b16 %v989, %v981
    %v1102 = vpack.c.b16 %v990, %v982
    %v1103 = vpack.c.b16 %v991, %v983
    %v1104 = vpack.c.b16 %v992, %v984
    %v1105 = vpack.c.b16 %v993, %v985
    %v1106 = vpack.c.b16 %v994, %v986
    %v1107 = vpack.c.b16 %v995, %v987
    %v1108 = vpack.c.b16 %v1004, %v996
    %v1109 = vpack.c.b16 %v1005, %v997
    %v1110 = vpack.c.b16 %v1006, %v998
    %v1111 = vpack.c.b16 %v1007, %v999
    %v1112 = vpack.c.b16 %v1008, %v1000
    %v1113 = vpack.c.b16 %v1009, %v1001
    %v1114 = vpack.c.b16 %v1010, %v1002
    %v1115 = vpack.c.b16 %v1011, %v1003
    %v1116 = vpack.c.b16 %v1020, %v1012
    %v1117 = vpack.c.b16 %v1021, %v1013
    %v1118 = vpack.c.b16 %v1022, %v1014
    %v1119 = vpack.c.b16 %v1023, %v1015
    %v1120 = vpack.c.b16 %v1024, %v1016
    %v1121 = vpack.c.b16 %v1025, %v1017
    %v1122 = vpack.c.b16 %v1026, %v1018
    %v1123 = vpack.c.b16 %v1027, %v1019
    %v1124 = vpack.c.b16 %v1036, %v1028
    %v1125 = vpack.c.b16 %v1037, %v1029
    %v1126 = vpack.c.b16 %v1038, %v1030
    %v1127 = vpack.c.b16 %v1039, %v1031
    %v1128 = vpack.c.b16 %v1040, %v1032
    %v1129 = vpack.c.b16 %v1041, %v1033
    %v1130 = vpack.c.b16 %v1042, %v1034
    %v1131 = vpack.c.b16 %v1043, %v1035
    %v1132 = vpack.c.b16 %v1052, %v1044
    %v1133 = vpack.c.b16 %v1053, %v1045
    %v1134 = vpack.c.b16 %v1054, %v1046
    %v1135 = vpack.c.b16 %v1055, %v1047
    %v1136 = vpack.c.b16 %v1056, %v1048
    %v1137 = vpack.c.b16 %v1057, %v1049
    %v1138 = vpack.c.b16 %v1058, %v1050
    %v1139 = vpack.c.b16 %v1059, %v1051
    %v1140 = vpack.c.b16 %v1068, %v1060
    %v1141 = vpack.c.b16 %v1069, %v1061
    %v1142 = vpack.c.b16 %v1070, %v1062
    %v1143 = vpack.c.b16 %v1071, %v1063
    %v1144 = vpack.c.b16 %v1072, %v1064
    %v1145 = vpack.c.b16 %v1073, %v1065
    %v1146 = vpack.c.b16 %v1074, %v1066
    %v1147 = vpack.c.b16 %v1075, %v1067
    %v1148 = vpack.c.b16 %v1084, %v1076
    %v1149 = vpack.c.b16 %v1085, %v1077
    %v1150 = vpack.c.b16 %v1086, %v1078
    %v1151 = vpack.c.b16 %v1087, %v1079
    %v1152 = vpack.c.b16 %v1088, %v1080
    %v1153 = vpack.c.b16 %v1089, %v1081
    %v1154 = vpack.c.b16 %v1090, %v1082
    %v1155 = vpack.c.b16 %v1091, %v1083
    %1220 = vmatprep.subr.bf16.mxu0 %v1093
    %1221 = vmatpush1.bf16.msra.mxu0 %v1092
    %1222 = vmatprep.subr.bf16.mxu0 %v1101
    %1223 = vmatpush1.bf16.msra.mxu0 %v1100
    %1224 = vmatprep.subr.bf16.mxu0 %v1109
    %1225 = vmatpush1.bf16.msra.mxu0 %v1108
    %1226 = vmatprep.subr.bf16.mxu0 %v1117
    %1227 = vmatpush1.bf16.msra.mxu0 %v1116
    %1228 = vmatprep.subr.bf16.mxu0 %v1125
    %1229 = vmatpush1.bf16.msra.mxu0 %v1124
    %1230 = vmatprep.subr.bf16.mxu0 %v1133
    %1231 = vmatpush1.bf16.msra.mxu0 %v1132
    %1232 = vmatprep.subr.bf16.mxu0 %v1141
    %1233 = vmatpush1.bf16.msra.mxu0 %v1140
    %1234 = vmatprep.subr.bf16.mxu0 %v1149
    %1235 = vmatpush1.bf16.msra.mxu0 %v1148
    %1236 = vmatprep.subr.bf16.mxu0 0
    %1237 = vmatpush1.bf16.msra.mxu0 0
    %1238 = vmatprep.subr.bf16.mxu0 0
    %1239 = vmatpush1.bf16.msra.mxu0 0
    %1240 = vmatprep.subr.bf16.mxu0 0
    %1241 = vmatpush1.bf16.msra.mxu0 0
    %1242 = vmatprep.subr.bf16.mxu0 0
    %1243 = vmatpush1.bf16.msra.mxu0 0
    %1244 = vmatprep.subr.bf16.mxu0 0
    %1245 = vmatpush1.bf16.msra.mxu0 0
    %1246 = vmatprep.subr.bf16.mxu0 0
    %1247 = vmatpush1.bf16.msra.mxu0 0
    %1248 = vmatprep.subr.bf16.mxu0 0
    %1249 = vmatpush1.bf16.msra.mxu0 0
    %1250 = vmatprep.subr.bf16.mxu0 0
    %1251 = vmatpush1.bf16.msra.mxu0 0
    %1252 = vmatprep.mubr.bf16.mxu0 0
    %1253 = vmatmul.mubr.bf16.gmra.mrb[0].mxu0 %v148
    %v1254 = vpop.f32.mrb[0].mxu0
    %v1255 = vadd.f32 0.0, %v1254
    %v1256 = vpop.f32.mrb[0].mxu0
    %v1257 = vadd.f32 0.0, %v1256
    %v1258 = vpop.f32.mrb[0].mxu0
    %v1259 = vpop.f32.mrb[0].mxu0
    %1260 = vdwg.mxu0
    %1261 = vmatprep.subr.bf16.mxu0 %v1095
    %1262 = vmatpush1.bf16.msra.mxu0 %v1094
    %1263 = vmatprep.subr.bf16.mxu0 %v1103
    %1264 = vmatpush1.bf16.msra.mxu0 %v1102
    %1265 = vmatprep.subr.bf16.mxu0 %v1111
    %1266 = vmatpush1.bf16.msra.mxu0 %v1110
    %1267 = vmatprep.subr.bf16.mxu0 %v1119
    %1268 = vmatpush1.bf16.msra.mxu0 %v1118
    %1269 = vmatprep.subr.bf16.mxu0 %v1127
    %1270 = vmatpush1.bf16.msra.mxu0 %v1126
    %1271 = vmatprep.subr.bf16.mxu0 %v1135
    %1272 = vmatpush1.bf16.msra.mxu0 %v1134
    %1273 = vmatprep.subr.bf16.mxu0 %v1143
    %1274 = vmatpush1.bf16.msra.mxu0 %v1142
    %1275 = vmatprep.subr.bf16.mxu0 %v1151
    %1276 = vmatpush1.bf16.msra.mxu0 %v1150
    %1277 = vmatprep.subr.bf16.mxu0 0
    %1278 = vmatpush1.bf16.msra.mxu0 0
    %1279 = vmatprep.subr.bf16.mxu0 0
    %1280 = vmatpush1.bf16.msra.mxu0 0
    %1281 = vmatprep.subr.bf16.mxu0 0
    %1282 = vmatpush1.bf16.msra.mxu0 0
    %1283 = vmatprep.subr.bf16.mxu0 0
    %1284 = vmatpush1.bf16.msra.mxu0 0
    %1285 = vmatprep.subr.bf16.mxu0 0
    %1286 = vmatpush1.bf16.msra.mxu0 0
    %1287 = vmatprep.subr.bf16.mxu0 0
    %1288 = vmatpush1.bf16.msra.mxu0 0
    %1289 = vmatprep.subr.bf16.mxu0 0
    %1290 = vmatpush1.bf16.msra.mxu0 0
    %1291 = vmatprep.subr.bf16.mxu0 0
    %1292 = vmatpush1.bf16.msra.mxu0 0
    %1293 = vmatprep.mubr.bf16.mxu0 0
    %1294 = vmatmul.mubr.bf16.gmra.mrb[0].mxu0 %v148
    %v1295 = vpop.f32.mrb[0].mxu0
    %v1296 = vadd.f32 0.0, %v1295
    %v1297 = vpop.f32.mrb[0].mxu0
    %v1298 = vadd.f32 0.0, %v1297
    %v1299 = vpop.f32.mrb[0].mxu0
    %v1300 = vpop.f32.mrb[0].mxu0
    %1301 = vdwg.mxu0
    %1302 = vmatprep.subr.bf16.mxu0 %v1097
    %1303 = vmatpush1.bf16.msra.mxu0 %v1096
    %1304 = vmatprep.subr.bf16.mxu0 %v1105
    %1305 = vmatpush1.bf16.msra.mxu0 %v1104
    %1306 = vmatprep.subr.bf16.mxu0 %v1113
    %1307 = vmatpush1.bf16.msra.mxu0 %v1112
    %1308 = vmatprep.subr.bf16.mxu0 %v1121
    %1309 = vmatpush1.bf16.msra.mxu0 %v1120
    %1310 = vmatprep.subr.bf16.mxu0 %v1129
    %1311 = vmatpush1.bf16.msra.mxu0 %v1128
    %1312 = vmatprep.subr.bf16.mxu0 %v1137
    %1313 = vmatpush1.bf16.msra.mxu0 %v1136
    %1314 = vmatprep.subr.bf16.mxu0 %v1145
    %1315 = vmatpush1.bf16.msra.mxu0 %v1144
    %1316 = vmatprep.subr.bf16.mxu0 %v1153
    %1317 = vmatpush1.bf16.msra.mxu0 %v1152
    %1318 = vmatprep.subr.bf16.mxu0 0
    %1319 = vmatpush1.bf16.msra.mxu0 0
    %1320 = vmatprep.subr.bf16.mxu0 0
    %1321 = vmatpush1.bf16.msra.mxu0 0
    %1322 = vmatprep.subr.bf16.mxu0 0
    %1323 = vmatpush1.bf16.msra.mxu0 0
    %1324 = vmatprep.subr.bf16.mxu0 0
    %1325 = vmatpush1.bf16.msra.mxu0 0
    %1326 = vmatprep.subr.bf16.mxu0 0
    %1327 = vmatpush1.bf16.msra.mxu0 0
    %1328 = vmatprep.subr.bf16.mxu0 0
    %1329 = vmatpush1.bf16.msra.mxu0 0
    %1330 = vmatprep.subr.bf16.mxu0 0
    %1331 = vmatpush1.bf16.msra.mxu0 0
    %1332 = vmatprep.subr.bf16.mxu0 0
    %1333 = vmatpush1.bf16.msra.mxu0 0
    %1334 = vmatprep.mubr.bf16.mxu0 0
    %1335 = vmatmul.mubr.bf16.gmra.mrb[0].mxu0 %v148
    %v1336 = vpop.f32.mrb[0].mxu0
    %v1337 = vadd.f32 0.0, %v1336
    %v1338 = vpop.f32.mrb[0].mxu0
    %v1339 = vadd.f32 0.0, %v1338
    %v1340 = vpop.f32.mrb[0].mxu0
    %v1341 = vpop.f32.mrb[0].mxu0
    %1342 = vdwg.mxu0
    %1343 = vmatprep.subr.bf16.mxu0 %v1099
    %1344 = vmatpush1.bf16.msra.mxu0 %v1098
    %1345 = vmatprep.subr.bf16.mxu0 %v1107
    %1346 = vmatpush1.bf16.msra.mxu0 %v1106
    %1347 = vmatprep.subr.bf16.mxu0 %v1115
    %1348 = vmatpush1.bf16.msra.mxu0 %v1114
    %1349 = vmatprep.subr.bf16.mxu0 %v1123
    %1350 = vmatpush1.bf16.msra.mxu0 %v1122
    %1351 = vmatprep.subr.bf16.mxu0 %v1131
    %1352 = vmatpush1.bf16.msra.mxu0 %v1130
    %1353 = vmatprep.subr.bf16.mxu0 %v1139
    %1354 = vmatpush1.bf16.msra.mxu0 %v1138
    %1355 = vmatprep.subr.bf16.mxu0 %v1147
    %1356 = vmatpush1.bf16.msra.mxu0 %v1146
    %1357 = vmatprep.subr.bf16.mxu0 %v1155
    %1358 = vmatpush1.bf16.msra.mxu0 %v1154
    %1359 = vmatprep.subr.bf16.mxu0 0
    %1360 = vmatpush1.bf16.msra.mxu0 0
    %1361 = vmatprep.subr.bf16.mxu0 0
    %1362 = vmatpush1.bf16.msra.mxu0 0
    %1363 = vmatprep.subr.bf16.mxu0 0
    %1364 = vmatpush1.bf16.msra.mxu0 0
    %1365 = vmatprep.subr.bf16.mxu0 0
    %1366 = vmatpush1.bf16.msra.mxu0 0
    %1367 = vmatprep.subr.bf16.mxu0 0
    %1368 = vmatpush1.bf16.msra.mxu0 0
    %1369 = vmatprep.subr.bf16.mxu0 0
    %1370 = vmatpush1.bf16.msra.mxu0 0
    %1371 = vmatprep.subr.bf16.mxu0 0
    %1372 = vmatpush1.bf16.msra.mxu0 0
    %1373 = vmatprep.subr.bf16.mxu0 0
    %1374 = vmatpush1.bf16.msra.mxu0 0
    %1375 = vmatprep.mubr.bf16.mxu0 0
    %1376 = vmatmul.mubr.bf16.gmra.mrb[0].mxu0 %v148
    %v1377 = vpop.f32.mrb[0].mxu0
    %v1378 = vadd.f32 0.0, %v1377
    %v1379 = vpop.f32.mrb[0].mxu0
    %v1380 = vadd.f32 0.0, %v1379
    %v1381 = vpop.f32.mrb[0].mxu0
    %v1382 = vpop.f32.mrb[0].mxu0
    %1383 = vdwg.mxu0
    %v1384 = vadd.f32 %v666, %v1255
    %v1385 = vadd.f32 %v668, %v1257
    %v1386 = vadd.f32 %v707, %v1296
    %v1387 = vadd.f32 %v709, %v1298
    %v1388 = vadd.f32 %v748, %v1337
    %v1389 = vadd.f32 %v750, %v1339
    %v1390 = vadd.f32 %v789, %v1378
    %v1391 = vadd.f32 %v791, %v1380
    %v1392 = vld [vmem:[#allocation8 + $0x200] sm:$0xff]
    %v1393 = vld [vmem:[#allocation8 + $0x208] sm:$0xff]
    %v1394 = vld [vmem:[#allocation8 + $0x210] sm:$0xff]
    %v1395 = vld [vmem:[#allocation8 + $0x218] sm:$0xff]
    %v1396 = vld [vmem:[#allocation8 + $0x220] sm:$0xff]
    %v1397 = vld [vmem:[#allocation8 + $0x228] sm:$0xff]
    %v1398 = vld [vmem:[#allocation8 + $0x230] sm:$0xff]
    %v1399 = vld [vmem:[#allocation8 + $0x238] sm:$0xff]
    %v1400 = vld [vmem:[#allocation8 + $0x240] sm:$0xff]
    %v1401 = vld [vmem:[#allocation8 + $0x248] sm:$0xff]
    %v1402 = vld [vmem:[#allocation8 + $0x250] sm:$0xff]
    %v1403 = vld [vmem:[#allocation8 + $0x258] sm:$0xff]
    %v1404 = vld [vmem:[#allocation8 + $0x260] sm:$0xff]
    %v1405 = vld [vmem:[#allocation8 + $0x268] sm:$0xff]
    %v1406 = vld [vmem:[#allocation8 + $0x270] sm:$0xff]
    %v1407 = vld [vmem:[#allocation8 + $0x278] sm:$0xff]
    %v1408 = vld [vmem:[#allocation8 + $0x280] sm:$0xff]
    %v1409 = vld [vmem:[#allocation8 + $0x288] sm:$0xff]
    %v1410 = vld [vmem:[#allocation8 + $0x290] sm:$0xff]
    %v1411 = vld [vmem:[#allocation8 + $0x298] sm:$0xff]
    %v1412 = vld [vmem:[#allocation8 + $0x2a0] sm:$0xff]
    %v1413 = vld [vmem:[#allocation8 + $0x2a8] sm:$0xff]
    %v1414 = vld [vmem:[#allocation8 + $0x2b0] sm:$0xff]
    %v1415 = vld [vmem:[#allocation8 + $0x2b8] sm:$0xff]
    %v1416 = vld [vmem:[#allocation8 + $0x2c0] sm:$0xff]
    %v1417 = vld [vmem:[#allocation8 + $0x2c8] sm:$0xff]
    %v1418 = vld [vmem:[#allocation8 + $0x2d0] sm:$0xff]
    %v1419 = vld [vmem:[#allocation8 + $0x2d8] sm:$0xff]
    %v1420 = vld [vmem:[#allocation8 + $0x2e0] sm:$0xff]
    %v1421 = vld [vmem:[#allocation8 + $0x2e8] sm:$0xff]
    %v1422 = vld [vmem:[#allocation8 + $0x2f0] sm:$0xff]
    %v1423 = vld [vmem:[#allocation8 + $0x2f8] sm:$0xff]
    %v1424 = vld [vmem:[#allocation8 + $0x300] sm:$0xff]
    %v1425 = vld [vmem:[#allocation8 + $0x308] sm:$0xff]
    %v1426 = vld [vmem:[#allocation8 + $0x310] sm:$0xff]
    %v1427 = vld [vmem:[#allocation8 + $0x318] sm:$0xff]
    %v1428 = vld [vmem:[#allocation8 + $0x320] sm:$0xff]
    %v1429 = vld [vmem:[#allocation8 + $0x328] sm:$0xff]
    %v1430 = vld [vmem:[#allocation8 + $0x330] sm:$0xff]
    %v1431 = vld [vmem:[#allocation8 + $0x338] sm:$0xff]
    %v1432 = vld [vmem:[#allocation8 + $0x340] sm:$0xff]
    %v1433 = vld [vmem:[#allocation8 + $0x348] sm:$0xff]
    %v1434 = vld [vmem:[#allocation8 + $0x350] sm:$0xff]
    %v1435 = vld [vmem:[#allocation8 + $0x358] sm:$0xff]
    %v1436 = vld [vmem:[#allocation8 + $0x360] sm:$0xff]
    %v1437 = vld [vmem:[#allocation8 + $0x368] sm:$0xff]
    %v1438 = vld [vmem:[#allocation8 + $0x370] sm:$0xff]
    %v1439 = vld [vmem:[#allocation8 + $0x378] sm:$0xff]
    %v1440 = vld [vmem:[#allocation8 + $0x380] sm:$0xff]
    %v1441 = vld [vmem:[#allocation8 + $0x388] sm:$0xff]
    %v1442 = vld [vmem:[#allocation8 + $0x390] sm:$0xff]
    %v1443 = vld [vmem:[#allocation8 + $0x398] sm:$0xff]
    %v1444 = vld [vmem:[#allocation8 + $0x3a0] sm:$0xff]
    %v1445 = vld [vmem:[#allocation8 + $0x3a8] sm:$0xff]
    %v1446 = vld [vmem:[#allocation8 + $0x3b0] sm:$0xff]
    %v1447 = vld [vmem:[#allocation8 + $0x3b8] sm:$0xff]
    %v1448 = vld [vmem:[#allocation8 + $0x3c0] sm:$0xff]
    %v1449 = vld [vmem:[#allocation8 + $0x3c8] sm:$0xff]
    %v1450 = vld [vmem:[#allocation8 + $0x3d0] sm:$0xff]
    %v1451 = vld [vmem:[#allocation8 + $0x3d8] sm:$0xff]
    %v1452 = vld [vmem:[#allocation8 + $0x3e0] sm:$0xff]
    %v1453 = vld [vmem:[#allocation8 + $0x3e8] sm:$0xff]
    %v1454 = vld [vmem:[#allocation8 + $0x3f0] sm:$0xff]
    %v1455 = vld [vmem:[#allocation8 + $0x3f8] sm:$0xff]
    %v1520 = vunpack.c.l.b16 %v1392
    %v1521 = vunpack.c.h.b16 %v1392
    %v1522 = vunpack.c.l.b16 %v1393
    %v1523 = vunpack.c.h.b16 %v1393
    %v1524 = vunpack.c.l.b16 %v1394
    %v1525 = vunpack.c.h.b16 %v1394
    %v1526 = vunpack.c.l.b16 %v1395
    %v1527 = vunpack.c.h.b16 %v1395
    %v1528 = vunpack.c.l.b16 %v1396
    %v1529 = vunpack.c.h.b16 %v1396
    %v1530 = vunpack.c.l.b16 %v1397
    %v1531 = vunpack.c.h.b16 %v1397
    %v1532 = vunpack.c.l.b16 %v1398
    %v1533 = vunpack.c.h.b16 %v1398
    %v1534 = vunpack.c.l.b16 %v1399
    %v1535 = vunpack.c.h.b16 %v1399
    %v1536 = vunpack.c.l.b16 %v1400
    %v1537 = vunpack.c.h.b16 %v1400
    %v1538 = vunpack.c.l.b16 %v1401
    %v1539 = vunpack.c.h.b16 %v1401
    %v1540 = vunpack.c.l.b16 %v1402
    %v1541 = vunpack.c.h.b16 %v1402
    %v1542 = vunpack.c.l.b16 %v1403
    %v1543 = vunpack.c.h.b16 %v1403
    %v1544 = vunpack.c.l.b16 %v1404
    %v1545 = vunpack.c.h.b16 %v1404
    %v1546 = vunpack.c.l.b16 %v1405
    %v1547 = vunpack.c.h.b16 %v1405
    %v1548 = vunpack.c.l.b16 %v1406
    %v1549 = vunpack.c.h.b16 %v1406
    %v1550 = vunpack.c.l.b16 %v1407
    %v1551 = vunpack.c.h.b16 %v1407
    %v1552 = vunpack.c.l.b16 %v1408
    %v1553 = vunpack.c.h.b16 %v1408
    %v1554 = vunpack.c.l.b16 %v1409
    %v1555 = vunpack.c.h.b16 %v1409
    %v1556 = vunpack.c.l.b16 %v1410
    %v1557 = vunpack.c.h.b16 %v1410
    %v1558 = vunpack.c.l.b16 %v1411
    %v1559 = vunpack.c.h.b16 %v1411
    %v1560 = vunpack.c.l.b16 %v1412
    %v1561 = vunpack.c.h.b16 %v1412
    %v1562 = vunpack.c.l.b16 %v1413
    %v1563 = vunpack.c.h.b16 %v1413
    %v1564 = vunpack.c.l.b16 %v1414
    %v1565 = vunpack.c.h.b16 %v1414
    %v1566 = vunpack.c.l.b16 %v1415
    %v1567 = vunpack.c.h.b16 %v1415
    %v1568 = vunpack.c.l.b16 %v1416
    %v1569 = vunpack.c.h.b16 %v1416
    %v1570 = vunpack.c.l.b16 %v1417
    %v1571 = vunpack.c.h.b16 %v1417
    %v1572 = vunpack.c.l.b16 %v1418
    %v1573 = vunpack.c.h.b16 %v1418
    %v1574 = vunpack.c.l.b16 %v1419
    %v1575 = vunpack.c.h.b16 %v1419
    %v1576 = vunpack.c.l.b16 %v1420
    %v1577 = vunpack.c.h.b16 %v1420
    %v1578 = vunpack.c.l.b16 %v1421
    %v1579 = vunpack.c.h.b16 %v1421
    %v1580 = vunpack.c.l.b16 %v1422
    %v1581 = vunpack.c.h.b16 %v1422
    %v1582 = vunpack.c.l.b16 %v1423
    %v1583 = vunpack.c.h.b16 %v1423
    %v1584 = vunpack.c.l.b16 %v1424
    %v1585 = vunpack.c.h.b16 %v1424
    %v1586 = vunpack.c.l.b16 %v1425
    %v1587 = vunpack.c.h.b16 %v1425
    %v1588 = vunpack.c.l.b16 %v1426
    %v1589 = vunpack.c.h.b16 %v1426
    %v1590 = vunpack.c.l.b16 %v1427
    %v1591 = vunpack.c.h.b16 %v1427
    %v1592 = vunpack.c.l.b16 %v1428
    %v1593 = vunpack.c.h.b16 %v1428
    %v1594 = vunpack.c.l.b16 %v1429
    %v1595 = vunpack.c.h.b16 %v1429
    %v1596 = vunpack.c.l.b16 %v1430
    %v1597 = vunpack.c.h.b16 %v1430
    %v1598 = vunpack.c.l.b16 %v1431
    %v1599 = vunpack.c.h.b16 %v1431
    %v1600 = vunpack.c.l.b16 %v1432
    %v1601 = vunpack.c.h.b16 %v1432
    %v1602 = vunpack.c.l.b16 %v1433
    %v1603 = vunpack.c.h.b16 %v1433
    %v1604 = vunpack.c.l.b16 %v1434
    %v1605 = vunpack.c.h.b16 %v1434
    %v1606 = vunpack.c.l.b16 %v1435
    %v1607 = vunpack.c.h.b16 %v1435
    %v1608 = vunpack.c.l.b16 %v1436
    %v1609 = vunpack.c.h.b16 %v1436
    %v1610 = vunpack.c.l.b16 %v1437
    %v1611 = vunpack.c.h.b16 %v1437
    %v1612 = vunpack.c.l.b16 %v1438
    %v1613 = vunpack.c.h.b16 %v1438
    %v1614 = vunpack.c.l.b16 %v1439
    %v1615 = vunpack.c.h.b16 %v1439
    %v1616 = vunpack.c.l.b16 %v1440
    %v1617 = vunpack.c.h.b16 %v1440
    %v1618 = vunpack.c.l.b16 %v1441
    %v1619 = vunpack.c.h.b16 %v1441
    %v1620 = vunpack.c.l.b16 %v1442
    %v1621 = vunpack.c.h.b16 %v1442
    %v1622 = vunpack.c.l.b16 %v1443
    %v1623 = vunpack.c.h.b16 %v1443
    %v1624 = vunpack.c.l.b16 %v1444
    %v1625 = vunpack.c.h.b16 %v1444
    %v1626 = vunpack.c.l.b16 %v1445
    %v1627 = vunpack.c.h.b16 %v1445
    %v1628 = vunpack.c.l.b16 %v1446
    %v1629 = vunpack.c.h.b16 %v1446
    %v1630 = vunpack.c.l.b16 %v1447
    %v1631 = vunpack.c.h.b16 %v1447
    %v1632 = vunpack.c.l.b16 %v1448
    %v1633 = vunpack.c.h.b16 %v1448
    %v1634 = vunpack.c.l.b16 %v1449
    %v1635 = vunpack.c.h.b16 %v1449
    %v1636 = vunpack.c.l.b16 %v1450
    %v1637 = vunpack.c.h.b16 %v1450
    %v1638 = vunpack.c.l.b16 %v1451
    %v1639 = vunpack.c.h.b16 %v1451
    %v1640 = vunpack.c.l.b16 %v1452
    %v1641 = vunpack.c.h.b16 %v1452
    %v1642 = vunpack.c.l.b16 %v1453
    %v1643 = vunpack.c.h.b16 %v1453
    %v1644 = vunpack.c.l.b16 %v1454
    %v1645 = vunpack.c.h.b16 %v1454
    %v1646 = vunpack.c.l.b16 %v1455
    %v1647 = vunpack.c.h.b16 %v1455
    %v1648 = vpack.c.b16 %v1528, %v1520
    %v1649 = vpack.c.b16 %v1529, %v1521
    %v1650 = vpack.c.b16 %v1530, %v1522
    %v1651 = vpack.c.b16 %v1531, %v1523
    %v1652 = vpack.c.b16 %v1532, %v1524
    %v1653 = vpack.c.b16 %v1533, %v1525
    %v1654 = vpack.c.b16 %v1534, %v1526
    %v1655 = vpack.c.b16 %v1535, %v1527
    %v1656 = vpack.c.b16 %v1544, %v1536
    %v1657 = vpack.c.b16 %v1545, %v1537
    %v1658 = vpack.c.b16 %v1546, %v1538
    %v1659 = vpack.c.b16 %v1547, %v1539
    %v1660 = vpack.c.b16 %v1548, %v1540
    %v1661 = vpack.c.b16 %v1549, %v1541
    %v1662 = vpack.c.b16 %v1550, %v1542
    %v1663 = vpack.c.b16 %v1551, %v1543
    %v1664 = vpack.c.b16 %v1560, %v1552
    %v1665 = vpack.c.b16 %v1561, %v1553
    %v1666 = vpack.c.b16 %v1562, %v1554
    %v1667 = vpack.c.b16 %v1563, %v1555
    %v1668 = vpack.c.b16 %v1564, %v1556
    %v1669 = vpack.c.b16 %v1565, %v1557
    %v1670 = vpack.c.b16 %v1566, %v1558
    %v1671 = vpack.c.b16 %v1567, %v1559
    %v1672 = vpack.c.b16 %v1576, %v1568
    %v1673 = vpack.c.b16 %v1577, %v1569
    %v1674 = vpack.c.b16 %v1578, %v1570
    %v1675 = vpack.c.b16 %v1579, %v1571
    %v1676 = vpack.c.b16 %v1580, %v1572
    %v1677 = vpack.c.b16 %v1581, %v1573
    %v1678 = vpack.c.b16 %v1582, %v1574
    %v1679 = vpack.c.b16 %v1583, %v1575
    %v1680 = vpack.c.b16 %v1592, %v1584
    %v1681 = vpack.c.b16 %v1593, %v1585
    %v1682 = vpack.c.b16 %v1594, %v1586
    %v1683 = vpack.c.b16 %v1595, %v1587
    %v1684 = vpack.c.b16 %v1596, %v1588
    %v1685 = vpack.c.b16 %v1597, %v1589
    %v1686 = vpack.c.b16 %v1598, %v1590
    %v1687 = vpack.c.b16 %v1599, %v1591
    %v1688 = vpack.c.b16 %v1608, %v1600
    %v1689 = vpack.c.b16 %v1609, %v1601
    %v1690 = vpack.c.b16 %v1610, %v1602
    %v1691 = vpack.c.b16 %v1611, %v1603
    %v1692 = vpack.c.b16 %v1612, %v1604
    %v1693 = vpack.c.b16 %v1613, %v1605
    %v1694 = vpack.c.b16 %v1614, %v1606
    %v1695 = vpack.c.b16 %v1615, %v1607
    %v1696 = vpack.c.b16 %v1624, %v1616
    %v1697 = vpack.c.b16 %v1625, %v1617
    %v1698 = vpack.c.b16 %v1626, %v1618
    %v1699 = vpack.c.b16 %v1627, %v1619
    %v1700 = vpack.c.b16 %v1628, %v1620
    %v1701 = vpack.c.b16 %v1629, %v1621
    %v1702 = vpack.c.b16 %v1630, %v1622
    %v1703 = vpack.c.b16 %v1631, %v1623
    %v1704 = vpack.c.b16 %v1640, %v1632
    %v1705 = vpack.c.b16 %v1641, %v1633
    %v1706 = vpack.c.b16 %v1642, %v1634
    %v1707 = vpack.c.b16 %v1643, %v1635
    %v1708 = vpack.c.b16 %v1644, %v1636
    %v1709 = vpack.c.b16 %v1645, %v1637
    %v1710 = vpack.c.b16 %v1646, %v1638
    %v1711 = vpack.c.b16 %v1647, %v1639
    %1776 = vmatprep.subr.bf16.mxu0 %v1649
    %1777 = vmatpush1.bf16.msra.mxu0 %v1648
    %1778 = vmatprep.subr.bf16.mxu0 %v1657
    %1779 = vmatpush1.bf16.msra.mxu0 %v1656
    %1780 = vmatprep.subr.bf16.mxu0 %v1665
    %1781 = vmatpush1.bf16.msra.mxu0 %v1664
    %1782 = vmatprep.subr.bf16.mxu0 %v1673
    %1783 = vmatpush1.bf16.msra.mxu0 %v1672
    %1784 = vmatprep.subr.bf16.mxu0 %v1681
    %1785 = vmatpush1.bf16.msra.mxu0 %v1680
    %1786 = vmatprep.subr.bf16.mxu0 %v1689
    %1787 = vmatpush1.bf16.msra.mxu0 %v1688
    %1788 = vmatprep.subr.bf16.mxu0 %v1697
    %1789 = vmatpush1.bf16.msra.mxu0 %v1696
    %1790 = vmatprep.subr.bf16.mxu0 %v1705
    %1791 = vmatpush1.bf16.msra.mxu0 %v1704
    %1792 = vmatprep.subr.bf16.mxu0 0
    %1793 = vmatpush1.bf16.msra.mxu0 0
    %1794 = vmatprep.subr.bf16.mxu0 0
    %1795 = vmatpush1.bf16.msra.mxu0 0
    %1796 = vmatprep.subr.bf16.mxu0 0
    %1797 = vmatpush1.bf16.msra.mxu0 0
    %1798 = vmatprep.subr.bf16.mxu0 0
    %1799 = vmatpush1.bf16.msra.mxu0 0
    %1800 = vmatprep.subr.bf16.mxu0 0
    %1801 = vmatpush1.bf16.msra.mxu0 0
    %1802 = vmatprep.subr.bf16.mxu0 0
    %1803 = vmatpush1.bf16.msra.mxu0 0
    %1804 = vmatprep.subr.bf16.mxu0 0
    %1805 = vmatpush1.bf16.msra.mxu0 0
    %1806 = vmatprep.subr.bf16.mxu0 0
    %1807 = vmatpush1.bf16.msra.mxu0 0
    %1808 = vmatprep.mubr.bf16.mxu0 0
    %1809 = vmatmul.mubr.bf16.gmra.mrb[0].mxu0 %v150
    %v1810 = vpop.f32.mrb[0].mxu0
    %v1811 = vadd.f32 0.0, %v1810
    %v1812 = vpop.f32.mrb[0].mxu0
    %v1813 = vadd.f32 0.0, %v1812
    %v1814 = vpop.f32.mrb[0].mxu0
    %v1815 = vpop.f32.mrb[0].mxu0
    %1816 = vdwg.mxu0
    %1817 = vmatprep.subr.bf16.mxu0 %v1651
    %1818 = vmatpush1.bf16.msra.mxu0 %v1650
    %1819 = vmatprep.subr.bf16.mxu0 %v1659
    %1820 = vmatpush1.bf16.msra.mxu0 %v1658
    %1821 = vmatprep.subr.bf16.mxu0 %v1667
    %1822 = vmatpush1.bf16.msra.mxu0 %v1666
    %1823 = vmatprep.subr.bf16.mxu0 %v1675
    %1824 = vmatpush1.bf16.msra.mxu0 %v1674
    %1825 = vmatprep.subr.bf16.mxu0 %v1683
    %1826 = vmatpush1.bf16.msra.mxu0 %v1682
    %1827 = vmatprep.subr.bf16.mxu0 %v1691
    %1828 = vmatpush1.bf16.msra.mxu0 %v1690
    %1829 = vmatprep.subr.bf16.mxu0 %v1699
    %1830 = vmatpush1.bf16.msra.mxu0 %v1698
    %1831 = vmatprep.subr.bf16.mxu0 %v1707
    %1832 = vmatpush1.bf16.msra.mxu0 %v1706
    %1833 = vmatprep.subr.bf16.mxu0 0
    %1834 = vmatpush1.bf16.msra.mxu0 0
    %1835 = vmatprep.subr.bf16.mxu0 0
    %1836 = vmatpush1.bf16.msra.mxu0 0
    %1837 = vmatprep.subr.bf16.mxu0 0
    %1838 = vmatpush1.bf16.msra.mxu0 0
    %1839 = vmatprep.subr.bf16.mxu0 0
    %1840 = vmatpush1.bf16.msra.mxu0 0
    %1841 = vmatprep.subr.bf16.mxu0 0
    %1842 = vmatpush1.bf16.msra.mxu0 0
    %1843 = vmatprep.subr.bf16.mxu0 0
    %1844 = vmatpush1.bf16.msra.mxu0 0
    %1845 = vmatprep.subr.bf16.mxu0 0
    %1846 = vmatpush1.bf16.msra.mxu0 0
    %1847 = vmatprep.subr.bf16.mxu0 0
    %1848 = vmatpush1.bf16.msra.mxu0 0
    %1849 = vmatprep.mubr.bf16.mxu0 0
    %1850 = vmatmul.mubr.bf16.gmra.mrb[0].mxu0 %v150
    %v1851 = vpop.f32.mrb[0].mxu0
    %v1852 = vadd.f32 0.0, %v1851
    %v1853 = vpop.f32.mrb[0].mxu0
    %v1854 = vadd.f32 0.0, %v1853
    %v1855 = vpop.f32.mrb[0].mxu0
    %v1856 = vpop.f32.mrb[0].mxu0
    %1857 = vdwg.mxu0
    %1858 = vmatprep.subr.bf16.mxu0 %v1653
    %1859 = vmatpush1.bf16.msra.mxu0 %v1652
    %1860 = vmatprep.subr.bf16.mxu0 %v1661
    %1861 = vmatpush1.bf16.msra.mxu0 %v1660
    %1862 = vmatprep.subr.bf16.mxu0 %v1669
    %1863 = vmatpush1.bf16.msra.mxu0 %v1668
    %1864 = vmatprep.subr.bf16.mxu0 %v1677
    %1865 = vmatpush1.bf16.msra.mxu0 %v1676
    %1866 = vmatprep.subr.bf16.mxu0 %v1685
    %1867 = vmatpush1.bf16.msra.mxu0 %v1684
    %1868 = vmatprep.subr.bf16.mxu0 %v1693
    %1869 = vmatpush1.bf16.msra.mxu0 %v1692
    %1870 = vmatprep.subr.bf16.mxu0 %v1701
    %1871 = vmatpush1.bf16.msra.mxu0 %v1700
    %1872 = vmatprep.subr.bf16.mxu0 %v1709
    %1873 = vmatpush1.bf16.msra.mxu0 %v1708
    %1874 = vmatprep.subr.bf16.mxu0 0
    %1875 = vmatpush1.bf16.msra.mxu0 0
    %1876 = vmatprep.subr.bf16.mxu0 0
    %1877 = vmatpush1.bf16.msra.mxu0 0
    %1878 = vmatprep.subr.bf16.mxu0 0
    %1879 = vmatpush1.bf16.msra.mxu0 0
    %1880 = vmatprep.subr.bf16.mxu0 0
    %1881 = vmatpush1.bf16.msra.mxu0 0
    %1882 = vmatprep.subr.bf16.mxu0 0
    %1883 = vmatpush1.bf16.msra.mxu0 0
    %1884 = vmatprep.subr.bf16.mxu0 0
    %1885 = vmatpush1.bf16.msra.mxu0 0
    %1886 = vmatprep.subr.bf16.mxu0 0
    %1887 = vmatpush1.bf16.msra.mxu0 0
    %1888 = vmatprep.subr.bf16.mxu0 0
    %1889 = vmatpush1.bf16.msra.mxu0 0
    %1890 = vmatprep.mubr.bf16.mxu0 0
    %1891 = vmatmul.mubr.bf16.gmra.mrb[0].mxu0 %v150
    %v1892 = vpop.f32.mrb[0].mxu0
    %v1893 = vadd.f32 0.0, %v1892
    %v1894 = vpop.f32.mrb[0].mxu0
    %v1895 = vadd.f32 0.0, %v1894
    %v1896 = vpop.f32.mrb[0].mxu0
    %v1897 = vpop.f32.mrb[0].mxu0
    %1898 = vdwg.mxu0
    %1899 = vmatprep.subr.bf16.mxu0 %v1655
    %1900 = vmatpush1.bf16.msra.mxu0 %v1654
    %1901 = vmatprep.subr.bf16.mxu0 %v1663
    %1902 = vmatpush1.bf16.msra.mxu0 %v1662
    %1903 = vmatprep.subr.bf16.mxu0 %v1671
    %1904 = vmatpush1.bf16.msra.mxu0 %v1670
    %1905 = vmatprep.subr.bf16.mxu0 %v1679
    %1906 = vmatpush1.bf16.msra.mxu0 %v1678
    %1907 = vmatprep.subr.bf16.mxu0 %v1687
    %1908 = vmatpush1.bf16.msra.mxu0 %v1686
    %1909 = vmatprep.subr.bf16.mxu0 %v1695
    %1910 = vmatpush1.bf16.msra.mxu0 %v1694
    %1911 = vmatprep.subr.bf16.mxu0 %v1703
    %1912 = vmatpush1.bf16.msra.mxu0 %v1702
    %1913 = vmatprep.subr.bf16.mxu0 %v1711
    %1914 = vmatpush1.bf16.msra.mxu0 %v1710
    %1915 = vmatprep.subr.bf16.mxu0 0
    %1916 = vmatpush1.bf16.msra.mxu0 0
    %1917 = vmatprep.subr.bf16.mxu0 0
    %1918 = vmatpush1.bf16.msra.mxu0 0
    %1919 = vmatprep.subr.bf16.mxu0 0
    %1920 = vmatpush1.bf16.msra.mxu0 0
    %1921 = vmatprep.subr.bf16.mxu0 0
    %1922 = vmatpush1.bf16.msra.mxu0 0
    %1923 = vmatprep.subr.bf16.mxu0 0
    %1924 = vmatpush1.bf16.msra.mxu0 0
    %1925 = vmatprep.subr.bf16.mxu0 0
    %1926 = vmatpush1.bf16.msra.mxu0 0
    %1927 = vmatprep.subr.bf16.mxu0 0
    %1928 = vmatpush1.bf16.msra.mxu0 0
    %1929 = vmatprep.subr.bf16.mxu0 0
    %1930 = vmatpush1.bf16.msra.mxu0 0
    %1931 = vmatprep.mubr.bf16.mxu0 0
    %1932 = vmatmul.mubr.bf16.gmra.mrb[0].mxu0 %v150
    %v1933 = vpop.f32.mrb[0].mxu0
    %v1934 = vadd.f32 0.0, %v1933
    %v1935 = vpop.f32.mrb[0].mxu0
    %v1936 = vadd.f32 0.0, %v1935
    %v1937 = vpop.f32.mrb[0].mxu0
    %v1938 = vpop.f32.mrb[0].mxu0
    %1939 = vdwg.mxu0
    %v1940 = vadd.f32 %v1384, %v1811
    %v1941 = vadd.f32 %v1385, %v1813
    %v1942 = vadd.f32 %v1386, %v1852
    %v1943 = vadd.f32 %v1387, %v1854
    %v1944 = vadd.f32 %v1388, %v1893
    %v1945 = vadd.f32 %v1389, %v1895
    %v1946 = vadd.f32 %v1390, %v1934
    %v1947 = vadd.f32 %v1391, %v1936
    %v1948 = vld [vmem:[#allocation14] sm:$0xff]
    %v1950 = vlaneseq
    %v1951 = vshrl.u32 %v1950, 7
    %v1952 = vsub.s32 0, %v1951
    %v1953 = vrot.slane %v1948, %v1952
    %v1954 = vlaneseq
    %v1955 = vshrl.u32 %v1954, 7
    %v1956 = vsub.s32 1, %v1955
    %v1957 = vrot.slane %v1948, %v1956
    %v1958 = vlaneseq
    %v1959 = vshrl.u32 %v1958, 7
    %v1960 = vsub.s32 2, %v1959
    %v1961 = vrot.slane %v1948, %v1960
    %v1962 = vlaneseq
    %v1963 = vshrl.u32 %v1962, 7
    %v1964 = vsub.s32 3, %v1963
    %v1965 = vrot.slane %v1948, %v1964
    %v1966 = vlaneseq
    %v1967 = vshrl.u32 %v1966, 7
    %v1968 = vsub.s32 4, %v1967
    %v1969 = vrot.slane %v1948, %v1968
    %v1970 = vlaneseq
    %v1971 = vshrl.u32 %v1970, 7
    %v1972 = vsub.s32 5, %v1971
    %v1973 = vrot.slane %v1948, %v1972
    %v1974 = vlaneseq
    %v1975 = vshrl.u32 %v1974, 7
    %v1976 = vsub.s32 6, %v1975
    %v1977 = vrot.slane %v1948, %v1976
    %v1978 = vlaneseq
    %v1979 = vshrl.u32 %v1978, 7
    %v1980 = vsub.s32 7, %v1979
    %v1981 = vrot.slane %v1948, %v1980
    %v1990 = vadd.f32 %v1940, %v1953
    %v1991 = vadd.f32 %v1941, %v1957
    %v1992 = vadd.f32 %v1942, %v1961
    %v1993 = vadd.f32 %v1943, %v1965
    %v1994 = vadd.f32 %v1944, %v1969
    %v1995 = vadd.f32 %v1945, %v1973
    %v1996 = vadd.f32 %v1946, %v1977
    %v1997 = vadd.f32 %v1947, %v1981
    %v1998 = vmax.f32 %v1990, 0.0
    %v1999 = vmax.f32 %v1991, 0.0
    %v2000 = vmax.f32 %v1992, 0.0
    %v2001 = vmax.f32 %v1993, 0.0
    %v2002 = vmax.f32 %v1994, 0.0
    %v2003 = vmax.f32 %v1995, 0.0
    %v2004 = vmax.f32 %v1996, 0.0
    %v2005 = vmax.f32 %v1997, 0.0
    %v2006 = vpack.c.bf16 %v1998, %v1998
    %v2007 = vpack.c.bf16 %v1999, %v1999
    %v2008 = vpack.c.bf16 %v2000, %v2000
    %v2009 = vpack.c.bf16 %v2001, %v2001
    %v2010 = vpack.c.bf16 %v2002, %v2002
    %v2011 = vpack.c.bf16 %v2003, %v2003
    %v2012 = vpack.c.bf16 %v2004, %v2004
    %v2013 = vpack.c.bf16 %v2005, %v2005
    %v2014 = vld [vmem:[#allocation14 + $0x8] sm:$0x3]
    %v2016 = vlaneseq
    %v2017 = vshrl.u32 %v2016, 7
    %v2018 = vsub.s32 0, %v2017
    %v2019 = vrot.slane %v2014, %v2018
    %v2020 = vlaneseq
    %v2021 = vshrl.u32 %v2020, 7
    %v2022 = vsub.s32 1, %v2021
    %v2023 = vrot.slane %v2014, %v2022
    %v2026 = vadd.f32 %v830, %v2019
    %v2027 = vadd.f32 %v832, %v2023
    %v2028 = vmax.f32 %v2026, 0.0
    %v2029 = vmax.f32 %v2027, 0.0
    %v2030 = vpack.c.bf16 %v2028, %v2028
    %v2031 = vpack.c.bf16 %v2029, %v2029
    %v2032 = vld [vmem:[#allocation10] sm:$0xff]
    %v2033 = vld [vmem:[#allocation10 + $0x8] sm:$0xff]
    %v2034 = vld [vmem:[#allocation10 + $0x10] sm:$0xff]
    %v2035 = vld [vmem:[#allocation10 + $0x18] sm:$0xff]
    %v2036 = vld [vmem:[#allocation10 + $0x20] sm:$0xff]
    %v2037 = vld [vmem:[#allocation10 + $0x28] sm:$0xff]
    %v2038 = vld [vmem:[#allocation10 + $0x30] sm:$0xff]
    %v2039 = vld [vmem:[#allocation10 + $0x38] sm:$0xff]
    %v2040 = vld [vmem:[#allocation10 + $0x40] sm:$0xff]
    %v2041 = vld [vmem:[#allocation10 + $0x48] sm:$0xff]
    %v2042 = vld [vmem:[#allocation10 + $0x50] sm:$0xff]
    %v2043 = vld [vmem:[#allocation10 + $0x58] sm:$0xff]
    %v2044 = vld [vmem:[#allocation10 + $0x60] sm:$0xff]
    %v2045 = vld [vmem:[#allocation10 + $0x68] sm:$0xff]
    %v2046 = vld [vmem:[#allocation10 + $0x70] sm:$0xff]
    %v2047 = vld [vmem:[#allocation10 + $0x78] sm:$0xff]
    %v2048 = vld [vmem:[#allocation10 + $0x80] sm:$0xff]
    %v2049 = vld [vmem:[#allocation10 + $0x88] sm:$0xff]
    %v2050 = vld [vmem:[#allocation10 + $0x90] sm:$0xff]
    %v2051 = vld [vmem:[#allocation10 + $0x98] sm:$0xff]
    %v2052 = vld [vmem:[#allocation10 + $0xa0] sm:$0xff]
    %v2053 = vld [vmem:[#allocation10 + $0xa8] sm:$0xff]
    %v2054 = vld [vmem:[#allocation10 + $0xb0] sm:$0xff]
    %v2055 = vld [vmem:[#allocation10 + $0xb8] sm:$0xff]
    %v2056 = vld [vmem:[#allocation10 + $0xc0] sm:$0xff]
    %v2057 = vld [vmem:[#allocation10 + $0xc8] sm:$0xff]
    %v2058 = vld [vmem:[#allocation10 + $0xd0] sm:$0xff]
    %v2059 = vld [vmem:[#allocation10 + $0xd8] sm:$0xff]
    %v2060 = vld [vmem:[#allocation10 + $0xe0] sm:$0xff]
    %v2061 = vld [vmem:[#allocation10 + $0xe8] sm:$0xff]
    %v2062 = vld [vmem:[#allocation10 + $0xf0] sm:$0xff]
    %v2063 = vld [vmem:[#allocation10 + $0xf8] sm:$0xff]
    %v2064 = vld [vmem:[#allocation10 + $0x100] sm:$0xff]
    %v2065 = vld [vmem:[#allocation10 + $0x108] sm:$0xff]
    %v2066 = vld [vmem:[#allocation10 + $0x110] sm:$0xff]
    %v2067 = vld [vmem:[#allocation10 + $0x118] sm:$0xff]
    %v2068 = vld [vmem:[#allocation10 + $0x120] sm:$0xff]
    %v2069 = vld [vmem:[#allocation10 + $0x128] sm:$0xff]
    %v2070 = vld [vmem:[#allocation10 + $0x130] sm:$0xff]
    %v2071 = vld [vmem:[#allocation10 + $0x138] sm:$0xff]
    %v2072 = vld [vmem:[#allocation10 + $0x140] sm:$0xff]
    %v2073 = vld [vmem:[#allocation10 + $0x148] sm:$0xff]
    %v2074 = vld [vmem:[#allocation10 + $0x150] sm:$0xff]
    %v2075 = vld [vmem:[#allocation10 + $0x158] sm:$0xff]
    %v2076 = vld [vmem:[#allocation10 + $0x160] sm:$0xff]
    %v2077 = vld [vmem:[#allocation10 + $0x168] sm:$0xff]
    %v2078 = vld [vmem:[#allocation10 + $0x170] sm:$0xff]
    %v2079 = vld [vmem:[#allocation10 + $0x178] sm:$0xff]
    %v2080 = vld [vmem:[#allocation10 + $0x180] sm:$0xff]
    %v2081 = vld [vmem:[#allocation10 + $0x188] sm:$0xff]
    %v2082 = vld [vmem:[#allocation10 + $0x190] sm:$0xff]
    %v2083 = vld [vmem:[#allocation10 + $0x198] sm:$0xff]
    %v2084 = vld [vmem:[#allocation10 + $0x1a0] sm:$0xff]
    %v2085 = vld [vmem:[#allocation10 + $0x1a8] sm:$0xff]
    %v2086 = vld [vmem:[#allocation10 + $0x1b0] sm:$0xff]
    %v2087 = vld [vmem:[#allocation10 + $0x1b8] sm:$0xff]
    %v2088 = vld [vmem:[#allocation10 + $0x1c0] sm:$0xff]
    %v2089 = vld [vmem:[#allocation10 + $0x1c8] sm:$0xff]
    %v2090 = vld [vmem:[#allocation10 + $0x1d0] sm:$0xff]
    %v2091 = vld [vmem:[#allocation10 + $0x1d8] sm:$0xff]
    %v2092 = vld [vmem:[#allocation10 + $0x1e0] sm:$0xff]
    %v2093 = vld [vmem:[#allocation10 + $0x1e8] sm:$0xff]
    %v2094 = vld [vmem:[#allocation10 + $0x1f0] sm:$0xff]
    %v2095 = vld [vmem:[#allocation10 + $0x1f8] sm:$0xff]
    %v2096 = vld [vmem:[#allocation10 + $0x200] sm:$0xff]
    %v2097 = vld [vmem:[#allocation10 + $0x208] sm:$0xff]
    %v2098 = vld [vmem:[#allocation10 + $0x210] sm:$0xff]
    %v2099 = vld [vmem:[#allocation10 + $0x218] sm:$0xff]
    %v2100 = vld [vmem:[#allocation10 + $0x220] sm:$0xff]
    %v2101 = vld [vmem:[#allocation10 + $0x228] sm:$0xff]
    %v2102 = vld [vmem:[#allocation10 + $0x230] sm:$0xff]
    %v2103 = vld [vmem:[#allocation10 + $0x238] sm:$0xff]
    %v2104 = vld [vmem:[#allocation10 + $0x240] sm:$0xff]
    %v2105 = vld [vmem:[#allocation10 + $0x248] sm:$0xff]
    %v2106 = vld [vmem:[#allocation10 + $0x250] sm:$0xff]
    %v2107 = vld [vmem:[#allocation10 + $0x258] sm:$0xff]
    %v2108 = vld [vmem:[#allocation10 + $0x260] sm:$0xff]
    %v2109 = vld [vmem:[#allocation10 + $0x268] sm:$0xff]
    %v2110 = vld [vmem:[#allocation10 + $0x270] sm:$0xff]
    %v2111 = vld [vmem:[#allocation10 + $0x278] sm:$0xff]
    %v2112 = vld [vmem:[#allocation10 + $0x280] sm:$0xff]
    %v2113 = vld [vmem:[#allocation10 + $0x288] sm:$0xff]
    %v2114 = vld [vmem:[#allocation10 + $0x290] sm:$0xff]
    %v2115 = vld [vmem:[#allocation10 + $0x298] sm:$0xff]
    %v2116 = vld [vmem:[#allocation10 + $0x2a0] sm:$0xff]
    %v2117 = vld [vmem:[#allocation10 + $0x2a8] sm:$0xff]
    %v2118 = vld [vmem:[#allocation10 + $0x2b0] sm:$0xff]
    %v2119 = vld [vmem:[#allocation10 + $0x2b8] sm:$0xff]
    %v2120 = vld [vmem:[#allocation10 + $0x2c0] sm:$0xff]
    %v2121 = vld [vmem:[#allocation10 + $0x2c8] sm:$0xff]
    %v2122 = vld [vmem:[#allocation10 + $0x2d0] sm:$0xff]
    %v2123 = vld [vmem:[#allocation10 + $0x2d8] sm:$0xff]
    %v2124 = vld [vmem:[#allocation10 + $0x2e0] sm:$0xff]
    %v2125 = vld [vmem:[#allocation10 + $0x2e8] sm:$0xff]
    %v2126 = vld [vmem:[#allocation10 + $0x2f0] sm:$0xff]
    %v2127 = vld [vmem:[#allocation10 + $0x2f8] sm:$0xff]
    %v2128 = vld [vmem:[#allocation10 + $0x300] sm:$0xff]
    %v2129 = vld [vmem:[#allocation10 + $0x308] sm:$0xff]
    %v2130 = vld [vmem:[#allocation10 + $0x310] sm:$0xff]
    %v2131 = vld [vmem:[#allocation10 + $0x318] sm:$0xff]
    %v2132 = vld [vmem:[#allocation10 + $0x320] sm:$0xff]
    %v2133 = vld [vmem:[#allocation10 + $0x328] sm:$0xff]
    %v2134 = vld [vmem:[#allocation10 + $0x330] sm:$0xff]
    %v2135 = vld [vmem:[#allocation10 + $0x338] sm:$0xff]
    %v2136 = vld [vmem:[#allocation10 + $0x340] sm:$0xff]
    %v2137 = vld [vmem:[#allocation10 + $0x348] sm:$0xff]
    %v2138 = vld [vmem:[#allocation10 + $0x350] sm:$0xff]
    %v2139 = vld [vmem:[#allocation10 + $0x358] sm:$0xff]
    %v2140 = vld [vmem:[#allocation10 + $0x360] sm:$0xff]
    %v2141 = vld [vmem:[#allocation10 + $0x368] sm:$0xff]
    %v2142 = vld [vmem:[#allocation10 + $0x370] sm:$0xff]
    %v2143 = vld [vmem:[#allocation10 + $0x378] sm:$0xff]
    %v2144 = vld [vmem:[#allocation10 + $0x380] sm:$0xff]
    %v2145 = vld [vmem:[#allocation10 + $0x388] sm:$0xff]
    %v2146 = vld [vmem:[#allocation10 + $0x390] sm:$0xff]
    %v2147 = vld [vmem:[#allocation10 + $0x398] sm:$0xff]
    %v2148 = vld [vmem:[#allocation10 + $0x3a0] sm:$0xff]
    %v2149 = vld [vmem:[#allocation10 + $0x3a8] sm:$0xff]
    %v2150 = vld [vmem:[#allocation10 + $0x3b0] sm:$0xff]
    %v2151 = vld [vmem:[#allocation10 + $0x3b8] sm:$0xff]
    %v2152 = vld [vmem:[#allocation10 + $0x3c0] sm:$0xff]
    %v2153 = vld [vmem:[#allocation10 + $0x3c8] sm:$0xff]
    %v2154 = vld [vmem:[#allocation10 + $0x3d0] sm:$0xff]
    %v2155 = vld [vmem:[#allocation10 + $0x3d8] sm:$0xff]
    %v2156 = vld [vmem:[#allocation10 + $0x3e0] sm:$0xff]
    %v2157 = vld [vmem:[#allocation10 + $0x3e8] sm:$0xff]
    %v2158 = vld [vmem:[#allocation10 + $0x3f0] sm:$0xff]
    %v2159 = vld [vmem:[#allocation10 + $0x3f8] sm:$0xff]
    %v2160 = vld [vmem:[#allocation10 + $0x400] sm:$0xff]
    %v2161 = vld [vmem:[#allocation10 + $0x408] sm:$0xff]
    %v2162 = vld [vmem:[#allocation10 + $0x410] sm:$0xff]
    %v2163 = vld [vmem:[#allocation10 + $0x418] sm:$0xff]
    %v2164 = vld [vmem:[#allocation10 + $0x420] sm:$0xff]
    %v2165 = vld [vmem:[#allocation10 + $0x428] sm:$0xff]
    %v2166 = vld [vmem:[#allocation10 + $0x430] sm:$0xff]
    %v2167 = vld [vmem:[#allocation10 + $0x438] sm:$0xff]
    %v2168 = vld [vmem:[#allocation10 + $0x440] sm:$0xff]
    %v2169 = vld [vmem:[#allocation10 + $0x448] sm:$0xff]
    %v2170 = vld [vmem:[#allocation10 + $0x450] sm:$0xff]
    %v2171 = vld [vmem:[#allocation10 + $0x458] sm:$0xff]
    %v2172 = vld [vmem:[#allocation10 + $0x460] sm:$0xff]
    %v2173 = vld [vmem:[#allocation10 + $0x468] sm:$0xff]
    %v2174 = vld [vmem:[#allocation10 + $0x470] sm:$0xff]
    %v2175 = vld [vmem:[#allocation10 + $0x478] sm:$0xff]
    %v2176 = vld [vmem:[#allocation10 + $0x480] sm:$0xff]
    %v2177 = vld [vmem:[#allocation10 + $0x488] sm:$0xff]
    %v2178 = vld [vmem:[#allocation10 + $0x490] sm:$0xff]
    %v2179 = vld [vmem:[#allocation10 + $0x498] sm:$0xff]
    %v2180 = vld [vmem:[#allocation10 + $0x4a0] sm:$0xff]
    %v2181 = vld [vmem:[#allocation10 + $0x4a8] sm:$0xff]
    %v2182 = vld [vmem:[#allocation10 + $0x4b0] sm:$0xff]
    %v2183 = vld [vmem:[#allocation10 + $0x4b8] sm:$0xff]
    %v2184 = vld [vmem:[#allocation10 + $0x4c0] sm:$0xff]
    %v2185 = vld [vmem:[#allocation10 + $0x4c8] sm:$0xff]
    %v2186 = vld [vmem:[#allocation10 + $0x4d0] sm:$0xff]
    %v2187 = vld [vmem:[#allocation10 + $0x4d8] sm:$0xff]
    %v2188 = vld [vmem:[#allocation10 + $0x4e0] sm:$0xff]
    %v2189 = vld [vmem:[#allocation10 + $0x4e8] sm:$0xff]
    %v2190 = vld [vmem:[#allocation10 + $0x4f0] sm:$0xff]
    %v2191 = vld [vmem:[#allocation10 + $0x4f8] sm:$0xff]
    %v2192 = vld [vmem:[#allocation10 + $0x500] sm:$0xff]
    %v2193 = vld [vmem:[#allocation10 + $0x508] sm:$0xff]
    %v2194 = vld [vmem:[#allocation10 + $0x510] sm:$0xff]
    %v2195 = vld [vmem:[#allocation10 + $0x518] sm:$0xff]
    %v2196 = vld [vmem:[#allocation10 + $0x520] sm:$0xff]
    %v2197 = vld [vmem:[#allocation10 + $0x528] sm:$0xff]
    %v2198 = vld [vmem:[#allocation10 + $0x530] sm:$0xff]
    %v2199 = vld [vmem:[#allocation10 + $0x538] sm:$0xff]
    %v2200 = vld [vmem:[#allocation10 + $0x540] sm:$0xff]
    %v2201 = vld [vmem:[#allocation10 + $0x548] sm:$0xff]
    %v2202 = vld [vmem:[#allocation10 + $0x550] sm:$0xff]
    %v2203 = vld [vmem:[#allocation10 + $0x558] sm:$0xff]
    %v2204 = vld [vmem:[#allocation10 + $0x560] sm:$0xff]
    %v2205 = vld [vmem:[#allocation10 + $0x568] sm:$0xff]
    %v2206 = vld [vmem:[#allocation10 + $0x570] sm:$0xff]
    %v2207 = vld [vmem:[#allocation10 + $0x578] sm:$0xff]
    %v2208 = vld [vmem:[#allocation10 + $0x580] sm:$0xff]
    %v2209 = vld [vmem:[#allocation10 + $0x588] sm:$0xff]
    %v2210 = vld [vmem:[#allocation10 + $0x590] sm:$0xff]
    %v2211 = vld [vmem:[#allocation10 + $0x598] sm:$0xff]
    %v2212 = vld [vmem:[#allocation10 + $0x5a0] sm:$0xff]
    %v2213 = vld [vmem:[#allocation10 + $0x5a8] sm:$0xff]
    %v2214 = vld [vmem:[#allocation10 + $0x5b0] sm:$0xff]
    %v2215 = vld [vmem:[#allocation10 + $0x5b8] sm:$0xff]
    %v2216 = vld [vmem:[#allocation10 + $0x5c0] sm:$0xff]
    %v2217 = vld [vmem:[#allocation10 + $0x5c8] sm:$0xff]
    %v2218 = vld [vmem:[#allocation10 + $0x5d0] sm:$0xff]
    %v2219 = vld [vmem:[#allocation10 + $0x5d8] sm:$0xff]
    %v2220 = vld [vmem:[#allocation10 + $0x5e0] sm:$0xff]
    %v2221 = vld [vmem:[#allocation10 + $0x5e8] sm:$0xff]
    %v2222 = vld [vmem:[#allocation10 + $0x5f0] sm:$0xff]
    %v2223 = vld [vmem:[#allocation10 + $0x5f8] sm:$0xff]
    %v2224 = vld [vmem:[#allocation10 + $0x600] sm:$0xff]
    %v2225 = vld [vmem:[#allocation10 + $0x608] sm:$0xff]
    %v2226 = vld [vmem:[#allocation10 + $0x610] sm:$0xff]
    %v2227 = vld [vmem:[#allocation10 + $0x618] sm:$0xff]
    %v2228 = vld [vmem:[#allocation10 + $0x620] sm:$0xff]
    %v2229 = vld [vmem:[#allocation10 + $0x628] sm:$0xff]
    %v2230 = vld [vmem:[#allocation10 + $0x630] sm:$0xff]
    %v2231 = vld [vmem:[#allocation10 + $0x638] sm:$0xff]
    %v2232 = vld [vmem:[#allocation10 + $0x640] sm:$0xff]
    %v2233 = vld [vmem:[#allocation10 + $0x648] sm:$0xff]
    %v2234 = vld [vmem:[#allocation10 + $0x650] sm:$0xff]
    %v2235 = vld [vmem:[#allocation10 + $0x658] sm:$0xff]
    %v2236 = vld [vmem:[#allocation10 + $0x660] sm:$0xff]
    %v2237 = vld [vmem:[#allocation10 + $0x668] sm:$0xff]
    %v2238 = vld [vmem:[#allocation10 + $0x670] sm:$0xff]
    %v2239 = vld [vmem:[#allocation10 + $0x678] sm:$0xff]
    %v2240 = vld [vmem:[#allocation10 + $0x680] sm:$0xff]
    %v2241 = vld [vmem:[#allocation10 + $0x688] sm:$0xff]
    %v2242 = vld [vmem:[#allocation10 + $0x690] sm:$0xff]
    %v2243 = vld [vmem:[#allocation10 + $0x698] sm:$0xff]
    %v2244 = vld [vmem:[#allocation10 + $0x6a0] sm:$0xff]
    %v2245 = vld [vmem:[#allocation10 + $0x6a8] sm:$0xff]
    %v2246 = vld [vmem:[#allocation10 + $0x6b0] sm:$0xff]
    %v2247 = vld [vmem:[#allocation10 + $0x6b8] sm:$0xff]
    %v2248 = vld [vmem:[#allocation10 + $0x6c0] sm:$0xff]
    %v2249 = vld [vmem:[#allocation10 + $0x6c8] sm:$0xff]
    %v2250 = vld [vmem:[#allocation10 + $0x6d0] sm:$0xff]
    %v2251 = vld [vmem:[#allocation10 + $0x6d8] sm:$0xff]
    %v2252 = vld [vmem:[#allocation10 + $0x6e0] sm:$0xff]
    %v2253 = vld [vmem:[#allocation10 + $0x6e8] sm:$0xff]
    %v2254 = vld [vmem:[#allocation10 + $0x6f0] sm:$0xff]
    %v2255 = vld [vmem:[#allocation10 + $0x6f8] sm:$0xff]
    %v2256 = vld [vmem:[#allocation10 + $0x700] sm:$0xff]
    %v2257 = vld [vmem:[#allocation10 + $0x708] sm:$0xff]
    %v2258 = vld [vmem:[#allocation10 + $0x710] sm:$0xff]
    %v2259 = vld [vmem:[#allocation10 + $0x718] sm:$0xff]
    %v2260 = vld [vmem:[#allocation10 + $0x720] sm:$0xff]
    %v2261 = vld [vmem:[#allocation10 + $0x728] sm:$0xff]
    %v2262 = vld [vmem:[#allocation10 + $0x730] sm:$0xff]
    %v2263 = vld [vmem:[#allocation10 + $0x738] sm:$0xff]
    %v2264 = vld [vmem:[#allocation10 + $0x740] sm:$0xff]
    %v2265 = vld [vmem:[#allocation10 + $0x748] sm:$0xff]
    %v2266 = vld [vmem:[#allocation10 + $0x750] sm:$0xff]
    %v2267 = vld [vmem:[#allocation10 + $0x758] sm:$0xff]
    %v2268 = vld [vmem:[#allocation10 + $0x760] sm:$0xff]
    %v2269 = vld [vmem:[#allocation10 + $0x768] sm:$0xff]
    %v2270 = vld [vmem:[#allocation10 + $0x770] sm:$0xff]
    %v2271 = vld [vmem:[#allocation10 + $0x778] sm:$0xff]
    %v2272 = vld [vmem:[#allocation10 + $0x780] sm:$0xff]
    %v2273 = vld [vmem:[#allocation10 + $0x788] sm:$0xff]
    %v2274 = vld [vmem:[#allocation10 + $0x790] sm:$0xff]
    %v2275 = vld [vmem:[#allocation10 + $0x798] sm:$0xff]
    %v2276 = vld [vmem:[#allocation10 + $0x7a0] sm:$0xff]
    %v2277 = vld [vmem:[#allocation10 + $0x7a8] sm:$0xff]
    %v2278 = vld [vmem:[#allocation10 + $0x7b0] sm:$0xff]
    %v2279 = vld [vmem:[#allocation10 + $0x7b8] sm:$0xff]
    %v2280 = vld [vmem:[#allocation10 + $0x7c0] sm:$0xff]
    %v2281 = vld [vmem:[#allocation10 + $0x7c8] sm:$0xff]
    %v2282 = vld [vmem:[#allocation10 + $0x7d0] sm:$0xff]
    %v2283 = vld [vmem:[#allocation10 + $0x7d8] sm:$0xff]
    %v2284 = vld [vmem:[#allocation10 + $0x7e0] sm:$0xff]
    %v2285 = vld [vmem:[#allocation10 + $0x7e8] sm:$0xff]
    %v2286 = vld [vmem:[#allocation10 + $0x7f0] sm:$0xff]
    %v2287 = vld [vmem:[#allocation10 + $0x7f8] sm:$0xff]
    %v2288 = vld [vmem:[#allocation14 + $0xa] sm:$0xf]
    %v2290 = vlaneseq
    %v2291 = vshrl.u32 %v2290, 7
    %v2292 = vsub.s32 0, %v2291
    %v2293 = vrot.slane %v2288, %v2292
    %v2294 = vlaneseq
    %v2295 = vshrl.u32 %v2294, 7
    %v2296 = vsub.s32 1, %v2295
    %v2297 = vrot.slane %v2288, %v2296
    %v2298 = vlaneseq
    %v2299 = vshrl.u32 %v2298, 7
    %v2300 = vsub.s32 2, %v2299
    %v2301 = vrot.slane %v2288, %v2300
    %v2302 = vlaneseq
    %v2303 = vshrl.u32 %v2302, 7
    %v2304 = vsub.s32 3, %v2303
    %v2305 = vrot.slane %v2288, %v2304
    %v2566 = vunpack.c.l.b16 %v2032
    %v2567 = vunpack.c.h.b16 %v2032
    %v2568 = vunpack.c.l.b16 %v2033
    %v2569 = vunpack.c.h.b16 %v2033
    %v2570 = vunpack.c.l.b16 %v2034
    %v2571 = vunpack.c.h.b16 %v2034
    %v2572 = vunpack.c.l.b16 %v2035
    %v2573 = vunpack.c.h.b16 %v2035
    %v2574 = vunpack.c.l.b16 %v2036
    %v2575 = vunpack.c.h.b16 %v2036
    %v2576 = vunpack.c.l.b16 %v2037
    %v2577 = vunpack.c.h.b16 %v2037
    %v2578 = vunpack.c.l.b16 %v2038
    %v2579 = vunpack.c.h.b16 %v2038
    %v2580 = vunpack.c.l.b16 %v2039
    %v2581 = vunpack.c.h.b16 %v2039
    %v2582 = vunpack.c.l.b16 %v2040
    %v2583 = vunpack.c.h.b16 %v2040
    %v2584 = vunpack.c.l.b16 %v2041
    %v2585 = vunpack.c.h.b16 %v2041
    %v2586 = vunpack.c.l.b16 %v2042
    %v2587 = vunpack.c.h.b16 %v2042
    %v2588 = vunpack.c.l.b16 %v2043
    %v2589 = vunpack.c.h.b16 %v2043
    %v2590 = vunpack.c.l.b16 %v2044
    %v2591 = vunpack.c.h.b16 %v2044
    %v2592 = vunpack.c.l.b16 %v2045
    %v2593 = vunpack.c.h.b16 %v2045
    %v2594 = vunpack.c.l.b16 %v2046
    %v2595 = vunpack.c.h.b16 %v2046
    %v2596 = vunpack.c.l.b16 %v2047
    %v2597 = vunpack.c.h.b16 %v2047
    %v2598 = vunpack.c.l.b16 %v2048
    %v2599 = vunpack.c.h.b16 %v2048
    %v2600 = vunpack.c.l.b16 %v2049
    %v2601 = vunpack.c.h.b16 %v2049
    %v2602 = vunpack.c.l.b16 %v2050
    %v2603 = vunpack.c.h.b16 %v2050
    %v2604 = vunpack.c.l.b16 %v2051
    %v2605 = vunpack.c.h.b16 %v2051
    %v2606 = vunpack.c.l.b16 %v2052
    %v2607 = vunpack.c.h.b16 %v2052
    %v2608 = vunpack.c.l.b16 %v2053
    %v2609 = vunpack.c.h.b16 %v2053
    %v2610 = vunpack.c.l.b16 %v2054
    %v2611 = vunpack.c.h.b16 %v2054
    %v2612 = vunpack.c.l.b16 %v2055
    %v2613 = vunpack.c.h.b16 %v2055
    %v2614 = vunpack.c.l.b16 %v2056
    %v2615 = vunpack.c.h.b16 %v2056
    %v2616 = vunpack.c.l.b16 %v2057
    %v2617 = vunpack.c.h.b16 %v2057
    %v2618 = vunpack.c.l.b16 %v2058
    %v2619 = vunpack.c.h.b16 %v2058
    %v2620 = vunpack.c.l.b16 %v2059
    %v2621 = vunpack.c.h.b16 %v2059
    %v2622 = vunpack.c.l.b16 %v2060
    %v2623 = vunpack.c.h.b16 %v2060
    %v2624 = vunpack.c.l.b16 %v2061
    %v2625 = vunpack.c.h.b16 %v2061
    %v2626 = vunpack.c.l.b16 %v2062
    %v2627 = vunpack.c.h.b16 %v2062
    %v2628 = vunpack.c.l.b16 %v2063
    %v2629 = vunpack.c.h.b16 %v2063
    %v2630 = vunpack.c.l.b16 %v2064
    %v2631 = vunpack.c.h.b16 %v2064
    %v2632 = vunpack.c.l.b16 %v2065
    %v2633 = vunpack.c.h.b16 %v2065
    %v2634 = vunpack.c.l.b16 %v2066
    %v2635 = vunpack.c.h.b16 %v2066
    %v2636 = vunpack.c.l.b16 %v2067
    %v2637 = vunpack.c.h.b16 %v2067
    %v2638 = vunpack.c.l.b16 %v2068
    %v2639 = vunpack.c.h.b16 %v2068
    %v2640 = vunpack.c.l.b16 %v2069
    %v2641 = vunpack.c.h.b16 %v2069
    %v2642 = vunpack.c.l.b16 %v2070
    %v2643 = vunpack.c.h.b16 %v2070
    %v2644 = vunpack.c.l.b16 %v2071
    %v2645 = vunpack.c.h.b16 %v2071
    %v2646 = vunpack.c.l.b16 %v2072
    %v2647 = vunpack.c.h.b16 %v2072
    %v2648 = vunpack.c.l.b16 %v2073
    %v2649 = vunpack.c.h.b16 %v2073
    %v2650 = vunpack.c.l.b16 %v2074
    %v2651 = vunpack.c.h.b16 %v2074
    %v2652 = vunpack.c.l.b16 %v2075
    %v2653 = vunpack.c.h.b16 %v2075
    %v2654 = vunpack.c.l.b16 %v2076
    %v2655 = vunpack.c.h.b16 %v2076
    %v2656 = vunpack.c.l.b16 %v2077
    %v2657 = vunpack.c.h.b16 %v2077
    %v2658 = vunpack.c.l.b16 %v2078
    %v2659 = vunpack.c.h.b16 %v2078
    %v2660 = vunpack.c.l.b16 %v2079
    %v2661 = vunpack.c.h.b16 %v2079
    %v2662 = vunpack.c.l.b16 %v2080
    %v2663 = vunpack.c.h.b16 %v2080
    %v2664 = vunpack.c.l.b16 %v2081
    %v2665 = vunpack.c.h.b16 %v2081
    %v2666 = vunpack.c.l.b16 %v2082
    %v2667 = vunpack.c.h.b16 %v2082
    %v2668 = vunpack.c.l.b16 %v2083
    %v2669 = vunpack.c.h.b16 %v2083
    %v2670 = vunpack.c.l.b16 %v2084
    %v2671 = vunpack.c.h.b16 %v2084
    %v2672 = vunpack.c.l.b16 %v2085
    %v2673 = vunpack.c.h.b16 %v2085
    %v2674 = vunpack.c.l.b16 %v2086
    %v2675 = vunpack.c.h.b16 %v2086
    %v2676 = vunpack.c.l.b16 %v2087
    %v2677 = vunpack.c.h.b16 %v2087
    %v2678 = vunpack.c.l.b16 %v2088
    %v2679 = vunpack.c.h.b16 %v2088
    %v2680 = vunpack.c.l.b16 %v2089
    %v2681 = vunpack.c.h.b16 %v2089
    %v2682 = vunpack.c.l.b16 %v2090
    %v2683 = vunpack.c.h.b16 %v2090
    %v2684 = vunpack.c.l.b16 %v2091
    %v2685 = vunpack.c.h.b16 %v2091
    %v2686 = vunpack.c.l.b16 %v2092
    %v2687 = vunpack.c.h.b16 %v2092
    %v2688 = vunpack.c.l.b16 %v2093
    %v2689 = vunpack.c.h.b16 %v2093
    %v2690 = vunpack.c.l.b16 %v2094
    %v2691 = vunpack.c.h.b16 %v2094
    %v2692 = vunpack.c.l.b16 %v2095
    %v2693 = vunpack.c.h.b16 %v2095
    %v2694 = vunpack.c.l.b16 %v2096
    %v2695 = vunpack.c.h.b16 %v2096
    %v2696 = vunpack.c.l.b16 %v2097
    %v2697 = vunpack.c.h.b16 %v2097
    %v2698 = vunpack.c.l.b16 %v2098
    %v2699 = vunpack.c.h.b16 %v2098
    %v2700 = vunpack.c.l.b16 %v2099
    %v2701 = vunpack.c.h.b16 %v2099
    %v2702 = vunpack.c.l.b16 %v2100
    %v2703 = vunpack.c.h.b16 %v2100
    %v2704 = vunpack.c.l.b16 %v2101
    %v2705 = vunpack.c.h.b16 %v2101
    %v2706 = vunpack.c.l.b16 %v2102
    %v2707 = vunpack.c.h.b16 %v2102
    %v2708 = vunpack.c.l.b16 %v2103
    %v2709 = vunpack.c.h.b16 %v2103
    %v2710 = vunpack.c.l.b16 %v2104
    %v2711 = vunpack.c.h.b16 %v2104
    %v2712 = vunpack.c.l.b16 %v2105
    %v2713 = vunpack.c.h.b16 %v2105
    %v2714 = vunpack.c.l.b16 %v2106
    %v2715 = vunpack.c.h.b16 %v2106
    %v2716 = vunpack.c.l.b16 %v2107
    %v2717 = vunpack.c.h.b16 %v2107
    %v2718 = vunpack.c.l.b16 %v2108
    %v2719 = vunpack.c.h.b16 %v2108
    %v2720 = vunpack.c.l.b16 %v2109
    %v2721 = vunpack.c.h.b16 %v2109
    %v2722 = vunpack.c.l.b16 %v2110
    %v2723 = vunpack.c.h.b16 %v2110
    %v2724 = vunpack.c.l.b16 %v2111
    %v2725 = vunpack.c.h.b16 %v2111
    %v2726 = vunpack.c.l.b16 %v2112
    %v2727 = vunpack.c.h.b16 %v2112
    %v2728 = vunpack.c.l.b16 %v2113
    %v2729 = vunpack.c.h.b16 %v2113
    %v2730 = vunpack.c.l.b16 %v2114
    %v2731 = vunpack.c.h.b16 %v2114
    %v2732 = vunpack.c.l.b16 %v2115
    %v2733 = vunpack.c.h.b16 %v2115
    %v2734 = vunpack.c.l.b16 %v2116
    %v2735 = vunpack.c.h.b16 %v2116
    %v2736 = vunpack.c.l.b16 %v2117
    %v2737 = vunpack.c.h.b16 %v2117
    %v2738 = vunpack.c.l.b16 %v2118
    %v2739 = vunpack.c.h.b16 %v2118
    %v2740 = vunpack.c.l.b16 %v2119
    %v2741 = vunpack.c.h.b16 %v2119
    %v2742 = vunpack.c.l.b16 %v2120
    %v2743 = vunpack.c.h.b16 %v2120
    %v2744 = vunpack.c.l.b16 %v2121
    %v2745 = vunpack.c.h.b16 %v2121
    %v2746 = vunpack.c.l.b16 %v2122
    %v2747 = vunpack.c.h.b16 %v2122
    %v2748 = vunpack.c.l.b16 %v2123
    %v2749 = vunpack.c.h.b16 %v2123
    %v2750 = vunpack.c.l.b16 %v2124
    %v2751 = vunpack.c.h.b16 %v2124
    %v2752 = vunpack.c.l.b16 %v2125
    %v2753 = vunpack.c.h.b16 %v2125
    %v2754 = vunpack.c.l.b16 %v2126
    %v2755 = vunpack.c.h.b16 %v2126
    %v2756 = vunpack.c.l.b16 %v2127
    %v2757 = vunpack.c.h.b16 %v2127
    %v2758 = vunpack.c.l.b16 %v2128
    %v2759 = vunpack.c.h.b16 %v2128
    %v2760 = vunpack.c.l.b16 %v2129
    %v2761 = vunpack.c.h.b16 %v2129
    %v2762 = vunpack.c.l.b16 %v2130
    %v2763 = vunpack.c.h.b16 %v2130
    %v2764 = vunpack.c.l.b16 %v2131
    %v2765 = vunpack.c.h.b16 %v2131
    %v2766 = vunpack.c.l.b16 %v2132
    %v2767 = vunpack.c.h.b16 %v2132
    %v2768 = vunpack.c.l.b16 %v2133
    %v2769 = vunpack.c.h.b16 %v2133
    %v2770 = vunpack.c.l.b16 %v2134
    %v2771 = vunpack.c.h.b16 %v2134
    %v2772 = vunpack.c.l.b16 %v2135
    %v2773 = vunpack.c.h.b16 %v2135
    %v2774 = vunpack.c.l.b16 %v2136
    %v2775 = vunpack.c.h.b16 %v2136
    %v2776 = vunpack.c.l.b16 %v2137
    %v2777 = vunpack.c.h.b16 %v2137
    %v2778 = vunpack.c.l.b16 %v2138
    %v2779 = vunpack.c.h.b16 %v2138
    %v2780 = vunpack.c.l.b16 %v2139
    %v2781 = vunpack.c.h.b16 %v2139
    %v2782 = vunpack.c.l.b16 %v2140
    %v2783 = vunpack.c.h.b16 %v2140
    %v2784 = vunpack.c.l.b16 %v2141
    %v2785 = vunpack.c.h.b16 %v2141
    %v2786 = vunpack.c.l.b16 %v2142
    %v2787 = vunpack.c.h.b16 %v2142
    %v2788 = vunpack.c.l.b16 %v2143
    %v2789 = vunpack.c.h.b16 %v2143
    %v2790 = vunpack.c.l.b16 %v2144
    %v2791 = vunpack.c.h.b16 %v2144
    %v2792 = vunpack.c.l.b16 %v2145
    %v2793 = vunpack.c.h.b16 %v2145
    %v2794 = vunpack.c.l.b16 %v2146
    %v2795 = vunpack.c.h.b16 %v2146
    %v2796 = vunpack.c.l.b16 %v2147
    %v2797 = vunpack.c.h.b16 %v2147
    %v2798 = vunpack.c.l.b16 %v2148
    %v2799 = vunpack.c.h.b16 %v2148
    %v2800 = vunpack.c.l.b16 %v2149
    %v2801 = vunpack.c.h.b16 %v2149
    %v2802 = vunpack.c.l.b16 %v2150
    %v2803 = vunpack.c.h.b16 %v2150
    %v2804 = vunpack.c.l.b16 %v2151
    %v2805 = vunpack.c.h.b16 %v2151
    %v2806 = vunpack.c.l.b16 %v2152
    %v2807 = vunpack.c.h.b16 %v2152
    %v2808 = vunpack.c.l.b16 %v2153
    %v2809 = vunpack.c.h.b16 %v2153
    %v2810 = vunpack.c.l.b16 %v2154
    %v2811 = vunpack.c.h.b16 %v2154
    %v2812 = vunpack.c.l.b16 %v2155
    %v2813 = vunpack.c.h.b16 %v2155
    %v2814 = vunpack.c.l.b16 %v2156
    %v2815 = vunpack.c.h.b16 %v2156
    %v2816 = vunpack.c.l.b16 %v2157
    %v2817 = vunpack.c.h.b16 %v2157
    %v2818 = vunpack.c.l.b16 %v2158
    %v2819 = vunpack.c.h.b16 %v2158
    %v2820 = vunpack.c.l.b16 %v2159
    %v2821 = vunpack.c.h.b16 %v2159
    %v2822 = vunpack.c.l.b16 %v2160
    %v2823 = vunpack.c.h.b16 %v2160
    %v2824 = vunpack.c.l.b16 %v2161
    %v2825 = vunpack.c.h.b16 %v2161
    %v2826 = vunpack.c.l.b16 %v2162
    %v2827 = vunpack.c.h.b16 %v2162
    %v2828 = vunpack.c.l.b16 %v2163
    %v2829 = vunpack.c.h.b16 %v2163
    %v2830 = vunpack.c.l.b16 %v2164
    %v2831 = vunpack.c.h.b16 %v2164
    %v2832 = vunpack.c.l.b16 %v2165
    %v2833 = vunpack.c.h.b16 %v2165
    %v2834 = vunpack.c.l.b16 %v2166
    %v2835 = vunpack.c.h.b16 %v2166
    %v2836 = vunpack.c.l.b16 %v2167
    %v2837 = vunpack.c.h.b16 %v2167
    %v2838 = vunpack.c.l.b16 %v2168
    %v2839 = vunpack.c.h.b16 %v2168
    %v2840 = vunpack.c.l.b16 %v2169
    %v2841 = vunpack.c.h.b16 %v2169
    %v2842 = vunpack.c.l.b16 %v2170
    %v2843 = vunpack.c.h.b16 %v2170
    %v2844 = vunpack.c.l.b16 %v2171
    %v2845 = vunpack.c.h.b16 %v2171
    %v2846 = vunpack.c.l.b16 %v2172
    %v2847 = vunpack.c.h.b16 %v2172
    %v2848 = vunpack.c.l.b16 %v2173
    %v2849 = vunpack.c.h.b16 %v2173
    %v2850 = vunpack.c.l.b16 %v2174
    %v2851 = vunpack.c.h.b16 %v2174
    %v2852 = vunpack.c.l.b16 %v2175
    %v2853 = vunpack.c.h.b16 %v2175
    %v2854 = vunpack.c.l.b16 %v2176
    %v2855 = vunpack.c.h.b16 %v2176
    %v2856 = vunpack.c.l.b16 %v2177
    %v2857 = vunpack.c.h.b16 %v2177
    %v2858 = vunpack.c.l.b16 %v2178
    %v2859 = vunpack.c.h.b16 %v2178
    %v2860 = vunpack.c.l.b16 %v2179
    %v2861 = vunpack.c.h.b16 %v2179
    %v2862 = vunpack.c.l.b16 %v2180
    %v2863 = vunpack.c.h.b16 %v2180
    %v2864 = vunpack.c.l.b16 %v2181
    %v2865 = vunpack.c.h.b16 %v2181
    %v2866 = vunpack.c.l.b16 %v2182
    %v2867 = vunpack.c.h.b16 %v2182
    %v2868 = vunpack.c.l.b16 %v2183
    %v2869 = vunpack.c.h.b16 %v2183
    %v2870 = vunpack.c.l.b16 %v2184
    %v2871 = vunpack.c.h.b16 %v2184
    %v2872 = vunpack.c.l.b16 %v2185
    %v2873 = vunpack.c.h.b16 %v2185
    %v2874 = vunpack.c.l.b16 %v2186
    %v2875 = vunpack.c.h.b16 %v2186
    %v2876 = vunpack.c.l.b16 %v2187
    %v2877 = vunpack.c.h.b16 %v2187
    %v2878 = vunpack.c.l.b16 %v2188
    %v2879 = vunpack.c.h.b16 %v2188
    %v2880 = vunpack.c.l.b16 %v2189
    %v2881 = vunpack.c.h.b16 %v2189
    %v2882 = vunpack.c.l.b16 %v2190
    %v2883 = vunpack.c.h.b16 %v2190
    %v2884 = vunpack.c.l.b16 %v2191
    %v2885 = vunpack.c.h.b16 %v2191
    %v2886 = vunpack.c.l.b16 %v2192
    %v2887 = vunpack.c.h.b16 %v2192
    %v2888 = vunpack.c.l.b16 %v2193
    %v2889 = vunpack.c.h.b16 %v2193
    %v2890 = vunpack.c.l.b16 %v2194
    %v2891 = vunpack.c.h.b16 %v2194
    %v2892 = vunpack.c.l.b16 %v2195
    %v2893 = vunpack.c.h.b16 %v2195
    %v2894 = vunpack.c.l.b16 %v2196
    %v2895 = vunpack.c.h.b16 %v2196
    %v2896 = vunpack.c.l.b16 %v2197
    %v2897 = vunpack.c.h.b16 %v2197
    %v2898 = vunpack.c.l.b16 %v2198
    %v2899 = vunpack.c.h.b16 %v2198
    %v2900 = vunpack.c.l.b16 %v2199
    %v2901 = vunpack.c.h.b16 %v2199
    %v2902 = vunpack.c.l.b16 %v2200
    %v2903 = vunpack.c.h.b16 %v2200
    %v2904 = vunpack.c.l.b16 %v2201
    %v2905 = vunpack.c.h.b16 %v2201
    %v2906 = vunpack.c.l.b16 %v2202
    %v2907 = vunpack.c.h.b16 %v2202
    %v2908 = vunpack.c.l.b16 %v2203
    %v2909 = vunpack.c.h.b16 %v2203
    %v2910 = vunpack.c.l.b16 %v2204
    %v2911 = vunpack.c.h.b16 %v2204
    %v2912 = vunpack.c.l.b16 %v2205
    %v2913 = vunpack.c.h.b16 %v2205
    %v2914 = vunpack.c.l.b16 %v2206
    %v2915 = vunpack.c.h.b16 %v2206
    %v2916 = vunpack.c.l.b16 %v2207
    %v2917 = vunpack.c.h.b16 %v2207
    %v2918 = vunpack.c.l.b16 %v2208
    %v2919 = vunpack.c.h.b16 %v2208
    %v2920 = vunpack.c.l.b16 %v2209
    %v2921 = vunpack.c.h.b16 %v2209
    %v2922 = vunpack.c.l.b16 %v2210
    %v2923 = vunpack.c.h.b16 %v2210
    %v2924 = vunpack.c.l.b16 %v2211
    %v2925 = vunpack.c.h.b16 %v2211
    %v2926 = vunpack.c.l.b16 %v2212
    %v2927 = vunpack.c.h.b16 %v2212
    %v2928 = vunpack.c.l.b16 %v2213
    %v2929 = vunpack.c.h.b16 %v2213
    %v2930 = vunpack.c.l.b16 %v2214
    %v2931 = vunpack.c.h.b16 %v2214
    %v2932 = vunpack.c.l.b16 %v2215
    %v2933 = vunpack.c.h.b16 %v2215
    %v2934 = vunpack.c.l.b16 %v2216
    %v2935 = vunpack.c.h.b16 %v2216
    %v2936 = vunpack.c.l.b16 %v2217
    %v2937 = vunpack.c.h.b16 %v2217
    %v2938 = vunpack.c.l.b16 %v2218
    %v2939 = vunpack.c.h.b16 %v2218
    %v2940 = vunpack.c.l.b16 %v2219
    %v2941 = vunpack.c.h.b16 %v2219
    %v2942 = vunpack.c.l.b16 %v2220
    %v2943 = vunpack.c.h.b16 %v2220
    %v2944 = vunpack.c.l.b16 %v2221
    %v2945 = vunpack.c.h.b16 %v2221
    %v2946 = vunpack.c.l.b16 %v2222
    %v2947 = vunpack.c.h.b16 %v2222
    %v2948 = vunpack.c.l.b16 %v2223
    %v2949 = vunpack.c.h.b16 %v2223
    %v2950 = vunpack.c.l.b16 %v2224
    %v2951 = vunpack.c.h.b16 %v2224
    %v2952 = vunpack.c.l.b16 %v2225
    %v2953 = vunpack.c.h.b16 %v2225
    %v2954 = vunpack.c.l.b16 %v2226
    %v2955 = vunpack.c.h.b16 %v2226
    %v2956 = vunpack.c.l.b16 %v2227
    %v2957 = vunpack.c.h.b16 %v2227
    %v2958 = vunpack.c.l.b16 %v2228
    %v2959 = vunpack.c.h.b16 %v2228
    %v2960 = vunpack.c.l.b16 %v2229
    %v2961 = vunpack.c.h.b16 %v2229
    %v2962 = vunpack.c.l.b16 %v2230
    %v2963 = vunpack.c.h.b16 %v2230
    %v2964 = vunpack.c.l.b16 %v2231
    %v2965 = vunpack.c.h.b16 %v2231
    %v2966 = vunpack.c.l.b16 %v2232
    %v2967 = vunpack.c.h.b16 %v2232
    %v2968 = vunpack.c.l.b16 %v2233
    %v2969 = vunpack.c.h.b16 %v2233
    %v2970 = vunpack.c.l.b16 %v2234
    %v2971 = vunpack.c.h.b16 %v2234
    %v2972 = vunpack.c.l.b16 %v2235
    %v2973 = vunpack.c.h.b16 %v2235
    %v2974 = vunpack.c.l.b16 %v2236
    %v2975 = vunpack.c.h.b16 %v2236
    %v2976 = vunpack.c.l.b16 %v2237
    %v2977 = vunpack.c.h.b16 %v2237
    %v2978 = vunpack.c.l.b16 %v2238
    %v2979 = vunpack.c.h.b16 %v2238
    %v2980 = vunpack.c.l.b16 %v2239
    %v2981 = vunpack.c.h.b16 %v2239
    %v2982 = vunpack.c.l.b16 %v2240
    %v2983 = vunpack.c.h.b16 %v2240
    %v2984 = vunpack.c.l.b16 %v2241
    %v2985 = vunpack.c.h.b16 %v2241
    %v2986 = vunpack.c.l.b16 %v2242
    %v2987 = vunpack.c.h.b16 %v2242
    %v2988 = vunpack.c.l.b16 %v2243
    %v2989 = vunpack.c.h.b16 %v2243
    %v2990 = vunpack.c.l.b16 %v2244
    %v2991 = vunpack.c.h.b16 %v2244
    %v2992 = vunpack.c.l.b16 %v2245
    %v2993 = vunpack.c.h.b16 %v2245
    %v2994 = vunpack.c.l.b16 %v2246
    %v2995 = vunpack.c.h.b16 %v2246
    %v2996 = vunpack.c.l.b16 %v2247
    %v2997 = vunpack.c.h.b16 %v2247
    %v2998 = vunpack.c.l.b16 %v2248
    %v2999 = vunpack.c.h.b16 %v2248
    %v3000 = vunpack.c.l.b16 %v2249
    %v3001 = vunpack.c.h.b16 %v2249
    %v3002 = vunpack.c.l.b16 %v2250
    %v3003 = vunpack.c.h.b16 %v2250
    %v3004 = vunpack.c.l.b16 %v2251
    %v3005 = vunpack.c.h.b16 %v2251
    %v3006 = vunpack.c.l.b16 %v2252
    %v3007 = vunpack.c.h.b16 %v2252
    %v3008 = vunpack.c.l.b16 %v2253
    %v3009 = vunpack.c.h.b16 %v2253
    %v3010 = vunpack.c.l.b16 %v2254
    %v3011 = vunpack.c.h.b16 %v2254
    %v3012 = vunpack.c.l.b16 %v2255
    %v3013 = vunpack.c.h.b16 %v2255
    %v3014 = vunpack.c.l.b16 %v2256
    %v3015 = vunpack.c.h.b16 %v2256
    %v3016 = vunpack.c.l.b16 %v2257
    %v3017 = vunpack.c.h.b16 %v2257
    %v3018 = vunpack.c.l.b16 %v2258
    %v3019 = vunpack.c.h.b16 %v2258
    %v3020 = vunpack.c.l.b16 %v2259
    %v3021 = vunpack.c.h.b16 %v2259
    %v3022 = vunpack.c.l.b16 %v2260
    %v3023 = vunpack.c.h.b16 %v2260
    %v3024 = vunpack.c.l.b16 %v2261
    %v3025 = vunpack.c.h.b16 %v2261
    %v3026 = vunpack.c.l.b16 %v2262
    %v3027 = vunpack.c.h.b16 %v2262
    %v3028 = vunpack.c.l.b16 %v2263
    %v3029 = vunpack.c.h.b16 %v2263
    %v3030 = vunpack.c.l.b16 %v2264
    %v3031 = vunpack.c.h.b16 %v2264
    %v3032 = vunpack.c.l.b16 %v2265
    %v3033 = vunpack.c.h.b16 %v2265
    %v3034 = vunpack.c.l.b16 %v2266
    %v3035 = vunpack.c.h.b16 %v2266
    %v3036 = vunpack.c.l.b16 %v2267
    %v3037 = vunpack.c.h.b16 %v2267
    %v3038 = vunpack.c.l.b16 %v2268
    %v3039 = vunpack.c.h.b16 %v2268
    %v3040 = vunpack.c.l.b16 %v2269
    %v3041 = vunpack.c.h.b16 %v2269
    %v3042 = vunpack.c.l.b16 %v2270
    %v3043 = vunpack.c.h.b16 %v2270
    %v3044 = vunpack.c.l.b16 %v2271
    %v3045 = vunpack.c.h.b16 %v2271
    %v3046 = vunpack.c.l.b16 %v2272
    %v3047 = vunpack.c.h.b16 %v2272
    %v3048 = vunpack.c.l.b16 %v2273
    %v3049 = vunpack.c.h.b16 %v2273
    %v3050 = vunpack.c.l.b16 %v2274
    %v3051 = vunpack.c.h.b16 %v2274
    %v3052 = vunpack.c.l.b16 %v2275
    %v3053 = vunpack.c.h.b16 %v2275
    %v3054 = vunpack.c.l.b16 %v2276
    %v3055 = vunpack.c.h.b16 %v2276
    %v3056 = vunpack.c.l.b16 %v2277
    %v3057 = vunpack.c.h.b16 %v2277
    %v3058 = vunpack.c.l.b16 %v2278
    %v3059 = vunpack.c.h.b16 %v2278
    %v3060 = vunpack.c.l.b16 %v2279
    %v3061 = vunpack.c.h.b16 %v2279
    %v3062 = vunpack.c.l.b16 %v2280
    %v3063 = vunpack.c.h.b16 %v2280
    %v3064 = vunpack.c.l.b16 %v2281
    %v3065 = vunpack.c.h.b16 %v2281
    %v3066 = vunpack.c.l.b16 %v2282
    %v3067 = vunpack.c.h.b16 %v2282
    %v3068 = vunpack.c.l.b16 %v2283
    %v3069 = vunpack.c.h.b16 %v2283
    %v3070 = vunpack.c.l.b16 %v2284
    %v3071 = vunpack.c.h.b16 %v2284
    %v3072 = vunpack.c.l.b16 %v2285
    %v3073 = vunpack.c.h.b16 %v2285
    %v3074 = vunpack.c.l.b16 %v2286
    %v3075 = vunpack.c.h.b16 %v2286
    %v3076 = vunpack.c.l.b16 %v2287
    %v3077 = vunpack.c.h.b16 %v2287
    %v3078 = vpack.c.b16 %v2570, %v2566
    %v3079 = vpack.c.b16 %v2571, %v2567
    %v3080 = vpack.c.b16 %v2572, %v2568
    %v3081 = vpack.c.b16 %v2573, %v2569
    %v3082 = vpack.c.b16 %v2578, %v2574
    %v3083 = vpack.c.b16 %v2579, %v2575
    %v3084 = vpack.c.b16 %v2580, %v2576
    %v3085 = vpack.c.b16 %v2581, %v2577
    %v3086 = vpack.c.b16 %v2586, %v2582
    %v3087 = vpack.c.b16 %v2587, %v2583
    %v3088 = vpack.c.b16 %v2588, %v2584
    %v3089 = vpack.c.b16 %v2589, %v2585
    %v3090 = vpack.c.b16 %v2594, %v2590
    %v3091 = vpack.c.b16 %v2595, %v2591
    %v3092 = vpack.c.b16 %v2596, %v2592
    %v3093 = vpack.c.b16 %v2597, %v2593
    %v3094 = vpack.c.b16 %v2602, %v2598
    %v3095 = vpack.c.b16 %v2603, %v2599
    %v3096 = vpack.c.b16 %v2604, %v2600
    %v3097 = vpack.c.b16 %v2605, %v2601
    %v3098 = vpack.c.b16 %v2610, %v2606
    %v3099 = vpack.c.b16 %v2611, %v2607
    %v3100 = vpack.c.b16 %v2612, %v2608
    %v3101 = vpack.c.b16 %v2613, %v2609
    %v3102 = vpack.c.b16 %v2618, %v2614
    %v3103 = vpack.c.b16 %v2619, %v2615
    %v3104 = vpack.c.b16 %v2620, %v2616
    %v3105 = vpack.c.b16 %v2621, %v2617
    %v3106 = vpack.c.b16 %v2626, %v2622
    %v3107 = vpack.c.b16 %v2627, %v2623
    %v3108 = vpack.c.b16 %v2628, %v2624
    %v3109 = vpack.c.b16 %v2629, %v2625
    %v3110 = vpack.c.b16 %v2634, %v2630
    %v3111 = vpack.c.b16 %v2635, %v2631
    %v3112 = vpack.c.b16 %v2636, %v2632
    %v3113 = vpack.c.b16 %v2637, %v2633
    %v3114 = vpack.c.b16 %v2642, %v2638
    %v3115 = vpack.c.b16 %v2643, %v2639
    %v3116 = vpack.c.b16 %v2644, %v2640
    %v3117 = vpack.c.b16 %v2645, %v2641
    %v3118 = vpack.c.b16 %v2650, %v2646
    %v3119 = vpack.c.b16 %v2651, %v2647
    %v3120 = vpack.c.b16 %v2652, %v2648
    %v3121 = vpack.c.b16 %v2653, %v2649
    %v3122 = vpack.c.b16 %v2658, %v2654
    %v3123 = vpack.c.b16 %v2659, %v2655
    %v3124 = vpack.c.b16 %v2660, %v2656
    %v3125 = vpack.c.b16 %v2661, %v2657
    %v3126 = vpack.c.b16 %v2666, %v2662
    %v3127 = vpack.c.b16 %v2667, %v2663
    %v3128 = vpack.c.b16 %v2668, %v2664
    %v3129 = vpack.c.b16 %v2669, %v2665
    %v3130 = vpack.c.b16 %v2674, %v2670
    %v3131 = vpack.c.b16 %v2675, %v2671
    %v3132 = vpack.c.b16 %v2676, %v2672
    %v3133 = vpack.c.b16 %v2677, %v2673
    %v3134 = vpack.c.b16 %v2682, %v2678
    %v3135 = vpack.c.b16 %v2683, %v2679
    %v3136 = vpack.c.b16 %v2684, %v2680
    %v3137 = vpack.c.b16 %v2685, %v2681
    %v3138 = vpack.c.b16 %v2690, %v2686
    %v3139 = vpack.c.b16 %v2691, %v2687
    %v3140 = vpack.c.b16 %v2692, %v2688
    %v3141 = vpack.c.b16 %v2693, %v2689
    %v3142 = vpack.c.b16 %v2698, %v2694
    %v3143 = vpack.c.b16 %v2699, %v2695
    %v3144 = vpack.c.b16 %v2700, %v2696
    %v3145 = vpack.c.b16 %v2701, %v2697
    %v3146 = vpack.c.b16 %v2706, %v2702
    %v3147 = vpack.c.b16 %v2707, %v2703
    %v3148 = vpack.c.b16 %v2708, %v2704
    %v3149 = vpack.c.b16 %v2709, %v2705
    %v3150 = vpack.c.b16 %v2714, %v2710
    %v3151 = vpack.c.b16 %v2715, %v2711
    %v3152 = vpack.c.b16 %v2716, %v2712
    %v3153 = vpack.c.b16 %v2717, %v2713
    %v3154 = vpack.c.b16 %v2722, %v2718
    %v3155 = vpack.c.b16 %v2723, %v2719
    %v3156 = vpack.c.b16 %v2724, %v2720
    %v3157 = vpack.c.b16 %v2725, %v2721
    %v3158 = vpack.c.b16 %v2730, %v2726
    %v3159 = vpack.c.b16 %v2731, %v2727
    %v3160 = vpack.c.b16 %v2732, %v2728
    %v3161 = vpack.c.b16 %v2733, %v2729
    %v3162 = vpack.c.b16 %v2738, %v2734
    %v3163 = vpack.c.b16 %v2739, %v2735
    %v3164 = vpack.c.b16 %v2740, %v2736
    %v3165 = vpack.c.b16 %v2741, %v2737
    %v3166 = vpack.c.b16 %v2746, %v2742
    %v3167 = vpack.c.b16 %v2747, %v2743
    %v3168 = vpack.c.b16 %v2748, %v2744
    %v3169 = vpack.c.b16 %v2749, %v2745
    %v3170 = vpack.c.b16 %v2754, %v2750
    %v3171 = vpack.c.b16 %v2755, %v2751
    %v3172 = vpack.c.b16 %v2756, %v2752
    %v3173 = vpack.c.b16 %v2757, %v2753
    %v3174 = vpack.c.b16 %v2762, %v2758
    %v3175 = vpack.c.b16 %v2763, %v2759
    %v3176 = vpack.c.b16 %v2764, %v2760
    %v3177 = vpack.c.b16 %v2765, %v2761
    %v3178 = vpack.c.b16 %v2770, %v2766
    %v3179 = vpack.c.b16 %v2771, %v2767
    %v3180 = vpack.c.b16 %v2772, %v2768
    %v3181 = vpack.c.b16 %v2773, %v2769
    %v3182 = vpack.c.b16 %v2778, %v2774
    %v3183 = vpack.c.b16 %v2779, %v2775
    %v3184 = vpack.c.b16 %v2780, %v2776
    %v3185 = vpack.c.b16 %v2781, %v2777
    %v3186 = vpack.c.b16 %v2786, %v2782
    %v3187 = vpack.c.b16 %v2787, %v2783
    %v3188 = vpack.c.b16 %v2788, %v2784
    %v3189 = vpack.c.b16 %v2789, %v2785
    %v3190 = vpack.c.b16 %v2794, %v2790
    %v3191 = vpack.c.b16 %v2795, %v2791
    %v3192 = vpack.c.b16 %v2796, %v2792
    %v3193 = vpack.c.b16 %v2797, %v2793
    %v3194 = vpack.c.b16 %v2802, %v2798
    %v3195 = vpack.c.b16 %v2803, %v2799
    %v3196 = vpack.c.b16 %v2804, %v2800
    %v3197 = vpack.c.b16 %v2805, %v2801
    %v3198 = vpack.c.b16 %v2810, %v2806
    %v3199 = vpack.c.b16 %v2811, %v2807
    %v3200 = vpack.c.b16 %v2812, %v2808
    %v3201 = vpack.c.b16 %v2813, %v2809
    %v3202 = vpack.c.b16 %v2818, %v2814
    %v3203 = vpack.c.b16 %v2819, %v2815
    %v3204 = vpack.c.b16 %v2820, %v2816
    %v3205 = vpack.c.b16 %v2821, %v2817
    %v3206 = vpack.c.b16 %v2826, %v2822
    %v3207 = vpack.c.b16 %v2827, %v2823
    %v3208 = vpack.c.b16 %v2828, %v2824
    %v3209 = vpack.c.b16 %v2829, %v2825
    %v3210 = vpack.c.b16 %v2834, %v2830
    %v3211 = vpack.c.b16 %v2835, %v2831
    %v3212 = vpack.c.b16 %v2836, %v2832
    %v3213 = vpack.c.b16 %v2837, %v2833
    %v3214 = vpack.c.b16 %v2842, %v2838
    %v3215 = vpack.c.b16 %v2843, %v2839
    %v3216 = vpack.c.b16 %v2844, %v2840
    %v3217 = vpack.c.b16 %v2845, %v2841
    %v3218 = vpack.c.b16 %v2850, %v2846
    %v3219 = vpack.c.b16 %v2851, %v2847
    %v3220 = vpack.c.b16 %v2852, %v2848
    %v3221 = vpack.c.b16 %v2853, %v2849
    %v3222 = vpack.c.b16 %v2858, %v2854
    %v3223 = vpack.c.b16 %v2859, %v2855
    %v3224 = vpack.c.b16 %v2860, %v2856
    %v3225 = vpack.c.b16 %v2861, %v2857
    %v3226 = vpack.c.b16 %v2866, %v2862
    %v3227 = vpack.c.b16 %v2867, %v2863
    %v3228 = vpack.c.b16 %v2868, %v2864
    %v3229 = vpack.c.b16 %v2869, %v2865
    %v3230 = vpack.c.b16 %v2874, %v2870
    %v3231 = vpack.c.b16 %v2875, %v2871
    %v3232 = vpack.c.b16 %v2876, %v2872
    %v3233 = vpack.c.b16 %v2877, %v2873
    %v3234 = vpack.c.b16 %v2882, %v2878
    %v3235 = vpack.c.b16 %v2883, %v2879
    %v3236 = vpack.c.b16 %v2884, %v2880
    %v3237 = vpack.c.b16 %v2885, %v2881
    %v3238 = vpack.c.b16 %v2890, %v2886
    %v3239 = vpack.c.b16 %v2891, %v2887
    %v3240 = vpack.c.b16 %v2892, %v2888
    %v3241 = vpack.c.b16 %v2893, %v2889
    %v3242 = vpack.c.b16 %v2898, %v2894
    %v3243 = vpack.c.b16 %v2899, %v2895
    %v3244 = vpack.c.b16 %v2900, %v2896
    %v3245 = vpack.c.b16 %v2901, %v2897
    %v3246 = vpack.c.b16 %v2906, %v2902
    %v3247 = vpack.c.b16 %v2907, %v2903
    %v3248 = vpack.c.b16 %v2908, %v2904
    %v3249 = vpack.c.b16 %v2909, %v2905
    %v3250 = vpack.c.b16 %v2914, %v2910
    %v3251 = vpack.c.b16 %v2915, %v2911
    %v3252 = vpack.c.b16 %v2916, %v2912
    %v3253 = vpack.c.b16 %v2917, %v2913
    %v3254 = vpack.c.b16 %v2922, %v2918
    %v3255 = vpack.c.b16 %v2923, %v2919
    %v3256 = vpack.c.b16 %v2924, %v2920
    %v3257 = vpack.c.b16 %v2925, %v2921
    %v3258 = vpack.c.b16 %v2930, %v2926
    %v3259 = vpack.c.b16 %v2931, %v2927
    %v3260 = vpack.c.b16 %v2932, %v2928
    %v3261 = vpack.c.b16 %v2933, %v2929
    %v3262 = vpack.c.b16 %v2938, %v2934
    %v3263 = vpack.c.b16 %v2939, %v2935
    %v3264 = vpack.c.b16 %v2940, %v2936
    %v3265 = vpack.c.b16 %v2941, %v2937
    %v3266 = vpack.c.b16 %v2946, %v2942
    %v3267 = vpack.c.b16 %v2947, %v2943
    %v3268 = vpack.c.b16 %v2948, %v2944
    %v3269 = vpack.c.b16 %v2949, %v2945
    %v3270 = vpack.c.b16 %v2954, %v2950
    %v3271 = vpack.c.b16 %v2955, %v2951
    %v3272 = vpack.c.b16 %v2956, %v2952
    %v3273 = vpack.c.b16 %v2957, %v2953
    %v3274 = vpack.c.b16 %v2962, %v2958
    %v3275 = vpack.c.b16 %v2963, %v2959
    %v3276 = vpack.c.b16 %v2964, %v2960
    %v3277 = vpack.c.b16 %v2965, %v2961
    %v3278 = vpack.c.b16 %v2970, %v2966
    %v3279 = vpack.c.b16 %v2971, %v2967
    %v3280 = vpack.c.b16 %v2972, %v2968
    %v3281 = vpack.c.b16 %v2973, %v2969
    %v3282 = vpack.c.b16 %v2978, %v2974
    %v3283 = vpack.c.b16 %v2979, %v2975
    %v3284 = vpack.c.b16 %v2980, %v2976
    %v3285 = vpack.c.b16 %v2981, %v2977
    %v3286 = vpack.c.b16 %v2986, %v2982
    %v3287 = vpack.c.b16 %v2987, %v2983
    %v3288 = vpack.c.b16 %v2988, %v2984
    %v3289 = vpack.c.b16 %v2989, %v2985
    %v3290 = vpack.c.b16 %v2994, %v2990
    %v3291 = vpack.c.b16 %v2995, %v2991
    %v3292 = vpack.c.b16 %v2996, %v2992
    %v3293 = vpack.c.b16 %v2997, %v2993
    %v3294 = vpack.c.b16 %v3002, %v2998
    %v3295 = vpack.c.b16 %v3003, %v2999
    %v3296 = vpack.c.b16 %v3004, %v3000
    %v3297 = vpack.c.b16 %v3005, %v3001
    %v3298 = vpack.c.b16 %v3010, %v3006
    %v3299 = vpack.c.b16 %v3011, %v3007
    %v3300 = vpack.c.b16 %v3012, %v3008
    %v3301 = vpack.c.b16 %v3013, %v3009
    %v3302 = vpack.c.b16 %v3018, %v3014
    %v3303 = vpack.c.b16 %v3019, %v3015
    %v3304 = vpack.c.b16 %v3020, %v3016
    %v3305 = vpack.c.b16 %v3021, %v3017
    %v3306 = vpack.c.b16 %v3026, %v3022
    %v3307 = vpack.c.b16 %v3027, %v3023
    %v3308 = vpack.c.b16 %v3028, %v3024
    %v3309 = vpack.c.b16 %v3029, %v3025
    %v3310 = vpack.c.b16 %v3034, %v3030
    %v3311 = vpack.c.b16 %v3035, %v3031
    %v3312 = vpack.c.b16 %v3036, %v3032
    %v3313 = vpack.c.b16 %v3037, %v3033
    %v3314 = vpack.c.b16 %v3042, %v3038
    %v3315 = vpack.c.b16 %v3043, %v3039
    %v3316 = vpack.c.b16 %v3044, %v3040
    %v3317 = vpack.c.b16 %v3045, %v3041
    %v3318 = vpack.c.b16 %v3050, %v3046
    %v3319 = vpack.c.b16 %v3051, %v3047
    %v3320 = vpack.c.b16 %v3052, %v3048
    %v3321 = vpack.c.b16 %v3053, %v3049
    %v3322 = vpack.c.b16 %v3058, %v3054
    %v3323 = vpack.c.b16 %v3059, %v3055
    %v3324 = vpack.c.b16 %v3060, %v3056
    %v3325 = vpack.c.b16 %v3061, %v3057
    %v3326 = vpack.c.b16 %v3066, %v3062
    %v3327 = vpack.c.b16 %v3067, %v3063
    %v3328 = vpack.c.b16 %v3068, %v3064
    %v3329 = vpack.c.b16 %v3069, %v3065
    %v3330 = vpack.c.b16 %v3074, %v3070
    %v3331 = vpack.c.b16 %v3075, %v3071
    %v3332 = vpack.c.b16 %v3076, %v3072
    %v3333 = vpack.c.b16 %v3077, %v3073
    %3590 = vmatprep.subr.bf16.mxu0 %v3079
    %3591 = vmatpush1.bf16.msra.mxu0 %v3078
    %3592 = vmatprep.subr.bf16.mxu0 %v3083
    %3593 = vmatpush1.bf16.msra.mxu0 %v3082
    %3594 = vmatprep.subr.bf16.mxu0 %v3087
    %3595 = vmatpush1.bf16.msra.mxu0 %v3086
    %3596 = vmatprep.subr.bf16.mxu0 %v3091
    %3597 = vmatpush1.bf16.msra.mxu0 %v3090
    %3598 = vmatprep.subr.bf16.mxu0 %v3095
    %3599 = vmatpush1.bf16.msra.mxu0 %v3094
    %3600 = vmatprep.subr.bf16.mxu0 %v3099
    %3601 = vmatpush1.bf16.msra.mxu0 %v3098
    %3602 = vmatprep.subr.bf16.mxu0 %v3103
    %3603 = vmatpush1.bf16.msra.mxu0 %v3102
    %3604 = vmatprep.subr.bf16.mxu0 %v3107
    %3605 = vmatpush1.bf16.msra.mxu0 %v3106
    %3606 = vmatprep.subr.bf16.mxu0 %v3111
    %3607 = vmatpush1.bf16.msra.mxu0 %v3110
    %3608 = vmatprep.subr.bf16.mxu0 %v3115
    %3609 = vmatpush1.bf16.msra.mxu0 %v3114
    %3610 = vmatprep.subr.bf16.mxu0 %v3119
    %3611 = vmatpush1.bf16.msra.mxu0 %v3118
    %3612 = vmatprep.subr.bf16.mxu0 %v3123
    %3613 = vmatpush1.bf16.msra.mxu0 %v3122
    %3614 = vmatprep.subr.bf16.mxu0 %v3127
    %3615 = vmatpush1.bf16.msra.mxu0 %v3126
    %3616 = vmatprep.subr.bf16.mxu0 %v3131
    %3617 = vmatpush1.bf16.msra.mxu0 %v3130
    %3618 = vmatprep.subr.bf16.mxu0 %v3135
    %3619 = vmatpush1.bf16.msra.mxu0 %v3134
    %3620 = vmatprep.subr.bf16.mxu0 %v3139
    %3621 = vmatpush1.bf16.msra.mxu0 %v3138
    %3622 = vmatprep.mubr.bf16.mxu0 %v2007
    %3623 = vmatmul.mubr.bf16.gmra.mrb[0].mxu0 %v2006
    %v3624 = vpop.f32.mrb[0].mxu0
    %v3625 = vadd.f32 %v2293, %v3624
    %v3626 = vpop.f32.mrb[0].mxu0
    %v3627 = vadd.f32 %v2297, %v3626
    %v3628 = vpop.f32.mrb[0].mxu0
    %v3629 = vpop.f32.mrb[0].mxu0
    %3630 = vdwg.mxu0
    %3631 = vmatprep.subr.bf16.mxu0 %v3143
    %3632 = vmatpush1.bf16.msra.mxu0 %v3142
    %3633 = vmatprep.subr.bf16.mxu0 %v3147
    %3634 = vmatpush1.bf16.msra.mxu0 %v3146
    %3635 = vmatprep.subr.bf16.mxu0 %v3151
    %3636 = vmatpush1.bf16.msra.mxu0 %v3150
    %3637 = vmatprep.subr.bf16.mxu0 %v3155
    %3638 = vmatpush1.bf16.msra.mxu0 %v3154
    %3639 = vmatprep.subr.bf16.mxu0 %v3159
    %3640 = vmatpush1.bf16.msra.mxu0 %v3158
    %3641 = vmatprep.subr.bf16.mxu0 %v3163
    %3642 = vmatpush1.bf16.msra.mxu0 %v3162
    %3643 = vmatprep.subr.bf16.mxu0 %v3167
    %3644 = vmatpush1.bf16.msra.mxu0 %v3166
    %3645 = vmatprep.subr.bf16.mxu0 %v3171
    %3646 = vmatpush1.bf16.msra.mxu0 %v3170
    %3647 = vmatprep.subr.bf16.mxu0 %v3175
    %3648 = vmatpush1.bf16.msra.mxu0 %v3174
    %3649 = vmatprep.subr.bf16.mxu0 %v3179
    %3650 = vmatpush1.bf16.msra.mxu0 %v3178
    %3651 = vmatprep.subr.bf16.mxu0 %v3183
    %3652 = vmatpush1.bf16.msra.mxu0 %v3182
    %3653 = vmatprep.subr.bf16.mxu0 %v3187
    %3654 = vmatpush1.bf16.msra.mxu0 %v3186
    %3655 = vmatprep.subr.bf16.mxu0 %v3191
    %3656 = vmatpush1.bf16.msra.mxu0 %v3190
    %3657 = vmatprep.subr.bf16.mxu0 %v3195
    %3658 = vmatpush1.bf16.msra.mxu0 %v3194
    %3659 = vmatprep.subr.bf16.mxu0 %v3199
    %3660 = vmatpush1.bf16.msra.mxu0 %v3198
    %3661 = vmatprep.subr.bf16.mxu0 %v3203
    %3662 = vmatpush1.bf16.msra.mxu0 %v3202
    %3663 = vmatprep.mubr.bf16.mxu0 %v2009
    %3664 = vmatmul.mubr.bf16.gmra.mrb[0].mxu0 %v2008
    %v3665 = vpop.f32.mrb[0].mxu0
    %v3666 = vadd.f32 %v3625, %v3665
    %v3667 = vpop.f32.mrb[0].mxu0
    %v3668 = vadd.f32 %v3627, %v3667
    %v3669 = vpop.f32.mrb[0].mxu0
    %v3670 = vpop.f32.mrb[0].mxu0
    %3671 = vdwg.mxu0
    %3672 = vmatprep.subr.bf16.mxu0 %v3207
    %3673 = vmatpush1.bf16.msra.mxu0 %v3206
    %3674 = vmatprep.subr.bf16.mxu0 %v3211
    %3675 = vmatpush1.bf16.msra.mxu0 %v3210
    %3676 = vmatprep.subr.bf16.mxu0 %v3215
    %3677 = vmatpush1.bf16.msra.mxu0 %v3214
    %3678 = vmatprep.subr.bf16.mxu0 %v3219
    %3679 = vmatpush1.bf16.msra.mxu0 %v3218
    %3680 = vmatprep.subr.bf16.mxu0 %v3223
    %3681 = vmatpush1.bf16.msra.mxu0 %v3222
    %3682 = vmatprep.subr.bf16.mxu0 %v3227
    %3683 = vmatpush1.bf16.msra.mxu0 %v3226
    %3684 = vmatprep.subr.bf16.mxu0 %v3231
    %3685 = vmatpush1.bf16.msra.mxu0 %v3230
    %3686 = vmatprep.subr.bf16.mxu0 %v3235
    %3687 = vmatpush1.bf16.msra.mxu0 %v3234
    %3688 = vmatprep.subr.bf16.mxu0 %v3239
    %3689 = vmatpush1.bf16.msra.mxu0 %v3238
    %3690 = vmatprep.subr.bf16.mxu0 %v3243
    %3691 = vmatpush1.bf16.msra.mxu0 %v3242
    %3692 = vmatprep.subr.bf16.mxu0 %v3247
    %3693 = vmatpush1.bf16.msra.mxu0 %v3246
    %3694 = vmatprep.subr.bf16.mxu0 %v3251
    %3695 = vmatpush1.bf16.msra.mxu0 %v3250
    %3696 = vmatprep.subr.bf16.mxu0 %v3255
    %3697 = vmatpush1.bf16.msra.mxu0 %v3254
    %3698 = vmatprep.subr.bf16.mxu0 %v3259
    %3699 = vmatpush1.bf16.msra.mxu0 %v3258
    %3700 = vmatprep.subr.bf16.mxu0 %v3263
    %3701 = vmatpush1.bf16.msra.mxu0 %v3262
    %3702 = vmatprep.subr.bf16.mxu0 %v3267
    %3703 = vmatpush1.bf16.msra.mxu0 %v3266
    %3704 = vmatprep.mubr.bf16.mxu0 %v2011
    %3705 = vmatmul.mubr.bf16.gmra.mrb[0].mxu0 %v2010
    %v3706 = vpop.f32.mrb[0].mxu0
    %v3707 = vadd.f32 %v3666, %v3706
    %v3708 = vpop.f32.mrb[0].mxu0
    %v3709 = vadd.f32 %v3668, %v3708
    %v3710 = vpop.f32.mrb[0].mxu0
    %v3711 = vpop.f32.mrb[0].mxu0
    %3712 = vdwg.mxu0
    %3713 = vmatprep.subr.bf16.mxu0 %v3271
    %3714 = vmatpush1.bf16.msra.mxu0 %v3270
    %3715 = vmatprep.subr.bf16.mxu0 %v3275
    %3716 = vmatpush1.bf16.msra.mxu0 %v3274
    %3717 = vmatprep.subr.bf16.mxu0 %v3279
    %3718 = vmatpush1.bf16.msra.mxu0 %v3278
    %3719 = vmatprep.subr.bf16.mxu0 %v3283
    %3720 = vmatpush1.bf16.msra.mxu0 %v3282
    %3721 = vmatprep.subr.bf16.mxu0 %v3287
    %3722 = vmatpush1.bf16.msra.mxu0 %v3286
    %3723 = vmatprep.subr.bf16.mxu0 %v3291
    %3724 = vmatpush1.bf16.msra.mxu0 %v3290
    %3725 = vmatprep.subr.bf16.mxu0 %v3295
    %3726 = vmatpush1.bf16.msra.mxu0 %v3294
    %3727 = vmatprep.subr.bf16.mxu0 %v3299
    %3728 = vmatpush1.bf16.msra.mxu0 %v3298
    %3729 = vmatprep.subr.bf16.mxu0 %v3303
    %3730 = vmatpush1.bf16.msra.mxu0 %v3302
    %3731 = vmatprep.subr.bf16.mxu0 %v3307
    %3732 = vmatpush1.bf16.msra.mxu0 %v3306
    %3733 = vmatprep.subr.bf16.mxu0 %v3311
    %3734 = vmatpush1.bf16.msra.mxu0 %v3310
    %3735 = vmatprep.subr.bf16.mxu0 %v3315
    %3736 = vmatpush1.bf16.msra.mxu0 %v3314
    %3737 = vmatprep.subr.bf16.mxu0 %v3319
    %3738 = vmatpush1.bf16.msra.mxu0 %v3318
    %3739 = vmatprep.subr.bf16.mxu0 %v3323
    %3740 = vmatpush1.bf16.msra.mxu0 %v3322
    %3741 = vmatprep.subr.bf16.mxu0 %v3327
    %3742 = vmatpush1.bf16.msra.mxu0 %v3326
    %3743 = vmatprep.subr.bf16.mxu0 %v3331
    %3744 = vmatpush1.bf16.msra.mxu0 %v3330
    %3745 = vmatprep.mubr.bf16.mxu0 %v2013
    %3746 = vmatmul.mubr.bf16.gmra.mrb[0].mxu0 %v2012
    %v3747 = vpop.f32.mrb[0].mxu0
    %v3748 = vadd.f32 %v3707, %v3747
    %v3749 = vpop.f32.mrb[0].mxu0
    %v3750 = vadd.f32 %v3709, %v3749
    %v3751 = vpop.f32.mrb[0].mxu0
    %v3752 = vpop.f32.mrb[0].mxu0
    %3753 = vdwg.mxu0
    %3754 = vmatprep.subr.bf16.mxu0 %v3081
    %3755 = vmatpush1.bf16.msra.mxu0 %v3080
    %3756 = vmatprep.subr.bf16.mxu0 %v3085
    %3757 = vmatpush1.bf16.msra.mxu0 %v3084
    %3758 = vmatprep.subr.bf16.mxu0 %v3089
    %3759 = vmatpush1.bf16.msra.mxu0 %v3088
    %3760 = vmatprep.subr.bf16.mxu0 %v3093
    %3761 = vmatpush1.bf16.msra.mxu0 %v3092
    %3762 = vmatprep.subr.bf16.mxu0 %v3097
    %3763 = vmatpush1.bf16.msra.mxu0 %v3096
    %3764 = vmatprep.subr.bf16.mxu0 %v3101
    %3765 = vmatpush1.bf16.msra.mxu0 %v3100
    %3766 = vmatprep.subr.bf16.mxu0 %v3105
    %3767 = vmatpush1.bf16.msra.mxu0 %v3104
    %3768 = vmatprep.subr.bf16.mxu0 %v3109
    %3769 = vmatpush1.bf16.msra.mxu0 %v3108
    %3770 = vmatprep.subr.bf16.mxu0 %v3113
    %3771 = vmatpush1.bf16.msra.mxu0 %v3112
    %3772 = vmatprep.subr.bf16.mxu0 %v3117
    %3773 = vmatpush1.bf16.msra.mxu0 %v3116
    %3774 = vmatprep.subr.bf16.mxu0 %v3121
    %3775 = vmatpush1.bf16.msra.mxu0 %v3120
    %3776 = vmatprep.subr.bf16.mxu0 %v3125
    %3777 = vmatpush1.bf16.msra.mxu0 %v3124
    %3778 = vmatprep.subr.bf16.mxu0 %v3129
    %3779 = vmatpush1.bf16.msra.mxu0 %v3128
    %3780 = vmatprep.subr.bf16.mxu0 %v3133
    %3781 = vmatpush1.bf16.msra.mxu0 %v3132
    %3782 = vmatprep.subr.bf16.mxu0 %v3137
    %3783 = vmatpush1.bf16.msra.mxu0 %v3136
    %3784 = vmatprep.subr.bf16.mxu0 %v3141
    %3785 = vmatpush1.bf16.msra.mxu0 %v3140
    %3786 = vmatprep.mubr.bf16.mxu0 %v2007
    %3787 = vmatmul.mubr.bf16.gmra.mrb[0].mxu0 %v2006
    %v3788 = vpop.f32.mrb[0].mxu0
    %v3789 = vadd.f32 %v2301, %v3788
    %v3790 = vpop.f32.mrb[0].mxu0
    %v3791 = vadd.f32 %v2305, %v3790
    %v3792 = vpop.f32.mrb[0].mxu0
    %v3793 = vpop.f32.mrb[0].mxu0
    %3794 = vdwg.mxu0
    %3795 = vmatprep.subr.bf16.mxu0 %v3145
    %3796 = vmatpush1.bf16.msra.mxu0 %v3144
    %3797 = vmatprep.subr.bf16.mxu0 %v3149
    %3798 = vmatpush1.bf16.msra.mxu0 %v3148
    %3799 = vmatprep.subr.bf16.mxu0 %v3153
    %3800 = vmatpush1.bf16.msra.mxu0 %v3152
    %3801 = vmatprep.subr.bf16.mxu0 %v3157
    %3802 = vmatpush1.bf16.msra.mxu0 %v3156
    %3803 = vmatprep.subr.bf16.mxu0 %v3161
    %3804 = vmatpush1.bf16.msra.mxu0 %v3160
    %3805 = vmatprep.subr.bf16.mxu0 %v3165
    %3806 = vmatpush1.bf16.msra.mxu0 %v3164
    %3807 = vmatprep.subr.bf16.mxu0 %v3169
    %3808 = vmatpush1.bf16.msra.mxu0 %v3168
    %3809 = vmatprep.subr.bf16.mxu0 %v3173
    %3810 = vmatpush1.bf16.msra.mxu0 %v3172
    %3811 = vmatprep.subr.bf16.mxu0 %v3177
    %3812 = vmatpush1.bf16.msra.mxu0 %v3176
    %3813 = vmatprep.subr.bf16.mxu0 %v3181
    %3814 = vmatpush1.bf16.msra.mxu0 %v3180
    %3815 = vmatprep.subr.bf16.mxu0 %v3185
    %3816 = vmatpush1.bf16.msra.mxu0 %v3184
    %3817 = vmatprep.subr.bf16.mxu0 %v3189
    %3818 = vmatpush1.bf16.msra.mxu0 %v3188
    %3819 = vmatprep.subr.bf16.mxu0 %v3193
    %3820 = vmatpush1.bf16.msra.mxu0 %v3192
    %3821 = vmatprep.subr.bf16.mxu0 %v3197
    %3822 = vmatpush1.bf16.msra.mxu0 %v3196
    %3823 = vmatprep.subr.bf16.mxu0 %v3201
    %3824 = vmatpush1.bf16.msra.mxu0 %v3200
    %3825 = vmatprep.subr.bf16.mxu0 %v3205
    %3826 = vmatpush1.bf16.msra.mxu0 %v3204
    %3827 = vmatprep.mubr.bf16.mxu0 %v2009
    %3828 = vmatmul.mubr.bf16.gmra.mrb[0].mxu0 %v2008
    %v3829 = vpop.f32.mrb[0].mxu0
    %v3830 = vadd.f32 %v3789, %v3829
    %v3831 = vpop.f32.mrb[0].mxu0
    %v3832 = vadd.f32 %v3791, %v3831
    %v3833 = vpop.f32.mrb[0].mxu0
    %v3834 = vpop.f32.mrb[0].mxu0
    %3835 = vdwg.mxu0
    %3836 = vmatprep.subr.bf16.mxu0 %v3209
    %3837 = vmatpush1.bf16.msra.mxu0 %v3208
    %3838 = vmatprep.subr.bf16.mxu0 %v3213
    %3839 = vmatpush1.bf16.msra.mxu0 %v3212
    %3840 = vmatprep.subr.bf16.mxu0 %v3217
    %3841 = vmatpush1.bf16.msra.mxu0 %v3216
    %3842 = vmatprep.subr.bf16.mxu0 %v3221
    %3843 = vmatpush1.bf16.msra.mxu0 %v3220
    %3844 = vmatprep.subr.bf16.mxu0 %v3225
    %3845 = vmatpush1.bf16.msra.mxu0 %v3224
    %3846 = vmatprep.subr.bf16.mxu0 %v3229
    %3847 = vmatpush1.bf16.msra.mxu0 %v3228
    %3848 = vmatprep.subr.bf16.mxu0 %v3233
    %3849 = vmatpush1.bf16.msra.mxu0 %v3232
    %3850 = vmatprep.subr.bf16.mxu0 %v3237
    %3851 = vmatpush1.bf16.msra.mxu0 %v3236
    %3852 = vmatprep.subr.bf16.mxu0 %v3241
    %3853 = vmatpush1.bf16.msra.mxu0 %v3240
    %3854 = vmatprep.subr.bf16.mxu0 %v3245
    %3855 = vmatpush1.bf16.msra.mxu0 %v3244
    %3856 = vmatprep.subr.bf16.mxu0 %v3249
    %3857 = vmatpush1.bf16.msra.mxu0 %v3248
    %3858 = vmatprep.subr.bf16.mxu0 %v3253
    %3859 = vmatpush1.bf16.msra.mxu0 %v3252
    %3860 = vmatprep.subr.bf16.mxu0 %v3257
    %3861 = vmatpush1.bf16.msra.mxu0 %v3256
    %3862 = vmatprep.subr.bf16.mxu0 %v3261
    %3863 = vmatpush1.bf16.msra.mxu0 %v3260
    %3864 = vmatprep.subr.bf16.mxu0 %v3265
    %3865 = vmatpush1.bf16.msra.mxu0 %v3264
    %3866 = vmatprep.subr.bf16.mxu0 %v3269
    %3867 = vmatpush1.bf16.msra.mxu0 %v3268
    %3868 = vmatprep.mubr.bf16.mxu0 %v2011
    %3869 = vmatmul.mubr.bf16.gmra.mrb[0].mxu0 %v2010
    %v3870 = vpop.f32.mrb[0].mxu0
    %v3871 = vadd.f32 %v3830, %v3870
    %v3872 = vpop.f32.mrb[0].mxu0
    %v3873 = vadd.f32 %v3832, %v3872
    %v3874 = vpop.f32.mrb[0].mxu0
    %v3875 = vpop.f32.mrb[0].mxu0
    %3876 = vdwg.mxu0
    %3877 = vmatprep.subr.bf16.mxu0 %v3273
    %3878 = vmatpush1.bf16.msra.mxu0 %v3272
    %3879 = vmatprep.subr.bf16.mxu0 %v3277
    %3880 = vmatpush1.bf16.msra.mxu0 %v3276
    %3881 = vmatprep.subr.bf16.mxu0 %v3281
    %3882 = vmatpush1.bf16.msra.mxu0 %v3280
    %3883 = vmatprep.subr.bf16.mxu0 %v3285
    %3884 = vmatpush1.bf16.msra.mxu0 %v3284
    %3885 = vmatprep.subr.bf16.mxu0 %v3289
    %3886 = vmatpush1.bf16.msra.mxu0 %v3288
    %3887 = vmatprep.subr.bf16.mxu0 %v3293
    %3888 = vmatpush1.bf16.msra.mxu0 %v3292
    %3889 = vmatprep.subr.bf16.mxu0 %v3297
    %3890 = vmatpush1.bf16.msra.mxu0 %v3296
    %3891 = vmatprep.subr.bf16.mxu0 %v3301
    %3892 = vmatpush1.bf16.msra.mxu0 %v3300
    %3893 = vmatprep.subr.bf16.mxu0 %v3305
    %3894 = vmatpush1.bf16.msra.mxu0 %v3304
    %3895 = vmatprep.subr.bf16.mxu0 %v3309
    %3896 = vmatpush1.bf16.msra.mxu0 %v3308
    %3897 = vmatprep.subr.bf16.mxu0 %v3313
    %3898 = vmatpush1.bf16.msra.mxu0 %v3312
    %3899 = vmatprep.subr.bf16.mxu0 %v3317
    %3900 = vmatpush1.bf16.msra.mxu0 %v3316
    %3901 = vmatprep.subr.bf16.mxu0 %v3321
    %3902 = vmatpush1.bf16.msra.mxu0 %v3320
    %3903 = vmatprep.subr.bf16.mxu0 %v3325
    %3904 = vmatpush1.bf16.msra.mxu0 %v3324
    %3905 = vmatprep.subr.bf16.mxu0 %v3329
    %3906 = vmatpush1.bf16.msra.mxu0 %v3328
    %3907 = vmatprep.subr.bf16.mxu0 %v3333
    %3908 = vmatpush1.bf16.msra.mxu0 %v3332
    %3909 = vmatprep.mubr.bf16.mxu0 %v2013
    %3910 = vmatmul.mubr.bf16.gmra.mrb[0].mxu0 %v2012
    %v3911 = vpop.f32.mrb[0].mxu0
    %v3912 = vadd.f32 %v3871, %v3911
    %v3913 = vpop.f32.mrb[0].mxu0
    %v3914 = vadd.f32 %v3873, %v3913
    %v3915 = vpop.f32.mrb[0].mxu0
    %v3916 = vpop.f32.mrb[0].mxu0
    %3917 = vdwg.mxu0
    %v3918 = vmax.f32 %v3748, 0.0
    %v3919 = vmax.f32 %v3750, 0.0
    %v3920 = vmax.f32 %v3912, 0.0
    %v3921 = vmax.f32 %v3914, 0.0
    %v3922 = vpack.c.bf16 %v3918, %v3918
    %v3923 = vpack.c.bf16 %v3919, %v3919
    %v3924 = vpack.c.bf16 %v3920, %v3920
    %v3925 = vpack.c.bf16 %v3921, %v3921
    %v3926 = vld [vmem:[#allocation13] sm:$0xf]
    %v3927 = vld [vmem:[#allocation13 + $0x4] sm:$0xf]
    %v3928 = vld [vmem:[#allocation13 + $0x8] sm:$0xf]
    %v3929 = vld [vmem:[#allocation13 + $0xc] sm:$0xf]
    %v3930 = vld [vmem:[#allocation13 + $0x10] sm:$0xf]
    %v3931 = vld [vmem:[#allocation13 + $0x14] sm:$0xf]
    %v3932 = vld [vmem:[#allocation13 + $0x18] sm:$0xf]
    %v3933 = vld [vmem:[#allocation13 + $0x1c] sm:$0xf]
    %v3934 = vld [vmem:[#allocation13 + $0x20] sm:$0xf]
    %v3935 = vld [vmem:[#allocation13 + $0x24] sm:$0xf]
    %v3936 = vld [vmem:[#allocation13 + $0x28] sm:$0xf]
    %v3937 = vld [vmem:[#allocation13 + $0x2c] sm:$0xf]
    %v3938 = vld [vmem:[#allocation13 + $0x30] sm:$0xf]
    %v3939 = vld [vmem:[#allocation13 + $0x34] sm:$0xf]
    %v3940 = vld [vmem:[#allocation13 + $0x38] sm:$0xf]
    %v3941 = vld [vmem:[#allocation13 + $0x3c] sm:$0xf]
    %v3942 = vld [vmem:[#allocation13 + $0x40] sm:$0xf]
    %v3943 = vld [vmem:[#allocation13 + $0x44] sm:$0xf]
    %v3944 = vld [vmem:[#allocation13 + $0x48] sm:$0xf]
    %v3945 = vld [vmem:[#allocation13 + $0x4c] sm:$0xf]
    %v3946 = vld [vmem:[#allocation13 + $0x50] sm:$0xf]
    %v3947 = vld [vmem:[#allocation13 + $0x54] sm:$0xf]
    %v3948 = vld [vmem:[#allocation13 + $0x58] sm:$0xf]
    %v3949 = vld [vmem:[#allocation13 + $0x5c] sm:$0xf]
    %v3950 = vld [vmem:[#allocation13 + $0x60] sm:$0xf]
    %v3951 = vld [vmem:[#allocation13 + $0x64] sm:$0xf]
    %v3952 = vld [vmem:[#allocation13 + $0x68] sm:$0xf]
    %v3953 = vld [vmem:[#allocation13 + $0x6c] sm:$0xf]
    %v3954 = vld [vmem:[#allocation13 + $0x70] sm:$0xf]
    %v3955 = vld [vmem:[#allocation13 + $0x74] sm:$0xf]
    %v3956 = vld [vmem:[#allocation13 + $0x78] sm:$0xf]
    %v3957 = vld [vmem:[#allocation13 + $0x7c] sm:$0xf]
    %v3958 = vld [vmem:[#allocation13 + $0x80] sm:$0xf]
    %v3959 = vld [vmem:[#allocation13 + $0x84] sm:$0xf]
    %v3960 = vld [vmem:[#allocation13 + $0x88] sm:$0xf]
    %v3961 = vld [vmem:[#allocation13 + $0x8c] sm:$0xf]
    %v3962 = vld [vmem:[#allocation13 + $0x90] sm:$0xf]
    %v3963 = vld [vmem:[#allocation13 + $0x94] sm:$0xf]
    %v3964 = vld [vmem:[#allocation13 + $0x98] sm:$0xf]
    %v3965 = vld [vmem:[#allocation13 + $0x9c] sm:$0xf]
    %v3966 = vld [vmem:[#allocation13 + $0xa0] sm:$0xf]
    %v3967 = vld [vmem:[#allocation13 + $0xa4] sm:$0xf]
    %v3968 = vld [vmem:[#allocation13 + $0xa8] sm:$0xf]
    %v3969 = vld [vmem:[#allocation13 + $0xac] sm:$0xf]
    %v3970 = vld [vmem:[#allocation13 + $0xb0] sm:$0xf]
    %v3971 = vld [vmem:[#allocation13 + $0xb4] sm:$0xf]
    %v3972 = vld [vmem:[#allocation13 + $0xb8] sm:$0xf]
    %v3973 = vld [vmem:[#allocation13 + $0xbc] sm:$0xf]
    %v3974 = vld [vmem:[#allocation13 + $0xc0] sm:$0xf]
    %v3975 = vld [vmem:[#allocation13 + $0xc4] sm:$0xf]
    %v3976 = vld [vmem:[#allocation13 + $0xc8] sm:$0xf]
    %v3977 = vld [vmem:[#allocation13 + $0xcc] sm:$0xf]
    %v3978 = vld [vmem:[#allocation13 + $0xd0] sm:$0xf]
    %v3979 = vld [vmem:[#allocation13 + $0xd4] sm:$0xf]
    %v3980 = vld [vmem:[#allocation13 + $0xd8] sm:$0xf]
    %v3981 = vld [vmem:[#allocation13 + $0xdc] sm:$0xf]
    %v3982 = vld [vmem:[#allocation13 + $0xe0] sm:$0xf]
    %v3983 = vld [vmem:[#allocation13 + $0xe4] sm:$0xf]
    %v3984 = vld [vmem:[#allocation13 + $0xe8] sm:$0xf]
    %v3985 = vld [vmem:[#allocation13 + $0xec] sm:$0xf]
    %v3986 = vld [vmem:[#allocation13 + $0xf0] sm:$0xf]
    %v3987 = vld [vmem:[#allocation13 + $0xf4] sm:$0xf]
    %v3988 = vld [vmem:[#allocation13 + $0xf8] sm:$0xf]
    %v3989 = vld [vmem:[#allocation13 + $0xfc] sm:$0xf]
    %v3990 = vld [vmem:[#allocation14 + $0xe] sm:$0x1]
    %v3992 = vlaneseq
    %v3993 = vshrl.u32 %v3992, 7
    %v3994 = vsub.s32 0, %v3993
    %v3995 = vrot.slane %v3990, %v3994
    %v4061 = vunpack.c.l.b16 %v3926
    %v4062 = vunpack.c.l.b16 %v3927
    %v4063 = vunpack.c.l.b16 %v3928
    %v4064 = vunpack.c.l.b16 %v3929
    %v4065 = vunpack.c.l.b16 %v3930
    %v4066 = vunpack.c.l.b16 %v3931
    %v4067 = vunpack.c.l.b16 %v3932
    %v4068 = vunpack.c.l.b16 %v3933
    %v4069 = vunpack.c.l.b16 %v3934
    %v4070 = vunpack.c.l.b16 %v3935
    %v4071 = vunpack.c.l.b16 %v3936
    %v4072 = vunpack.c.l.b16 %v3937
    %v4073 = vunpack.c.l.b16 %v3938
    %v4074 = vunpack.c.l.b16 %v3939
    %v4075 = vunpack.c.l.b16 %v3940
    %v4076 = vunpack.c.l.b16 %v3941
    %v4077 = vunpack.c.l.b16 %v3942
    %v4078 = vunpack.c.l.b16 %v3943
    %v4079 = vunpack.c.l.b16 %v3944
    %v4080 = vunpack.c.l.b16 %v3945
    %v4081 = vunpack.c.l.b16 %v3946
    %v4082 = vunpack.c.l.b16 %v3947
    %v4083 = vunpack.c.l.b16 %v3948
    %v4084 = vunpack.c.l.b16 %v3949
    %v4085 = vunpack.c.l.b16 %v3950
    %v4086 = vunpack.c.l.b16 %v3951
    %v4087 = vunpack.c.l.b16 %v3952
    %v4088 = vunpack.c.l.b16 %v3953
    %v4089 = vunpack.c.l.b16 %v3954
    %v4090 = vunpack.c.l.b16 %v3955
    %v4091 = vunpack.c.l.b16 %v3956
    %v4092 = vunpack.c.l.b16 %v3957
    %v4093 = vunpack.c.l.b16 %v3958
    %v4094 = vunpack.c.l.b16 %v3959
    %v4095 = vunpack.c.l.b16 %v3960
    %v4096 = vunpack.c.l.b16 %v3961
    %v4097 = vunpack.c.l.b16 %v3962
    %v4098 = vunpack.c.l.b16 %v3963
    %v4099 = vunpack.c.l.b16 %v3964
    %v4100 = vunpack.c.l.b16 %v3965
    %v4101 = vunpack.c.l.b16 %v3966
    %v4102 = vunpack.c.l.b16 %v3967
    %v4103 = vunpack.c.l.b16 %v3968
    %v4104 = vunpack.c.l.b16 %v3969
    %v4105 = vunpack.c.l.b16 %v3970
    %v4106 = vunpack.c.l.b16 %v3971
    %v4107 = vunpack.c.l.b16 %v3972
    %v4108 = vunpack.c.l.b16 %v3973
    %v4109 = vunpack.c.l.b16 %v3974
    %v4110 = vunpack.c.l.b16 %v3975
    %v4111 = vunpack.c.l.b16 %v3976
    %v4112 = vunpack.c.l.b16 %v3977
    %v4113 = vunpack.c.l.b16 %v3978
    %v4114 = vunpack.c.l.b16 %v3979
    %v4115 = vunpack.c.l.b16 %v3980
    %v4116 = vunpack.c.l.b16 %v3981
    %v4117 = vunpack.c.l.b16 %v3982
    %v4118 = vunpack.c.l.b16 %v3983
    %v4119 = vunpack.c.l.b16 %v3984
    %v4120 = vunpack.c.l.b16 %v3985
    %v4121 = vunpack.c.l.b16 %v3986
    %v4122 = vunpack.c.l.b16 %v3987
    %v4123 = vunpack.c.l.b16 %v3988
    %v4124 = vunpack.c.l.b16 %v3989
    %v4125 = vpack.c.b16 %v4062, %v4061
    %v4126 = vpack.c.b16 %v4064, %v4063
    %v4127 = vpack.c.b16 %v4066, %v4065
    %v4128 = vpack.c.b16 %v4068, %v4067
    %v4129 = vpack.c.b16 %v4070, %v4069
    %v4130 = vpack.c.b16 %v4072, %v4071
    %v4131 = vpack.c.b16 %v4074, %v4073
    %v4132 = vpack.c.b16 %v4076, %v4075
    %v4133 = vpack.c.b16 %v4078, %v4077
    %v4134 = vpack.c.b16 %v4080, %v4079
    %v4135 = vpack.c.b16 %v4082, %v4081
    %v4136 = vpack.c.b16 %v4084, %v4083
    %v4137 = vpack.c.b16 %v4086, %v4085
    %v4138 = vpack.c.b16 %v4088, %v4087
    %v4139 = vpack.c.b16 %v4090, %v4089
    %v4140 = vpack.c.b16 %v4092, %v4091
    %v4141 = vpack.c.b16 %v4094, %v4093
    %v4142 = vpack.c.b16 %v4096, %v4095
    %v4143 = vpack.c.b16 %v4098, %v4097
    %v4144 = vpack.c.b16 %v4100, %v4099
    %v4145 = vpack.c.b16 %v4102, %v4101
    %v4146 = vpack.c.b16 %v4104, %v4103
    %v4147 = vpack.c.b16 %v4106, %v4105
    %v4148 = vpack.c.b16 %v4108, %v4107
    %v4149 = vpack.c.b16 %v4110, %v4109
    %v4150 = vpack.c.b16 %v4112, %v4111
    %v4151 = vpack.c.b16 %v4114, %v4113
    %v4152 = vpack.c.b16 %v4116, %v4115
    %v4153 = vpack.c.b16 %v4118, %v4117
    %v4154 = vpack.c.b16 %v4120, %v4119
    %v4155 = vpack.c.b16 %v4122, %v4121
    %v4156 = vpack.c.b16 %v4124, %v4123
    %4189 = vmatprep.subr.bf16.mxu0 0
    %4190 = vmatpush1.bf16.msra.mxu0 %v4125
    %4191 = vmatprep.subr.bf16.mxu0 0
    %4192 = vmatpush1.bf16.msra.mxu0 %v4126
    %4193 = vmatprep.subr.bf16.mxu0 0
    %4194 = vmatpush1.bf16.msra.mxu0 %v4127
    %4195 = vmatprep.subr.bf16.mxu0 0
    %4196 = vmatpush1.bf16.msra.mxu0 %v4128
    %4197 = vmatprep.subr.bf16.mxu0 0
    %4198 = vmatpush1.bf16.msra.mxu0 %v4129
    %4199 = vmatprep.subr.bf16.mxu0 0
    %4200 = vmatpush1.bf16.msra.mxu0 %v4130
    %4201 = vmatprep.subr.bf16.mxu0 0
    %4202 = vmatpush1.bf16.msra.mxu0 %v4131
    %4203 = vmatprep.subr.bf16.mxu0 0
    %4204 = vmatpush1.bf16.msra.mxu0 %v4132
    %4205 = vmatprep.subr.bf16.mxu0 0
    %4206 = vmatpush1.bf16.msra.mxu0 %v4133
    %4207 = vmatprep.subr.bf16.mxu0 0
    %4208 = vmatpush1.bf16.msra.mxu0 %v4134
    %4209 = vmatprep.subr.bf16.mxu0 0
    %4210 = vmatpush1.bf16.msra.mxu0 %v4135
    %4211 = vmatprep.subr.bf16.mxu0 0
    %4212 = vmatpush1.bf16.msra.mxu0 %v4136
    %4213 = vmatprep.subr.bf16.mxu0 0
    %4214 = vmatpush1.bf16.msra.mxu0 %v4137
    %4215 = vmatprep.subr.bf16.mxu0 0
    %4216 = vmatpush1.bf16.msra.mxu0 %v4138
    %4217 = vmatprep.subr.bf16.mxu0 0
    %4218 = vmatpush1.bf16.msra.mxu0 %v4139
    %4219 = vmatprep.subr.bf16.mxu0 0
    %4220 = vmatpush1.bf16.msra.mxu0 %v4140
    %4221 = vmatprep.mubr.bf16.mxu0 %v3923
    %4222 = vmatmul.mubr.bf16.gmra.mrb[0].mxu0 %v3922
    %v4223 = vpop.f32.mrb[0].mxu0
    %v4224 = vadd.f32 %v3995, %v4223
    %v4225 = vpop.f32.mrb[0].mxu0
    %v4226 = vpop.f32.mrb[0].mxu0
    %v4227 = vpop.f32.mrb[0].mxu0
    %4228 = vdwg.mxu0
    %4229 = vmatprep.subr.bf16.mxu0 0
    %4230 = vmatpush1.bf16.msra.mxu0 %v4141
    %4231 = vmatprep.subr.bf16.mxu0 0
    %4232 = vmatpush1.bf16.msra.mxu0 %v4142
    %4233 = vmatprep.subr.bf16.mxu0 0
    %4234 = vmatpush1.bf16.msra.mxu0 %v4143
    %4235 = vmatprep.subr.bf16.mxu0 0
    %4236 = vmatpush1.bf16.msra.mxu0 %v4144
    %4237 = vmatprep.subr.bf16.mxu0 0
    %4238 = vmatpush1.bf16.msra.mxu0 %v4145
    %4239 = vmatprep.subr.bf16.mxu0 0
    %4240 = vmatpush1.bf16.msra.mxu0 %v4146
    %4241 = vmatprep.subr.bf16.mxu0 0
    %4242 = vmatpush1.bf16.msra.mxu0 %v4147
    %4243 = vmatprep.subr.bf16.mxu0 0
    %4244 = vmatpush1.bf16.msra.mxu0 %v4148
    %4245 = vmatprep.subr.bf16.mxu0 0
    %4246 = vmatpush1.bf16.msra.mxu0 %v4149
    %4247 = vmatprep.subr.bf16.mxu0 0
    %4248 = vmatpush1.bf16.msra.mxu0 %v4150
    %4249 = vmatprep.subr.bf16.mxu0 0
    %4250 = vmatpush1.bf16.msra.mxu0 %v4151
    %4251 = vmatprep.subr.bf16.mxu0 0
    %4252 = vmatpush1.bf16.msra.mxu0 %v4152
    %4253 = vmatprep.subr.bf16.mxu0 0
    %4254 = vmatpush1.bf16.msra.mxu0 %v4153
    %4255 = vmatprep.subr.bf16.mxu0 0
    %4256 = vmatpush1.bf16.msra.mxu0 %v4154
    %4257 = vmatprep.subr.bf16.mxu0 0
    %4258 = vmatpush1.bf16.msra.mxu0 %v4155
    %4259 = vmatprep.subr.bf16.mxu0 0
    %4260 = vmatpush1.bf16.msra.mxu0 %v4156
    %4261 = vmatprep.mubr.bf16.mxu0 %v3925
    %4262 = vmatmul.mubr.bf16.gmra.mrb[0].mxu0 %v3924
    %v4263 = vpop.f32.mrb[0].mxu0
    %v4264 = vadd.f32 %v4224, %v4263
    %v4265 = vpop.f32.mrb[0].mxu0
    %v4266 = vpop.f32.mrb[0].mxu0
    %v4267 = vpop.f32.mrb[0].mxu0
    %4268 = vdwg.mxu0
    %v4269 = vpack.c.bf16 %v4264, %v4264
    %v4270 = vld [vmem:[#allocation8 + $0x400] sm:$0xff]
    %v4271 = vld [vmem:[#allocation8 + $0x408] sm:$0xff]
    %v4272 = vld [vmem:[#allocation8 + $0x410] sm:$0xff]
    %v4273 = vld [vmem:[#allocation8 + $0x418] sm:$0xff]
    %v4274 = vld [vmem:[#allocation8 + $0x420] sm:$0xff]
    %v4275 = vld [vmem:[#allocation8 + $0x428] sm:$0xff]
    %v4276 = vld [vmem:[#allocation8 + $0x430] sm:$0xff]
    %v4277 = vld [vmem:[#allocation8 + $0x438] sm:$0xff]
    %v4278 = vld [vmem:[#allocation8 + $0x440] sm:$0xff]
    %v4279 = vld [vmem:[#allocation8 + $0x448] sm:$0xff]
    %v4280 = vld [vmem:[#allocation8 + $0x450] sm:$0xff]
    %v4281 = vld [vmem:[#allocation8 + $0x458] sm:$0xff]
    %v4282 = vld [vmem:[#allocation8 + $0x460] sm:$0xff]
    %v4283 = vld [vmem:[#allocation8 + $0x468] sm:$0xff]
    %v4284 = vld [vmem:[#allocation8 + $0x470] sm:$0xff]
    %v4285 = vld [vmem:[#allocation8 + $0x478] sm:$0xff]
    %v4286 = vld [vmem:[#allocation8 + $0x480] sm:$0xff]
    %v4287 = vld [vmem:[#allocation8 + $0x488] sm:$0xff]
    %v4288 = vld [vmem:[#allocation8 + $0x490] sm:$0xff]
    %v4289 = vld [vmem:[#allocation8 + $0x498] sm:$0xff]
    %v4290 = vld [vmem:[#allocation8 + $0x4a0] sm:$0xff]
    %v4291 = vld [vmem:[#allocation8 + $0x4a8] sm:$0xff]
    %v4292 = vld [vmem:[#allocation8 + $0x4b0] sm:$0xff]
    %v4293 = vld [vmem:[#allocation8 + $0x4b8] sm:$0xff]
    %v4294 = vld [vmem:[#allocation8 + $0x4c0] sm:$0xff]
    %v4295 = vld [vmem:[#allocation8 + $0x4c8] sm:$0xff]
    %v4296 = vld [vmem:[#allocation8 + $0x4d0] sm:$0xff]
    %v4297 = vld [vmem:[#allocation8 + $0x4d8] sm:$0xff]
    %v4298 = vld [vmem:[#allocation8 + $0x4e0] sm:$0xff]
    %v4299 = vld [vmem:[#allocation8 + $0x4e8] sm:$0xff]
    %v4300 = vld [vmem:[#allocation8 + $0x4f0] sm:$0xff]
    %v4301 = vld [vmem:[#allocation8 + $0x4f8] sm:$0xff]
    %v4302 = vld [vmem:[#allocation8 + $0x500] sm:$0xff]
    %v4303 = vld [vmem:[#allocation8 + $0x508] sm:$0xff]
    %v4304 = vld [vmem:[#allocation8 + $0x510] sm:$0xff]
    %v4305 = vld [vmem:[#allocation8 + $0x518] sm:$0xff]
    %v4306 = vld [vmem:[#allocation8 + $0x520] sm:$0xff]
    %v4307 = vld [vmem:[#allocation8 + $0x528] sm:$0xff]
    %v4308 = vld [vmem:[#allocation8 + $0x530] sm:$0xff]
    %v4309 = vld [vmem:[#allocation8 + $0x538] sm:$0xff]
    %v4310 = vld [vmem:[#allocation8 + $0x540] sm:$0xff]
    %v4311 = vld [vmem:[#allocation8 + $0x548] sm:$0xff]
    %v4312 = vld [vmem:[#allocation8 + $0x550] sm:$0xff]
    %v4313 = vld [vmem:[#allocation8 + $0x558] sm:$0xff]
    %v4314 = vld [vmem:[#allocation8 + $0x560] sm:$0xff]
    %v4315 = vld [vmem:[#allocation8 + $0x568] sm:$0xff]
    %v4316 = vld [vmem:[#allocation8 + $0x570] sm:$0xff]
    %v4317 = vld [vmem:[#allocation8 + $0x578] sm:$0xff]
    %v4318 = vld [vmem:[#allocation8 + $0x580] sm:$0xff]
    %v4319 = vld [vmem:[#allocation8 + $0x588] sm:$0xff]
    %v4320 = vld [vmem:[#allocation8 + $0x590] sm:$0xff]
    %v4321 = vld [vmem:[#allocation8 + $0x598] sm:$0xff]
    %v4322 = vld [vmem:[#allocation8 + $0x5a0] sm:$0xff]
    %v4323 = vld [vmem:[#allocation8 + $0x5a8] sm:$0xff]
    %v4324 = vld [vmem:[#allocation8 + $0x5b0] sm:$0xff]
    %v4325 = vld [vmem:[#allocation8 + $0x5b8] sm:$0xff]
    %v4326 = vld [vmem:[#allocation8 + $0x5c0] sm:$0xff]
    %v4327 = vld [vmem:[#allocation8 + $0x5c8] sm:$0xff]
    %v4328 = vld [vmem:[#allocation8 + $0x5d0] sm:$0xff]
    %v4329 = vld [vmem:[#allocation8 + $0x5d8] sm:$0xff]
    %v4330 = vld [vmem:[#allocation8 + $0x5e0] sm:$0xff]
    %v4331 = vld [vmem:[#allocation8 + $0x5e8] sm:$0xff]
    %v4332 = vld [vmem:[#allocation8 + $0x5f0] sm:$0xff]
    %v4333 = vld [vmem:[#allocation8 + $0x5f8] sm:$0xff]
    %v4398 = vunpack.c.l.b16 %v4270
    %v4399 = vunpack.c.h.b16 %v4270
    %v4400 = vunpack.c.l.b16 %v4271
    %v4401 = vunpack.c.h.b16 %v4271
    %v4402 = vunpack.c.l.b16 %v4272
    %v4403 = vunpack.c.h.b16 %v4272
    %v4404 = vunpack.c.l.b16 %v4273
    %v4405 = vunpack.c.h.b16 %v4273
    %v4406 = vunpack.c.l.b16 %v4274
    %v4407 = vunpack.c.h.b16 %v4274
    %v4408 = vunpack.c.l.b16 %v4275
    %v4409 = vunpack.c.h.b16 %v4275
    %v4410 = vunpack.c.l.b16 %v4276
    %v4411 = vunpack.c.h.b16 %v4276
    %v4412 = vunpack.c.l.b16 %v4277
    %v4413 = vunpack.c.h.b16 %v4277
    %v4414 = vunpack.c.l.b16 %v4278
    %v4415 = vunpack.c.h.b16 %v4278
    %v4416 = vunpack.c.l.b16 %v4279
    %v4417 = vunpack.c.h.b16 %v4279
    %v4418 = vunpack.c.l.b16 %v4280
    %v4419 = vunpack.c.h.b16 %v4280
    %v4420 = vunpack.c.l.b16 %v4281
    %v4421 = vunpack.c.h.b16 %v4281
    %v4422 = vunpack.c.l.b16 %v4282
    %v4423 = vunpack.c.h.b16 %v4282
    %v4424 = vunpack.c.l.b16 %v4283
    %v4425 = vunpack.c.h.b16 %v4283
    %v4426 = vunpack.c.l.b16 %v4284
    %v4427 = vunpack.c.h.b16 %v4284
    %v4428 = vunpack.c.l.b16 %v4285
    %v4429 = vunpack.c.h.b16 %v4285
    %v4430 = vunpack.c.l.b16 %v4286
    %v4431 = vunpack.c.h.b16 %v4286
    %v4432 = vunpack.c.l.b16 %v4287
    %v4433 = vunpack.c.h.b16 %v4287
    %v4434 = vunpack.c.l.b16 %v4288
    %v4435 = vunpack.c.h.b16 %v4288
    %v4436 = vunpack.c.l.b16 %v4289
    %v4437 = vunpack.c.h.b16 %v4289
    %v4438 = vunpack.c.l.b16 %v4290
    %v4439 = vunpack.c.h.b16 %v4290
    %v4440 = vunpack.c.l.b16 %v4291
    %v4441 = vunpack.c.h.b16 %v4291
    %v4442 = vunpack.c.l.b16 %v4292
    %v4443 = vunpack.c.h.b16 %v4292
    %v4444 = vunpack.c.l.b16 %v4293
    %v4445 = vunpack.c.h.b16 %v4293
    %v4446 = vunpack.c.l.b16 %v4294
    %v4447 = vunpack.c.h.b16 %v4294
    %v4448 = vunpack.c.l.b16 %v4295
    %v4449 = vunpack.c.h.b16 %v4295
    %v4450 = vunpack.c.l.b16 %v4296
    %v4451 = vunpack.c.h.b16 %v4296
    %v4452 = vunpack.c.l.b16 %v4297
    %v4453 = vunpack.c.h.b16 %v4297
    %v4454 = vunpack.c.l.b16 %v4298
    %v4455 = vunpack.c.h.b16 %v4298
    %v4456 = vunpack.c.l.b16 %v4299
    %v4457 = vunpack.c.h.b16 %v4299
    %v4458 = vunpack.c.l.b16 %v4300
    %v4459 = vunpack.c.h.b16 %v4300
    %v4460 = vunpack.c.l.b16 %v4301
    %v4461 = vunpack.c.h.b16 %v4301
    %v4462 = vunpack.c.l.b16 %v4302
    %v4463 = vunpack.c.h.b16 %v4302
    %v4464 = vunpack.c.l.b16 %v4303
    %v4465 = vunpack.c.h.b16 %v4303
    %v4466 = vunpack.c.l.b16 %v4304
    %v4467 = vunpack.c.h.b16 %v4304
    %v4468 = vunpack.c.l.b16 %v4305
    %v4469 = vunpack.c.h.b16 %v4305
    %v4470 = vunpack.c.l.b16 %v4306
    %v4471 = vunpack.c.h.b16 %v4306
    %v4472 = vunpack.c.l.b16 %v4307
    %v4473 = vunpack.c.h.b16 %v4307
    %v4474 = vunpack.c.l.b16 %v4308
    %v4475 = vunpack.c.h.b16 %v4308
    %v4476 = vunpack.c.l.b16 %v4309
    %v4477 = vunpack.c.h.b16 %v4309
    %v4478 = vunpack.c.l.b16 %v4310
    %v4479 = vunpack.c.h.b16 %v4310
    %v4480 = vunpack.c.l.b16 %v4311
    %v4481 = vunpack.c.h.b16 %v4311
    %v4482 = vunpack.c.l.b16 %v4312
    %v4483 = vunpack.c.h.b16 %v4312
    %v4484 = vunpack.c.l.b16 %v4313
    %v4485 = vunpack.c.h.b16 %v4313
    %v4486 = vunpack.c.l.b16 %v4314
    %v4487 = vunpack.c.h.b16 %v4314
    %v4488 = vunpack.c.l.b16 %v4315
    %v4489 = vunpack.c.h.b16 %v4315
    %v4490 = vunpack.c.l.b16 %v4316
    %v4491 = vunpack.c.h.b16 %v4316
    %v4492 = vunpack.c.l.b16 %v4317
    %v4493 = vunpack.c.h.b16 %v4317
    %v4494 = vunpack.c.l.b16 %v4318
    %v4495 = vunpack.c.h.b16 %v4318
    %v4496 = vunpack.c.l.b16 %v4319
    %v4497 = vunpack.c.h.b16 %v4319
    %v4498 = vunpack.c.l.b16 %v4320
    %v4499 = vunpack.c.h.b16 %v4320
    %v4500 = vunpack.c.l.b16 %v4321
    %v4501 = vunpack.c.h.b16 %v4321
    %v4502 = vunpack.c.l.b16 %v4322
    %v4503 = vunpack.c.h.b16 %v4322
    %v4504 = vunpack.c.l.b16 %v4323
    %v4505 = vunpack.c.h.b16 %v4323
    %v4506 = vunpack.c.l.b16 %v4324
    %v4507 = vunpack.c.h.b16 %v4324
    %v4508 = vunpack.c.l.b16 %v4325
    %v4509 = vunpack.c.h.b16 %v4325
    %v4510 = vunpack.c.l.b16 %v4326
    %v4511 = vunpack.c.h.b16 %v4326
    %v4512 = vunpack.c.l.b16 %v4327
    %v4513 = vunpack.c.h.b16 %v4327
    %v4514 = vunpack.c.l.b16 %v4328
    %v4515 = vunpack.c.h.b16 %v4328
    %v4516 = vunpack.c.l.b16 %v4329
    %v4517 = vunpack.c.h.b16 %v4329
    %v4518 = vunpack.c.l.b16 %v4330
    %v4519 = vunpack.c.h.b16 %v4330
    %v4520 = vunpack.c.l.b16 %v4331
    %v4521 = vunpack.c.h.b16 %v4331
    %v4522 = vunpack.c.l.b16 %v4332
    %v4523 = vunpack.c.h.b16 %v4332
    %v4524 = vunpack.c.l.b16 %v4333
    %v4525 = vunpack.c.h.b16 %v4333
    %v4526 = vpack.c.b16 %v4406, %v4398
    %v4527 = vpack.c.b16 %v4407, %v4399
    %v4528 = vpack.c.b16 %v4408, %v4400
    %v4529 = vpack.c.b16 %v4409, %v4401
    %v4530 = vpack.c.b16 %v4410, %v4402
    %v4531 = vpack.c.b16 %v4411, %v4403
    %v4532 = vpack.c.b16 %v4412, %v4404
    %v4533 = vpack.c.b16 %v4413, %v4405
    %v4534 = vpack.c.b16 %v4422, %v4414
    %v4535 = vpack.c.b16 %v4423, %v4415
    %v4536 = vpack.c.b16 %v4424, %v4416
    %v4537 = vpack.c.b16 %v4425, %v4417
    %v4538 = vpack.c.b16 %v4426, %v4418
    %v4539 = vpack.c.b16 %v4427, %v4419
    %v4540 = vpack.c.b16 %v4428, %v4420
    %v4541 = vpack.c.b16 %v4429, %v4421
    %v4542 = vpack.c.b16 %v4438, %v4430
    %v4543 = vpack.c.b16 %v4439, %v4431
    %v4544 = vpack.c.b16 %v4440, %v4432
    %v4545 = vpack.c.b16 %v4441, %v4433
    %v4546 = vpack.c.b16 %v4442, %v4434
    %v4547 = vpack.c.b16 %v4443, %v4435
    %v4548 = vpack.c.b16 %v4444, %v4436
    %v4549 = vpack.c.b16 %v4445, %v4437
    %v4550 = vpack.c.b16 %v4454, %v4446
    %v4551 = vpack.c.b16 %v4455, %v4447
    %v4552 = vpack.c.b16 %v4456, %v4448
    %v4553 = vpack.c.b16 %v4457, %v4449
    %v4554 = vpack.c.b16 %v4458, %v4450
    %v4555 = vpack.c.b16 %v4459, %v4451
    %v4556 = vpack.c.b16 %v4460, %v4452
    %v4557 = vpack.c.b16 %v4461, %v4453
    %v4558 = vpack.c.b16 %v4470, %v4462
    %v4559 = vpack.c.b16 %v4471, %v4463
    %v4560 = vpack.c.b16 %v4472, %v4464
    %v4561 = vpack.c.b16 %v4473, %v4465
    %v4562 = vpack.c.b16 %v4474, %v4466
    %v4563 = vpack.c.b16 %v4475, %v4467
    %v4564 = vpack.c.b16 %v4476, %v4468
    %v4565 = vpack.c.b16 %v4477, %v4469
    %v4566 = vpack.c.b16 %v4486, %v4478
    %v4567 = vpack.c.b16 %v4487, %v4479
    %v4568 = vpack.c.b16 %v4488, %v4480
    %v4569 = vpack.c.b16 %v4489, %v4481
    %v4570 = vpack.c.b16 %v4490, %v4482
    %v4571 = vpack.c.b16 %v4491, %v4483
    %v4572 = vpack.c.b16 %v4492, %v4484
    %v4573 = vpack.c.b16 %v4493, %v4485
    %v4574 = vpack.c.b16 %v4502, %v4494
    %v4575 = vpack.c.b16 %v4503, %v4495
    %v4576 = vpack.c.b16 %v4504, %v4496
    %v4577 = vpack.c.b16 %v4505, %v4497
    %v4578 = vpack.c.b16 %v4506, %v4498
    %v4579 = vpack.c.b16 %v4507, %v4499
    %v4580 = vpack.c.b16 %v4508, %v4500
    %v4581 = vpack.c.b16 %v4509, %v4501
    %v4582 = vpack.c.b16 %v4518, %v4510
    %v4583 = vpack.c.b16 %v4519, %v4511
    %v4584 = vpack.c.b16 %v4520, %v4512
    %v4585 = vpack.c.b16 %v4521, %v4513
    %v4586 = vpack.c.b16 %v4522, %v4514
    %v4587 = vpack.c.b16 %v4523, %v4515
    %v4588 = vpack.c.b16 %v4524, %v4516
    %v4589 = vpack.c.b16 %v4525, %v4517
    %4654 = vmatprep.subr.bf16.mxu0 %v4527
    %4655 = vmatpush1.bf16.msra.mxu0 %v4526
    %4656 = vmatprep.subr.bf16.mxu0 %v4535
    %4657 = vmatpush1.bf16.msra.mxu0 %v4534
    %4658 = vmatprep.subr.bf16.mxu0 %v4543
    %4659 = vmatpush1.bf16.msra.mxu0 %v4542
    %4660 = vmatprep.subr.bf16.mxu0 %v4551
    %4661 = vmatpush1.bf16.msra.mxu0 %v4550
    %4662 = vmatprep.subr.bf16.mxu0 %v4559
    %4663 = vmatpush1.bf16.msra.mxu0 %v4558
    %4664 = vmatprep.subr.bf16.mxu0 %v4567
    %4665 = vmatpush1.bf16.msra.mxu0 %v4566
    %4666 = vmatprep.subr.bf16.mxu0 %v4575
    %4667 = vmatpush1.bf16.msra.mxu0 %v4574
    %4668 = vmatprep.subr.bf16.mxu0 %v4583
    %4669 = vmatpush1.bf16.msra.mxu0 %v4582
    %4670 = vmatprep.subr.bf16.mxu0 0
    %4671 = vmatpush1.bf16.msra.mxu0 0
    %4672 = vmatprep.subr.bf16.mxu0 0
    %4673 = vmatpush1.bf16.msra.mxu0 0
    %4674 = vmatprep.subr.bf16.mxu0 0
    %4675 = vmatpush1.bf16.msra.mxu0 0
    %4676 = vmatprep.subr.bf16.mxu0 0
    %4677 = vmatpush1.bf16.msra.mxu0 0
    %4678 = vmatprep.subr.bf16.mxu0 0
    %4679 = vmatpush1.bf16.msra.mxu0 0
    %4680 = vmatprep.subr.bf16.mxu0 0
    %4681 = vmatpush1.bf16.msra.mxu0 0
    %4682 = vmatprep.subr.bf16.mxu0 0
    %4683 = vmatpush1.bf16.msra.mxu0 0
    %4684 = vmatprep.subr.bf16.mxu0 0
    %4685 = vmatpush1.bf16.msra.mxu0 0
    %4686 = vmatprep.mubr.bf16.mxu0 0
    %4687 = vmatmul.mubr.bf16.gmra.mrb[0].mxu0 %v4269
    %v4688 = vpop.f32.mrb[0].mxu0
    %v4689 = vadd.f32 0.0, %v4688
    %v4690 = vpop.f32.mrb[0].mxu0
    %v4691 = vadd.f32 0.0, %v4690
    %v4692 = vpop.f32.mrb[0].mxu0
    %v4693 = vpop.f32.mrb[0].mxu0
    %4694 = vdwg.mxu0
    %4695 = vmatprep.subr.bf16.mxu0 %v4529
    %4696 = vmatpush1.bf16.msra.mxu0 %v4528
    %4697 = vmatprep.subr.bf16.mxu0 %v4537
    %4698 = vmatpush1.bf16.msra.mxu0 %v4536
    %4699 = vmatprep.subr.bf16.mxu0 %v4545
    %4700 = vmatpush1.bf16.msra.mxu0 %v4544
    %4701 = vmatprep.subr.bf16.mxu0 %v4553
    %4702 = vmatpush1.bf16.msra.mxu0 %v4552
    %4703 = vmatprep.subr.bf16.mxu0 %v4561
    %4704 = vmatpush1.bf16.msra.mxu0 %v4560
    %4705 = vmatprep.subr.bf16.mxu0 %v4569
    %4706 = vmatpush1.bf16.msra.mxu0 %v4568
    %4707 = vmatprep.subr.bf16.mxu0 %v4577
    %4708 = vmatpush1.bf16.msra.mxu0 %v4576
    %4709 = vmatprep.subr.bf16.mxu0 %v4585
    %4710 = vmatpush1.bf16.msra.mxu0 %v4584
    %4711 = vmatprep.subr.bf16.mxu0 0
    %4712 = vmatpush1.bf16.msra.mxu0 0
    %4713 = vmatprep.subr.bf16.mxu0 0
    %4714 = vmatpush1.bf16.msra.mxu0 0
    %4715 = vmatprep.subr.bf16.mxu0 0
    %4716 = vmatpush1.bf16.msra.mxu0 0
    %4717 = vmatprep.subr.bf16.mxu0 0
    %4718 = vmatpush1.bf16.msra.mxu0 0
    %4719 = vmatprep.subr.bf16.mxu0 0
    %4720 = vmatpush1.bf16.msra.mxu0 0
    %4721 = vmatprep.subr.bf16.mxu0 0
    %4722 = vmatpush1.bf16.msra.mxu0 0
    %4723 = vmatprep.subr.bf16.mxu0 0
    %4724 = vmatpush1.bf16.msra.mxu0 0
    %4725 = vmatprep.subr.bf16.mxu0 0
    %4726 = vmatpush1.bf16.msra.mxu0 0
    %4727 = vmatprep.mubr.bf16.mxu0 0
    %4728 = vmatmul.mubr.bf16.gmra.mrb[0].mxu0 %v4269
    %v4729 = vpop.f32.mrb[0].mxu0
    %v4730 = vadd.f32 0.0, %v4729
    %v4731 = vpop.f32.mrb[0].mxu0
    %v4732 = vadd.f32 0.0, %v4731
    %v4733 = vpop.f32.mrb[0].mxu0
    %v4734 = vpop.f32.mrb[0].mxu0
    %4735 = vdwg.mxu0
    %4736 = vmatprep.subr.bf16.mxu0 %v4531
    %4737 = vmatpush1.bf16.msra.mxu0 %v4530
    %4738 = vmatprep.subr.bf16.mxu0 %v4539
    %4739 = vmatpush1.bf16.msra.mxu0 %v4538
    %4740 = vmatprep.subr.bf16.mxu0 %v4547
    %4741 = vmatpush1.bf16.msra.mxu0 %v4546
    %4742 = vmatprep.subr.bf16.mxu0 %v4555
    %4743 = vmatpush1.bf16.msra.mxu0 %v4554
    %4744 = vmatprep.subr.bf16.mxu0 %v4563
    %4745 = vmatpush1.bf16.msra.mxu0 %v4562
    %4746 = vmatprep.subr.bf16.mxu0 %v4571
    %4747 = vmatpush1.bf16.msra.mxu0 %v4570
    %4748 = vmatprep.subr.bf16.mxu0 %v4579
    %4749 = vmatpush1.bf16.msra.mxu0 %v4578
    %4750 = vmatprep.subr.bf16.mxu0 %v4587
    %4751 = vmatpush1.bf16.msra.mxu0 %v4586
    %4752 = vmatprep.subr.bf16.mxu0 0
    %4753 = vmatpush1.bf16.msra.mxu0 0
    %4754 = vmatprep.subr.bf16.mxu0 0
    %4755 = vmatpush1.bf16.msra.mxu0 0
    %4756 = vmatprep.subr.bf16.mxu0 0
    %4757 = vmatpush1.bf16.msra.mxu0 0
    %4758 = vmatprep.subr.bf16.mxu0 0
    %4759 = vmatpush1.bf16.msra.mxu0 0
    %4760 = vmatprep.subr.bf16.mxu0 0
    %4761 = vmatpush1.bf16.msra.mxu0 0
    %4762 = vmatprep.subr.bf16.mxu0 0
    %4763 = vmatpush1.bf16.msra.mxu0 0
    %4764 = vmatprep.subr.bf16.mxu0 0
    %4765 = vmatpush1.bf16.msra.mxu0 0
    %4766 = vmatprep.subr.bf16.mxu0 0
    %4767 = vmatpush1.bf16.msra.mxu0 0
    %4768 = vmatprep.mubr.bf16.mxu0 0
    %4769 = vmatmul.mubr.bf16.gmra.mrb[0].mxu0 %v4269
    %v4770 = vpop.f32.mrb[0].mxu0
    %v4771 = vadd.f32 0.0, %v4770
    %v4772 = vpop.f32.mrb[0].mxu0
    %v4773 = vadd.f32 0.0, %v4772
    %v4774 = vpop.f32.mrb[0].mxu0
    %v4775 = vpop.f32.mrb[0].mxu0
    %4776 = vdwg.mxu0
    %4777 = vmatprep.subr.bf16.mxu0 %v4533
    %4778 = vmatpush1.bf16.msra.mxu0 %v4532
    %4779 = vmatprep.subr.bf16.mxu0 %v4541
    %4780 = vmatpush1.bf16.msra.mxu0 %v4540
    %4781 = vmatprep.subr.bf16.mxu0 %v4549
    %4782 = vmatpush1.bf16.msra.mxu0 %v4548
    %4783 = vmatprep.subr.bf16.mxu0 %v4557
    %4784 = vmatpush1.bf16.msra.mxu0 %v4556
    %4785 = vmatprep.subr.bf16.mxu0 %v4565
    %4786 = vmatpush1.bf16.msra.mxu0 %v4564
    %4787 = vmatprep.subr.bf16.mxu0 %v4573
    %4788 = vmatpush1.bf16.msra.mxu0 %v4572
    %4789 = vmatprep.subr.bf16.mxu0 %v4581
    %4790 = vmatpush1.bf16.msra.mxu0 %v4580
    %4791 = vmatprep.subr.bf16.mxu0 %v4589
    %4792 = vmatpush1.bf16.msra.mxu0 %v4588
    %4793 = vmatprep.subr.bf16.mxu0 0
    %4794 = vmatpush1.bf16.msra.mxu0 0
    %4795 = vmatprep.subr.bf16.mxu0 0
    %4796 = vmatpush1.bf16.msra.mxu0 0
    %4797 = vmatprep.subr.bf16.mxu0 0
    %4798 = vmatpush1.bf16.msra.mxu0 0
    %4799 = vmatprep.subr.bf16.mxu0 0
    %4800 = vmatpush1.bf16.msra.mxu0 0
    %4801 = vmatprep.subr.bf16.mxu0 0
    %4802 = vmatpush1.bf16.msra.mxu0 0
    %4803 = vmatprep.subr.bf16.mxu0 0
    %4804 = vmatpush1.bf16.msra.mxu0 0
    %4805 = vmatprep.subr.bf16.mxu0 0
    %4806 = vmatpush1.bf16.msra.mxu0 0
    %4807 = vmatprep.subr.bf16.mxu0 0
    %4808 = vmatpush1.bf16.msra.mxu0 0
    %4809 = vmatprep.mubr.bf16.mxu0 0
    %4810 = vmatmul.mubr.bf16.gmra.mrb[0].mxu0 %v4269
    %v4811 = vpop.f32.mrb[0].mxu0
    %v4812 = vadd.f32 0.0, %v4811
    %v4813 = vpop.f32.mrb[0].mxu0
    %v4814 = vadd.f32 0.0, %v4813
    %v4815 = vpop.f32.mrb[0].mxu0
    %v4816 = vpop.f32.mrb[0].mxu0
    %4817 = vdwg.mxu0
    %v4818 = vld [vmem:[#allocation14 + $0xf] sm:$0xf]
    %v4820 = vlaneseq
    %v4821 = vshrl.u32 %v4820, 7
    %v4822 = vsub.s32 0, %v4821
    %v4823 = vrot.slane %v4818, %v4822
    %v4824 = vlaneseq
    %v4825 = vshrl.u32 %v4824, 7
    %v4826 = vsub.s32 1, %v4825
    %v4827 = vrot.slane %v4818, %v4826
    %v4828 = vlaneseq
    %v4829 = vshrl.u32 %v4828, 7
    %v4830 = vsub.s32 2, %v4829
    %v4831 = vrot.slane %v4818, %v4830
    %v4832 = vlaneseq
    %v4833 = vshrl.u32 %v4832, 7
    %v4834 = vsub.s32 3, %v4833
    %v4835 = vrot.slane %v4818, %v4834
    %v4840 = vadd.f32 %v4689, %v4823
    %v4841 = vadd.f32 %v4691, %v4827
    %v4842 = vadd.f32 %v4730, %v4831
    %v4843 = vadd.f32 %v4732, %v4835
    %v4844 = vmax.f32 %v4840, 0.0
    %v4845 = vmax.f32 %v4841, 0.0
    %v4846 = vmax.f32 %v4842, 0.0
    %v4847 = vmax.f32 %v4843, 0.0
    %v4848 = vpack.c.bf16 %v4844, %v4844
    %v4849 = vpack.c.bf16 %v4845, %v4845
    %v4850 = vpack.c.bf16 %v4846, %v4846
    %v4851 = vpack.c.bf16 %v4847, %v4847
    %v4852 = vld [vmem:[#allocation11] sm:$0xff]
    %v4853 = vld [vmem:[#allocation11 + $0x8] sm:$0xff]
    %v4854 = vld [vmem:[#allocation11 + $0x10] sm:$0xff]
    %v4855 = vld [vmem:[#allocation11 + $0x18] sm:$0xff]
    %v4856 = vld [vmem:[#allocation11 + $0x20] sm:$0xff]
    %v4857 = vld [vmem:[#allocation11 + $0x28] sm:$0xff]
    %v4858 = vld [vmem:[#allocation11 + $0x30] sm:$0xff]
    %v4859 = vld [vmem:[#allocation11 + $0x38] sm:$0xff]
    %v4860 = vld [vmem:[#allocation11 + $0x40] sm:$0xff]
    %v4861 = vld [vmem:[#allocation11 + $0x48] sm:$0xff]
    %v4862 = vld [vmem:[#allocation11 + $0x50] sm:$0xff]
    %v4863 = vld [vmem:[#allocation11 + $0x58] sm:$0xff]
    %v4864 = vld [vmem:[#allocation11 + $0x60] sm:$0xff]
    %v4865 = vld [vmem:[#allocation11 + $0x68] sm:$0xff]
    %v4866 = vld [vmem:[#allocation11 + $0x70] sm:$0xff]
    %v4867 = vld [vmem:[#allocation11 + $0x78] sm:$0xff]
    %v4868 = vld [vmem:[#allocation11 + $0x80] sm:$0xff]
    %v4869 = vld [vmem:[#allocation11 + $0x88] sm:$0xff]
    %v4870 = vld [vmem:[#allocation11 + $0x90] sm:$0xff]
    %v4871 = vld [vmem:[#allocation11 + $0x98] sm:$0xff]
    %v4872 = vld [vmem:[#allocation11 + $0xa0] sm:$0xff]
    %v4873 = vld [vmem:[#allocation11 + $0xa8] sm:$0xff]
    %v4874 = vld [vmem:[#allocation11 + $0xb0] sm:$0xff]
    %v4875 = vld [vmem:[#allocation11 + $0xb8] sm:$0xff]
    %v4876 = vld [vmem:[#allocation11 + $0xc0] sm:$0xff]
    %v4877 = vld [vmem:[#allocation11 + $0xc8] sm:$0xff]
    %v4878 = vld [vmem:[#allocation11 + $0xd0] sm:$0xff]
    %v4879 = vld [vmem:[#allocation11 + $0xd8] sm:$0xff]
    %v4880 = vld [vmem:[#allocation11 + $0xe0] sm:$0xff]
    %v4881 = vld [vmem:[#allocation11 + $0xe8] sm:$0xff]
    %v4882 = vld [vmem:[#allocation11 + $0xf0] sm:$0xff]
    %v4883 = vld [vmem:[#allocation11 + $0xf8] sm:$0xff]
    %v4884 = vld [vmem:[#allocation11 + $0x100] sm:$0xff]
    %v4885 = vld [vmem:[#allocation11 + $0x108] sm:$0xff]
    %v4886 = vld [vmem:[#allocation11 + $0x110] sm:$0xff]
    %v4887 = vld [vmem:[#allocation11 + $0x118] sm:$0xff]
    %v4888 = vld [vmem:[#allocation11 + $0x120] sm:$0xff]
    %v4889 = vld [vmem:[#allocation11 + $0x128] sm:$0xff]
    %v4890 = vld [vmem:[#allocation11 + $0x130] sm:$0xff]
    %v4891 = vld [vmem:[#allocation11 + $0x138] sm:$0xff]
    %v4892 = vld [vmem:[#allocation11 + $0x140] sm:$0xff]
    %v4893 = vld [vmem:[#allocation11 + $0x148] sm:$0xff]
    %v4894 = vld [vmem:[#allocation11 + $0x150] sm:$0xff]
    %v4895 = vld [vmem:[#allocation11 + $0x158] sm:$0xff]
    %v4896 = vld [vmem:[#allocation11 + $0x160] sm:$0xff]
    %v4897 = vld [vmem:[#allocation11 + $0x168] sm:$0xff]
    %v4898 = vld [vmem:[#allocation11 + $0x170] sm:$0xff]
    %v4899 = vld [vmem:[#allocation11 + $0x178] sm:$0xff]
    %v4900 = vld [vmem:[#allocation11 + $0x180] sm:$0xff]
    %v4901 = vld [vmem:[#allocation11 + $0x188] sm:$0xff]
    %v4902 = vld [vmem:[#allocation11 + $0x190] sm:$0xff]
    %v4903 = vld [vmem:[#allocation11 + $0x198] sm:$0xff]
    %v4904 = vld [vmem:[#allocation11 + $0x1a0] sm:$0xff]
    %v4905 = vld [vmem:[#allocation11 + $0x1a8] sm:$0xff]
    %v4906 = vld [vmem:[#allocation11 + $0x1b0] sm:$0xff]
    %v4907 = vld [vmem:[#allocation11 + $0x1b8] sm:$0xff]
    %v4908 = vld [vmem:[#allocation11 + $0x1c0] sm:$0xff]
    %v4909 = vld [vmem:[#allocation11 + $0x1c8] sm:$0xff]
    %v4910 = vld [vmem:[#allocation11 + $0x1d0] sm:$0xff]
    %v4911 = vld [vmem:[#allocation11 + $0x1d8] sm:$0xff]
    %v4912 = vld [vmem:[#allocation11 + $0x1e0] sm:$0xff]
    %v4913 = vld [vmem:[#allocation11 + $0x1e8] sm:$0xff]
    %v4914 = vld [vmem:[#allocation11 + $0x1f0] sm:$0xff]
    %v4915 = vld [vmem:[#allocation11 + $0x1f8] sm:$0xff]
    %v4916 = vld [vmem:[#allocation14 + $0x13] sm:$0x3]
    %v4918 = vlaneseq
    %v4919 = vshrl.u32 %v4918, 7
    %v4920 = vsub.s32 0, %v4919
    %v4921 = vrot.slane %v4916, %v4920
    %v4922 = vlaneseq
    %v4923 = vshrl.u32 %v4922, 7
    %v4924 = vsub.s32 1, %v4923
    %v4925 = vrot.slane %v4916, %v4924
    %v4992 = vunpack.c.l.b16 %v4852
    %v4993 = vunpack.c.h.b16 %v4852
    %v4994 = vunpack.c.l.b16 %v4853
    %v4995 = vunpack.c.h.b16 %v4853
    %v4996 = vunpack.c.l.b16 %v4854
    %v4997 = vunpack.c.h.b16 %v4854
    %v4998 = vunpack.c.l.b16 %v4855
    %v4999 = vunpack.c.h.b16 %v4855
    %v5000 = vunpack.c.l.b16 %v4856
    %v5001 = vunpack.c.h.b16 %v4856
    %v5002 = vunpack.c.l.b16 %v4857
    %v5003 = vunpack.c.h.b16 %v4857
    %v5004 = vunpack.c.l.b16 %v4858
    %v5005 = vunpack.c.h.b16 %v4858
    %v5006 = vunpack.c.l.b16 %v4859
    %v5007 = vunpack.c.h.b16 %v4859
    %v5008 = vunpack.c.l.b16 %v4860
    %v5009 = vunpack.c.h.b16 %v4860
    %v5010 = vunpack.c.l.b16 %v4861
    %v5011 = vunpack.c.h.b16 %v4861
    %v5012 = vunpack.c.l.b16 %v4862
    %v5013 = vunpack.c.h.b16 %v4862
    %v5014 = vunpack.c.l.b16 %v4863
    %v5015 = vunpack.c.h.b16 %v4863
    %v5016 = vunpack.c.l.b16 %v4864
    %v5017 = vunpack.c.h.b16 %v4864
    %v5018 = vunpack.c.l.b16 %v4865
    %v5019 = vunpack.c.h.b16 %v4865
    %v5020 = vunpack.c.l.b16 %v4866
    %v5021 = vunpack.c.h.b16 %v4866
    %v5022 = vunpack.c.l.b16 %v4867
    %v5023 = vunpack.c.h.b16 %v4867
    %v5024 = vunpack.c.l.b16 %v4868
    %v5025 = vunpack.c.h.b16 %v4868
    %v5026 = vunpack.c.l.b16 %v4869
    %v5027 = vunpack.c.h.b16 %v4869
    %v5028 = vunpack.c.l.b16 %v4870
    %v5029 = vunpack.c.h.b16 %v4870
    %v5030 = vunpack.c.l.b16 %v4871
    %v5031 = vunpack.c.h.b16 %v4871
    %v5032 = vunpack.c.l.b16 %v4872
    %v5033 = vunpack.c.h.b16 %v4872
    %v5034 = vunpack.c.l.b16 %v4873
    %v5035 = vunpack.c.h.b16 %v4873
    %v5036 = vunpack.c.l.b16 %v4874
    %v5037 = vunpack.c.h.b16 %v4874
    %v5038 = vunpack.c.l.b16 %v4875
    %v5039 = vunpack.c.h.b16 %v4875
    %v5040 = vunpack.c.l.b16 %v4876
    %v5041 = vunpack.c.h.b16 %v4876
    %v5042 = vunpack.c.l.b16 %v4877
    %v5043 = vunpack.c.h.b16 %v4877
    %v5044 = vunpack.c.l.b16 %v4878
    %v5045 = vunpack.c.h.b16 %v4878
    %v5046 = vunpack.c.l.b16 %v4879
    %v5047 = vunpack.c.h.b16 %v4879
    %v5048 = vunpack.c.l.b16 %v4880
    %v5049 = vunpack.c.h.b16 %v4880
    %v5050 = vunpack.c.l.b16 %v4881
    %v5051 = vunpack.c.h.b16 %v4881
    %v5052 = vunpack.c.l.b16 %v4882
    %v5053 = vunpack.c.h.b16 %v4882
    %v5054 = vunpack.c.l.b16 %v4883
    %v5055 = vunpack.c.h.b16 %v4883
    %v5056 = vunpack.c.l.b16 %v4884
    %v5057 = vunpack.c.h.b16 %v4884
    %v5058 = vunpack.c.l.b16 %v4885
    %v5059 = vunpack.c.h.b16 %v4885
    %v5060 = vunpack.c.l.b16 %v4886
    %v5061 = vunpack.c.h.b16 %v4886
    %v5062 = vunpack.c.l.b16 %v4887
    %v5063 = vunpack.c.h.b16 %v4887
    %v5064 = vunpack.c.l.b16 %v4888
    %v5065 = vunpack.c.h.b16 %v4888
    %v5066 = vunpack.c.l.b16 %v4889
    %v5067 = vunpack.c.h.b16 %v4889
    %v5068 = vunpack.c.l.b16 %v4890
    %v5069 = vunpack.c.h.b16 %v4890
    %v5070 = vunpack.c.l.b16 %v4891
    %v5071 = vunpack.c.h.b16 %v4891
    %v5072 = vunpack.c.l.b16 %v4892
    %v5073 = vunpack.c.h.b16 %v4892
    %v5074 = vunpack.c.l.b16 %v4893
    %v5075 = vunpack.c.h.b16 %v4893
    %v5076 = vunpack.c.l.b16 %v4894
    %v5077 = vunpack.c.h.b16 %v4894
    %v5078 = vunpack.c.l.b16 %v4895
    %v5079 = vunpack.c.h.b16 %v4895
    %v5080 = vunpack.c.l.b16 %v4896
    %v5081 = vunpack.c.h.b16 %v4896
    %v5082 = vunpack.c.l.b16 %v4897
    %v5083 = vunpack.c.h.b16 %v4897
    %v5084 = vunpack.c.l.b16 %v4898
    %v5085 = vunpack.c.h.b16 %v4898
    %v5086 = vunpack.c.l.b16 %v4899
    %v5087 = vunpack.c.h.b16 %v4899
    %v5088 = vunpack.c.l.b16 %v4900
    %v5089 = vunpack.c.h.b16 %v4900
    %v5090 = vunpack.c.l.b16 %v4901
    %v5091 = vunpack.c.h.b16 %v4901
    %v5092 = vunpack.c.l.b16 %v4902
    %v5093 = vunpack.c.h.b16 %v4902
    %v5094 = vunpack.c.l.b16 %v4903
    %v5095 = vunpack.c.h.b16 %v4903
    %v5096 = vunpack.c.l.b16 %v4904
    %v5097 = vunpack.c.h.b16 %v4904
    %v5098 = vunpack.c.l.b16 %v4905
    %v5099 = vunpack.c.h.b16 %v4905
    %v5100 = vunpack.c.l.b16 %v4906
    %v5101 = vunpack.c.h.b16 %v4906
    %v5102 = vunpack.c.l.b16 %v4907
    %v5103 = vunpack.c.h.b16 %v4907
    %v5104 = vunpack.c.l.b16 %v4908
    %v5105 = vunpack.c.h.b16 %v4908
    %v5106 = vunpack.c.l.b16 %v4909
    %v5107 = vunpack.c.h.b16 %v4909
    %v5108 = vunpack.c.l.b16 %v4910
    %v5109 = vunpack.c.h.b16 %v4910
    %v5110 = vunpack.c.l.b16 %v4911
    %v5111 = vunpack.c.h.b16 %v4911
    %v5112 = vunpack.c.l.b16 %v4912
    %v5113 = vunpack.c.h.b16 %v4912
    %v5114 = vunpack.c.l.b16 %v4913
    %v5115 = vunpack.c.h.b16 %v4913
    %v5116 = vunpack.c.l.b16 %v4914
    %v5117 = vunpack.c.h.b16 %v4914
    %v5118 = vunpack.c.l.b16 %v4915
    %v5119 = vunpack.c.h.b16 %v4915
    %v5120 = vpack.c.b16 %v4994, %v4992
    %v5121 = vpack.c.b16 %v4995, %v4993
    %v5122 = vpack.c.b16 %v4998, %v4996
    %v5123 = vpack.c.b16 %v4999, %v4997
    %v5124 = vpack.c.b16 %v5002, %v5000
    %v5125 = vpack.c.b16 %v5003, %v5001
    %v5126 = vpack.c.b16 %v5006, %v5004
    %v5127 = vpack.c.b16 %v5007, %v5005
    %v5128 = vpack.c.b16 %v5010, %v5008
    %v5129 = vpack.c.b16 %v5011, %v5009
    %v5130 = vpack.c.b16 %v5014, %v5012
    %v5131 = vpack.c.b16 %v5015, %v5013
    %v5132 = vpack.c.b16 %v5018, %v5016
    %v5133 = vpack.c.b16 %v5019, %v5017
    %v5134 = vpack.c.b16 %v5022, %v5020
    %v5135 = vpack.c.b16 %v5023, %v5021
    %v5136 = vpack.c.b16 %v5026, %v5024
    %v5137 = vpack.c.b16 %v5027, %v5025
    %v5138 = vpack.c.b16 %v5030, %v5028
    %v5139 = vpack.c.b16 %v5031, %v5029
    %v5140 = vpack.c.b16 %v5034, %v5032
    %v5141 = vpack.c.b16 %v5035, %v5033
    %v5142 = vpack.c.b16 %v5038, %v5036
    %v5143 = vpack.c.b16 %v5039, %v5037
    %v5144 = vpack.c.b16 %v5042, %v5040
    %v5145 = vpack.c.b16 %v5043, %v5041
    %v5146 = vpack.c.b16 %v5046, %v5044
    %v5147 = vpack.c.b16 %v5047, %v5045
    %v5148 = vpack.c.b16 %v5050, %v5048
    %v5149 = vpack.c.b16 %v5051, %v5049
    %v5150 = vpack.c.b16 %v5054, %v5052
    %v5151 = vpack.c.b16 %v5055, %v5053
    %v5152 = vpack.c.b16 %v5058, %v5056
    %v5153 = vpack.c.b16 %v5059, %v5057
    %v5154 = vpack.c.b16 %v5062, %v5060
    %v5155 = vpack.c.b16 %v5063, %v5061
    %v5156 = vpack.c.b16 %v5066, %v5064
    %v5157 = vpack.c.b16 %v5067, %v5065
    %v5158 = vpack.c.b16 %v5070, %v5068
    %v5159 = vpack.c.b16 %v5071, %v5069
    %v5160 = vpack.c.b16 %v5074, %v5072
    %v5161 = vpack.c.b16 %v5075, %v5073
    %v5162 = vpack.c.b16 %v5078, %v5076
    %v5163 = vpack.c.b16 %v5079, %v5077
    %v5164 = vpack.c.b16 %v5082, %v5080
    %v5165 = vpack.c.b16 %v5083, %v5081
    %v5166 = vpack.c.b16 %v5086, %v5084
    %v5167 = vpack.c.b16 %v5087, %v5085
    %v5168 = vpack.c.b16 %v5090, %v5088
    %v5169 = vpack.c.b16 %v5091, %v5089
    %v5170 = vpack.c.b16 %v5094, %v5092
    %v5171 = vpack.c.b16 %v5095, %v5093
    %v5172 = vpack.c.b16 %v5098, %v5096
    %v5173 = vpack.c.b16 %v5099, %v5097
    %v5174 = vpack.c.b16 %v5102, %v5100
    %v5175 = vpack.c.b16 %v5103, %v5101
    %v5176 = vpack.c.b16 %v5106, %v5104
    %v5177 = vpack.c.b16 %v5107, %v5105
    %v5178 = vpack.c.b16 %v5110, %v5108
    %v5179 = vpack.c.b16 %v5111, %v5109
    %v5180 = vpack.c.b16 %v5114, %v5112
    %v5181 = vpack.c.b16 %v5115, %v5113
    %v5182 = vpack.c.b16 %v5118, %v5116
    %v5183 = vpack.c.b16 %v5119, %v5117
    %5248 = vmatprep.subr.bf16.mxu0 %v5121
    %5249 = vmatpush1.bf16.msra.mxu0 %v5120
    %5250 = vmatprep.subr.bf16.mxu0 %v5123
    %5251 = vmatpush1.bf16.msra.mxu0 %v5122
    %5252 = vmatprep.subr.bf16.mxu0 %v5125
    %5253 = vmatpush1.bf16.msra.mxu0 %v5124
    %5254 = vmatprep.subr.bf16.mxu0 %v5127
    %5255 = vmatpush1.bf16.msra.mxu0 %v5126
    %5256 = vmatprep.subr.bf16.mxu0 %v5129
    %5257 = vmatpush1.bf16.msra.mxu0 %v5128
    %5258 = vmatprep.subr.bf16.mxu0 %v5131
    %5259 = vmatpush1.bf16.msra.mxu0 %v5130
    %5260 = vmatprep.subr.bf16.mxu0 %v5133
    %5261 = vmatpush1.bf16.msra.mxu0 %v5132
    %5262 = vmatprep.subr.bf16.mxu0 %v5135
    %5263 = vmatpush1.bf16.msra.mxu0 %v5134
    %5264 = vmatprep.subr.bf16.mxu0 %v5137
    %5265 = vmatpush1.bf16.msra.mxu0 %v5136
    %5266 = vmatprep.subr.bf16.mxu0 %v5139
    %5267 = vmatpush1.bf16.msra.mxu0 %v5138
    %5268 = vmatprep.subr.bf16.mxu0 %v5141
    %5269 = vmatpush1.bf16.msra.mxu0 %v5140
    %5270 = vmatprep.subr.bf16.mxu0 %v5143
    %5271 = vmatpush1.bf16.msra.mxu0 %v5142
    %5272 = vmatprep.subr.bf16.mxu0 %v5145
    %5273 = vmatpush1.bf16.msra.mxu0 %v5144
    %5274 = vmatprep.subr.bf16.mxu0 %v5147
    %5275 = vmatpush1.bf16.msra.mxu0 %v5146
    %5276 = vmatprep.subr.bf16.mxu0 %v5149
    %5277 = vmatpush1.bf16.msra.mxu0 %v5148
    %5278 = vmatprep.subr.bf16.mxu0 %v5151
    %5279 = vmatpush1.bf16.msra.mxu0 %v5150
    %5280 = vmatprep.mubr.bf16.mxu0 %v4849
    %5281 = vmatmul.mubr.bf16.gmra.mrb[0].mxu0 %v4848
    %v5282 = vpop.f32.mrb[0].mxu0
    %v5283 = vadd.f32 %v4921, %v5282
    %v5284 = vpop.f32.mrb[0].mxu0
    %v5285 = vadd.f32 %v4925, %v5284
    %v5286 = vpop.f32.mrb[0].mxu0
    %v5287 = vpop.f32.mrb[0].mxu0
    %5288 = vdwg.mxu0
    %5289 = vmatprep.subr.bf16.mxu0 %v5153
    %5290 = vmatpush1.bf16.msra.mxu0 %v5152
    %5291 = vmatprep.subr.bf16.mxu0 %v5155
    %5292 = vmatpush1.bf16.msra.mxu0 %v5154
    %5293 = vmatprep.subr.bf16.mxu0 %v5157
    %5294 = vmatpush1.bf16.msra.mxu0 %v5156
    %5295 = vmatprep.subr.bf16.mxu0 %v5159
    %5296 = vmatpush1.bf16.msra.mxu0 %v5158
    %5297 = vmatprep.subr.bf16.mxu0 %v5161
    %5298 = vmatpush1.bf16.msra.mxu0 %v5160
    %5299 = vmatprep.subr.bf16.mxu0 %v5163
    %5300 = vmatpush1.bf16.msra.mxu0 %v5162
    %5301 = vmatprep.subr.bf16.mxu0 %v5165
    %5302 = vmatpush1.bf16.msra.mxu0 %v5164
    %5303 = vmatprep.subr.bf16.mxu0 %v5167
    %5304 = vmatpush1.bf16.msra.mxu0 %v5166
    %5305 = vmatprep.subr.bf16.mxu0 %v5169
    %5306 = vmatpush1.bf16.msra.mxu0 %v5168
    %5307 = vmatprep.subr.bf16.mxu0 %v5171
    %5308 = vmatpush1.bf16.msra.mxu0 %v5170
    %5309 = vmatprep.subr.bf16.mxu0 %v5173
    %5310 = vmatpush1.bf16.msra.mxu0 %v5172
    %5311 = vmatprep.subr.bf16.mxu0 %v5175
    %5312 = vmatpush1.bf16.msra.mxu0 %v5174
    %5313 = vmatprep.subr.bf16.mxu0 %v5177
    %5314 = vmatpush1.bf16.msra.mxu0 %v5176
    %5315 = vmatprep.subr.bf16.mxu0 %v5179
    %5316 = vmatpush1.bf16.msra.mxu0 %v5178
    %5317 = vmatprep.subr.bf16.mxu0 %v5181
    %5318 = vmatpush1.bf16.msra.mxu0 %v5180
    %5319 = vmatprep.subr.bf16.mxu0 %v5183
    %5320 = vmatpush1.bf16.msra.mxu0 %v5182
    %5321 = vmatprep.mubr.bf16.mxu0 %v4851
    %5322 = vmatmul.mubr.bf16.gmra.mrb[0].mxu0 %v4850
    %v5323 = vpop.f32.mrb[0].mxu0
    %v5324 = vadd.f32 %v5283, %v5323
    %v5325 = vpop.f32.mrb[0].mxu0
    %v5326 = vadd.f32 %v5285, %v5325
    %v5327 = vpop.f32.mrb[0].mxu0
    %v5328 = vpop.f32.mrb[0].mxu0
    %5329 = vdwg.mxu0
    %v5330 = vmax.f32 %v5324, 0.0
    %v5331 = vmax.f32 %v5326, 0.0
    %v5332 = vpack.c.bf16 %v5330, %v5330
    %v5333 = vpack.c.bf16 %v5331, %v5331
    %v5334 = vld [vmem:[#allocation13 + $0x100] sm:$0xf]
    %v5335 = vld [vmem:[#allocation13 + $0x104] sm:$0xf]
    %v5336 = vld [vmem:[#allocation13 + $0x108] sm:$0xf]
    %v5337 = vld [vmem:[#allocation13 + $0x10c] sm:$0xf]
    %v5338 = vld [vmem:[#allocation13 + $0x110] sm:$0xf]
    %v5339 = vld [vmem:[#allocation13 + $0x114] sm:$0xf]
    %v5340 = vld [vmem:[#allocation13 + $0x118] sm:$0xf]
    %v5341 = vld [vmem:[#allocation13 + $0x11c] sm:$0xf]
    %v5342 = vld [vmem:[#allocation13 + $0x120] sm:$0xf]
    %v5343 = vld [vmem:[#allocation13 + $0x124] sm:$0xf]
    %v5344 = vld [vmem:[#allocation13 + $0x128] sm:$0xf]
    %v5345 = vld [vmem:[#allocation13 + $0x12c] sm:$0xf]
    %v5346 = vld [vmem:[#allocation13 + $0x130] sm:$0xf]
    %v5347 = vld [vmem:[#allocation13 + $0x134] sm:$0xf]
    %v5348 = vld [vmem:[#allocation13 + $0x138] sm:$0xf]
    %v5349 = vld [vmem:[#allocation13 + $0x13c] sm:$0xf]
    %v5350 = vld [vmem:[#allocation13 + $0x140] sm:$0xf]
    %v5351 = vld [vmem:[#allocation13 + $0x144] sm:$0xf]
    %v5352 = vld [vmem:[#allocation13 + $0x148] sm:$0xf]
    %v5353 = vld [vmem:[#allocation13 + $0x14c] sm:$0xf]
    %v5354 = vld [vmem:[#allocation13 + $0x150] sm:$0xf]
    %v5355 = vld [vmem:[#allocation13 + $0x154] sm:$0xf]
    %v5356 = vld [vmem:[#allocation13 + $0x158] sm:$0xf]
    %v5357 = vld [vmem:[#allocation13 + $0x15c] sm:$0xf]
    %v5358 = vld [vmem:[#allocation13 + $0x160] sm:$0xf]
    %v5359 = vld [vmem:[#allocation13 + $0x164] sm:$0xf]
    %v5360 = vld [vmem:[#allocation13 + $0x168] sm:$0xf]
    %v5361 = vld [vmem:[#allocation13 + $0x16c] sm:$0xf]
    %v5362 = vld [vmem:[#allocation13 + $0x170] sm:$0xf]
    %v5363 = vld [vmem:[#allocation13 + $0x174] sm:$0xf]
    %v5364 = vld [vmem:[#allocation13 + $0x178] sm:$0xf]
    %v5365 = vld [vmem:[#allocation13 + $0x17c] sm:$0xf]
    %v5366 = vld [vmem:[#allocation14 + $0x15] sm:$0x1]
    %v5368 = vlaneseq
    %v5369 = vshrl.u32 %v5368, 7
    %v5370 = vsub.s32 0, %v5369
    %v5371 = vrot.slane %v5366, %v5370
    %v5405 = vunpack.c.l.b16 %v5334
    %v5406 = vunpack.c.l.b16 %v5335
    %v5407 = vunpack.c.l.b16 %v5336
    %v5408 = vunpack.c.l.b16 %v5337
    %v5409 = vunpack.c.l.b16 %v5338
    %v5410 = vunpack.c.l.b16 %v5339
    %v5411 = vunpack.c.l.b16 %v5340
    %v5412 = vunpack.c.l.b16 %v5341
    %v5413 = vunpack.c.l.b16 %v5342
    %v5414 = vunpack.c.l.b16 %v5343
    %v5415 = vunpack.c.l.b16 %v5344
    %v5416 = vunpack.c.l.b16 %v5345
    %v5417 = vunpack.c.l.b16 %v5346
    %v5418 = vunpack.c.l.b16 %v5347
    %v5419 = vunpack.c.l.b16 %v5348
    %v5420 = vunpack.c.l.b16 %v5349
    %v5421 = vunpack.c.l.b16 %v5350
    %v5422 = vunpack.c.l.b16 %v5351
    %v5423 = vunpack.c.l.b16 %v5352
    %v5424 = vunpack.c.l.b16 %v5353
    %v5425 = vunpack.c.l.b16 %v5354
    %v5426 = vunpack.c.l.b16 %v5355
    %v5427 = vunpack.c.l.b16 %v5356
    %v5428 = vunpack.c.l.b16 %v5357
    %v5429 = vunpack.c.l.b16 %v5358
    %v5430 = vunpack.c.l.b16 %v5359
    %v5431 = vunpack.c.l.b16 %v5360
    %v5432 = vunpack.c.l.b16 %v5361
    %v5433 = vunpack.c.l.b16 %v5362
    %v5434 = vunpack.c.l.b16 %v5363
    %v5435 = vunpack.c.l.b16 %v5364
    %v5436 = vunpack.c.l.b16 %v5365
    %v5437 = vpack.c.b16 %v5406, %v5405
    %v5438 = vpack.c.b16 %v5408, %v5407
    %v5439 = vpack.c.b16 %v5410, %v5409
    %v5440 = vpack.c.b16 %v5412, %v5411
    %v5441 = vpack.c.b16 %v5414, %v5413
    %v5442 = vpack.c.b16 %v5416, %v5415
    %v5443 = vpack.c.b16 %v5418, %v5417
    %v5444 = vpack.c.b16 %v5420, %v5419
    %v5445 = vpack.c.b16 %v5422, %v5421
    %v5446 = vpack.c.b16 %v5424, %v5423
    %v5447 = vpack.c.b16 %v5426, %v5425
    %v5448 = vpack.c.b16 %v5428, %v5427
    %v5449 = vpack.c.b16 %v5430, %v5429
    %v5450 = vpack.c.b16 %v5432, %v5431
    %v5451 = vpack.c.b16 %v5434, %v5433
    %v5452 = vpack.c.b16 %v5436, %v5435
    %5469 = vmatprep.subr.bf16.mxu0 0
    %5470 = vmatpush1.bf16.msra.mxu0 %v5437
    %5471 = vmatprep.subr.bf16.mxu0 0
    %5472 = vmatpush1.bf16.msra.mxu0 %v5438
    %5473 = vmatprep.subr.bf16.mxu0 0
    %5474 = vmatpush1.bf16.msra.mxu0 %v5439
    %5475 = vmatprep.subr.bf16.mxu0 0
    %5476 = vmatpush1.bf16.msra.mxu0 %v5440
    %5477 = vmatprep.subr.bf16.mxu0 0
    %5478 = vmatpush1.bf16.msra.mxu0 %v5441
    %5479 = vmatprep.subr.bf16.mxu0 0
    %5480 = vmatpush1.bf16.msra.mxu0 %v5442
    %5481 = vmatprep.subr.bf16.mxu0 0
    %5482 = vmatpush1.bf16.msra.mxu0 %v5443
    %5483 = vmatprep.subr.bf16.mxu0 0
    %5484 = vmatpush1.bf16.msra.mxu0 %v5444
    %5485 = vmatprep.subr.bf16.mxu0 0
    %5486 = vmatpush1.bf16.msra.mxu0 %v5445
    %5487 = vmatprep.subr.bf16.mxu0 0
    %5488 = vmatpush1.bf16.msra.mxu0 %v5446
    %5489 = vmatprep.subr.bf16.mxu0 0
    %5490 = vmatpush1.bf16.msra.mxu0 %v5447
    %5491 = vmatprep.subr.bf16.mxu0 0
    %5492 = vmatpush1.bf16.msra.mxu0 %v5448
    %5493 = vmatprep.subr.bf16.mxu0 0
    %5494 = vmatpush1.bf16.msra.mxu0 %v5449
    %5495 = vmatprep.subr.bf16.mxu0 0
    %5496 = vmatpush1.bf16.msra.mxu0 %v5450
    %5497 = vmatprep.subr.bf16.mxu0 0
    %5498 = vmatpush1.bf16.msra.mxu0 %v5451
    %5499 = vmatprep.subr.bf16.mxu0 0
    %5500 = vmatpush1.bf16.msra.mxu0 %v5452
    %5501 = vmatprep.mubr.bf16.mxu0 %v5333
    %5502 = vmatmul.mubr.bf16.gmra.mrb[0].mxu0 %v5332
    %v5503 = vpop.f32.mrb[0].mxu0
    %v5504 = vadd.f32 %v5371, %v5503
    %v5505 = vpop.f32.mrb[0].mxu0
    %v5506 = vpop.f32.mrb[0].mxu0
    %v5507 = vpop.f32.mrb[0].mxu0
    %5508 = vdwg.mxu0
    %v5509 = vxor.u32 %v5504, 2147483648
    %v5510 = vmul.f32 %v5509, 1.442695
    %v5511 = vpow.pop %v5510
    %v5512 = vadd.f32 %v5511, 1.0
    %v5513 = vrcp.pop %v5512
    %v5514 = vmul.f32 1.0, %v5513
    %v5515 = vpack.c.bf16 %v5514, %v5514
    %v5516 = vld [vmem:[#allocation10 + $0x800] sm:$0xff]
    %v5517 = vld [vmem:[#allocation10 + $0x808] sm:$0xff]
    %v5518 = vld [vmem:[#allocation10 + $0x810] sm:$0xff]
    %v5519 = vld [vmem:[#allocation10 + $0x818] sm:$0xff]
    %v5520 = vld [vmem:[#allocation10 + $0x820] sm:$0xff]
    %v5521 = vld [vmem:[#allocation10 + $0x828] sm:$0xff]
    %v5522 = vld [vmem:[#allocation10 + $0x830] sm:$0xff]
    %v5523 = vld [vmem:[#allocation10 + $0x838] sm:$0xff]
    %v5524 = vld [vmem:[#allocation10 + $0x840] sm:$0xff]
    %v5525 = vld [vmem:[#allocation10 + $0x848] sm:$0xff]
    %v5526 = vld [vmem:[#allocation10 + $0x850] sm:$0xff]
    %v5527 = vld [vmem:[#allocation10 + $0x858] sm:$0xff]
    %v5528 = vld [vmem:[#allocation10 + $0x860] sm:$0xff]
    %v5529 = vld [vmem:[#allocation10 + $0x868] sm:$0xff]
    %v5530 = vld [vmem:[#allocation10 + $0x870] sm:$0xff]
    %v5531 = vld [vmem:[#allocation10 + $0x878] sm:$0xff]
    %v5532 = vld [vmem:[#allocation10 + $0x880] sm:$0xff]
    %v5533 = vld [vmem:[#allocation10 + $0x888] sm:$0xff]
    %v5534 = vld [vmem:[#allocation10 + $0x890] sm:$0xff]
    %v5535 = vld [vmem:[#allocation10 + $0x898] sm:$0xff]
    %v5536 = vld [vmem:[#allocation10 + $0x8a0] sm:$0xff]
    %v5537 = vld [vmem:[#allocation10 + $0x8a8] sm:$0xff]
    %v5538 = vld [vmem:[#allocation10 + $0x8b0] sm:$0xff]
    %v5539 = vld [vmem:[#allocation10 + $0x8b8] sm:$0xff]
    %v5540 = vld [vmem:[#allocation10 + $0x8c0] sm:$0xff]
    %v5541 = vld [vmem:[#allocation10 + $0x8c8] sm:$0xff]
    %v5542 = vld [vmem:[#allocation10 + $0x8d0] sm:$0xff]
    %v5543 = vld [vmem:[#allocation10 + $0x8d8] sm:$0xff]
    %v5544 = vld [vmem:[#allocation10 + $0x8e0] sm:$0xff]
    %v5545 = vld [vmem:[#allocation10 + $0x8e8] sm:$0xff]
    %v5546 = vld [vmem:[#allocation10 + $0x8f0] sm:$0xff]
    %v5547 = vld [vmem:[#allocation10 + $0x8f8] sm:$0xff]
    %v5580 = vunpack.c.l.b16 %v5516
    %v5581 = vunpack.c.h.b16 %v5516
    %v5582 = vunpack.c.l.b16 %v5517
    %v5583 = vunpack.c.h.b16 %v5517
    %v5584 = vunpack.c.l.b16 %v5518
    %v5585 = vunpack.c.h.b16 %v5518
    %v5586 = vunpack.c.l.b16 %v5519
    %v5587 = vunpack.c.h.b16 %v5519
    %v5588 = vunpack.c.l.b16 %v5520
    %v5589 = vunpack.c.h.b16 %v5520
    %v5590 = vunpack.c.l.b16 %v5521
    %v5591 = vunpack.c.h.b16 %v5521
    %v5592 = vunpack.c.l.b16 %v5522
    %v5593 = vunpack.c.h.b16 %v5522
    %v5594 = vunpack.c.l.b16 %v5523
    %v5595 = vunpack.c.h.b16 %v5523
    %v5596 = vunpack.c.l.b16 %v5524
    %v5597 = vunpack.c.h.b16 %v5524
    %v5598 = vunpack.c.l.b16 %v5525
    %v5599 = vunpack.c.h.b16 %v5525
    %v5600 = vunpack.c.l.b16 %v5526
    %v5601 = vunpack.c.h.b16 %v5526
    %v5602 = vunpack.c.l.b16 %v5527
    %v5603 = vunpack.c.h.b16 %v5527
    %v5604 = vunpack.c.l.b16 %v5528
    %v5605 = vunpack.c.h.b16 %v5528
    %v5606 = vunpack.c.l.b16 %v5529
    %v5607 = vunpack.c.h.b16 %v5529
    %v5608 = vunpack.c.l.b16 %v5530
    %v5609 = vunpack.c.h.b16 %v5530
    %v5610 = vunpack.c.l.b16 %v5531
    %v5611 = vunpack.c.h.b16 %v5531
    %v5612 = vunpack.c.l.b16 %v5532
    %v5613 = vunpack.c.h.b16 %v5532
    %v5614 = vunpack.c.l.b16 %v5533
    %v5615 = vunpack.c.h.b16 %v5533
    %v5616 = vunpack.c.l.b16 %v5534
    %v5617 = vunpack.c.h.b16 %v5534
    %v5618 = vunpack.c.l.b16 %v5535
    %v5619 = vunpack.c.h.b16 %v5535
    %v5620 = vunpack.c.l.b16 %v5536
    %v5621 = vunpack.c.h.b16 %v5536
    %v5622 = vunpack.c.l.b16 %v5537
    %v5623 = vunpack.c.h.b16 %v5537
    %v5624 = vunpack.c.l.b16 %v5538
    %v5625 = vunpack.c.h.b16 %v5538
    %v5626 = vunpack.c.l.b16 %v5539
    %v5627 = vunpack.c.h.b16 %v5539
    %v5628 = vunpack.c.l.b16 %v5540
    %v5629 = vunpack.c.h.b16 %v5540
    %v5630 = vunpack.c.l.b16 %v5541
    %v5631 = vunpack.c.h.b16 %v5541
    %v5632 = vunpack.c.l.b16 %v5542
    %v5633 = vunpack.c.h.b16 %v5542
    %v5634 = vunpack.c.l.b16 %v5543
    %v5635 = vunpack.c.h.b16 %v5543
    %v5636 = vunpack.c.l.b16 %v5544
    %v5637 = vunpack.c.h.b16 %v5544
    %v5638 = vunpack.c.l.b16 %v5545
    %v5639 = vunpack.c.h.b16 %v5545
    %v5640 = vunpack.c.l.b16 %v5546
    %v5641 = vunpack.c.h.b16 %v5546
    %v5642 = vunpack.c.l.b16 %v5547
    %v5643 = vunpack.c.h.b16 %v5547
    %v5644 = vpack.c.b16 %v5584, %v5580
    %v5645 = vpack.c.b16 %v5585, %v5581
    %v5646 = vpack.c.b16 %v5586, %v5582
    %v5647 = vpack.c.b16 %v5587, %v5583
    %v5648 = vpack.c.b16 %v5592, %v5588
    %v5649 = vpack.c.b16 %v5593, %v5589
    %v5650 = vpack.c.b16 %v5594, %v5590
    %v5651 = vpack.c.b16 %v5595, %v5591
    %v5652 = vpack.c.b16 %v5600, %v5596
    %v5653 = vpack.c.b16 %v5601, %v5597
    %v5654 = vpack.c.b16 %v5602, %v5598
    %v5655 = vpack.c.b16 %v5603, %v5599
    %v5656 = vpack.c.b16 %v5608, %v5604
    %v5657 = vpack.c.b16 %v5609, %v5605
    %v5658 = vpack.c.b16 %v5610, %v5606
    %v5659 = vpack.c.b16 %v5611, %v5607
    %v5660 = vpack.c.b16 %v5616, %v5612
    %v5661 = vpack.c.b16 %v5617, %v5613
    %v5662 = vpack.c.b16 %v5618, %v5614
    %v5663 = vpack.c.b16 %v5619, %v5615
    %v5664 = vpack.c.b16 %v5624, %v5620
    %v5665 = vpack.c.b16 %v5625, %v5621
    %v5666 = vpack.c.b16 %v5626, %v5622
    %v5667 = vpack.c.b16 %v5627, %v5623
    %v5668 = vpack.c.b16 %v5632, %v5628
    %v5669 = vpack.c.b16 %v5633, %v5629
    %v5670 = vpack.c.b16 %v5634, %v5630
    %v5671 = vpack.c.b16 %v5635, %v5631
    %v5672 = vpack.c.b16 %v5640, %v5636
    %v5673 = vpack.c.b16 %v5641, %v5637
    %v5674 = vpack.c.b16 %v5642, %v5638
    %v5675 = vpack.c.b16 %v5643, %v5639
    %5708 = vmatprep.subr.bf16.mxu0 %v5645
    %5709 = vmatpush1.bf16.msra.mxu0 %v5644
    %5710 = vmatprep.subr.bf16.mxu0 %v5649
    %5711 = vmatpush1.bf16.msra.mxu0 %v5648
    %5712 = vmatprep.subr.bf16.mxu0 %v5653
    %5713 = vmatpush1.bf16.msra.mxu0 %v5652
    %5714 = vmatprep.subr.bf16.mxu0 %v5657
    %5715 = vmatpush1.bf16.msra.mxu0 %v5656
    %5716 = vmatprep.subr.bf16.mxu0 %v5661
    %5717 = vmatpush1.bf16.msra.mxu0 %v5660
    %5718 = vmatprep.subr.bf16.mxu0 %v5665
    %5719 = vmatpush1.bf16.msra.mxu0 %v5664
    %5720 = vmatprep.subr.bf16.mxu0 %v5669
    %5721 = vmatpush1.bf16.msra.mxu0 %v5668
    %5722 = vmatprep.subr.bf16.mxu0 %v5673
    %5723 = vmatpush1.bf16.msra.mxu0 %v5672
    %5724 = vmatprep.subr.bf16.mxu0 0
    %5725 = vmatpush1.bf16.msra.mxu0 0
    %5726 = vmatprep.subr.bf16.mxu0 0
    %5727 = vmatpush1.bf16.msra.mxu0 0
    %5728 = vmatprep.subr.bf16.mxu0 0
    %5729 = vmatpush1.bf16.msra.mxu0 0
    %5730 = vmatprep.subr.bf16.mxu0 0
    %5731 = vmatpush1.bf16.msra.mxu0 0
    %5732 = vmatprep.subr.bf16.mxu0 0
    %5733 = vmatpush1.bf16.msra.mxu0 0
    %5734 = vmatprep.subr.bf16.mxu0 0
    %5735 = vmatpush1.bf16.msra.mxu0 0
    %5736 = vmatprep.subr.bf16.mxu0 0
    %5737 = vmatpush1.bf16.msra.mxu0 0
    %5738 = vmatprep.subr.bf16.mxu0 0
    %5739 = vmatpush1.bf16.msra.mxu0 0
    %5740 = vmatprep.mubr.bf16.mxu0 0
    %5741 = vmatmul.mubr.bf16.gmra.mrb[0].mxu0 %v5515
    %v5742 = vpop.f32.mrb[0].mxu0
    %v5743 = vadd.f32 0.0, %v5742
    %v5744 = vpop.f32.mrb[0].mxu0
    %v5745 = vadd.f32 0.0, %v5744
    %v5746 = vpop.f32.mrb[0].mxu0
    %v5747 = vpop.f32.mrb[0].mxu0
    %5748 = vdwg.mxu0
    %5749 = vmatprep.subr.bf16.mxu0 %v5647
    %5750 = vmatpush1.bf16.msra.mxu0 %v5646
    %5751 = vmatprep.subr.bf16.mxu0 %v5651
    %5752 = vmatpush1.bf16.msra.mxu0 %v5650
    %5753 = vmatprep.subr.bf16.mxu0 %v5655
    %5754 = vmatpush1.bf16.msra.mxu0 %v5654
    %5755 = vmatprep.subr.bf16.mxu0 %v5659
    %5756 = vmatpush1.bf16.msra.mxu0 %v5658
    %5757 = vmatprep.subr.bf16.mxu0 %v5663
    %5758 = vmatpush1.bf16.msra.mxu0 %v5662
    %5759 = vmatprep.subr.bf16.mxu0 %v5667
    %5760 = vmatpush1.bf16.msra.mxu0 %v5666
    %5761 = vmatprep.subr.bf16.mxu0 %v5671
    %5762 = vmatpush1.bf16.msra.mxu0 %v5670
    %5763 = vmatprep.subr.bf16.mxu0 %v5675
    %5764 = vmatpush1.bf16.msra.mxu0 %v5674
    %5765 = vmatprep.subr.bf16.mxu0 0
    %5766 = vmatpush1.bf16.msra.mxu0 0
    %5767 = vmatprep.subr.bf16.mxu0 0
    %5768 = vmatpush1.bf16.msra.mxu0 0
    %5769 = vmatprep.subr.bf16.mxu0 0
    %5770 = vmatpush1.bf16.msra.mxu0 0
    %5771 = vmatprep.subr.bf16.mxu0 0
    %5772 = vmatpush1.bf16.msra.mxu0 0
    %5773 = vmatprep.subr.bf16.mxu0 0
    %5774 = vmatpush1.bf16.msra.mxu0 0
    %5775 = vmatprep.subr.bf16.mxu0 0
    %5776 = vmatpush1.bf16.msra.mxu0 0
    %5777 = vmatprep.subr.bf16.mxu0 0
    %5778 = vmatpush1.bf16.msra.mxu0 0
    %5779 = vmatprep.subr.bf16.mxu0 0
    %5780 = vmatpush1.bf16.msra.mxu0 0
    %5781 = vmatprep.mubr.bf16.mxu0 0
    %5782 = vmatmul.mubr.bf16.gmra.mrb[0].mxu0 %v5515
    %v5783 = vpop.f32.mrb[0].mxu0
    %v5784 = vadd.f32 0.0, %v5783
    %v5785 = vpop.f32.mrb[0].mxu0
    %v5786 = vadd.f32 0.0, %v5785
    %v5787 = vpop.f32.mrb[0].mxu0
    %v5788 = vpop.f32.mrb[0].mxu0
    %5789 = vdwg.mxu0
    %v5790 = vadd.f32 %v4771, %v5743
    %v5791 = vadd.f32 %v4773, %v5745
    %v5792 = vadd.f32 %v4812, %v5784
    %v5793 = vadd.f32 %v4814, %v5786
    %v5794 = vld [vmem:[#allocation14 + $0x16] sm:$0xf]
    %v5796 = vlaneseq
    %v5797 = vshrl.u32 %v5796, 7
    %v5798 = vsub.s32 0, %v5797
    %v5799 = vrot.slane %v5794, %v5798
    %v5800 = vlaneseq
    %v5801 = vshrl.u32 %v5800, 7
    %v5802 = vsub.s32 1, %v5801
    %v5803 = vrot.slane %v5794, %v5802
    %v5804 = vlaneseq
    %v5805 = vshrl.u32 %v5804, 7
    %v5806 = vsub.s32 2, %v5805
    %v5807 = vrot.slane %v5794, %v5806
    %v5808 = vlaneseq
    %v5809 = vshrl.u32 %v5808, 7
    %v5810 = vsub.s32 3, %v5809
    %v5811 = vrot.slane %v5794, %v5810
    %v5816 = vadd.f32 %v5790, %v5799
    %v5817 = vadd.f32 %v5791, %v5803
    %v5818 = vadd.f32 %v5792, %v5807
    %v5819 = vadd.f32 %v5793, %v5811
    %v5820 = vmax.f32 %v5816, 0.0
    %v5821 = vmax.f32 %v5817, 0.0
    %v5822 = vmax.f32 %v5818, 0.0
    %v5823 = vmax.f32 %v5819, 0.0
    %v5824 = vpack.c.bf16 %v5820, %v5820
    %v5825 = vpack.c.bf16 %v5821, %v5821
    %v5826 = vpack.c.bf16 %v5822, %v5822
    %v5827 = vpack.c.bf16 %v5823, %v5823
    %v5828 = vld [vmem:[#allocation11 + $0x200] sm:$0xff]
    %v5829 = vld [vmem:[#allocation11 + $0x208] sm:$0xff]
    %v5830 = vld [vmem:[#allocation11 + $0x210] sm:$0xff]
    %v5831 = vld [vmem:[#allocation11 + $0x218] sm:$0xff]
    %v5832 = vld [vmem:[#allocation11 + $0x220] sm:$0xff]
    %v5833 = vld [vmem:[#allocation11 + $0x228] sm:$0xff]
    %v5834 = vld [vmem:[#allocation11 + $0x230] sm:$0xff]
    %v5835 = vld [vmem:[#allocation11 + $0x238] sm:$0xff]
    %v5836 = vld [vmem:[#allocation11 + $0x240] sm:$0xff]
    %v5837 = vld [vmem:[#allocation11 + $0x248] sm:$0xff]
    %v5838 = vld [vmem:[#allocation11 + $0x250] sm:$0xff]
    %v5839 = vld [vmem:[#allocation11 + $0x258] sm:$0xff]
    %v5840 = vld [vmem:[#allocation11 + $0x260] sm:$0xff]
    %v5841 = vld [vmem:[#allocation11 + $0x268] sm:$0xff]
    %v5842 = vld [vmem:[#allocation11 + $0x270] sm:$0xff]
    %v5843 = vld [vmem:[#allocation11 + $0x278] sm:$0xff]
    %v5844 = vld [vmem:[#allocation11 + $0x280] sm:$0xff]
    %v5845 = vld [vmem:[#allocation11 + $0x288] sm:$0xff]
    %v5846 = vld [vmem:[#allocation11 + $0x290] sm:$0xff]
    %v5847 = vld [vmem:[#allocation11 + $0x298] sm:$0xff]
    %v5848 = vld [vmem:[#allocation11 + $0x2a0] sm:$0xff]
    %v5849 = vld [vmem:[#allocation11 + $0x2a8] sm:$0xff]
    %v5850 = vld [vmem:[#allocation11 + $0x2b0] sm:$0xff]
    %v5851 = vld [vmem:[#allocation11 + $0x2b8] sm:$0xff]
    %v5852 = vld [vmem:[#allocation11 + $0x2c0] sm:$0xff]
    %v5853 = vld [vmem:[#allocation11 + $0x2c8] sm:$0xff]
    %v5854 = vld [vmem:[#allocation11 + $0x2d0] sm:$0xff]
    %v5855 = vld [vmem:[#allocation11 + $0x2d8] sm:$0xff]
    %v5856 = vld [vmem:[#allocation11 + $0x2e0] sm:$0xff]
    %v5857 = vld [vmem:[#allocation11 + $0x2e8] sm:$0xff]
    %v5858 = vld [vmem:[#allocation11 + $0x2f0] sm:$0xff]
    %v5859 = vld [vmem:[#allocation11 + $0x2f8] sm:$0xff]
    %v5860 = vld [vmem:[#allocation11 + $0x300] sm:$0xff]
    %v5861 = vld [vmem:[#allocation11 + $0x308] sm:$0xff]
    %v5862 = vld [vmem:[#allocation11 + $0x310] sm:$0xff]
    %v5863 = vld [vmem:[#allocation11 + $0x318] sm:$0xff]
    %v5864 = vld [vmem:[#allocation11 + $0x320] sm:$0xff]
    %v5865 = vld [vmem:[#allocation11 + $0x328] sm:$0xff]
    %v5866 = vld [vmem:[#allocation11 + $0x330] sm:$0xff]
    %v5867 = vld [vmem:[#allocation11 + $0x338] sm:$0xff]
    %v5868 = vld [vmem:[#allocation11 + $0x340] sm:$0xff]
    %v5869 = vld [vmem:[#allocation11 + $0x348] sm:$0xff]
    %v5870 = vld [vmem:[#allocation11 + $0x350] sm:$0xff]
    %v5871 = vld [vmem:[#allocation11 + $0x358] sm:$0xff]
    %v5872 = vld [vmem:[#allocation11 + $0x360] sm:$0xff]
    %v5873 = vld [vmem:[#allocation11 + $0x368] sm:$0xff]
    %v5874 = vld [vmem:[#allocation11 + $0x370] sm:$0xff]
    %v5875 = vld [vmem:[#allocation11 + $0x378] sm:$0xff]
    %v5876 = vld [vmem:[#allocation11 + $0x380] sm:$0xff]
    %v5877 = vld [vmem:[#allocation11 + $0x388] sm:$0xff]
    %v5878 = vld [vmem:[#allocation11 + $0x390] sm:$0xff]
    %v5879 = vld [vmem:[#allocation11 + $0x398] sm:$0xff]
    %v5880 = vld [vmem:[#allocation11 + $0x3a0] sm:$0xff]
    %v5881 = vld [vmem:[#allocation11 + $0x3a8] sm:$0xff]
    %v5882 = vld [vmem:[#allocation11 + $0x3b0] sm:$0xff]
    %v5883 = vld [vmem:[#allocation11 + $0x3b8] sm:$0xff]
    %v5884 = vld [vmem:[#allocation11 + $0x3c0] sm:$0xff]
    %v5885 = vld [vmem:[#allocation11 + $0x3c8] sm:$0xff]
    %v5886 = vld [vmem:[#allocation11 + $0x3d0] sm:$0xff]
    %v5887 = vld [vmem:[#allocation11 + $0x3d8] sm:$0xff]
    %v5888 = vld [vmem:[#allocation11 + $0x3e0] sm:$0xff]
    %v5889 = vld [vmem:[#allocation11 + $0x3e8] sm:$0xff]
    %v5890 = vld [vmem:[#allocation11 + $0x3f0] sm:$0xff]
    %v5891 = vld [vmem:[#allocation11 + $0x3f8] sm:$0xff]
    %v5892 = vld [vmem:[#allocation14 + $0x1a] sm:$0x3]
    %v5894 = vlaneseq
    %v5895 = vshrl.u32 %v5894, 7
    %v5896 = vsub.s32 0, %v5895
    %v5897 = vrot.slane %v5892, %v5896
    %v5898 = vlaneseq
    %v5899 = vshrl.u32 %v5898, 7
    %v5900 = vsub.s32 1, %v5899
    %v5901 = vrot.slane %v5892, %v5900
    %v5968 = vunpack.c.l.b16 %v5828
    %v5969 = vunpack.c.h.b16 %v5828
    %v5970 = vunpack.c.l.b16 %v5829
    %v5971 = vunpack.c.h.b16 %v5829
    %v5972 = vunpack.c.l.b16 %v5830
    %v5973 = vunpack.c.h.b16 %v5830
    %v5974 = vunpack.c.l.b16 %v5831
    %v5975 = vunpack.c.h.b16 %v5831
    %v5976 = vunpack.c.l.b16 %v5832
    %v5977 = vunpack.c.h.b16 %v5832
    %v5978 = vunpack.c.l.b16 %v5833
    %v5979 = vunpack.c.h.b16 %v5833
    %v5980 = vunpack.c.l.b16 %v5834
    %v5981 = vunpack.c.h.b16 %v5834
    %v5982 = vunpack.c.l.b16 %v5835
    %v5983 = vunpack.c.h.b16 %v5835
    %v5984 = vunpack.c.l.b16 %v5836
    %v5985 = vunpack.c.h.b16 %v5836
    %v5986 = vunpack.c.l.b16 %v5837
    %v5987 = vunpack.c.h.b16 %v5837
    %v5988 = vunpack.c.l.b16 %v5838
    %v5989 = vunpack.c.h.b16 %v5838
    %v5990 = vunpack.c.l.b16 %v5839
    %v5991 = vunpack.c.h.b16 %v5839
    %v5992 = vunpack.c.l.b16 %v5840
    %v5993 = vunpack.c.h.b16 %v5840
    %v5994 = vunpack.c.l.b16 %v5841
    %v5995 = vunpack.c.h.b16 %v5841
    %v5996 = vunpack.c.l.b16 %v5842
    %v5997 = vunpack.c.h.b16 %v5842
    %v5998 = vunpack.c.l.b16 %v5843
    %v5999 = vunpack.c.h.b16 %v5843
    %v6000 = vunpack.c.l.b16 %v5844
    %v6001 = vunpack.c.h.b16 %v5844
    %v6002 = vunpack.c.l.b16 %v5845
    %v6003 = vunpack.c.h.b16 %v5845
    %v6004 = vunpack.c.l.b16 %v5846
    %v6005 = vunpack.c.h.b16 %v5846
    %v6006 = vunpack.c.l.b16 %v5847
    %v6007 = vunpack.c.h.b16 %v5847
    %v6008 = vunpack.c.l.b16 %v5848
    %v6009 = vunpack.c.h.b16 %v5848
    %v6010 = vunpack.c.l.b16 %v5849
    %v6011 = vunpack.c.h.b16 %v5849
    %v6012 = vunpack.c.l.b16 %v5850
    %v6013 = vunpack.c.h.b16 %v5850
    %v6014 = vunpack.c.l.b16 %v5851
    %v6015 = vunpack.c.h.b16 %v5851
    %v6016 = vunpack.c.l.b16 %v5852
    %v6017 = vunpack.c.h.b16 %v5852
    %v6018 = vunpack.c.l.b16 %v5853
    %v6019 = vunpack.c.h.b16 %v5853
    %v6020 = vunpack.c.l.b16 %v5854
    %v6021 = vunpack.c.h.b16 %v5854
    %v6022 = vunpack.c.l.b16 %v5855
    %v6023 = vunpack.c.h.b16 %v5855
    %v6024 = vunpack.c.l.b16 %v5856
    %v6025 = vunpack.c.h.b16 %v5856
    %v6026 = vunpack.c.l.b16 %v5857
    %v6027 = vunpack.c.h.b16 %v5857
    %v6028 = vunpack.c.l.b16 %v5858
    %v6029 = vunpack.c.h.b16 %v5858
    %v6030 = vunpack.c.l.b16 %v5859
    %v6031 = vunpack.c.h.b16 %v5859
    %v6032 = vunpack.c.l.b16 %v5860
    %v6033 = vunpack.c.h.b16 %v5860
    %v6034 = vunpack.c.l.b16 %v5861
    %v6035 = vunpack.c.h.b16 %v5861
    %v6036 = vunpack.c.l.b16 %v5862
    %v6037 = vunpack.c.h.b16 %v5862
    %v6038 = vunpack.c.l.b16 %v5863
    %v6039 = vunpack.c.h.b16 %v5863
    %v6040 = vunpack.c.l.b16 %v5864
    %v6041 = vunpack.c.h.b16 %v5864
    %v6042 = vunpack.c.l.b16 %v5865
    %v6043 = vunpack.c.h.b16 %v5865
    %v6044 = vunpack.c.l.b16 %v5866
    %v6045 = vunpack.c.h.b16 %v5866
    %v6046 = vunpack.c.l.b16 %v5867
    %v6047 = vunpack.c.h.b16 %v5867
    %v6048 = vunpack.c.l.b16 %v5868
    %v6049 = vunpack.c.h.b16 %v5868
    %v6050 = vunpack.c.l.b16 %v5869
    %v6051 = vunpack.c.h.b16 %v5869
    %v6052 = vunpack.c.l.b16 %v5870
    %v6053 = vunpack.c.h.b16 %v5870
    %v6054 = vunpack.c.l.b16 %v5871
    %v6055 = vunpack.c.h.b16 %v5871
    %v6056 = vunpack.c.l.b16 %v5872
    %v6057 = vunpack.c.h.b16 %v5872
    %v6058 = vunpack.c.l.b16 %v5873
    %v6059 = vunpack.c.h.b16 %v5873
    %v6060 = vunpack.c.l.b16 %v5874
    %v6061 = vunpack.c.h.b16 %v5874
    %v6062 = vunpack.c.l.b16 %v5875
    %v6063 = vunpack.c.h.b16 %v5875
    %v6064 = vunpack.c.l.b16 %v5876
    %v6065 = vunpack.c.h.b16 %v5876
    %v6066 = vunpack.c.l.b16 %v5877
    %v6067 = vunpack.c.h.b16 %v5877
    %v6068 = vunpack.c.l.b16 %v5878
    %v6069 = vunpack.c.h.b16 %v5878
    %v6070 = vunpack.c.l.b16 %v5879
    %v6071 = vunpack.c.h.b16 %v5879
    %v6072 = vunpack.c.l.b16 %v5880
    %v6073 = vunpack.c.h.b16 %v5880
    %v6074 = vunpack.c.l.b16 %v5881
    %v6075 = vunpack.c.h.b16 %v5881
    %v6076 = vunpack.c.l.b16 %v5882
    %v6077 = vunpack.c.h.b16 %v5882
    %v6078 = vunpack.c.l.b16 %v5883
    %v6079 = vunpack.c.h.b16 %v5883
    %v6080 = vunpack.c.l.b16 %v5884
    %v6081 = vunpack.c.h.b16 %v5884
    %v6082 = vunpack.c.l.b16 %v5885
    %v6083 = vunpack.c.h.b16 %v5885
    %v6084 = vunpack.c.l.b16 %v5886
    %v6085 = vunpack.c.h.b16 %v5886
    %v6086 = vunpack.c.l.b16 %v5887
    %v6087 = vunpack.c.h.b16 %v5887
    %v6088 = vunpack.c.l.b16 %v5888
    %v6089 = vunpack.c.h.b16 %v5888
    %v6090 = vunpack.c.l.b16 %v5889
    %v6091 = vunpack.c.h.b16 %v5889
    %v6092 = vunpack.c.l.b16 %v5890
    %v6093 = vunpack.c.h.b16 %v5890
    %v6094 = vunpack.c.l.b16 %v5891
    %v6095 = vunpack.c.h.b16 %v5891
    %v6096 = vpack.c.b16 %v5970, %v5968
    %v6097 = vpack.c.b16 %v5971, %v5969
    %v6098 = vpack.c.b16 %v5974, %v5972
    %v6099 = vpack.c.b16 %v5975, %v5973
    %v6100 = vpack.c.b16 %v5978, %v5976
    %v6101 = vpack.c.b16 %v5979, %v5977
    %v6102 = vpack.c.b16 %v5982, %v5980
    %v6103 = vpack.c.b16 %v5983, %v5981
    %v6104 = vpack.c.b16 %v5986, %v5984
    %v6105 = vpack.c.b16 %v5987, %v5985
    %v6106 = vpack.c.b16 %v5990, %v5988
    %v6107 = vpack.c.b16 %v5991, %v5989
    %v6108 = vpack.c.b16 %v5994, %v5992
    %v6109 = vpack.c.b16 %v5995, %v5993
    %v6110 = vpack.c.b16 %v5998, %v5996
    %v6111 = vpack.c.b16 %v5999, %v5997
    %v6112 = vpack.c.b16 %v6002, %v6000
    %v6113 = vpack.c.b16 %v6003, %v6001
    %v6114 = vpack.c.b16 %v6006, %v6004
    %v6115 = vpack.c.b16 %v6007, %v6005
    %v6116 = vpack.c.b16 %v6010, %v6008
    %v6117 = vpack.c.b16 %v6011, %v6009
    %v6118 = vpack.c.b16 %v6014, %v6012
    %v6119 = vpack.c.b16 %v6015, %v6013
    %v6120 = vpack.c.b16 %v6018, %v6016
    %v6121 = vpack.c.b16 %v6019, %v6017
    %v6122 = vpack.c.b16 %v6022, %v6020
    %v6123 = vpack.c.b16 %v6023, %v6021
    %v6124 = vpack.c.b16 %v6026, %v6024
    %v6125 = vpack.c.b16 %v6027, %v6025
    %v6126 = vpack.c.b16 %v6030, %v6028
    %v6127 = vpack.c.b16 %v6031, %v6029
    %v6128 = vpack.c.b16 %v6034, %v6032
    %v6129 = vpack.c.b16 %v6035, %v6033
    %v6130 = vpack.c.b16 %v6038, %v6036
    %v6131 = vpack.c.b16 %v6039, %v6037
    %v6132 = vpack.c.b16 %v6042, %v6040
    %v6133 = vpack.c.b16 %v6043, %v6041
    %v6134 = vpack.c.b16 %v6046, %v6044
    %v6135 = vpack.c.b16 %v6047, %v6045
    %v6136 = vpack.c.b16 %v6050, %v6048
    %v6137 = vpack.c.b16 %v6051, %v6049
    %v6138 = vpack.c.b16 %v6054, %v6052
    %v6139 = vpack.c.b16 %v6055, %v6053
    %v6140 = vpack.c.b16 %v6058, %v6056
    %v6141 = vpack.c.b16 %v6059, %v6057
    %v6142 = vpack.c.b16 %v6062, %v6060
    %v6143 = vpack.c.b16 %v6063, %v6061
    %v6144 = vpack.c.b16 %v6066, %v6064
    %v6145 = vpack.c.b16 %v6067, %v6065
    %v6146 = vpack.c.b16 %v6070, %v6068
    %v6147 = vpack.c.b16 %v6071, %v6069
    %v6148 = vpack.c.b16 %v6074, %v6072
    %v6149 = vpack.c.b16 %v6075, %v6073
    %v6150 = vpack.c.b16 %v6078, %v6076
    %v6151 = vpack.c.b16 %v6079, %v6077
    %v6152 = vpack.c.b16 %v6082, %v6080
    %v6153 = vpack.c.b16 %v6083, %v6081
    %v6154 = vpack.c.b16 %v6086, %v6084
    %v6155 = vpack.c.b16 %v6087, %v6085
    %v6156 = vpack.c.b16 %v6090, %v6088
    %v6157 = vpack.c.b16 %v6091, %v6089
    %v6158 = vpack.c.b16 %v6094, %v6092
    %v6159 = vpack.c.b16 %v6095, %v6093
    %6224 = vmatprep.subr.bf16.mxu0 %v6097
    %6225 = vmatpush1.bf16.msra.mxu0 %v6096
    %6226 = vmatprep.subr.bf16.mxu0 %v6099
    %6227 = vmatpush1.bf16.msra.mxu0 %v6098
    %6228 = vmatprep.subr.bf16.mxu0 %v6101
    %6229 = vmatpush1.bf16.msra.mxu0 %v6100
    %6230 = vmatprep.subr.bf16.mxu0 %v6103
    %6231 = vmatpush1.bf16.msra.mxu0 %v6102
    %6232 = vmatprep.subr.bf16.mxu0 %v6105
    %6233 = vmatpush1.bf16.msra.mxu0 %v6104
    %6234 = vmatprep.subr.bf16.mxu0 %v6107
    %6235 = vmatpush1.bf16.msra.mxu0 %v6106
    %6236 = vmatprep.subr.bf16.mxu0 %v6109
    %6237 = vmatpush1.bf16.msra.mxu0 %v6108
    %6238 = vmatprep.subr.bf16.mxu0 %v6111
    %6239 = vmatpush1.bf16.msra.mxu0 %v6110
    %6240 = vmatprep.subr.bf16.mxu0 %v6113
    %6241 = vmatpush1.bf16.msra.mxu0 %v6112
    %6242 = vmatprep.subr.bf16.mxu0 %v6115
    %6243 = vmatpush1.bf16.msra.mxu0 %v6114
    %6244 = vmatprep.subr.bf16.mxu0 %v6117
    %6245 = vmatpush1.bf16.msra.mxu0 %v6116
    %6246 = vmatprep.subr.bf16.mxu0 %v6119
    %6247 = vmatpush1.bf16.msra.mxu0 %v6118
    %6248 = vmatprep.subr.bf16.mxu0 %v6121
    %6249 = vmatpush1.bf16.msra.mxu0 %v6120
    %6250 = vmatprep.subr.bf16.mxu0 %v6123
    %6251 = vmatpush1.bf16.msra.mxu0 %v6122
    %6252 = vmatprep.subr.bf16.mxu0 %v6125
    %6253 = vmatpush1.bf16.msra.mxu0 %v6124
    %6254 = vmatprep.subr.bf16.mxu0 %v6127
    %6255 = vmatpush1.bf16.msra.mxu0 %v6126
    %6256 = vmatprep.mubr.bf16.mxu0 %v5825
    %6257 = vmatmul.mubr.bf16.gmra.mrb[0].mxu0 %v5824
    %v6258 = vpop.f32.mrb[0].mxu0
    %v6259 = vadd.f32 %v5897, %v6258
    %v6260 = vpop.f32.mrb[0].mxu0
    %v6261 = vadd.f32 %v5901, %v6260
    %v6262 = vpop.f32.mrb[0].mxu0
    %v6263 = vpop.f32.mrb[0].mxu0
    %6264 = vdwg.mxu0
    %6265 = vmatprep.subr.bf16.mxu0 %v6129
    %6266 = vmatpush1.bf16.msra.mxu0 %v6128
    %6267 = vmatprep.subr.bf16.mxu0 %v6131
    %6268 = vmatpush1.bf16.msra.mxu0 %v6130
    %6269 = vmatprep.subr.bf16.mxu0 %v6133
    %6270 = vmatpush1.bf16.msra.mxu0 %v6132
    %6271 = vmatprep.subr.bf16.mxu0 %v6135
    %6272 = vmatpush1.bf16.msra.mxu0 %v6134
    %6273 = vmatprep.subr.bf16.mxu0 %v6137
    %6274 = vmatpush1.bf16.msra.mxu0 %v6136
    %6275 = vmatprep.subr.bf16.mxu0 %v6139
    %6276 = vmatpush1.bf16.msra.mxu0 %v6138
    %6277 = vmatprep.subr.bf16.mxu0 %v6141
    %6278 = vmatpush1.bf16.msra.mxu0 %v6140
    %6279 = vmatprep.subr.bf16.mxu0 %v6143
    %6280 = vmatpush1.bf16.msra.mxu0 %v6142
    %6281 = vmatprep.subr.bf16.mxu0 %v6145
    %6282 = vmatpush1.bf16.msra.mxu0 %v6144
    %6283 = vmatprep.subr.bf16.mxu0 %v6147
    %6284 = vmatpush1.bf16.msra.mxu0 %v6146
    %6285 = vmatprep.subr.bf16.mxu0 %v6149
    %6286 = vmatpush1.bf16.msra.mxu0 %v6148
    %6287 = vmatprep.subr.bf16.mxu0 %v6151
    %6288 = vmatpush1.bf16.msra.mxu0 %v6150
    %6289 = vmatprep.subr.bf16.mxu0 %v6153
    %6290 = vmatpush1.bf16.msra.mxu0 %v6152
    %6291 = vmatprep.subr.bf16.mxu0 %v6155
    %6292 = vmatpush1.bf16.msra.mxu0 %v6154
    %6293 = vmatprep.subr.bf16.mxu0 %v6157
    %6294 = vmatpush1.bf16.msra.mxu0 %v6156
    %6295 = vmatprep.subr.bf16.mxu0 %v6159
    %6296 = vmatpush1.bf16.msra.mxu0 %v6158
    %6297 = vmatprep.mubr.bf16.mxu0 %v5827
    %6298 = vmatmul.mubr.bf16.gmra.mrb[0].mxu0 %v5826
    %v6299 = vpop.f32.mrb[0].mxu0
    %v6300 = vadd.f32 %v6259, %v6299
    %v6301 = vpop.f32.mrb[0].mxu0
    %v6302 = vadd.f32 %v6261, %v6301
    %v6303 = vpop.f32.mrb[0].mxu0
    %v6304 = vpop.f32.mrb[0].mxu0
    %6305 = vdwg.mxu0
    %v6306 = vmax.f32 %v6300, 0.0
    %v6307 = vmax.f32 %v6302, 0.0
    %v6308 = vpack.c.bf16 %v6306, %v6306
    %v6309 = vpack.c.bf16 %v6307, %v6307
    %v6310 = vld [vmem:[#allocation13 + $0x180] sm:$0xf]
    %v6311 = vld [vmem:[#allocation13 + $0x184] sm:$0xf]
    %v6312 = vld [vmem:[#allocation13 + $0x188] sm:$0xf]
    %v6313 = vld [vmem:[#allocation13 + $0x18c] sm:$0xf]
    %v6314 = vld [vmem:[#allocation13 + $0x190] sm:$0xf]
    %v6315 = vld [vmem:[#allocation13 + $0x194] sm:$0xf]
    %v6316 = vld [vmem:[#allocation13 + $0x198] sm:$0xf]
    %v6317 = vld [vmem:[#allocation13 + $0x19c] sm:$0xf]
    %v6318 = vld [vmem:[#allocation13 + $0x1a0] sm:$0xf]
    %v6319 = vld [vmem:[#allocation13 + $0x1a4] sm:$0xf]
    %v6320 = vld [vmem:[#allocation13 + $0x1a8] sm:$0xf]
    %v6321 = vld [vmem:[#allocation13 + $0x1ac] sm:$0xf]
    %v6322 = vld [vmem:[#allocation13 + $0x1b0] sm:$0xf]
    %v6323 = vld [vmem:[#allocation13 + $0x1b4] sm:$0xf]
    %v6324 = vld [vmem:[#allocation13 + $0x1b8] sm:$0xf]
    %v6325 = vld [vmem:[#allocation13 + $0x1bc] sm:$0xf]
    %v6326 = vld [vmem:[#allocation13 + $0x1c0] sm:$0xf]
    %v6327 = vld [vmem:[#allocation13 + $0x1c4] sm:$0xf]
    %v6328 = vld [vmem:[#allocation13 + $0x1c8] sm:$0xf]
    %v6329 = vld [vmem:[#allocation13 + $0x1cc] sm:$0xf]
    %v6330 = vld [vmem:[#allocation13 + $0x1d0] sm:$0xf]
    %v6331 = vld [vmem:[#allocation13 + $0x1d4] sm:$0xf]
    %v6332 = vld [vmem:[#allocation13 + $0x1d8] sm:$0xf]
    %v6333 = vld [vmem:[#allocation13 + $0x1dc] sm:$0xf]
    %v6334 = vld [vmem:[#allocation13 + $0x1e0] sm:$0xf]
    %v6335 = vld [vmem:[#allocation13 + $0x1e4] sm:$0xf]
    %v6336 = vld [vmem:[#allocation13 + $0x1e8] sm:$0xf]
    %v6337 = vld [vmem:[#allocation13 + $0x1ec] sm:$0xf]
    %v6338 = vld [vmem:[#allocation13 + $0x1f0] sm:$0xf]
    %v6339 = vld [vmem:[#allocation13 + $0x1f4] sm:$0xf]
    %v6340 = vld [vmem:[#allocation13 + $0x1f8] sm:$0xf]
    %v6341 = vld [vmem:[#allocation13 + $0x1fc] sm:$0xf]
    %v6342 = vld [vmem:[#allocation14 + $0x1c] sm:$0x1]
    %v6344 = vlaneseq
    %v6345 = vshrl.u32 %v6344, 7
    %v6346 = vsub.s32 0, %v6345
    %v6347 = vrot.slane %v6342, %v6346
    %v6381 = vunpack.c.l.b16 %v6310
    %v6382 = vunpack.c.l.b16 %v6311
    %v6383 = vunpack.c.l.b16 %v6312
    %v6384 = vunpack.c.l.b16 %v6313
    %v6385 = vunpack.c.l.b16 %v6314
    %v6386 = vunpack.c.l.b16 %v6315
    %v6387 = vunpack.c.l.b16 %v6316
    %v6388 = vunpack.c.l.b16 %v6317
    %v6389 = vunpack.c.l.b16 %v6318
    %v6390 = vunpack.c.l.b16 %v6319
    %v6391 = vunpack.c.l.b16 %v6320
    %v6392 = vunpack.c.l.b16 %v6321
    %v6393 = vunpack.c.l.b16 %v6322
    %v6394 = vunpack.c.l.b16 %v6323
    %v6395 = vunpack.c.l.b16 %v6324
    %v6396 = vunpack.c.l.b16 %v6325
    %v6397 = vunpack.c.l.b16 %v6326
    %v6398 = vunpack.c.l.b16 %v6327
    %v6399 = vunpack.c.l.b16 %v6328
    %v6400 = vunpack.c.l.b16 %v6329
    %v6401 = vunpack.c.l.b16 %v6330
    %v6402 = vunpack.c.l.b16 %v6331
    %v6403 = vunpack.c.l.b16 %v6332
    %v6404 = vunpack.c.l.b16 %v6333
    %v6405 = vunpack.c.l.b16 %v6334
    %v6406 = vunpack.c.l.b16 %v6335
    %v6407 = vunpack.c.l.b16 %v6336
    %v6408 = vunpack.c.l.b16 %v6337
    %v6409 = vunpack.c.l.b16 %v6338
    %v6410 = vunpack.c.l.b16 %v6339
    %v6411 = vunpack.c.l.b16 %v6340
    %v6412 = vunpack.c.l.b16 %v6341
    %v6413 = vpack.c.b16 %v6382, %v6381
    %v6414 = vpack.c.b16 %v6384, %v6383
    %v6415 = vpack.c.b16 %v6386, %v6385
    %v6416 = vpack.c.b16 %v6388, %v6387
    %v6417 = vpack.c.b16 %v6390, %v6389
    %v6418 = vpack.c.b16 %v6392, %v6391
    %v6419 = vpack.c.b16 %v6394, %v6393
    %v6420 = vpack.c.b16 %v6396, %v6395
    %v6421 = vpack.c.b16 %v6398, %v6397
    %v6422 = vpack.c.b16 %v6400, %v6399
    %v6423 = vpack.c.b16 %v6402, %v6401
    %v6424 = vpack.c.b16 %v6404, %v6403
    %v6425 = vpack.c.b16 %v6406, %v6405
    %v6426 = vpack.c.b16 %v6408, %v6407
    %v6427 = vpack.c.b16 %v6410, %v6409
    %v6428 = vpack.c.b16 %v6412, %v6411
    %6445 = vmatprep.subr.bf16.mxu0 0
    %6446 = vmatpush1.bf16.msra.mxu0 %v6413
    %6447 = vmatprep.subr.bf16.mxu0 0
    %6448 = vmatpush1.bf16.msra.mxu0 %v6414
    %6449 = vmatprep.subr.bf16.mxu0 0
    %6450 = vmatpush1.bf16.msra.mxu0 %v6415
    %6451 = vmatprep.subr.bf16.mxu0 0
    %6452 = vmatpush1.bf16.msra.mxu0 %v6416
    %6453 = vmatprep.subr.bf16.mxu0 0
    %6454 = vmatpush1.bf16.msra.mxu0 %v6417
    %6455 = vmatprep.subr.bf16.mxu0 0
    %6456 = vmatpush1.bf16.msra.mxu0 %v6418
    %6457 = vmatprep.subr.bf16.mxu0 0
    %6458 = vmatpush1.bf16.msra.mxu0 %v6419
    %6459 = vmatprep.subr.bf16.mxu0 0
    %6460 = vmatpush1.bf16.msra.mxu0 %v6420
    %6461 = vmatprep.subr.bf16.mxu0 0
    %6462 = vmatpush1.bf16.msra.mxu0 %v6421
    %6463 = vmatprep.subr.bf16.mxu0 0
    %6464 = vmatpush1.bf16.msra.mxu0 %v6422
    %6465 = vmatprep.subr.bf16.mxu0 0
    %6466 = vmatpush1.bf16.msra.mxu0 %v6423
    %6467 = vmatprep.subr.bf16.mxu0 0
    %6468 = vmatpush1.bf16.msra.mxu0 %v6424
    %6469 = vmatprep.subr.bf16.mxu0 0
    %6470 = vmatpush1.bf16.msra.mxu0 %v6425
    %6471 = vmatprep.subr.bf16.mxu0 0
    %6472 = vmatpush1.bf16.msra.mxu0 %v6426
    %6473 = vmatprep.subr.bf16.mxu0 0
    %6474 = vmatpush1.bf16.msra.mxu0 %v6427
    %6475 = vmatprep.subr.bf16.mxu0 0
    %6476 = vmatpush1.bf16.msra.mxu0 %v6428
    %6477 = vmatprep.mubr.bf16.mxu0 %v6309
    %6478 = vmatmul.mubr.bf16.gmra.mrb[0].mxu0 %v6308
    %v6479 = vpop.f32.mrb[0].mxu0
    %v6480 = vadd.f32 %v6347, %v6479
    %v6481 = vpop.f32.mrb[0].mxu0
    %v6482 = vpop.f32.mrb[0].mxu0
    %v6483 = vpop.f32.mrb[0].mxu0
    %6484 = vdwg.mxu0
    %v6485 = vtanh.pop %v6480
    %v6486 = vld [vmem:[#allocation7 + $0x280] sm:$0xff]
    %v6487 = vld [vmem:[#allocation7 + $0x288] sm:$0xff]
    %v6488 = vld [vmem:[#allocation7 + $0x290] sm:$0xff]
    %v6489 = vld [vmem:[#allocation7 + $0x298] sm:$0xff]
    %v6490 = vld [vmem:[#allocation7 + $0x2a0] sm:$0xff]
    %v6491 = vld [vmem:[#allocation7 + $0x2a8] sm:$0xff]
    %v6492 = vld [vmem:[#allocation7 + $0x2b0] sm:$0xff]
    %v6493 = vld [vmem:[#allocation7 + $0x2b8] sm:$0xff]
    %v6494 = vld [vmem:[#allocation7 + $0x2c0] sm:$0xff]
    %v6495 = vld [vmem:[#allocation7 + $0x2c8] sm:$0xff]
    %v6496 = vld [vmem:[#allocation7 + $0x2d0] sm:$0xff]
    %v6497 = vld [vmem:[#allocation7 + $0x2d8] sm:$0xff]
    %v6498 = vld [vmem:[#allocation7 + $0x2e0] sm:$0xff]
    %v6499 = vld [vmem:[#allocation7 + $0x2e8] sm:$0xff]
    %v6500 = vld [vmem:[#allocation7 + $0x2f0] sm:$0xff]
    %v6501 = vld [vmem:[#allocation7 + $0x2f8] sm:$0xff]
    %v6502 = vld [vmem:[#allocation7 + $0x300] sm:$0xff]
    %v6503 = vld [vmem:[#allocation7 + $0x308] sm:$0xff]
    %v6504 = vld [vmem:[#allocation7 + $0x310] sm:$0xff]
    %v6505 = vld [vmem:[#allocation7 + $0x318] sm:$0xff]
    %v6506 = vld [vmem:[#allocation7 + $0x320] sm:$0xff]
    %v6507 = vld [vmem:[#allocation7 + $0x328] sm:$0xff]
    %v6508 = vld [vmem:[#allocation7 + $0x330] sm:$0xff]
    %v6509 = vld [vmem:[#allocation7 + $0x338] sm:$0xff]
    %v6510 = vld [vmem:[#allocation7 + $0x340] sm:$0xff]
    %v6511 = vld [vmem:[#allocation7 + $0x348] sm:$0xff]
    %v6512 = vld [vmem:[#allocation7 + $0x350] sm:$0xff]
    %v6513 = vld [vmem:[#allocation7 + $0x358] sm:$0xff]
    %v6514 = vld [vmem:[#allocation7 + $0x360] sm:$0xff]
    %v6515 = vld [vmem:[#allocation7 + $0x368] sm:$0xff]
    %v6516 = vld [vmem:[#allocation7 + $0x370] sm:$0xff]
    %v6517 = vld [vmem:[#allocation7 + $0x378] sm:$0xff]
    %v6518 = vld [vmem:[#allocation7 + $0x380] sm:$0xff]
    %v6519 = vld [vmem:[#allocation7 + $0x388] sm:$0xff]
    %v6520 = vld [vmem:[#allocation7 + $0x390] sm:$0xff]
    %v6521 = vld [vmem:[#allocation7 + $0x398] sm:$0xff]
    %v6522 = vld [vmem:[#allocation7 + $0x3a0] sm:$0xff]
    %v6523 = vld [vmem:[#allocation7 + $0x3a8] sm:$0xff]
    %v6524 = vld [vmem:[#allocation7 + $0x3b0] sm:$0xff]
    %v6525 = vld [vmem:[#allocation7 + $0x3b8] sm:$0xff]
    %v6526 = vld [vmem:[#allocation7 + $0x3c0] sm:$0xff]
    %v6527 = vld [vmem:[#allocation7 + $0x3c8] sm:$0xff]
    %v6528 = vld [vmem:[#allocation7 + $0x3d0] sm:$0xff]
    %v6529 = vld [vmem:[#allocation7 + $0x3d8] sm:$0xff]
    %v6530 = vld [vmem:[#allocation7 + $0x3e0] sm:$0xff]
    %v6531 = vld [vmem:[#allocation7 + $0x3e8] sm:$0xff]
    %v6532 = vld [vmem:[#allocation7 + $0x3f0] sm:$0xff]
    %v6533 = vld [vmem:[#allocation7 + $0x3f8] sm:$0xff]
    %v6534 = vld [vmem:[#allocation7 + $0x400] sm:$0xff]
    %v6535 = vld [vmem:[#allocation7 + $0x408] sm:$0xff]
    %v6536 = vld [vmem:[#allocation7 + $0x410] sm:$0xff]
    %v6537 = vld [vmem:[#allocation7 + $0x418] sm:$0xff]
    %v6538 = vld [vmem:[#allocation7 + $0x420] sm:$0xff]
    %v6539 = vld [vmem:[#allocation7 + $0x428] sm:$0xff]
    %v6540 = vld [vmem:[#allocation7 + $0x430] sm:$0xff]
    %v6541 = vld [vmem:[#allocation7 + $0x438] sm:$0xff]
    %v6542 = vld [vmem:[#allocation7 + $0x440] sm:$0xff]
    %v6543 = vld [vmem:[#allocation7 + $0x448] sm:$0xff]
    %v6544 = vld [vmem:[#allocation7 + $0x450] sm:$0xff]
    %v6545 = vld [vmem:[#allocation7 + $0x458] sm:$0xff]
    %v6546 = vld [vmem:[#allocation7 + $0x460] sm:$0xff]
    %v6547 = vld [vmem:[#allocation7 + $0x468] sm:$0xff]
    %v6548 = vld [vmem:[#allocation7 + $0x470] sm:$0xff]
    %v6549 = vld [vmem:[#allocation7 + $0x478] sm:$0xff]
    %v6550 = vld [vmem:[#allocation7 + $0x480] sm:$0xff]
    %v6551 = vld [vmem:[#allocation7 + $0x488] sm:$0xff]
    %v6552 = vld [vmem:[#allocation7 + $0x490] sm:$0xff]
    %v6553 = vld [vmem:[#allocation7 + $0x498] sm:$0xff]
    %v6554 = vld [vmem:[#allocation7 + $0x4a0] sm:$0xff]
    %v6555 = vld [vmem:[#allocation7 + $0x4a8] sm:$0xff]
    %v6556 = vld [vmem:[#allocation7 + $0x4b0] sm:$0xff]
    %v6557 = vld [vmem:[#allocation7 + $0x4b8] sm:$0xff]
    %v6558 = vld [vmem:[#allocation7 + $0x4c0] sm:$0xff]
    %v6559 = vld [vmem:[#allocation7 + $0x4c8] sm:$0xff]
    %v6560 = vld [vmem:[#allocation7 + $0x4d0] sm:$0xff]
    %v6561 = vld [vmem:[#allocation7 + $0x4d8] sm:$0xff]
    %v6562 = vld [vmem:[#allocation7 + $0x4e0] sm:$0xff]
    %v6563 = vld [vmem:[#allocation7 + $0x4e8] sm:$0xff]
    %v6564 = vld [vmem:[#allocation7 + $0x4f0] sm:$0xff]
    %v6565 = vld [vmem:[#allocation7 + $0x4f8] sm:$0xff]
    %v6566 = vld [vmem:[#allocation7 + $0x500] sm:$0xff]
    %v6567 = vld [vmem:[#allocation7 + $0x508] sm:$0xff]
    %v6568 = vld [vmem:[#allocation7 + $0x510] sm:$0xff]
    %v6569 = vld [vmem:[#allocation7 + $0x518] sm:$0xff]
    %v6570 = vld [vmem:[#allocation7 + $0x520] sm:$0xff]
    %v6571 = vld [vmem:[#allocation7 + $0x528] sm:$0xff]
    %v6572 = vld [vmem:[#allocation7 + $0x530] sm:$0xff]
    %v6573 = vld [vmem:[#allocation7 + $0x538] sm:$0xff]
    %v6574 = vld [vmem:[#allocation7 + $0x540] sm:$0xff]
    %v6575 = vld [vmem:[#allocation7 + $0x548] sm:$0xff]
    %v6576 = vld [vmem:[#allocation7 + $0x550] sm:$0xff]
    %v6577 = vld [vmem:[#allocation7 + $0x558] sm:$0xff]
    %v6578 = vld [vmem:[#allocation7 + $0x560] sm:$0xff]
    %v6579 = vld [vmem:[#allocation7 + $0x568] sm:$0xff]
    %v6580 = vld [vmem:[#allocation7 + $0x570] sm:$0xff]
    %v6581 = vld [vmem:[#allocation7 + $0x578] sm:$0xff]
    %v6582 = vld [vmem:[#allocation7 + $0x580] sm:$0xff]
    %v6583 = vld [vmem:[#allocation7 + $0x588] sm:$0xff]
    %v6584 = vld [vmem:[#allocation7 + $0x590] sm:$0xff]
    %v6585 = vld [vmem:[#allocation7 + $0x598] sm:$0xff]
    %v6586 = vld [vmem:[#allocation7 + $0x5a0] sm:$0xff]
    %v6587 = vld [vmem:[#allocation7 + $0x5a8] sm:$0xff]
    %v6588 = vld [vmem:[#allocation7 + $0x5b0] sm:$0xff]
    %v6589 = vld [vmem:[#allocation7 + $0x5b8] sm:$0xff]
    %v6590 = vld [vmem:[#allocation7 + $0x5c0] sm:$0xff]
    %v6591 = vld [vmem:[#allocation7 + $0x5c8] sm:$0xff]
    %v6592 = vld [vmem:[#allocation7 + $0x5d0] sm:$0xff]
    %v6593 = vld [vmem:[#allocation7 + $0x5d8] sm:$0xff]
    %v6594 = vld [vmem:[#allocation7 + $0x5e0] sm:$0xff]
    %v6595 = vld [vmem:[#allocation7 + $0x5e8] sm:$0xff]
    %v6596 = vld [vmem:[#allocation7 + $0x5f0] sm:$0xff]
    %v6597 = vld [vmem:[#allocation7 + $0x5f8] sm:$0xff]
    %v6598 = vld [vmem:[#allocation7 + $0x600] sm:$0xff]
    %v6599 = vld [vmem:[#allocation7 + $0x608] sm:$0xff]
    %v6600 = vld [vmem:[#allocation7 + $0x610] sm:$0xff]
    %v6601 = vld [vmem:[#allocation7 + $0x618] sm:$0xff]
    %v6602 = vld [vmem:[#allocation7 + $0x620] sm:$0xff]
    %v6603 = vld [vmem:[#allocation7 + $0x628] sm:$0xff]
    %v6604 = vld [vmem:[#allocation7 + $0x630] sm:$0xff]
    %v6605 = vld [vmem:[#allocation7 + $0x638] sm:$0xff]
    %v6606 = vld [vmem:[#allocation7 + $0x640] sm:$0xff]
    %v6607 = vld [vmem:[#allocation7 + $0x648] sm:$0xff]
    %v6608 = vld [vmem:[#allocation7 + $0x650] sm:$0xff]
    %v6609 = vld [vmem:[#allocation7 + $0x658] sm:$0xff]
    %v6610 = vld [vmem:[#allocation7 + $0x660] sm:$0xff]
    %v6611 = vld [vmem:[#allocation7 + $0x668] sm:$0xff]
    %v6612 = vld [vmem:[#allocation7 + $0x670] sm:$0xff]
    %v6613 = vld [vmem:[#allocation7 + $0x678] sm:$0xff]
    %v6614 = vld [vmem:[#allocation7 + $0x680] sm:$0xff]
    %v6615 = vld [vmem:[#allocation7 + $0x688] sm:$0xff]
    %v6616 = vld [vmem:[#allocation7 + $0x690] sm:$0xff]
    %v6617 = vld [vmem:[#allocation7 + $0x698] sm:$0xff]
    %v6618 = vld [vmem:[#allocation7 + $0x6a0] sm:$0xff]
    %v6619 = vld [vmem:[#allocation7 + $0x6a8] sm:$0xff]
    %v6620 = vld [vmem:[#allocation7 + $0x6b0] sm:$0xff]
    %v6621 = vld [vmem:[#allocation7 + $0x6b8] sm:$0xff]
    %v6622 = vld [vmem:[#allocation7 + $0x6c0] sm:$0xff]
    %v6623 = vld [vmem:[#allocation7 + $0x6c8] sm:$0xff]
    %v6624 = vld [vmem:[#allocation7 + $0x6d0] sm:$0xff]
    %v6625 = vld [vmem:[#allocation7 + $0x6d8] sm:$0xff]
    %v6626 = vld [vmem:[#allocation7 + $0x6e0] sm:$0xff]
    %v6627 = vld [vmem:[#allocation7 + $0x6e8] sm:$0xff]
    %v6628 = vld [vmem:[#allocation7 + $0x6f0] sm:$0xff]
    %v6629 = vld [vmem:[#allocation7 + $0x6f8] sm:$0xff]
    %v6630 = vld [vmem:[#allocation7 + $0x700] sm:$0xff]
    %v6631 = vld [vmem:[#allocation7 + $0x708] sm:$0xff]
    %v6632 = vld [vmem:[#allocation7 + $0x710] sm:$0xff]
    %v6633 = vld [vmem:[#allocation7 + $0x718] sm:$0xff]
    %v6634 = vld [vmem:[#allocation7 + $0x720] sm:$0xff]
    %v6635 = vld [vmem:[#allocation7 + $0x728] sm:$0xff]
    %v6636 = vld [vmem:[#allocation7 + $0x730] sm:$0xff]
    %v6637 = vld [vmem:[#allocation7 + $0x738] sm:$0xff]
    %v6638 = vld [vmem:[#allocation7 + $0x740] sm:$0xff]
    %v6639 = vld [vmem:[#allocation7 + $0x748] sm:$0xff]
    %v6640 = vld [vmem:[#allocation7 + $0x750] sm:$0xff]
    %v6641 = vld [vmem:[#allocation7 + $0x758] sm:$0xff]
    %v6642 = vld [vmem:[#allocation7 + $0x760] sm:$0xff]
    %v6643 = vld [vmem:[#allocation7 + $0x768] sm:$0xff]
    %v6644 = vld [vmem:[#allocation7 + $0x770] sm:$0xff]
    %v6645 = vld [vmem:[#allocation7 + $0x778] sm:$0xff]
    %v6726 = vunpack.c.l.b16 %v6566
    %v6727 = vunpack.c.h.b16 %v6566
    %v6728 = vunpack.c.l.b16 %v6567
    %v6729 = vunpack.c.h.b16 %v6567
    %v6730 = vunpack.c.l.b16 %v6568
    %v6731 = vunpack.c.h.b16 %v6568
    %v6732 = vunpack.c.l.b16 %v6569
    %v6733 = vunpack.c.h.b16 %v6569
    %v6734 = vunpack.c.l.b16 %v6570
    %v6735 = vunpack.c.h.b16 %v6570
    %v6736 = vunpack.c.l.b16 %v6571
    %v6737 = vunpack.c.h.b16 %v6571
    %v6738 = vunpack.c.l.b16 %v6572
    %v6739 = vunpack.c.h.b16 %v6572
    %v6740 = vunpack.c.l.b16 %v6573
    %v6741 = vunpack.c.h.b16 %v6573
    %v6742 = vunpack.c.l.b16 %v6574
    %v6743 = vunpack.c.h.b16 %v6574
    %v6744 = vunpack.c.l.b16 %v6575
    %v6745 = vunpack.c.h.b16 %v6575
    %v6746 = vunpack.c.l.b16 %v6576
    %v6747 = vunpack.c.h.b16 %v6576
    %v6748 = vunpack.c.l.b16 %v6577
    %v6749 = vunpack.c.h.b16 %v6577
    %v6750 = vunpack.c.l.b16 %v6578
    %v6751 = vunpack.c.h.b16 %v6578
    %v6752 = vunpack.c.l.b16 %v6579
    %v6753 = vunpack.c.h.b16 %v6579
    %v6754 = vunpack.c.l.b16 %v6580
    %v6755 = vunpack.c.h.b16 %v6580
    %v6756 = vunpack.c.l.b16 %v6581
    %v6757 = vunpack.c.h.b16 %v6581
    %v6758 = vunpack.c.l.b16 %v6582
    %v6759 = vunpack.c.h.b16 %v6582
    %v6760 = vunpack.c.l.b16 %v6583
    %v6761 = vunpack.c.h.b16 %v6583
    %v6762 = vunpack.c.l.b16 %v6584
    %v6763 = vunpack.c.h.b16 %v6584
    %v6764 = vunpack.c.l.b16 %v6585
    %v6765 = vunpack.c.h.b16 %v6585
    %v6766 = vunpack.c.l.b16 %v6586
    %v6767 = vunpack.c.h.b16 %v6586
    %v6768 = vunpack.c.l.b16 %v6587
    %v6769 = vunpack.c.h.b16 %v6587
    %v6770 = vunpack.c.l.b16 %v6588
    %v6771 = vunpack.c.h.b16 %v6588
    %v6772 = vunpack.c.l.b16 %v6589
    %v6773 = vunpack.c.h.b16 %v6589
    %v6774 = vunpack.c.l.b16 %v6590
    %v6775 = vunpack.c.h.b16 %v6590
    %v6776 = vunpack.c.l.b16 %v6591
    %v6777 = vunpack.c.h.b16 %v6591
    %v6778 = vunpack.c.l.b16 %v6592
    %v6779 = vunpack.c.h.b16 %v6592
    %v6780 = vunpack.c.l.b16 %v6593
    %v6781 = vunpack.c.h.b16 %v6593
    %v6782 = vunpack.c.l.b16 %v6594
    %v6783 = vunpack.c.h.b16 %v6594
    %v6784 = vunpack.c.l.b16 %v6595
    %v6785 = vunpack.c.h.b16 %v6595
    %v6786 = vunpack.c.l.b16 %v6596
    %v6787 = vunpack.c.h.b16 %v6596
    %v6788 = vunpack.c.l.b16 %v6597
    %v6789 = vunpack.c.h.b16 %v6597
    %v6790 = vunpack.c.l.b16 %v6598
    %v6791 = vunpack.c.h.b16 %v6598
    %v6792 = vunpack.c.l.b16 %v6599
    %v6793 = vunpack.c.h.b16 %v6599
    %v6794 = vunpack.c.l.b16 %v6600
    %v6795 = vunpack.c.h.b16 %v6600
    %v6796 = vunpack.c.l.b16 %v6601
    %v6797 = vunpack.c.h.b16 %v6601
    %v6798 = vunpack.c.l.b16 %v6602
    %v6799 = vunpack.c.h.b16 %v6602
    %v6800 = vunpack.c.l.b16 %v6603
    %v6801 = vunpack.c.h.b16 %v6603
    %v6802 = vunpack.c.l.b16 %v6604
    %v6803 = vunpack.c.h.b16 %v6604
    %v6804 = vunpack.c.l.b16 %v6605
    %v6805 = vunpack.c.h.b16 %v6605
    %v6806 = vunpack.c.l.b16 %v6606
    %v6807 = vunpack.c.h.b16 %v6606
    %v6808 = vunpack.c.l.b16 %v6607
    %v6809 = vunpack.c.h.b16 %v6607
    %v6810 = vunpack.c.l.b16 %v6608
    %v6811 = vunpack.c.h.b16 %v6608
    %v6812 = vunpack.c.l.b16 %v6609
    %v6813 = vunpack.c.h.b16 %v6609
    %v6814 = vunpack.c.l.b16 %v6610
    %v6815 = vunpack.c.h.b16 %v6610
    %v6816 = vunpack.c.l.b16 %v6611
    %v6817 = vunpack.c.h.b16 %v6611
    %v6818 = vunpack.c.l.b16 %v6612
    %v6819 = vunpack.c.h.b16 %v6612
    %v6820 = vunpack.c.l.b16 %v6613
    %v6821 = vunpack.c.h.b16 %v6613
    %v6822 = vunpack.c.l.b16 %v6614
    %v6823 = vunpack.c.h.b16 %v6614
    %v6824 = vunpack.c.l.b16 %v6615
    %v6825 = vunpack.c.h.b16 %v6615
    %v6826 = vunpack.c.l.b16 %v6616
    %v6827 = vunpack.c.h.b16 %v6616
    %v6828 = vunpack.c.l.b16 %v6617
    %v6829 = vunpack.c.h.b16 %v6617
    %v6830 = vunpack.c.l.b16 %v6618
    %v6831 = vunpack.c.h.b16 %v6618
    %v6832 = vunpack.c.l.b16 %v6619
    %v6833 = vunpack.c.h.b16 %v6619
    %v6834 = vunpack.c.l.b16 %v6620
    %v6835 = vunpack.c.h.b16 %v6620
    %v6836 = vunpack.c.l.b16 %v6621
    %v6837 = vunpack.c.h.b16 %v6621
    %v6838 = vunpack.c.l.b16 %v6622
    %v6839 = vunpack.c.h.b16 %v6622
    %v6840 = vunpack.c.l.b16 %v6623
    %v6841 = vunpack.c.h.b16 %v6623
    %v6842 = vunpack.c.l.b16 %v6624
    %v6843 = vunpack.c.h.b16 %v6624
    %v6844 = vunpack.c.l.b16 %v6625
    %v6845 = vunpack.c.h.b16 %v6625
    %v6846 = vunpack.c.l.b16 %v6626
    %v6847 = vunpack.c.h.b16 %v6626
    %v6848 = vunpack.c.l.b16 %v6627
    %v6849 = vunpack.c.h.b16 %v6627
    %v6850 = vunpack.c.l.b16 %v6628
    %v6851 = vunpack.c.h.b16 %v6628
    %v6852 = vunpack.c.l.b16 %v6629
    %v6853 = vunpack.c.h.b16 %v6629
    %v6854 = vunpack.c.l.b16 %v6630
    %v6855 = vunpack.c.h.b16 %v6630
    %v6856 = vunpack.c.l.b16 %v6631
    %v6857 = vunpack.c.h.b16 %v6631
    %v6858 = vunpack.c.l.b16 %v6632
    %v6859 = vunpack.c.h.b16 %v6632
    %v6860 = vunpack.c.l.b16 %v6633
    %v6861 = vunpack.c.h.b16 %v6633
    %v6862 = vunpack.c.l.b16 %v6634
    %v6863 = vunpack.c.h.b16 %v6634
    %v6864 = vunpack.c.l.b16 %v6635
    %v6865 = vunpack.c.h.b16 %v6635
    %v6866 = vunpack.c.l.b16 %v6636
    %v6867 = vunpack.c.h.b16 %v6636
    %v6868 = vunpack.c.l.b16 %v6637
    %v6869 = vunpack.c.h.b16 %v6637
    %v6870 = vunpack.c.l.b16 %v6638
    %v6871 = vunpack.c.h.b16 %v6638
    %v6872 = vunpack.c.l.b16 %v6639
    %v6873 = vunpack.c.h.b16 %v6639
    %v6874 = vunpack.c.l.b16 %v6640
    %v6875 = vunpack.c.h.b16 %v6640
    %v6876 = vunpack.c.l.b16 %v6641
    %v6877 = vunpack.c.h.b16 %v6641
    %v6878 = vunpack.c.l.b16 %v6642
    %v6879 = vunpack.c.h.b16 %v6642
    %v6880 = vunpack.c.l.b16 %v6643
    %v6881 = vunpack.c.h.b16 %v6643
    %v6882 = vunpack.c.l.b16 %v6644
    %v6883 = vunpack.c.h.b16 %v6644
    %v6884 = vunpack.c.l.b16 %v6645
    %v6885 = vunpack.c.h.b16 %v6645
    %v6886 = vpack.c.b16 %v6736, %v6726
    %v6887 = vpack.c.b16 %v6737, %v6727
    %v6888 = vpack.c.b16 %v6738, %v6728
    %v6889 = vpack.c.b16 %v6739, %v6729
    %v6890 = vpack.c.b16 %v6740, %v6730
    %v6891 = vpack.c.b16 %v6741, %v6731
    %v6892 = vpack.c.b16 %v6742, %v6732
    %v6893 = vpack.c.b16 %v6743, %v6733
    %v6894 = vpack.c.b16 %v6744, %v6734
    %v6895 = vpack.c.b16 %v6745, %v6735
    %v6896 = vpack.c.b16 %v6756, %v6746
    %v6897 = vpack.c.b16 %v6757, %v6747
    %v6898 = vpack.c.b16 %v6758, %v6748
    %v6899 = vpack.c.b16 %v6759, %v6749
    %v6900 = vpack.c.b16 %v6760, %v6750
    %v6901 = vpack.c.b16 %v6761, %v6751
    %v6902 = vpack.c.b16 %v6762, %v6752
    %v6903 = vpack.c.b16 %v6763, %v6753
    %v6904 = vpack.c.b16 %v6764, %v6754
    %v6905 = vpack.c.b16 %v6765, %v6755
    %v6906 = vpack.c.b16 %v6776, %v6766
    %v6907 = vpack.c.b16 %v6777, %v6767
    %v6908 = vpack.c.b16 %v6778, %v6768
    %v6909 = vpack.c.b16 %v6779, %v6769
    %v6910 = vpack.c.b16 %v6780, %v6770
    %v6911 = vpack.c.b16 %v6781, %v6771
    %v6912 = vpack.c.b16 %v6782, %v6772
    %v6913 = vpack.c.b16 %v6783, %v6773
    %v6914 = vpack.c.b16 %v6784, %v6774
    %v6915 = vpack.c.b16 %v6785, %v6775
    %v6916 = vpack.c.b16 %v6796, %v6786
    %v6917 = vpack.c.b16 %v6797, %v6787
    %v6918 = vpack.c.b16 %v6798, %v6788
    %v6919 = vpack.c.b16 %v6799, %v6789
    %v6920 = vpack.c.b16 %v6800, %v6790
    %v6921 = vpack.c.b16 %v6801, %v6791
    %v6922 = vpack.c.b16 %v6802, %v6792
    %v6923 = vpack.c.b16 %v6803, %v6793
    %v6924 = vpack.c.b16 %v6804, %v6794
    %v6925 = vpack.c.b16 %v6805, %v6795
    %v6926 = vpack.c.b16 %v6816, %v6806
    %v6927 = vpack.c.b16 %v6817, %v6807
    %v6928 = vpack.c.b16 %v6818, %v6808
    %v6929 = vpack.c.b16 %v6819, %v6809
    %v6930 = vpack.c.b16 %v6820, %v6810
    %v6931 = vpack.c.b16 %v6821, %v6811
    %v6932 = vpack.c.b16 %v6822, %v6812
    %v6933 = vpack.c.b16 %v6823, %v6813
    %v6934 = vpack.c.b16 %v6824, %v6814
    %v6935 = vpack.c.b16 %v6825, %v6815
    %v6936 = vpack.c.b16 %v6836, %v6826
    %v6937 = vpack.c.b16 %v6837, %v6827
    %v6938 = vpack.c.b16 %v6838, %v6828
    %v6939 = vpack.c.b16 %v6839, %v6829
    %v6940 = vpack.c.b16 %v6840, %v6830
    %v6941 = vpack.c.b16 %v6841, %v6831
    %v6942 = vpack.c.b16 %v6842, %v6832
    %v6943 = vpack.c.b16 %v6843, %v6833
    %v6944 = vpack.c.b16 %v6844, %v6834
    %v6945 = vpack.c.b16 %v6845, %v6835
    %v6946 = vpack.c.b16 %v6856, %v6846
    %v6947 = vpack.c.b16 %v6857, %v6847
    %v6948 = vpack.c.b16 %v6858, %v6848
    %v6949 = vpack.c.b16 %v6859, %v6849
    %v6950 = vpack.c.b16 %v6860, %v6850
    %v6951 = vpack.c.b16 %v6861, %v6851
    %v6952 = vpack.c.b16 %v6862, %v6852
    %v6953 = vpack.c.b16 %v6863, %v6853
    %v6954 = vpack.c.b16 %v6864, %v6854
    %v6955 = vpack.c.b16 %v6865, %v6855
    %v6956 = vpack.c.b16 %v6876, %v6866
    %v6957 = vpack.c.b16 %v6877, %v6867
    %v6958 = vpack.c.b16 %v6878, %v6868
    %v6959 = vpack.c.b16 %v6879, %v6869
    %v6960 = vpack.c.b16 %v6880, %v6870
    %v6961 = vpack.c.b16 %v6881, %v6871
    %v6962 = vpack.c.b16 %v6882, %v6872
    %v6963 = vpack.c.b16 %v6883, %v6873
    %v6964 = vpack.c.b16 %v6884, %v6874
    %v6965 = vpack.c.b16 %v6885, %v6875
    %7046 = vmatprep.subr.bf16.mxu0 %v6887
    %7047 = vmatpush1.bf16.msra.mxu0 %v6886
    %7048 = vmatprep.subr.bf16.mxu0 %v6897
    %7049 = vmatpush1.bf16.msra.mxu0 %v6896
    %7050 = vmatprep.subr.bf16.mxu0 %v6907
    %7051 = vmatpush1.bf16.msra.mxu0 %v6906
    %7052 = vmatprep.subr.bf16.mxu0 %v6917
    %7053 = vmatpush1.bf16.msra.mxu0 %v6916
    %7054 = vmatprep.subr.bf16.mxu0 %v6927
    %7055 = vmatpush1.bf16.msra.mxu0 %v6926
    %7056 = vmatprep.subr.bf16.mxu0 %v6937
    %7057 = vmatpush1.bf16.msra.mxu0 %v6936
    %7058 = vmatprep.subr.bf16.mxu0 %v6947
    %7059 = vmatpush1.bf16.msra.mxu0 %v6946
    %7060 = vmatprep.subr.bf16.mxu0 %v6957
    %7061 = vmatpush1.bf16.msra.mxu0 %v6956
    %7062 = vmatprep.subr.bf16.mxu0 0
    %7063 = vmatpush1.bf16.msra.mxu0 0
    %7064 = vmatprep.subr.bf16.mxu0 0
    %7065 = vmatpush1.bf16.msra.mxu0 0
    %7066 = vmatprep.subr.bf16.mxu0 0
    %7067 = vmatpush1.bf16.msra.mxu0 0
    %7068 = vmatprep.subr.bf16.mxu0 0
    %7069 = vmatpush1.bf16.msra.mxu0 0
    %7070 = vmatprep.subr.bf16.mxu0 0
    %7071 = vmatpush1.bf16.msra.mxu0 0
    %7072 = vmatprep.subr.bf16.mxu0 0
    %7073 = vmatpush1.bf16.msra.mxu0 0
    %7074 = vmatprep.subr.bf16.mxu0 0
    %7075 = vmatpush1.bf16.msra.mxu0 0
    %7076 = vmatprep.subr.bf16.mxu0 0
    %7077 = vmatpush1.bf16.msra.mxu0 0
    %7078 = vmatprep.mubr.bf16.mxu0 0
    %7079 = vmatmul.mubr.bf16.gmra.mrb[0].mxu0 %v150
    %v7080 = vpop.f32.mrb[0].mxu0
    %v7081 = vadd.f32 0.0, %v7080
    %v7082 = vpop.f32.mrb[0].mxu0
    %v7083 = vadd.f32 0.0, %v7082
    %v7084 = vpop.f32.mrb[0].mxu0
    %v7085 = vpop.f32.mrb[0].mxu0
    %7086 = vdwg.mxu0
    %7087 = vmatprep.subr.bf16.mxu0 %v6889
    %7088 = vmatpush1.bf16.msra.mxu0 %v6888
    %7089 = vmatprep.subr.bf16.mxu0 %v6899
    %7090 = vmatpush1.bf16.msra.mxu0 %v6898
    %7091 = vmatprep.subr.bf16.mxu0 %v6909
    %7092 = vmatpush1.bf16.msra.mxu0 %v6908
    %7093 = vmatprep.subr.bf16.mxu0 %v6919
    %7094 = vmatpush1.bf16.msra.mxu0 %v6918
    %7095 = vmatprep.subr.bf16.mxu0 %v6929
    %7096 = vmatpush1.bf16.msra.mxu0 %v6928
    %7097 = vmatprep.subr.bf16.mxu0 %v6939
    %7098 = vmatpush1.bf16.msra.mxu0 %v6938
    %7099 = vmatprep.subr.bf16.mxu0 %v6949
    %7100 = vmatpush1.bf16.msra.mxu0 %v6948
    %7101 = vmatprep.subr.bf16.mxu0 %v6959
    %7102 = vmatpush1.bf16.msra.mxu0 %v6958
    %7103 = vmatprep.subr.bf16.mxu0 0
    %7104 = vmatpush1.bf16.msra.mxu0 0
    %7105 = vmatprep.subr.bf16.mxu0 0
    %7106 = vmatpush1.bf16.msra.mxu0 0
    %7107 = vmatprep.subr.bf16.mxu0 0
    %7108 = vmatpush1.bf16.msra.mxu0 0
    %7109 = vmatprep.subr.bf16.mxu0 0
    %7110 = vmatpush1.bf16.msra.mxu0 0
    %7111 = vmatprep.subr.bf16.mxu0 0
    %7112 = vmatpush1.bf16.msra.mxu0 0
    %7113 = vmatprep.subr.bf16.mxu0 0
    %7114 = vmatpush1.bf16.msra.mxu0 0
    %7115 = vmatprep.subr.bf16.mxu0 0
    %7116 = vmatpush1.bf16.msra.mxu0 0
    %7117 = vmatprep.subr.bf16.mxu0 0
    %7118 = vmatpush1.bf16.msra.mxu0 0
    %7119 = vmatprep.mubr.bf16.mxu0 0
    %7120 = vmatmul.mubr.bf16.gmra.mrb[0].mxu0 %v150
    %v7121 = vpop.f32.mrb[0].mxu0
    %v7122 = vadd.f32 0.0, %v7121
    %v7123 = vpop.f32.mrb[0].mxu0
    %v7124 = vadd.f32 0.0, %v7123
    %v7125 = vpop.f32.mrb[0].mxu0
    %v7126 = vpop.f32.mrb[0].mxu0
    %7127 = vdwg.mxu0
    %7128 = vmatprep.subr.bf16.mxu0 %v6891
    %7129 = vmatpush1.bf16.msra.mxu0 %v6890
    %7130 = vmatprep.subr.bf16.mxu0 %v6901
    %7131 = vmatpush1.bf16.msra.mxu0 %v6900
    %7132 = vmatprep.subr.bf16.mxu0 %v6911
    %7133 = vmatpush1.bf16.msra.mxu0 %v6910
    %7134 = vmatprep.subr.bf16.mxu0 %v6921
    %7135 = vmatpush1.bf16.msra.mxu0 %v6920
    %7136 = vmatprep.subr.bf16.mxu0 %v6931
    %7137 = vmatpush1.bf16.msra.mxu0 %v6930
    %7138 = vmatprep.subr.bf16.mxu0 %v6941
    %7139 = vmatpush1.bf16.msra.mxu0 %v6940
    %7140 = vmatprep.subr.bf16.mxu0 %v6951
    %7141 = vmatpush1.bf16.msra.mxu0 %v6950
    %7142 = vmatprep.subr.bf16.mxu0 %v6961
    %7143 = vmatpush1.bf16.msra.mxu0 %v6960
    %7144 = vmatprep.subr.bf16.mxu0 0
    %7145 = vmatpush1.bf16.msra.mxu0 0
    %7146 = vmatprep.subr.bf16.mxu0 0
    %7147 = vmatpush1.bf16.msra.mxu0 0
    %7148 = vmatprep.subr.bf16.mxu0 0
    %7149 = vmatpush1.bf16.msra.mxu0 0
    %7150 = vmatprep.subr.bf16.mxu0 0
    %7151 = vmatpush1.bf16.msra.mxu0 0
    %7152 = vmatprep.subr.bf16.mxu0 0
    %7153 = vmatpush1.bf16.msra.mxu0 0
    %7154 = vmatprep.subr.bf16.mxu0 0
    %7155 = vmatpush1.bf16.msra.mxu0 0
    %7156 = vmatprep.subr.bf16.mxu0 0
    %7157 = vmatpush1.bf16.msra.mxu0 0
    %7158 = vmatprep.subr.bf16.mxu0 0
    %7159 = vmatpush1.bf16.msra.mxu0 0
    %7160 = vmatprep.mubr.bf16.mxu0 0
    %7161 = vmatmul.mubr.bf16.gmra.mrb[0].mxu0 %v150
    %v7162 = vpop.f32.mrb[0].mxu0
    %v7163 = vadd.f32 0.0, %v7162
    %v7164 = vpop.f32.mrb[0].mxu0
    %v7165 = vadd.f32 0.0, %v7164
    %v7166 = vpop.f32.mrb[0].mxu0
    %v7167 = vpop.f32.mrb[0].mxu0
    %7168 = vdwg.mxu0
    %7169 = vmatprep.subr.bf16.mxu0 %v6893
    %7170 = vmatpush1.bf16.msra.mxu0 %v6892
    %7171 = vmatprep.subr.bf16.mxu0 %v6903
    %7172 = vmatpush1.bf16.msra.mxu0 %v6902
    %7173 = vmatprep.subr.bf16.mxu0 %v6913
    %7174 = vmatpush1.bf16.msra.mxu0 %v6912
    %7175 = vmatprep.subr.bf16.mxu0 %v6923
    %7176 = vmatpush1.bf16.msra.mxu0 %v6922
    %7177 = vmatprep.subr.bf16.mxu0 %v6933
    %7178 = vmatpush1.bf16.msra.mxu0 %v6932
    %7179 = vmatprep.subr.bf16.mxu0 %v6943
    %7180 = vmatpush1.bf16.msra.mxu0 %v6942
    %7181 = vmatprep.subr.bf16.mxu0 %v6953
    %7182 = vmatpush1.bf16.msra.mxu0 %v6952
    %7183 = vmatprep.subr.bf16.mxu0 %v6963
    %7184 = vmatpush1.bf16.msra.mxu0 %v6962
    %7185 = vmatprep.subr.bf16.mxu0 0
    %7186 = vmatpush1.bf16.msra.mxu0 0
    %7187 = vmatprep.subr.bf16.mxu0 0
    %7188 = vmatpush1.bf16.msra.mxu0 0
    %7189 = vmatprep.subr.bf16.mxu0 0
    %7190 = vmatpush1.bf16.msra.mxu0 0
    %7191 = vmatprep.subr.bf16.mxu0 0
    %7192 = vmatpush1.bf16.msra.mxu0 0
    %7193 = vmatprep.subr.bf16.mxu0 0
    %7194 = vmatpush1.bf16.msra.mxu0 0
    %7195 = vmatprep.subr.bf16.mxu0 0
    %7196 = vmatpush1.bf16.msra.mxu0 0
    %7197 = vmatprep.subr.bf16.mxu0 0
    %7198 = vmatpush1.bf16.msra.mxu0 0
    %7199 = vmatprep.subr.bf16.mxu0 0
    %7200 = vmatpush1.bf16.msra.mxu0 0
    %7201 = vmatprep.mubr.bf16.mxu0 0
    %7202 = vmatmul.mubr.bf16.gmra.mrb[0].mxu0 %v150
    %v7203 = vpop.f32.mrb[0].mxu0
    %v7204 = vadd.f32 0.0, %v7203
    %v7205 = vpop.f32.mrb[0].mxu0
    %v7206 = vadd.f32 0.0, %v7205
    %v7207 = vpop.f32.mrb[0].mxu0
    %v7208 = vpop.f32.mrb[0].mxu0
    %7209 = vdwg.mxu0
    %7210 = vmatprep.subr.bf16.mxu0 %v6895
    %7211 = vmatpush1.bf16.msra.mxu0 %v6894
    %7212 = vmatprep.subr.bf16.mxu0 %v6905
    %7213 = vmatpush1.bf16.msra.mxu0 %v6904
    %7214 = vmatprep.subr.bf16.mxu0 %v6915
    %7215 = vmatpush1.bf16.msra.mxu0 %v6914
    %7216 = vmatprep.subr.bf16.mxu0 %v6925
    %7217 = vmatpush1.bf16.msra.mxu0 %v6924
    %7218 = vmatprep.subr.bf16.mxu0 %v6935
    %7219 = vmatpush1.bf16.msra.mxu0 %v6934
    %7220 = vmatprep.subr.bf16.mxu0 %v6945
    %7221 = vmatpush1.bf16.msra.mxu0 %v6944
    %7222 = vmatprep.subr.bf16.mxu0 %v6955
    %7223 = vmatpush1.bf16.msra.mxu0 %v6954
    %7224 = vmatprep.subr.bf16.mxu0 %v6965
    %7225 = vmatpush1.bf16.msra.mxu0 %v6964
    %7226 = vmatprep.subr.bf16.mxu0 0
    %7227 = vmatpush1.bf16.msra.mxu0 0
    %7228 = vmatprep.subr.bf16.mxu0 0
    %7229 = vmatpush1.bf16.msra.mxu0 0
    %7230 = vmatprep.subr.bf16.mxu0 0
    %7231 = vmatpush1.bf16.msra.mxu0 0
    %7232 = vmatprep.subr.bf16.mxu0 0
    %7233 = vmatpush1.bf16.msra.mxu0 0
    %7234 = vmatprep.subr.bf16.mxu0 0
    %7235 = vmatpush1.bf16.msra.mxu0 0
    %7236 = vmatprep.subr.bf16.mxu0 0
    %7237 = vmatpush1.bf16.msra.mxu0 0
    %7238 = vmatprep.subr.bf16.mxu0 0
    %7239 = vmatpush1.bf16.msra.mxu0 0
    %7240 = vmatprep.subr.bf16.mxu0 0
    %7241 = vmatpush1.bf16.msra.mxu0 0
    %7242 = vmatprep.mubr.bf16.mxu0 0
    %7243 = vmatmul.mubr.bf16.gmra.mrb[0].mxu0 %v150
    %v7244 = vpop.f32.mrb[0].mxu0
    %v7245 = vadd.f32 0.0, %v7244
    %v7246 = vpop.f32.mrb[0].mxu0
    %v7247 = vadd.f32 0.0, %v7246
    %v7248 = vpop.f32.mrb[0].mxu0
    %v7249 = vpop.f32.mrb[0].mxu0
    %7250 = vdwg.mxu0
    %v7331 = vunpack.c.l.b16 %v6486
    %v7332 = vunpack.c.h.b16 %v6486
    %v7333 = vunpack.c.l.b16 %v6487
    %v7334 = vunpack.c.h.b16 %v6487
    %v7335 = vunpack.c.l.b16 %v6488
    %v7336 = vunpack.c.h.b16 %v6488
    %v7337 = vunpack.c.l.b16 %v6489
    %v7338 = vunpack.c.h.b16 %v6489
    %v7339 = vunpack.c.l.b16 %v6490
    %v7340 = vunpack.c.h.b16 %v6490
    %v7341 = vunpack.c.l.b16 %v6491
    %v7342 = vunpack.c.h.b16 %v6491
    %v7343 = vunpack.c.l.b16 %v6492
    %v7344 = vunpack.c.h.b16 %v6492
    %v7345 = vunpack.c.l.b16 %v6493
    %v7346 = vunpack.c.h.b16 %v6493
    %v7347 = vunpack.c.l.b16 %v6494
    %v7348 = vunpack.c.h.b16 %v6494
    %v7349 = vunpack.c.l.b16 %v6495
    %v7350 = vunpack.c.h.b16 %v6495
    %v7351 = vunpack.c.l.b16 %v6496
    %v7352 = vunpack.c.h.b16 %v6496
    %v7353 = vunpack.c.l.b16 %v6497
    %v7354 = vunpack.c.h.b16 %v6497
    %v7355 = vunpack.c.l.b16 %v6498
    %v7356 = vunpack.c.h.b16 %v6498
    %v7357 = vunpack.c.l.b16 %v6499
    %v7358 = vunpack.c.h.b16 %v6499
    %v7359 = vunpack.c.l.b16 %v6500
    %v7360 = vunpack.c.h.b16 %v6500
    %v7361 = vunpack.c.l.b16 %v6501
    %v7362 = vunpack.c.h.b16 %v6501
    %v7363 = vunpack.c.l.b16 %v6502
    %v7364 = vunpack.c.h.b16 %v6502
    %v7365 = vunpack.c.l.b16 %v6503
    %v7366 = vunpack.c.h.b16 %v6503
    %v7367 = vunpack.c.l.b16 %v6504
    %v7368 = vunpack.c.h.b16 %v6504
    %v7369 = vunpack.c.l.b16 %v6505
    %v7370 = vunpack.c.h.b16 %v6505
    %v7371 = vunpack.c.l.b16 %v6506
    %v7372 = vunpack.c.h.b16 %v6506
    %v7373 = vunpack.c.l.b16 %v6507
    %v7374 = vunpack.c.h.b16 %v6507
    %v7375 = vunpack.c.l.b16 %v6508
    %v7376 = vunpack.c.h.b16 %v6508
    %v7377 = vunpack.c.l.b16 %v6509
    %v7378 = vunpack.c.h.b16 %v6509
    %v7379 = vunpack.c.l.b16 %v6510
    %v7380 = vunpack.c.h.b16 %v6510
    %v7381 = vunpack.c.l.b16 %v6511
    %v7382 = vunpack.c.h.b16 %v6511
    %v7383 = vunpack.c.l.b16 %v6512
    %v7384 = vunpack.c.h.b16 %v6512
    %v7385 = vunpack.c.l.b16 %v6513
    %v7386 = vunpack.c.h.b16 %v6513
    %v7387 = vunpack.c.l.b16 %v6514
    %v7388 = vunpack.c.h.b16 %v6514
    %v7389 = vunpack.c.l.b16 %v6515
    %v7390 = vunpack.c.h.b16 %v6515
    %v7391 = vunpack.c.l.b16 %v6516
    %v7392 = vunpack.c.h.b16 %v6516
    %v7393 = vunpack.c.l.b16 %v6517
    %v7394 = vunpack.c.h.b16 %v6517
    %v7395 = vunpack.c.l.b16 %v6518
    %v7396 = vunpack.c.h.b16 %v6518
    %v7397 = vunpack.c.l.b16 %v6519
    %v7398 = vunpack.c.h.b16 %v6519
    %v7399 = vunpack.c.l.b16 %v6520
    %v7400 = vunpack.c.h.b16 %v6520
    %v7401 = vunpack.c.l.b16 %v6521
    %v7402 = vunpack.c.h.b16 %v6521
    %v7403 = vunpack.c.l.b16 %v6522
    %v7404 = vunpack.c.h.b16 %v6522
    %v7405 = vunpack.c.l.b16 %v6523
    %v7406 = vunpack.c.h.b16 %v6523
    %v7407 = vunpack.c.l.b16 %v6524
    %v7408 = vunpack.c.h.b16 %v6524
    %v7409 = vunpack.c.l.b16 %v6525
    %v7410 = vunpack.c.h.b16 %v6525
    %v7411 = vunpack.c.l.b16 %v6526
    %v7412 = vunpack.c.h.b16 %v6526
    %v7413 = vunpack.c.l.b16 %v6527
    %v7414 = vunpack.c.h.b16 %v6527
    %v7415 = vunpack.c.l.b16 %v6528
    %v7416 = vunpack.c.h.b16 %v6528
    %v7417 = vunpack.c.l.b16 %v6529
    %v7418 = vunpack.c.h.b16 %v6529
    %v7419 = vunpack.c.l.b16 %v6530
    %v7420 = vunpack.c.h.b16 %v6530
    %v7421 = vunpack.c.l.b16 %v6531
    %v7422 = vunpack.c.h.b16 %v6531
    %v7423 = vunpack.c.l.b16 %v6532
    %v7424 = vunpack.c.h.b16 %v6532
    %v7425 = vunpack.c.l.b16 %v6533
    %v7426 = vunpack.c.h.b16 %v6533
    %v7427 = vunpack.c.l.b16 %v6534
    %v7428 = vunpack.c.h.b16 %v6534
    %v7429 = vunpack.c.l.b16 %v6535
    %v7430 = vunpack.c.h.b16 %v6535
    %v7431 = vunpack.c.l.b16 %v6536
    %v7432 = vunpack.c.h.b16 %v6536
    %v7433 = vunpack.c.l.b16 %v6537
    %v7434 = vunpack.c.h.b16 %v6537
    %v7435 = vunpack.c.l.b16 %v6538
    %v7436 = vunpack.c.h.b16 %v6538
    %v7437 = vunpack.c.l.b16 %v6539
    %v7438 = vunpack.c.h.b16 %v6539
    %v7439 = vunpack.c.l.b16 %v6540
    %v7440 = vunpack.c.h.b16 %v6540
    %v7441 = vunpack.c.l.b16 %v6541
    %v7442 = vunpack.c.h.b16 %v6541
    %v7443 = vunpack.c.l.b16 %v6542
    %v7444 = vunpack.c.h.b16 %v6542
    %v7445 = vunpack.c.l.b16 %v6543
    %v7446 = vunpack.c.h.b16 %v6543
    %v7447 = vunpack.c.l.b16 %v6544
    %v7448 = vunpack.c.h.b16 %v6544
    %v7449 = vunpack.c.l.b16 %v6545
    %v7450 = vunpack.c.h.b16 %v6545
    %v7451 = vunpack.c.l.b16 %v6546
    %v7452 = vunpack.c.h.b16 %v6546
    %v7453 = vunpack.c.l.b16 %v6547
    %v7454 = vunpack.c.h.b16 %v6547
    %v7455 = vunpack.c.l.b16 %v6548
    %v7456 = vunpack.c.h.b16 %v6548
    %v7457 = vunpack.c.l.b16 %v6549
    %v7458 = vunpack.c.h.b16 %v6549
    %v7459 = vunpack.c.l.b16 %v6550
    %v7460 = vunpack.c.h.b16 %v6550
    %v7461 = vunpack.c.l.b16 %v6551
    %v7462 = vunpack.c.h.b16 %v6551
    %v7463 = vunpack.c.l.b16 %v6552
    %v7464 = vunpack.c.h.b16 %v6552
    %v7465 = vunpack.c.l.b16 %v6553
    %v7466 = vunpack.c.h.b16 %v6553
    %v7467 = vunpack.c.l.b16 %v6554
    %v7468 = vunpack.c.h.b16 %v6554
    %v7469 = vunpack.c.l.b16 %v6555
    %v7470 = vunpack.c.h.b16 %v6555
    %v7471 = vunpack.c.l.b16 %v6556
    %v7472 = vunpack.c.h.b16 %v6556
    %v7473 = vunpack.c.l.b16 %v6557
    %v7474 = vunpack.c.h.b16 %v6557
    %v7475 = vunpack.c.l.b16 %v6558
    %v7476 = vunpack.c.h.b16 %v6558
    %v7477 = vunpack.c.l.b16 %v6559
    %v7478 = vunpack.c.h.b16 %v6559
    %v7479 = vunpack.c.l.b16 %v6560
    %v7480 = vunpack.c.h.b16 %v6560
    %v7481 = vunpack.c.l.b16 %v6561
    %v7482 = vunpack.c.h.b16 %v6561
    %v7483 = vunpack.c.l.b16 %v6562
    %v7484 = vunpack.c.h.b16 %v6562
    %v7485 = vunpack.c.l.b16 %v6563
    %v7486 = vunpack.c.h.b16 %v6563
    %v7487 = vunpack.c.l.b16 %v6564
    %v7488 = vunpack.c.h.b16 %v6564
    %v7489 = vunpack.c.l.b16 %v6565
    %v7490 = vunpack.c.h.b16 %v6565
    %v7491 = vpack.c.b16 %v7341, %v7331
    %v7492 = vpack.c.b16 %v7342, %v7332
    %v7493 = vpack.c.b16 %v7343, %v7333
    %v7494 = vpack.c.b16 %v7344, %v7334
    %v7495 = vpack.c.b16 %v7345, %v7335
    %v7496 = vpack.c.b16 %v7346, %v7336
    %v7497 = vpack.c.b16 %v7347, %v7337
    %v7498 = vpack.c.b16 %v7348, %v7338
    %v7499 = vpack.c.b16 %v7349, %v7339
    %v7500 = vpack.c.b16 %v7350, %v7340
    %v7501 = vpack.c.b16 %v7361, %v7351
    %v7502 = vpack.c.b16 %v7362, %v7352
    %v7503 = vpack.c.b16 %v7363, %v7353
    %v7504 = vpack.c.b16 %v7364, %v7354
    %v7505 = vpack.c.b16 %v7365, %v7355
    %v7506 = vpack.c.b16 %v7366, %v7356
    %v7507 = vpack.c.b16 %v7367, %v7357
    %v7508 = vpack.c.b16 %v7368, %v7358
    %v7509 = vpack.c.b16 %v7369, %v7359
    %v7510 = vpack.c.b16 %v7370, %v7360
    %v7511 = vpack.c.b16 %v7381, %v7371
    %v7512 = vpack.c.b16 %v7382, %v7372
    %v7513 = vpack.c.b16 %v7383, %v7373
    %v7514 = vpack.c.b16 %v7384, %v7374
    %v7515 = vpack.c.b16 %v7385, %v7375
    %v7516 = vpack.c.b16 %v7386, %v7376
    %v7517 = vpack.c.b16 %v7387, %v7377
    %v7518 = vpack.c.b16 %v7388, %v7378
    %v7519 = vpack.c.b16 %v7389, %v7379
    %v7520 = vpack.c.b16 %v7390, %v7380
    %v7521 = vpack.c.b16 %v7401, %v7391
    %v7522 = vpack.c.b16 %v7402, %v7392
    %v7523 = vpack.c.b16 %v7403, %v7393
    %v7524 = vpack.c.b16 %v7404, %v7394
    %v7525 = vpack.c.b16 %v7405, %v7395
    %v7526 = vpack.c.b16 %v7406, %v7396
    %v7527 = vpack.c.b16 %v7407, %v7397
    %v7528 = vpack.c.b16 %v7408, %v7398
    %v7529 = vpack.c.b16 %v7409, %v7399
    %v7530 = vpack.c.b16 %v7410, %v7400
    %v7531 = vpack.c.b16 %v7421, %v7411
    %v7532 = vpack.c.b16 %v7422, %v7412
    %v7533 = vpack.c.b16 %v7423, %v7413
    %v7534 = vpack.c.b16 %v7424, %v7414
    %v7535 = vpack.c.b16 %v7425, %v7415
    %v7536 = vpack.c.b16 %v7426, %v7416
    %v7537 = vpack.c.b16 %v7427, %v7417
    %v7538 = vpack.c.b16 %v7428, %v7418
    %v7539 = vpack.c.b16 %v7429, %v7419
    %v7540 = vpack.c.b16 %v7430, %v7420
    %v7541 = vpack.c.b16 %v7441, %v7431
    %v7542 = vpack.c.b16 %v7442, %v7432
    %v7543 = vpack.c.b16 %v7443, %v7433
    %v7544 = vpack.c.b16 %v7444, %v7434
    %v7545 = vpack.c.b16 %v7445, %v7435
    %v7546 = vpack.c.b16 %v7446, %v7436
    %v7547 = vpack.c.b16 %v7447, %v7437
    %v7548 = vpack.c.b16 %v7448, %v7438
    %v7549 = vpack.c.b16 %v7449, %v7439
    %v7550 = vpack.c.b16 %v7450, %v7440
    %v7551 = vpack.c.b16 %v7461, %v7451
    %v7552 = vpack.c.b16 %v7462, %v7452
    %v7553 = vpack.c.b16 %v7463, %v7453
    %v7554 = vpack.c.b16 %v7464, %v7454
    %v7555 = vpack.c.b16 %v7465, %v7455
    %v7556 = vpack.c.b16 %v7466, %v7456
    %v7557 = vpack.c.b16 %v7467, %v7457
    %v7558 = vpack.c.b16 %v7468, %v7458
    %v7559 = vpack.c.b16 %v7469, %v7459
    %v7560 = vpack.c.b16 %v7470, %v7460
    %v7561 = vpack.c.b16 %v7481, %v7471
    %v7562 = vpack.c.b16 %v7482, %v7472
    %v7563 = vpack.c.b16 %v7483, %v7473
    %v7564 = vpack.c.b16 %v7484, %v7474
    %v7565 = vpack.c.b16 %v7485, %v7475
    %v7566 = vpack.c.b16 %v7486, %v7476
    %v7567 = vpack.c.b16 %v7487, %v7477
    %v7568 = vpack.c.b16 %v7488, %v7478
    %v7569 = vpack.c.b16 %v7489, %v7479
    %v7570 = vpack.c.b16 %v7490, %v7480
    %7651 = vmatprep.subr.bf16.mxu0 %v7492
    %7652 = vmatpush1.bf16.msra.mxu0 %v7491
    %7653 = vmatprep.subr.bf16.mxu0 %v7502
    %7654 = vmatpush1.bf16.msra.mxu0 %v7501
    %7655 = vmatprep.subr.bf16.mxu0 %v7512
    %7656 = vmatpush1.bf16.msra.mxu0 %v7511
    %7657 = vmatprep.subr.bf16.mxu0 %v7522
    %7658 = vmatpush1.bf16.msra.mxu0 %v7521
    %7659 = vmatprep.subr.bf16.mxu0 %v7532
    %7660 = vmatpush1.bf16.msra.mxu0 %v7531
    %7661 = vmatprep.subr.bf16.mxu0 %v7542
    %7662 = vmatpush1.bf16.msra.mxu0 %v7541
    %7663 = vmatprep.subr.bf16.mxu0 %v7552
    %7664 = vmatpush1.bf16.msra.mxu0 %v7551
    %7665 = vmatprep.subr.bf16.mxu0 %v7562
    %7666 = vmatpush1.bf16.msra.mxu0 %v7561
    %7667 = vmatprep.subr.bf16.mxu0 0
    %7668 = vmatpush1.bf16.msra.mxu0 0
    %7669 = vmatprep.subr.bf16.mxu0 0
    %7670 = vmatpush1.bf16.msra.mxu0 0
    %7671 = vmatprep.subr.bf16.mxu0 0
    %7672 = vmatpush1.bf16.msra.mxu0 0
    %7673 = vmatprep.subr.bf16.mxu0 0
    %7674 = vmatpush1.bf16.msra.mxu0 0
    %7675 = vmatprep.subr.bf16.mxu0 0
    %7676 = vmatpush1.bf16.msra.mxu0 0
    %7677 = vmatprep.subr.bf16.mxu0 0
    %7678 = vmatpush1.bf16.msra.mxu0 0
    %7679 = vmatprep.subr.bf16.mxu0 0
    %7680 = vmatpush1.bf16.msra.mxu0 0
    %7681 = vmatprep.subr.bf16.mxu0 0
    %7682 = vmatpush1.bf16.msra.mxu0 0
    %7683 = vmatprep.mubr.bf16.mxu0 0
    %7684 = vmatmul.mubr.bf16.gmra.mrb[0].mxu0 %v146
    %v7685 = vpop.f32.mrb[0].mxu0
    %v7686 = vadd.f32 %v7081, %v7685
    %v7687 = vpop.f32.mrb[0].mxu0
    %v7688 = vadd.f32 %v7083, %v7687
    %v7689 = vpop.f32.mrb[0].mxu0
    %v7690 = vpop.f32.mrb[0].mxu0
    %7691 = vdwg.mxu0
    %7692 = vmatprep.subr.bf16.mxu0 %v7494
    %7693 = vmatpush1.bf16.msra.mxu0 %v7493
    %7694 = vmatprep.subr.bf16.mxu0 %v7504
    %7695 = vmatpush1.bf16.msra.mxu0 %v7503
    %7696 = vmatprep.subr.bf16.mxu0 %v7514
    %7697 = vmatpush1.bf16.msra.mxu0 %v7513
    %7698 = vmatprep.subr.bf16.mxu0 %v7524
    %7699 = vmatpush1.bf16.msra.mxu0 %v7523
    %7700 = vmatprep.subr.bf16.mxu0 %v7534
    %7701 = vmatpush1.bf16.msra.mxu0 %v7533
    %7702 = vmatprep.subr.bf16.mxu0 %v7544
    %7703 = vmatpush1.bf16.msra.mxu0 %v7543
    %7704 = vmatprep.subr.bf16.mxu0 %v7554
    %7705 = vmatpush1.bf16.msra.mxu0 %v7553
    %7706 = vmatprep.subr.bf16.mxu0 %v7564
    %7707 = vmatpush1.bf16.msra.mxu0 %v7563
    %7708 = vmatprep.subr.bf16.mxu0 0
    %7709 = vmatpush1.bf16.msra.mxu0 0
    %7710 = vmatprep.subr.bf16.mxu0 0
    %7711 = vmatpush1.bf16.msra.mxu0 0
    %7712 = vmatprep.subr.bf16.mxu0 0
    %7713 = vmatpush1.bf16.msra.mxu0 0
    %7714 = vmatprep.subr.bf16.mxu0 0
    %7715 = vmatpush1.bf16.msra.mxu0 0
    %7716 = vmatprep.subr.bf16.mxu0 0
    %7717 = vmatpush1.bf16.msra.mxu0 0
    %7718 = vmatprep.subr.bf16.mxu0 0
    %7719 = vmatpush1.bf16.msra.mxu0 0
    %7720 = vmatprep.subr.bf16.mxu0 0
    %7721 = vmatpush1.bf16.msra.mxu0 0
    %7722 = vmatprep.subr.bf16.mxu0 0
    %7723 = vmatpush1.bf16.msra.mxu0 0
    %7724 = vmatprep.mubr.bf16.mxu0 0
    %7725 = vmatmul.mubr.bf16.gmra.mrb[0].mxu0 %v146
    %v7726 = vpop.f32.mrb[0].mxu0
    %v7727 = vadd.f32 %v7122, %v7726
    %v7728 = vpop.f32.mrb[0].mxu0
    %v7729 = vadd.f32 %v7124, %v7728
    %v7730 = vpop.f32.mrb[0].mxu0
    %v7731 = vpop.f32.mrb[0].mxu0
    %7732 = vdwg.mxu0
    %7733 = vmatprep.subr.bf16.mxu0 %v7496
    %7734 = vmatpush1.bf16.msra.mxu0 %v7495
    %7735 = vmatprep.subr.bf16.mxu0 %v7506
    %7736 = vmatpush1.bf16.msra.mxu0 %v7505
    %7737 = vmatprep.subr.bf16.mxu0 %v7516
    %7738 = vmatpush1.bf16.msra.mxu0 %v7515
    %7739 = vmatprep.subr.bf16.mxu0 %v7526
    %7740 = vmatpush1.bf16.msra.mxu0 %v7525
    %7741 = vmatprep.subr.bf16.mxu0 %v7536
    %7742 = vmatpush1.bf16.msra.mxu0 %v7535
    %7743 = vmatprep.subr.bf16.mxu0 %v7546
    %7744 = vmatpush1.bf16.msra.mxu0 %v7545
    %7745 = vmatprep.subr.bf16.mxu0 %v7556
    %7746 = vmatpush1.bf16.msra.mxu0 %v7555
    %7747 = vmatprep.subr.bf16.mxu0 %v7566
    %7748 = vmatpush1.bf16.msra.mxu0 %v7565
    %7749 = vmatprep.subr.bf16.mxu0 0
    %7750 = vmatpush1.bf16.msra.mxu0 0
    %7751 = vmatprep.subr.bf16.mxu0 0
    %7752 = vmatpush1.bf16.msra.mxu0 0
    %7753 = vmatprep.subr.bf16.mxu0 0
    %7754 = vmatpush1.bf16.msra.mxu0 0
    %7755 = vmatprep.subr.bf16.mxu0 0
    %7756 = vmatpush1.bf16.msra.mxu0 0
    %7757 = vmatprep.subr.bf16.mxu0 0
    %7758 = vmatpush1.bf16.msra.mxu0 0
    %7759 = vmatprep.subr.bf16.mxu0 0
    %7760 = vmatpush1.bf16.msra.mxu0 0
    %7761 = vmatprep.subr.bf16.mxu0 0
    %7762 = vmatpush1.bf16.msra.mxu0 0
    %7763 = vmatprep.subr.bf16.mxu0 0
    %7764 = vmatpush1.bf16.msra.mxu0 0
    %7765 = vmatprep.mubr.bf16.mxu0 0
    %7766 = vmatmul.mubr.bf16.gmra.mrb[0].mxu0 %v146
    %v7767 = vpop.f32.mrb[0].mxu0
    %v7768 = vadd.f32 %v7163, %v7767
    %v7769 = vpop.f32.mrb[0].mxu0
    %v7770 = vadd.f32 %v7165, %v7769
    %v7771 = vpop.f32.mrb[0].mxu0
    %v7772 = vpop.f32.mrb[0].mxu0
    %7773 = vdwg.mxu0
    %7774 = vmatprep.subr.bf16.mxu0 %v7498
    %7775 = vmatpush1.bf16.msra.mxu0 %v7497
    %7776 = vmatprep.subr.bf16.mxu0 %v7508
    %7777 = vmatpush1.bf16.msra.mxu0 %v7507
    %7778 = vmatprep.subr.bf16.mxu0 %v7518
    %7779 = vmatpush1.bf16.msra.mxu0 %v7517
    %7780 = vmatprep.subr.bf16.mxu0 %v7528
    %7781 = vmatpush1.bf16.msra.mxu0 %v7527
    %7782 = vmatprep.subr.bf16.mxu0 %v7538
    %7783 = vmatpush1.bf16.msra.mxu0 %v7537
    %7784 = vmatprep.subr.bf16.mxu0 %v7548
    %7785 = vmatpush1.bf16.msra.mxu0 %v7547
    %7786 = vmatprep.subr.bf16.mxu0 %v7558
    %7787 = vmatpush1.bf16.msra.mxu0 %v7557
    %7788 = vmatprep.subr.bf16.mxu0 %v7568
    %7789 = vmatpush1.bf16.msra.mxu0 %v7567
    %7790 = vmatprep.subr.bf16.mxu0 0
    %7791 = vmatpush1.bf16.msra.mxu0 0
    %7792 = vmatprep.subr.bf16.mxu0 0
    %7793 = vmatpush1.bf16.msra.mxu0 0
    %7794 = vmatprep.subr.bf16.mxu0 0
    %7795 = vmatpush1.bf16.msra.mxu0 0
    %7796 = vmatprep.subr.bf16.mxu0 0
    %7797 = vmatpush1.bf16.msra.mxu0 0
    %7798 = vmatprep.subr.bf16.mxu0 0
    %7799 = vmatpush1.bf16.msra.mxu0 0
    %7800 = vmatprep.subr.bf16.mxu0 0
    %7801 = vmatpush1.bf16.msra.mxu0 0
    %7802 = vmatprep.subr.bf16.mxu0 0
    %7803 = vmatpush1.bf16.msra.mxu0 0
    %7804 = vmatprep.subr.bf16.mxu0 0
    %7805 = vmatpush1.bf16.msra.mxu0 0
    %7806 = vmatprep.mubr.bf16.mxu0 0
    %7807 = vmatmul.mubr.bf16.gmra.mrb[0].mxu0 %v146
    %v7808 = vpop.f32.mrb[0].mxu0
    %v7809 = vadd.f32 %v7204, %v7808
    %v7810 = vpop.f32.mrb[0].mxu0
    %v7811 = vadd.f32 %v7206, %v7810
    %v7812 = vpop.f32.mrb[0].mxu0
    %v7813 = vpop.f32.mrb[0].mxu0
    %7814 = vdwg.mxu0
    %7815 = vmatprep.subr.bf16.mxu0 %v7500
    %7816 = vmatpush1.bf16.msra.mxu0 %v7499
    %7817 = vmatprep.subr.bf16.mxu0 %v7510
    %7818 = vmatpush1.bf16.msra.mxu0 %v7509
    %7819 = vmatprep.subr.bf16.mxu0 %v7520
    %7820 = vmatpush1.bf16.msra.mxu0 %v7519
    %7821 = vmatprep.subr.bf16.mxu0 %v7530
    %7822 = vmatpush1.bf16.msra.mxu0 %v7529
    %7823 = vmatprep.subr.bf16.mxu0 %v7540
    %7824 = vmatpush1.bf16.msra.mxu0 %v7539
    %7825 = vmatprep.subr.bf16.mxu0 %v7550
    %7826 = vmatpush1.bf16.msra.mxu0 %v7549
    %7827 = vmatprep.subr.bf16.mxu0 %v7560
    %7828 = vmatpush1.bf16.msra.mxu0 %v7559
    %7829 = vmatprep.subr.bf16.mxu0 %v7570
    %7830 = vmatpush1.bf16.msra.mxu0 %v7569
    %7831 = vmatprep.subr.bf16.mxu0 0
    %7832 = vmatpush1.bf16.msra.mxu0 0
    %7833 = vmatprep.subr.bf16.mxu0 0
    %7834 = vmatpush1.bf16.msra.mxu0 0
    %7835 = vmatprep.subr.bf16.mxu0 0
    %7836 = vmatpush1.bf16.msra.mxu0 0
    %7837 = vmatprep.subr.bf16.mxu0 0
    %7838 = vmatpush1.bf16.msra.mxu0 0
    %7839 = vmatprep.subr.bf16.mxu0 0
    %7840 = vmatpush1.bf16.msra.mxu0 0
    %7841 = vmatprep.subr.bf16.mxu0 0
    %7842 = vmatpush1.bf16.msra.mxu0 0
    %7843 = vmatprep.subr.bf16.mxu0 0
    %7844 = vmatpush1.bf16.msra.mxu0 0
    %7845 = vmatprep.subr.bf16.mxu0 0
    %7846 = vmatpush1.bf16.msra.mxu0 0
    %7847 = vmatprep.mubr.bf16.mxu0 0
    %7848 = vmatmul.mubr.bf16.gmra.mrb[0].mxu0 %v146
    %v7849 = vpop.f32.mrb[0].mxu0
    %v7850 = vadd.f32 %v7245, %v7849
    %v7851 = vpop.f32.mrb[0].mxu0
    %v7852 = vadd.f32 %v7247, %v7851
    %v7853 = vpop.f32.mrb[0].mxu0
    %v7854 = vpop.f32.mrb[0].mxu0
    %7855 = vdwg.mxu0
    %v7856 = vld [vmem:[#allocation14 + $0x1d] sm:$0x3f]
    %v7858 = vlaneseq
    %v7859 = vshrl.u32 %v7858, 7
    %v7860 = vsub.s32 0, %v7859
    %v7861 = vrot.slane %v7856, %v7860
    %v7862 = vlaneseq
    %v7863 = vshrl.u32 %v7862, 7
    %v7864 = vsub.s32 1, %v7863
    %v7865 = vrot.slane %v7856, %v7864
    %v7866 = vlaneseq
    %v7867 = vshrl.u32 %v7866, 7
    %v7868 = vsub.s32 2, %v7867
    %v7869 = vrot.slane %v7856, %v7868
    %v7870 = vlaneseq
    %v7871 = vshrl.u32 %v7870, 7
    %v7872 = vsub.s32 3, %v7871
    %v7873 = vrot.slane %v7856, %v7872
    %v7874 = vlaneseq
    %v7875 = vshrl.u32 %v7874, 7
    %v7876 = vsub.s32 4, %v7875
    %v7877 = vrot.slane %v7856, %v7876
    %v7878 = vlaneseq
    %v7879 = vshrl.u32 %v7878, 7
    %v7880 = vsub.s32 5, %v7879
    %v7881 = vrot.slane %v7856, %v7880
    %v7888 = vadd.f32 %v7686, %v7861
    %v7889 = vadd.f32 %v7688, %v7865
    %v7890 = vadd.f32 %v7727, %v7869
    %v7891 = vadd.f32 %v7729, %v7873
    %v7892 = vadd.f32 %v7768, %v7877
    %v7893 = vadd.f32 %v7770, %v7881
    %v7894 = vmax.f32 %v7888, 0.0
    %v7895 = vmax.f32 %v7889, 0.0
    %v7896 = vmax.f32 %v7890, 0.0
    %v7897 = vmax.f32 %v7891, 0.0
    %v7898 = vmax.f32 %v7892, 0.0
    %v7899 = vmax.f32 %v7893, 0.0
    %v7900 = vpack.c.bf16 %v7894, %v7894
    %v7901 = vpack.c.bf16 %v7895, %v7895
    %v7902 = vpack.c.bf16 %v7896, %v7896
    %v7903 = vpack.c.bf16 %v7897, %v7897
    %v7904 = vpack.c.bf16 %v7898, %v7898
    %v7905 = vpack.c.bf16 %v7899, %v7899
    %v7906 = vld [vmem:[#allocation14 + $0x23] sm:$0xf]
    %v7908 = vlaneseq
    %v7909 = vshrl.u32 %v7908, 7
    %v7910 = vsub.s32 0, %v7909
    %v7911 = vrot.slane %v7906, %v7910
    %v7912 = vlaneseq
    %v7913 = vshrl.u32 %v7912, 7
    %v7914 = vsub.s32 1, %v7913
    %v7915 = vrot.slane %v7906, %v7914
    %v7916 = vlaneseq
    %v7917 = vshrl.u32 %v7916, 7
    %v7918 = vsub.s32 2, %v7917
    %v7919 = vrot.slane %v7906, %v7918
    %v7920 = vlaneseq
    %v7921 = vshrl.u32 %v7920, 7
    %v7922 = vsub.s32 3, %v7921
    %v7923 = vrot.slane %v7906, %v7922
    %v7928 = vadd.f32 %v7809, %v7911
    %v7929 = vadd.f32 %v7811, %v7915
    %v7930 = vadd.f32 %v7850, %v7919
    %v7931 = vadd.f32 %v7852, %v7923
    %v7932 = vmax.f32 %v7928, 0.0
    %v7933 = vmax.f32 %v7929, 0.0
    %v7934 = vmax.f32 %v7930, 0.0
    %v7935 = vmax.f32 %v7931, 0.0
    %v7936 = vpack.c.bf16 %v7932, %v7932
    %v7937 = vpack.c.bf16 %v7933, %v7933
    %v7938 = vpack.c.bf16 %v7934, %v7934
    %v7939 = vpack.c.bf16 %v7935, %v7935
    %v7940 = vld [vmem:[#allocation10 + $0x900] sm:$0xff]
    %v7941 = vld [vmem:[#allocation10 + $0x908] sm:$0xff]
    %v7942 = vld [vmem:[#allocation10 + $0x910] sm:$0xff]
    %v7943 = vld [vmem:[#allocation10 + $0x918] sm:$0xff]
    %v7944 = vld [vmem:[#allocation10 + $0x920] sm:$0xff]
    %v7945 = vld [vmem:[#allocation10 + $0x928] sm:$0xff]
    %v7946 = vld [vmem:[#allocation10 + $0x930] sm:$0xff]
    %v7947 = vld [vmem:[#allocation10 + $0x938] sm:$0xff]
    %v7948 = vld [vmem:[#allocation10 + $0x940] sm:$0xff]
    %v7949 = vld [vmem:[#allocation10 + $0x948] sm:$0xff]
    %v7950 = vld [vmem:[#allocation10 + $0x950] sm:$0xff]
    %v7951 = vld [vmem:[#allocation10 + $0x958] sm:$0xff]
    %v7952 = vld [vmem:[#allocation10 + $0x960] sm:$0xff]
    %v7953 = vld [vmem:[#allocation10 + $0x968] sm:$0xff]
    %v7954 = vld [vmem:[#allocation10 + $0x970] sm:$0xff]
    %v7955 = vld [vmem:[#allocation10 + $0x978] sm:$0xff]
    %v7956 = vld [vmem:[#allocation10 + $0x980] sm:$0xff]
    %v7957 = vld [vmem:[#allocation10 + $0x988] sm:$0xff]
    %v7958 = vld [vmem:[#allocation10 + $0x990] sm:$0xff]
    %v7959 = vld [vmem:[#allocation10 + $0x998] sm:$0xff]
    %v7960 = vld [vmem:[#allocation10 + $0x9a0] sm:$0xff]
    %v7961 = vld [vmem:[#allocation10 + $0x9a8] sm:$0xff]
    %v7962 = vld [vmem:[#allocation10 + $0x9b0] sm:$0xff]
    %v7963 = vld [vmem:[#allocation10 + $0x9b8] sm:$0xff]
    %v7964 = vld [vmem:[#allocation10 + $0x9c0] sm:$0xff]
    %v7965 = vld [vmem:[#allocation10 + $0x9c8] sm:$0xff]
    %v7966 = vld [vmem:[#allocation10 + $0x9d0] sm:$0xff]
    %v7967 = vld [vmem:[#allocation10 + $0x9d8] sm:$0xff]
    %v7968 = vld [vmem:[#allocation10 + $0x9e0] sm:$0xff]
    %v7969 = vld [vmem:[#allocation10 + $0x9e8] sm:$0xff]
    %v7970 = vld [vmem:[#allocation10 + $0x9f0] sm:$0xff]
    %v7971 = vld [vmem:[#allocation10 + $0x9f8] sm:$0xff]
    %v7972 = vld [vmem:[#allocation10 + $0xa00] sm:$0xff]
    %v7973 = vld [vmem:[#allocation10 + $0xa08] sm:$0xff]
    %v7974 = vld [vmem:[#allocation10 + $0xa10] sm:$0xff]
    %v7975 = vld [vmem:[#allocation10 + $0xa18] sm:$0xff]
    %v7976 = vld [vmem:[#allocation10 + $0xa20] sm:$0xff]
    %v7977 = vld [vmem:[#allocation10 + $0xa28] sm:$0xff]
    %v7978 = vld [vmem:[#allocation10 + $0xa30] sm:$0xff]
    %v7979 = vld [vmem:[#allocation10 + $0xa38] sm:$0xff]
    %v7980 = vld [vmem:[#allocation10 + $0xa40] sm:$0xff]
    %v7981 = vld [vmem:[#allocation10 + $0xa48] sm:$0xff]
    %v7982 = vld [vmem:[#allocation10 + $0xa50] sm:$0xff]
    %v7983 = vld [vmem:[#allocation10 + $0xa58] sm:$0xff]
    %v7984 = vld [vmem:[#allocation10 + $0xa60] sm:$0xff]
    %v7985 = vld [vmem:[#allocation10 + $0xa68] sm:$0xff]
    %v7986 = vld [vmem:[#allocation10 + $0xa70] sm:$0xff]
    %v7987 = vld [vmem:[#allocation10 + $0xa78] sm:$0xff]
    %v7988 = vld [vmem:[#allocation10 + $0xa80] sm:$0xff]
    %v7989 = vld [vmem:[#allocation10 + $0xa88] sm:$0xff]
    %v7990 = vld [vmem:[#allocation10 + $0xa90] sm:$0xff]
    %v7991 = vld [vmem:[#allocation10 + $0xa98] sm:$0xff]
    %v7992 = vld [vmem:[#allocation10 + $0xaa0] sm:$0xff]
    %v7993 = vld [vmem:[#allocation10 + $0xaa8] sm:$0xff]
    %v7994 = vld [vmem:[#allocation10 + $0xab0] sm:$0xff]
    %v7995 = vld [vmem:[#allocation10 + $0xab8] sm:$0xff]
    %v7996 = vld [vmem:[#allocation10 + $0xac0] sm:$0xff]
    %v7997 = vld [vmem:[#allocation10 + $0xac8] sm:$0xff]
    %v7998 = vld [vmem:[#allocation10 + $0xad0] sm:$0xff]
    %v7999 = vld [vmem:[#allocation10 + $0xad8] sm:$0xff]
    %v8000 = vld [vmem:[#allocation10 + $0xae0] sm:$0xff]
    %v8001 = vld [vmem:[#allocation10 + $0xae8] sm:$0xff]
    %v8002 = vld [vmem:[#allocation10 + $0xaf0] sm:$0xff]
    %v8003 = vld [vmem:[#allocation10 + $0xaf8] sm:$0xff]
    %v8004 = vld [vmem:[#allocation10 + $0xb00] sm:$0xff]
    %v8005 = vld [vmem:[#allocation10 + $0xb08] sm:$0xff]
    %v8006 = vld [vmem:[#allocation10 + $0xb10] sm:$0xff]
    %v8007 = vld [vmem:[#allocation10 + $0xb18] sm:$0xff]
    %v8008 = vld [vmem:[#allocation10 + $0xb20] sm:$0xff]
    %v8009 = vld [vmem:[#allocation10 + $0xb28] sm:$0xff]
    %v8010 = vld [vmem:[#allocation10 + $0xb30] sm:$0xff]
    %v8011 = vld [vmem:[#allocation10 + $0xb38] sm:$0xff]
    %v8012 = vld [vmem:[#allocation10 + $0xb40] sm:$0xff]
    %v8013 = vld [vmem:[#allocation10 + $0xb48] sm:$0xff]
    %v8014 = vld [vmem:[#allocation10 + $0xb50] sm:$0xff]
    %v8015 = vld [vmem:[#allocation10 + $0xb58] sm:$0xff]
    %v8016 = vld [vmem:[#allocation10 + $0xb60] sm:$0xff]
    %v8017 = vld [vmem:[#allocation10 + $0xb68] sm:$0xff]
    %v8018 = vld [vmem:[#allocation10 + $0xb70] sm:$0xff]
    %v8019 = vld [vmem:[#allocation10 + $0xb78] sm:$0xff]
    %v8020 = vld [vmem:[#allocation10 + $0xb80] sm:$0xff]
    %v8021 = vld [vmem:[#allocation10 + $0xb88] sm:$0xff]
    %v8022 = vld [vmem:[#allocation10 + $0xb90] sm:$0xff]
    %v8023 = vld [vmem:[#allocation10 + $0xb98] sm:$0xff]
    %v8024 = vld [vmem:[#allocation10 + $0xba0] sm:$0xff]
    %v8025 = vld [vmem:[#allocation10 + $0xba8] sm:$0xff]
    %v8026 = vld [vmem:[#allocation10 + $0xbb0] sm:$0xff]
    %v8027 = vld [vmem:[#allocation10 + $0xbb8] sm:$0xff]
    %v8028 = vld [vmem:[#allocation10 + $0xbc0] sm:$0xff]
    %v8029 = vld [vmem:[#allocation10 + $0xbc8] sm:$0xff]
    %v8030 = vld [vmem:[#allocation10 + $0xbd0] sm:$0xff]
    %v8031 = vld [vmem:[#allocation10 + $0xbd8] sm:$0xff]
    %v8032 = vld [vmem:[#allocation10 + $0xbe0] sm:$0xff]
    %v8033 = vld [vmem:[#allocation10 + $0xbe8] sm:$0xff]
    %v8034 = vld [vmem:[#allocation10 + $0xbf0] sm:$0xff]
    %v8035 = vld [vmem:[#allocation10 + $0xbf8] sm:$0xff]
    %v8036 = vld [vmem:[#allocation10 + $0xc00] sm:$0xff]
    %v8037 = vld [vmem:[#allocation10 + $0xc08] sm:$0xff]
    %v8038 = vld [vmem:[#allocation10 + $0xc10] sm:$0xff]
    %v8039 = vld [vmem:[#allocation10 + $0xc18] sm:$0xff]
    %v8040 = vld [vmem:[#allocation10 + $0xc20] sm:$0xff]
    %v8041 = vld [vmem:[#allocation10 + $0xc28] sm:$0xff]
    %v8042 = vld [vmem:[#allocation10 + $0xc30] sm:$0xff]
    %v8043 = vld [vmem:[#allocation10 + $0xc38] sm:$0xff]
    %v8044 = vld [vmem:[#allocation10 + $0xc40] sm:$0xff]
    %v8045 = vld [vmem:[#allocation10 + $0xc48] sm:$0xff]
    %v8046 = vld [vmem:[#allocation10 + $0xc50] sm:$0xff]
    %v8047 = vld [vmem:[#allocation10 + $0xc58] sm:$0xff]
    %v8048 = vld [vmem:[#allocation10 + $0xc60] sm:$0xff]
    %v8049 = vld [vmem:[#allocation10 + $0xc68] sm:$0xff]
    %v8050 = vld [vmem:[#allocation10 + $0xc70] sm:$0xff]
    %v8051 = vld [vmem:[#allocation10 + $0xc78] sm:$0xff]
    %v8052 = vld [vmem:[#allocation10 + $0xc80] sm:$0xff]
    %v8053 = vld [vmem:[#allocation10 + $0xc88] sm:$0xff]
    %v8054 = vld [vmem:[#allocation10 + $0xc90] sm:$0xff]
    %v8055 = vld [vmem:[#allocation10 + $0xc98] sm:$0xff]
    %v8056 = vld [vmem:[#allocation10 + $0xca0] sm:$0xff]
    %v8057 = vld [vmem:[#allocation10 + $0xca8] sm:$0xff]
    %v8058 = vld [vmem:[#allocation10 + $0xcb0] sm:$0xff]
    %v8059 = vld [vmem:[#allocation10 + $0xcb8] sm:$0xff]
    %v8060 = vld [vmem:[#allocation10 + $0xcc0] sm:$0xff]
    %v8061 = vld [vmem:[#allocation10 + $0xcc8] sm:$0xff]
    %v8062 = vld [vmem:[#allocation10 + $0xcd0] sm:$0xff]
    %v8063 = vld [vmem:[#allocation10 + $0xcd8] sm:$0xff]
    %v8064 = vld [vmem:[#allocation10 + $0xce0] sm:$0xff]
    %v8065 = vld [vmem:[#allocation10 + $0xce8] sm:$0xff]
    %v8066 = vld [vmem:[#allocation10 + $0xcf0] sm:$0xff]
    %v8067 = vld [vmem:[#allocation10 + $0xcf8] sm:$0xff]
    %v8068 = vld [vmem:[#allocation10 + $0xd00] sm:$0xff]
    %v8069 = vld [vmem:[#allocation10 + $0xd08] sm:$0xff]
    %v8070 = vld [vmem:[#allocation10 + $0xd10] sm:$0xff]
    %v8071 = vld [vmem:[#allocation10 + $0xd18] sm:$0xff]
    %v8072 = vld [vmem:[#allocation10 + $0xd20] sm:$0xff]
    %v8073 = vld [vmem:[#allocation10 + $0xd28] sm:$0xff]
    %v8074 = vld [vmem:[#allocation10 + $0xd30] sm:$0xff]
    %v8075 = vld [vmem:[#allocation10 + $0xd38] sm:$0xff]
    %v8076 = vld [vmem:[#allocation10 + $0xd40] sm:$0xff]
    %v8077 = vld [vmem:[#allocation10 + $0xd48] sm:$0xff]
    %v8078 = vld [vmem:[#allocation10 + $0xd50] sm:$0xff]
    %v8079 = vld [vmem:[#allocation10 + $0xd58] sm:$0xff]
    %v8080 = vld [vmem:[#allocation10 + $0xd60] sm:$0xff]
    %v8081 = vld [vmem:[#allocation10 + $0xd68] sm:$0xff]
    %v8082 = vld [vmem:[#allocation10 + $0xd70] sm:$0xff]
    %v8083 = vld [vmem:[#allocation10 + $0xd78] sm:$0xff]
    %v8084 = vld [vmem:[#allocation10 + $0xd80] sm:$0xff]
    %v8085 = vld [vmem:[#allocation10 + $0xd88] sm:$0xff]
    %v8086 = vld [vmem:[#allocation10 + $0xd90] sm:$0xff]
    %v8087 = vld [vmem:[#allocation10 + $0xd98] sm:$0xff]
    %v8088 = vld [vmem:[#allocation10 + $0xda0] sm:$0xff]
    %v8089 = vld [vmem:[#allocation10 + $0xda8] sm:$0xff]
    %v8090 = vld [vmem:[#allocation10 + $0xdb0] sm:$0xff]
    %v8091 = vld [vmem:[#allocation10 + $0xdb8] sm:$0xff]
    %v8092 = vld [vmem:[#allocation10 + $0xdc0] sm:$0xff]
    %v8093 = vld [vmem:[#allocation10 + $0xdc8] sm:$0xff]
    %v8094 = vld [vmem:[#allocation10 + $0xdd0] sm:$0xff]
    %v8095 = vld [vmem:[#allocation10 + $0xdd8] sm:$0xff]
    %v8096 = vld [vmem:[#allocation10 + $0xde0] sm:$0xff]
    %v8097 = vld [vmem:[#allocation10 + $0xde8] sm:$0xff]
    %v8098 = vld [vmem:[#allocation10 + $0xdf0] sm:$0xff]
    %v8099 = vld [vmem:[#allocation10 + $0xdf8] sm:$0xff]
    %v8100 = vld [vmem:[#allocation10 + $0xe00] sm:$0xff]
    %v8101 = vld [vmem:[#allocation10 + $0xe08] sm:$0xff]
    %v8102 = vld [vmem:[#allocation10 + $0xe10] sm:$0xff]
    %v8103 = vld [vmem:[#allocation10 + $0xe18] sm:$0xff]
    %v8104 = vld [vmem:[#allocation10 + $0xe20] sm:$0xff]
    %v8105 = vld [vmem:[#allocation10 + $0xe28] sm:$0xff]
    %v8106 = vld [vmem:[#allocation10 + $0xe30] sm:$0xff]
    %v8107 = vld [vmem:[#allocation10 + $0xe38] sm:$0xff]
    %v8108 = vld [vmem:[#allocation10 + $0xe40] sm:$0xff]
    %v8109 = vld [vmem:[#allocation10 + $0xe48] sm:$0xff]
    %v8110 = vld [vmem:[#allocation10 + $0xe50] sm:$0xff]
    %v8111 = vld [vmem:[#allocation10 + $0xe58] sm:$0xff]
    %v8112 = vld [vmem:[#allocation10 + $0xe60] sm:$0xff]
    %v8113 = vld [vmem:[#allocation10 + $0xe68] sm:$0xff]
    %v8114 = vld [vmem:[#allocation10 + $0xe70] sm:$0xff]
    %v8115 = vld [vmem:[#allocation10 + $0xe78] sm:$0xff]
    %v8116 = vld [vmem:[#allocation10 + $0xe80] sm:$0xff]
    %v8117 = vld [vmem:[#allocation10 + $0xe88] sm:$0xff]
    %v8118 = vld [vmem:[#allocation10 + $0xe90] sm:$0xff]
    %v8119 = vld [vmem:[#allocation10 + $0xe98] sm:$0xff]
    %v8120 = vld [vmem:[#allocation10 + $0xea0] sm:$0xff]
    %v8121 = vld [vmem:[#allocation10 + $0xea8] sm:$0xff]
    %v8122 = vld [vmem:[#allocation10 + $0xeb0] sm:$0xff]
    %v8123 = vld [vmem:[#allocation10 + $0xeb8] sm:$0xff]
    %v8124 = vld [vmem:[#allocation10 + $0xec0] sm:$0xff]
    %v8125 = vld [vmem:[#allocation10 + $0xec8] sm:$0xff]
    %v8126 = vld [vmem:[#allocation10 + $0xed0] sm:$0xff]
    %v8127 = vld [vmem:[#allocation10 + $0xed8] sm:$0xff]
    %v8128 = vld [vmem:[#allocation10 + $0xee0] sm:$0xff]
    %v8129 = vld [vmem:[#allocation10 + $0xee8] sm:$0xff]
    %v8130 = vld [vmem:[#allocation10 + $0xef0] sm:$0xff]
    %v8131 = vld [vmem:[#allocation10 + $0xef8] sm:$0xff]
    %v8132 = vld [vmem:[#allocation14 + $0x27] sm:$0xf]
    %v8134 = vlaneseq
    %v8135 = vshrl.u32 %v8134, 7
    %v8136 = vsub.s32 0, %v8135
    %v8137 = vrot.slane %v8132, %v8136
    %v8138 = vlaneseq
    %v8139 = vshrl.u32 %v8138, 7
    %v8140 = vsub.s32 1, %v8139
    %v8141 = vrot.slane %v8132, %v8140
    %v8142 = vlaneseq
    %v8143 = vshrl.u32 %v8142, 7
    %v8144 = vsub.s32 2, %v8143
    %v8145 = vrot.slane %v8132, %v8144
    %v8146 = vlaneseq
    %v8147 = vshrl.u32 %v8146, 7
    %v8148 = vsub.s32 3, %v8147
    %v8149 = vrot.slane %v8132, %v8148
    %v8346 = vunpack.c.l.b16 %v7940
    %v8347 = vunpack.c.h.b16 %v7940
    %v8348 = vunpack.c.l.b16 %v7941
    %v8349 = vunpack.c.h.b16 %v7941
    %v8350 = vunpack.c.l.b16 %v7942
    %v8351 = vunpack.c.h.b16 %v7942
    %v8352 = vunpack.c.l.b16 %v7943
    %v8353 = vunpack.c.h.b16 %v7943
    %v8354 = vunpack.c.l.b16 %v7944
    %v8355 = vunpack.c.h.b16 %v7944
    %v8356 = vunpack.c.l.b16 %v7945
    %v8357 = vunpack.c.h.b16 %v7945
    %v8358 = vunpack.c.l.b16 %v7946
    %v8359 = vunpack.c.h.b16 %v7946
    %v8360 = vunpack.c.l.b16 %v7947
    %v8361 = vunpack.c.h.b16 %v7947
    %v8362 = vunpack.c.l.b16 %v7948
    %v8363 = vunpack.c.h.b16 %v7948
    %v8364 = vunpack.c.l.b16 %v7949
    %v8365 = vunpack.c.h.b16 %v7949
    %v8366 = vunpack.c.l.b16 %v7950
    %v8367 = vunpack.c.h.b16 %v7950
    %v8368 = vunpack.c.l.b16 %v7951
    %v8369 = vunpack.c.h.b16 %v7951
    %v8370 = vunpack.c.l.b16 %v7952
    %v8371 = vunpack.c.h.b16 %v7952
    %v8372 = vunpack.c.l.b16 %v7953
    %v8373 = vunpack.c.h.b16 %v7953
    %v8374 = vunpack.c.l.b16 %v7954
    %v8375 = vunpack.c.h.b16 %v7954
    %v8376 = vunpack.c.l.b16 %v7955
    %v8377 = vunpack.c.h.b16 %v7955
    %v8378 = vunpack.c.l.b16 %v7956
    %v8379 = vunpack.c.h.b16 %v7956
    %v8380 = vunpack.c.l.b16 %v7957
    %v8381 = vunpack.c.h.b16 %v7957
    %v8382 = vunpack.c.l.b16 %v7958
    %v8383 = vunpack.c.h.b16 %v7958
    %v8384 = vunpack.c.l.b16 %v7959
    %v8385 = vunpack.c.h.b16 %v7959
    %v8386 = vunpack.c.l.b16 %v7960
    %v8387 = vunpack.c.h.b16 %v7960
    %v8388 = vunpack.c.l.b16 %v7961
    %v8389 = vunpack.c.h.b16 %v7961
    %v8390 = vunpack.c.l.b16 %v7962
    %v8391 = vunpack.c.h.b16 %v7962
    %v8392 = vunpack.c.l.b16 %v7963
    %v8393 = vunpack.c.h.b16 %v7963
    %v8394 = vunpack.c.l.b16 %v7964
    %v8395 = vunpack.c.h.b16 %v7964
    %v8396 = vunpack.c.l.b16 %v7965
    %v8397 = vunpack.c.h.b16 %v7965
    %v8398 = vunpack.c.l.b16 %v7966
    %v8399 = vunpack.c.h.b16 %v7966
    %v8400 = vunpack.c.l.b16 %v7967
    %v8401 = vunpack.c.h.b16 %v7967
    %v8402 = vunpack.c.l.b16 %v7968
    %v8403 = vunpack.c.h.b16 %v7968
    %v8404 = vunpack.c.l.b16 %v7969
    %v8405 = vunpack.c.h.b16 %v7969
    %v8406 = vunpack.c.l.b16 %v7970
    %v8407 = vunpack.c.h.b16 %v7970
    %v8408 = vunpack.c.l.b16 %v7971
    %v8409 = vunpack.c.h.b16 %v7971
    %v8410 = vunpack.c.l.b16 %v7972
    %v8411 = vunpack.c.h.b16 %v7972
    %v8412 = vunpack.c.l.b16 %v7973
    %v8413 = vunpack.c.h.b16 %v7973
    %v8414 = vunpack.c.l.b16 %v7974
    %v8415 = vunpack.c.h.b16 %v7974
    %v8416 = vunpack.c.l.b16 %v7975
    %v8417 = vunpack.c.h.b16 %v7975
    %v8418 = vunpack.c.l.b16 %v7976
    %v8419 = vunpack.c.h.b16 %v7976
    %v8420 = vunpack.c.l.b16 %v7977
    %v8421 = vunpack.c.h.b16 %v7977
    %v8422 = vunpack.c.l.b16 %v7978
    %v8423 = vunpack.c.h.b16 %v7978
    %v8424 = vunpack.c.l.b16 %v7979
    %v8425 = vunpack.c.h.b16 %v7979
    %v8426 = vunpack.c.l.b16 %v7980
    %v8427 = vunpack.c.h.b16 %v7980
    %v8428 = vunpack.c.l.b16 %v7981
    %v8429 = vunpack.c.h.b16 %v7981
    %v8430 = vunpack.c.l.b16 %v7982
    %v8431 = vunpack.c.h.b16 %v7982
    %v8432 = vunpack.c.l.b16 %v7983
    %v8433 = vunpack.c.h.b16 %v7983
    %v8434 = vunpack.c.l.b16 %v7984
    %v8435 = vunpack.c.h.b16 %v7984
    %v8436 = vunpack.c.l.b16 %v7985
    %v8437 = vunpack.c.h.b16 %v7985
    %v8438 = vunpack.c.l.b16 %v7986
    %v8439 = vunpack.c.h.b16 %v7986
    %v8440 = vunpack.c.l.b16 %v7987
    %v8441 = vunpack.c.h.b16 %v7987
    %v8442 = vunpack.c.l.b16 %v7988
    %v8443 = vunpack.c.h.b16 %v7988
    %v8444 = vunpack.c.l.b16 %v7989
    %v8445 = vunpack.c.h.b16 %v7989
    %v8446 = vunpack.c.l.b16 %v7990
    %v8447 = vunpack.c.h.b16 %v7990
    %v8448 = vunpack.c.l.b16 %v7991
    %v8449 = vunpack.c.h.b16 %v7991
    %v8450 = vunpack.c.l.b16 %v7992
    %v8451 = vunpack.c.h.b16 %v7992
    %v8452 = vunpack.c.l.b16 %v7993
    %v8453 = vunpack.c.h.b16 %v7993
    %v8454 = vunpack.c.l.b16 %v7994
    %v8455 = vunpack.c.h.b16 %v7994
    %v8456 = vunpack.c.l.b16 %v7995
    %v8457 = vunpack.c.h.b16 %v7995
    %v8458 = vunpack.c.l.b16 %v7996
    %v8459 = vunpack.c.h.b16 %v7996
    %v8460 = vunpack.c.l.b16 %v7997
    %v8461 = vunpack.c.h.b16 %v7997
    %v8462 = vunpack.c.l.b16 %v7998
    %v8463 = vunpack.c.h.b16 %v7998
    %v8464 = vunpack.c.l.b16 %v7999
    %v8465 = vunpack.c.h.b16 %v7999
    %v8466 = vunpack.c.l.b16 %v8000
    %v8467 = vunpack.c.h.b16 %v8000
    %v8468 = vunpack.c.l.b16 %v8001
    %v8469 = vunpack.c.h.b16 %v8001
    %v8470 = vunpack.c.l.b16 %v8002
    %v8471 = vunpack.c.h.b16 %v8002
    %v8472 = vunpack.c.l.b16 %v8003
    %v8473 = vunpack.c.h.b16 %v8003
    %v8474 = vunpack.c.l.b16 %v8004
    %v8475 = vunpack.c.h.b16 %v8004
    %v8476 = vunpack.c.l.b16 %v8005
    %v8477 = vunpack.c.h.b16 %v8005
    %v8478 = vunpack.c.l.b16 %v8006
    %v8479 = vunpack.c.h.b16 %v8006
    %v8480 = vunpack.c.l.b16 %v8007
    %v8481 = vunpack.c.h.b16 %v8007
    %v8482 = vunpack.c.l.b16 %v8008
    %v8483 = vunpack.c.h.b16 %v8008
    %v8484 = vunpack.c.l.b16 %v8009
    %v8485 = vunpack.c.h.b16 %v8009
    %v8486 = vunpack.c.l.b16 %v8010
    %v8487 = vunpack.c.h.b16 %v8010
    %v8488 = vunpack.c.l.b16 %v8011
    %v8489 = vunpack.c.h.b16 %v8011
    %v8490 = vunpack.c.l.b16 %v8012
    %v8491 = vunpack.c.h.b16 %v8012
    %v8492 = vunpack.c.l.b16 %v8013
    %v8493 = vunpack.c.h.b16 %v8013
    %v8494 = vunpack.c.l.b16 %v8014
    %v8495 = vunpack.c.h.b16 %v8014
    %v8496 = vunpack.c.l.b16 %v8015
    %v8497 = vunpack.c.h.b16 %v8015
    %v8498 = vunpack.c.l.b16 %v8016
    %v8499 = vunpack.c.h.b16 %v8016
    %v8500 = vunpack.c.l.b16 %v8017
    %v8501 = vunpack.c.h.b16 %v8017
    %v8502 = vunpack.c.l.b16 %v8018
    %v8503 = vunpack.c.h.b16 %v8018
    %v8504 = vunpack.c.l.b16 %v8019
    %v8505 = vunpack.c.h.b16 %v8019
    %v8506 = vunpack.c.l.b16 %v8020
    %v8507 = vunpack.c.h.b16 %v8020
    %v8508 = vunpack.c.l.b16 %v8021
    %v8509 = vunpack.c.h.b16 %v8021
    %v8510 = vunpack.c.l.b16 %v8022
    %v8511 = vunpack.c.h.b16 %v8022
    %v8512 = vunpack.c.l.b16 %v8023
    %v8513 = vunpack.c.h.b16 %v8023
    %v8514 = vunpack.c.l.b16 %v8024
    %v8515 = vunpack.c.h.b16 %v8024
    %v8516 = vunpack.c.l.b16 %v8025
    %v8517 = vunpack.c.h.b16 %v8025
    %v8518 = vunpack.c.l.b16 %v8026
    %v8519 = vunpack.c.h.b16 %v8026
    %v8520 = vunpack.c.l.b16 %v8027
    %v8521 = vunpack.c.h.b16 %v8027
    %v8522 = vunpack.c.l.b16 %v8028
    %v8523 = vunpack.c.h.b16 %v8028
    %v8524 = vunpack.c.l.b16 %v8029
    %v8525 = vunpack.c.h.b16 %v8029
    %v8526 = vunpack.c.l.b16 %v8030
    %v8527 = vunpack.c.h.b16 %v8030
    %v8528 = vunpack.c.l.b16 %v8031
    %v8529 = vunpack.c.h.b16 %v8031
    %v8530 = vunpack.c.l.b16 %v8032
    %v8531 = vunpack.c.h.b16 %v8032
    %v8532 = vunpack.c.l.b16 %v8033
    %v8533 = vunpack.c.h.b16 %v8033
    %v8534 = vunpack.c.l.b16 %v8034
    %v8535 = vunpack.c.h.b16 %v8034
    %v8536 = vunpack.c.l.b16 %v8035
    %v8537 = vunpack.c.h.b16 %v8035
    %v8538 = vunpack.c.l.b16 %v8036
    %v8539 = vunpack.c.h.b16 %v8036
    %v8540 = vunpack.c.l.b16 %v8037
    %v8541 = vunpack.c.h.b16 %v8037
    %v8542 = vunpack.c.l.b16 %v8038
    %v8543 = vunpack.c.h.b16 %v8038
    %v8544 = vunpack.c.l.b16 %v8039
    %v8545 = vunpack.c.h.b16 %v8039
    %v8546 = vunpack.c.l.b16 %v8040
    %v8547 = vunpack.c.h.b16 %v8040
    %v8548 = vunpack.c.l.b16 %v8041
    %v8549 = vunpack.c.h.b16 %v8041
    %v8550 = vunpack.c.l.b16 %v8042
    %v8551 = vunpack.c.h.b16 %v8042
    %v8552 = vunpack.c.l.b16 %v8043
    %v8553 = vunpack.c.h.b16 %v8043
    %v8554 = vunpack.c.l.b16 %v8044
    %v8555 = vunpack.c.h.b16 %v8044
    %v8556 = vunpack.c.l.b16 %v8045
    %v8557 = vunpack.c.h.b16 %v8045
    %v8558 = vunpack.c.l.b16 %v8046
    %v8559 = vunpack.c.h.b16 %v8046
    %v8560 = vunpack.c.l.b16 %v8047
    %v8561 = vunpack.c.h.b16 %v8047
    %v8562 = vunpack.c.l.b16 %v8048
    %v8563 = vunpack.c.h.b16 %v8048
    %v8564 = vunpack.c.l.b16 %v8049
    %v8565 = vunpack.c.h.b16 %v8049
    %v8566 = vunpack.c.l.b16 %v8050
    %v8567 = vunpack.c.h.b16 %v8050
    %v8568 = vunpack.c.l.b16 %v8051
    %v8569 = vunpack.c.h.b16 %v8051
    %v8570 = vunpack.c.l.b16 %v8052
    %v8571 = vunpack.c.h.b16 %v8052
    %v8572 = vunpack.c.l.b16 %v8053
    %v8573 = vunpack.c.h.b16 %v8053
    %v8574 = vunpack.c.l.b16 %v8054
    %v8575 = vunpack.c.h.b16 %v8054
    %v8576 = vunpack.c.l.b16 %v8055
    %v8577 = vunpack.c.h.b16 %v8055
    %v8578 = vunpack.c.l.b16 %v8056
    %v8579 = vunpack.c.h.b16 %v8056
    %v8580 = vunpack.c.l.b16 %v8057
    %v8581 = vunpack.c.h.b16 %v8057
    %v8582 = vunpack.c.l.b16 %v8058
    %v8583 = vunpack.c.h.b16 %v8058
    %v8584 = vunpack.c.l.b16 %v8059
    %v8585 = vunpack.c.h.b16 %v8059
    %v8586 = vunpack.c.l.b16 %v8060
    %v8587 = vunpack.c.h.b16 %v8060
    %v8588 = vunpack.c.l.b16 %v8061
    %v8589 = vunpack.c.h.b16 %v8061
    %v8590 = vunpack.c.l.b16 %v8062
    %v8591 = vunpack.c.h.b16 %v8062
    %v8592 = vunpack.c.l.b16 %v8063
    %v8593 = vunpack.c.h.b16 %v8063
    %v8594 = vunpack.c.l.b16 %v8064
    %v8595 = vunpack.c.h.b16 %v8064
    %v8596 = vunpack.c.l.b16 %v8065
    %v8597 = vunpack.c.h.b16 %v8065
    %v8598 = vunpack.c.l.b16 %v8066
    %v8599 = vunpack.c.h.b16 %v8066
    %v8600 = vunpack.c.l.b16 %v8067
    %v8601 = vunpack.c.h.b16 %v8067
    %v8602 = vunpack.c.l.b16 %v8068
    %v8603 = vunpack.c.h.b16 %v8068
    %v8604 = vunpack.c.l.b16 %v8069
    %v8605 = vunpack.c.h.b16 %v8069
    %v8606 = vunpack.c.l.b16 %v8070
    %v8607 = vunpack.c.h.b16 %v8070
    %v8608 = vunpack.c.l.b16 %v8071
    %v8609 = vunpack.c.h.b16 %v8071
    %v8610 = vunpack.c.l.b16 %v8072
    %v8611 = vunpack.c.h.b16 %v8072
    %v8612 = vunpack.c.l.b16 %v8073
    %v8613 = vunpack.c.h.b16 %v8073
    %v8614 = vunpack.c.l.b16 %v8074
    %v8615 = vunpack.c.h.b16 %v8074
    %v8616 = vunpack.c.l.b16 %v8075
    %v8617 = vunpack.c.h.b16 %v8075
    %v8618 = vunpack.c.l.b16 %v8076
    %v8619 = vunpack.c.h.b16 %v8076
    %v8620 = vunpack.c.l.b16 %v8077
    %v8621 = vunpack.c.h.b16 %v8077
    %v8622 = vunpack.c.l.b16 %v8078
    %v8623 = vunpack.c.h.b16 %v8078
    %v8624 = vunpack.c.l.b16 %v8079
    %v8625 = vunpack.c.h.b16 %v8079
    %v8626 = vunpack.c.l.b16 %v8080
    %v8627 = vunpack.c.h.b16 %v8080
    %v8628 = vunpack.c.l.b16 %v8081
    %v8629 = vunpack.c.h.b16 %v8081
    %v8630 = vunpack.c.l.b16 %v8082
    %v8631 = vunpack.c.h.b16 %v8082
    %v8632 = vunpack.c.l.b16 %v8083
    %v8633 = vunpack.c.h.b16 %v8083
    %v8634 = vunpack.c.l.b16 %v8084
    %v8635 = vunpack.c.h.b16 %v8084
    %v8636 = vunpack.c.l.b16 %v8085
    %v8637 = vunpack.c.h.b16 %v8085
    %v8638 = vunpack.c.l.b16 %v8086
    %v8639 = vunpack.c.h.b16 %v8086
    %v8640 = vunpack.c.l.b16 %v8087
    %v8641 = vunpack.c.h.b16 %v8087
    %v8642 = vunpack.c.l.b16 %v8088
    %v8643 = vunpack.c.h.b16 %v8088
    %v8644 = vunpack.c.l.b16 %v8089
    %v8645 = vunpack.c.h.b16 %v8089
    %v8646 = vunpack.c.l.b16 %v8090
    %v8647 = vunpack.c.h.b16 %v8090
    %v8648 = vunpack.c.l.b16 %v8091
    %v8649 = vunpack.c.h.b16 %v8091
    %v8650 = vunpack.c.l.b16 %v8092
    %v8651 = vunpack.c.h.b16 %v8092
    %v8652 = vunpack.c.l.b16 %v8093
    %v8653 = vunpack.c.h.b16 %v8093
    %v8654 = vunpack.c.l.b16 %v8094
    %v8655 = vunpack.c.h.b16 %v8094
    %v8656 = vunpack.c.l.b16 %v8095
    %v8657 = vunpack.c.h.b16 %v8095
    %v8658 = vunpack.c.l.b16 %v8096
    %v8659 = vunpack.c.h.b16 %v8096
    %v8660 = vunpack.c.l.b16 %v8097
    %v8661 = vunpack.c.h.b16 %v8097
    %v8662 = vunpack.c.l.b16 %v8098
    %v8663 = vunpack.c.h.b16 %v8098
    %v8664 = vunpack.c.l.b16 %v8099
    %v8665 = vunpack.c.h.b16 %v8099
    %v8666 = vunpack.c.l.b16 %v8100
    %v8667 = vunpack.c.h.b16 %v8100
    %v8668 = vunpack.c.l.b16 %v8101
    %v8669 = vunpack.c.h.b16 %v8101
    %v8670 = vunpack.c.l.b16 %v8102
    %v8671 = vunpack.c.h.b16 %v8102
    %v8672 = vunpack.c.l.b16 %v8103
    %v8673 = vunpack.c.h.b16 %v8103
    %v8674 = vunpack.c.l.b16 %v8104
    %v8675 = vunpack.c.h.b16 %v8104
    %v8676 = vunpack.c.l.b16 %v8105
    %v8677 = vunpack.c.h.b16 %v8105
    %v8678 = vunpack.c.l.b16 %v8106
    %v8679 = vunpack.c.h.b16 %v8106
    %v8680 = vunpack.c.l.b16 %v8107
    %v8681 = vunpack.c.h.b16 %v8107
    %v8682 = vunpack.c.l.b16 %v8108
    %v8683 = vunpack.c.h.b16 %v8108
    %v8684 = vunpack.c.l.b16 %v8109
    %v8685 = vunpack.c.h.b16 %v8109
    %v8686 = vunpack.c.l.b16 %v8110
    %v8687 = vunpack.c.h.b16 %v8110
    %v8688 = vunpack.c.l.b16 %v8111
    %v8689 = vunpack.c.h.b16 %v8111
    %v8690 = vunpack.c.l.b16 %v8112
    %v8691 = vunpack.c.h.b16 %v8112
    %v8692 = vunpack.c.l.b16 %v8113
    %v8693 = vunpack.c.h.b16 %v8113
    %v8694 = vunpack.c.l.b16 %v8114
    %v8695 = vunpack.c.h.b16 %v8114
    %v8696 = vunpack.c.l.b16 %v8115
    %v8697 = vunpack.c.h.b16 %v8115
    %v8698 = vunpack.c.l.b16 %v8116
    %v8699 = vunpack.c.h.b16 %v8116
    %v8700 = vunpack.c.l.b16 %v8117
    %v8701 = vunpack.c.h.b16 %v8117
    %v8702 = vunpack.c.l.b16 %v8118
    %v8703 = vunpack.c.h.b16 %v8118
    %v8704 = vunpack.c.l.b16 %v8119
    %v8705 = vunpack.c.h.b16 %v8119
    %v8706 = vunpack.c.l.b16 %v8120
    %v8707 = vunpack.c.h.b16 %v8120
    %v8708 = vunpack.c.l.b16 %v8121
    %v8709 = vunpack.c.h.b16 %v8121
    %v8710 = vunpack.c.l.b16 %v8122
    %v8711 = vunpack.c.h.b16 %v8122
    %v8712 = vunpack.c.l.b16 %v8123
    %v8713 = vunpack.c.h.b16 %v8123
    %v8714 = vunpack.c.l.b16 %v8124
    %v8715 = vunpack.c.h.b16 %v8124
    %v8716 = vunpack.c.l.b16 %v8125
    %v8717 = vunpack.c.h.b16 %v8125
    %v8718 = vunpack.c.l.b16 %v8126
    %v8719 = vunpack.c.h.b16 %v8126
    %v8720 = vunpack.c.l.b16 %v8127
    %v8721 = vunpack.c.h.b16 %v8127
    %v8722 = vunpack.c.l.b16 %v8128
    %v8723 = vunpack.c.h.b16 %v8128
    %v8724 = vunpack.c.l.b16 %v8129
    %v8725 = vunpack.c.h.b16 %v8129
    %v8726 = vunpack.c.l.b16 %v8130
    %v8727 = vunpack.c.h.b16 %v8130
    %v8728 = vunpack.c.l.b16 %v8131
    %v8729 = vunpack.c.h.b16 %v8131
    %v8730 = vpack.c.b16 %v8350, %v8346
    %v8731 = vpack.c.b16 %v8351, %v8347
    %v8732 = vpack.c.b16 %v8352, %v8348
    %v8733 = vpack.c.b16 %v8353, %v8349
    %v8734 = vpack.c.b16 %v8358, %v8354
    %v8735 = vpack.c.b16 %v8359, %v8355
    %v8736 = vpack.c.b16 %v8360, %v8356
    %v8737 = vpack.c.b16 %v8361, %v8357
    %v8738 = vpack.c.b16 %v8366, %v8362
    %v8739 = vpack.c.b16 %v8367, %v8363
    %v8740 = vpack.c.b16 %v8368, %v8364
    %v8741 = vpack.c.b16 %v8369, %v8365
    %v8742 = vpack.c.b16 %v8374, %v8370
    %v8743 = vpack.c.b16 %v8375, %v8371
    %v8744 = vpack.c.b16 %v8376, %v8372
    %v8745 = vpack.c.b16 %v8377, %v8373
    %v8746 = vpack.c.b16 %v8382, %v8378
    %v8747 = vpack.c.b16 %v8383, %v8379
    %v8748 = vpack.c.b16 %v8384, %v8380
    %v8749 = vpack.c.b16 %v8385, %v8381
    %v8750 = vpack.c.b16 %v8390, %v8386
    %v8751 = vpack.c.b16 %v8391, %v8387
    %v8752 = vpack.c.b16 %v8392, %v8388
    %v8753 = vpack.c.b16 %v8393, %v8389
    %v8754 = vpack.c.b16 %v8398, %v8394
    %v8755 = vpack.c.b16 %v8399, %v8395
    %v8756 = vpack.c.b16 %v8400, %v8396
    %v8757 = vpack.c.b16 %v8401, %v8397
    %v8758 = vpack.c.b16 %v8406, %v8402
    %v8759 = vpack.c.b16 %v8407, %v8403
    %v8760 = vpack.c.b16 %v8408, %v8404
    %v8761 = vpack.c.b16 %v8409, %v8405
    %v8762 = vpack.c.b16 %v8414, %v8410
    %v8763 = vpack.c.b16 %v8415, %v8411
    %v8764 = vpack.c.b16 %v8416, %v8412
    %v8765 = vpack.c.b16 %v8417, %v8413
    %v8766 = vpack.c.b16 %v8422, %v8418
    %v8767 = vpack.c.b16 %v8423, %v8419
    %v8768 = vpack.c.b16 %v8424, %v8420
    %v8769 = vpack.c.b16 %v8425, %v8421
    %v8770 = vpack.c.b16 %v8430, %v8426
    %v8771 = vpack.c.b16 %v8431, %v8427
    %v8772 = vpack.c.b16 %v8432, %v8428
    %v8773 = vpack.c.b16 %v8433, %v8429
    %v8774 = vpack.c.b16 %v8438, %v8434
    %v8775 = vpack.c.b16 %v8439, %v8435
    %v8776 = vpack.c.b16 %v8440, %v8436
    %v8777 = vpack.c.b16 %v8441, %v8437
    %v8778 = vpack.c.b16 %v8446, %v8442
    %v8779 = vpack.c.b16 %v8447, %v8443
    %v8780 = vpack.c.b16 %v8448, %v8444
    %v8781 = vpack.c.b16 %v8449, %v8445
    %v8782 = vpack.c.b16 %v8454, %v8450
    %v8783 = vpack.c.b16 %v8455, %v8451
    %v8784 = vpack.c.b16 %v8456, %v8452
    %v8785 = vpack.c.b16 %v8457, %v8453
    %v8786 = vpack.c.b16 %v8462, %v8458
    %v8787 = vpack.c.b16 %v8463, %v8459
    %v8788 = vpack.c.b16 %v8464, %v8460
    %v8789 = vpack.c.b16 %v8465, %v8461
    %v8790 = vpack.c.b16 %v8470, %v8466
    %v8791 = vpack.c.b16 %v8471, %v8467
    %v8792 = vpack.c.b16 %v8472, %v8468
    %v8793 = vpack.c.b16 %v8473, %v8469
    %v8794 = vpack.c.b16 %v8478, %v8474
    %v8795 = vpack.c.b16 %v8479, %v8475
    %v8796 = vpack.c.b16 %v8480, %v8476
    %v8797 = vpack.c.b16 %v8481, %v8477
    %v8798 = vpack.c.b16 %v8486, %v8482
    %v8799 = vpack.c.b16 %v8487, %v8483
    %v8800 = vpack.c.b16 %v8488, %v8484
    %v8801 = vpack.c.b16 %v8489, %v8485
    %v8802 = vpack.c.b16 %v8494, %v8490
    %v8803 = vpack.c.b16 %v8495, %v8491
    %v8804 = vpack.c.b16 %v8496, %v8492
    %v8805 = vpack.c.b16 %v8497, %v8493
    %v8806 = vpack.c.b16 %v8502, %v8498
    %v8807 = vpack.c.b16 %v8503, %v8499
    %v8808 = vpack.c.b16 %v8504, %v8500
    %v8809 = vpack.c.b16 %v8505, %v8501
    %v8810 = vpack.c.b16 %v8510, %v8506
    %v8811 = vpack.c.b16 %v8511, %v8507
    %v8812 = vpack.c.b16 %v8512, %v8508
    %v8813 = vpack.c.b16 %v8513, %v8509
    %v8814 = vpack.c.b16 %v8518, %v8514
    %v8815 = vpack.c.b16 %v8519, %v8515
    %v8816 = vpack.c.b16 %v8520, %v8516
    %v8817 = vpack.c.b16 %v8521, %v8517
    %v8818 = vpack.c.b16 %v8526, %v8522
    %v8819 = vpack.c.b16 %v8527, %v8523
    %v8820 = vpack.c.b16 %v8528, %v8524
    %v8821 = vpack.c.b16 %v8529, %v8525
    %v8822 = vpack.c.b16 %v8534, %v8530
    %v8823 = vpack.c.b16 %v8535, %v8531
    %v8824 = vpack.c.b16 %v8536, %v8532
    %v8825 = vpack.c.b16 %v8537, %v8533
    %v8826 = vpack.c.b16 %v8542, %v8538
    %v8827 = vpack.c.b16 %v8543, %v8539
    %v8828 = vpack.c.b16 %v8544, %v8540
    %v8829 = vpack.c.b16 %v8545, %v8541
    %v8830 = vpack.c.b16 %v8550, %v8546
    %v8831 = vpack.c.b16 %v8551, %v8547
    %v8832 = vpack.c.b16 %v8552, %v8548
    %v8833 = vpack.c.b16 %v8553, %v8549
    %v8834 = vpack.c.b16 %v8558, %v8554
    %v8835 = vpack.c.b16 %v8559, %v8555
    %v8836 = vpack.c.b16 %v8560, %v8556
    %v8837 = vpack.c.b16 %v8561, %v8557
    %v8838 = vpack.c.b16 %v8566, %v8562
    %v8839 = vpack.c.b16 %v8567, %v8563
    %v8840 = vpack.c.b16 %v8568, %v8564
    %v8841 = vpack.c.b16 %v8569, %v8565
    %v8842 = vpack.c.b16 %v8574, %v8570
    %v8843 = vpack.c.b16 %v8575, %v8571
    %v8844 = vpack.c.b16 %v8576, %v8572
    %v8845 = vpack.c.b16 %v8577, %v8573
    %v8846 = vpack.c.b16 %v8582, %v8578
    %v8847 = vpack.c.b16 %v8583, %v8579
    %v8848 = vpack.c.b16 %v8584, %v8580
    %v8849 = vpack.c.b16 %v8585, %v8581
    %v8850 = vpack.c.b16 %v8590, %v8586
    %v8851 = vpack.c.b16 %v8591, %v8587
    %v8852 = vpack.c.b16 %v8592, %v8588
    %v8853 = vpack.c.b16 %v8593, %v8589
    %v8854 = vpack.c.b16 %v8598, %v8594
    %v8855 = vpack.c.b16 %v8599, %v8595
    %v8856 = vpack.c.b16 %v8600, %v8596
    %v8857 = vpack.c.b16 %v8601, %v8597
    %v8858 = vpack.c.b16 %v8606, %v8602
    %v8859 = vpack.c.b16 %v8607, %v8603
    %v8860 = vpack.c.b16 %v8608, %v8604
    %v8861 = vpack.c.b16 %v8609, %v8605
    %v8862 = vpack.c.b16 %v8614, %v8610
    %v8863 = vpack.c.b16 %v8615, %v8611
    %v8864 = vpack.c.b16 %v8616, %v8612
    %v8865 = vpack.c.b16 %v8617, %v8613
    %v8866 = vpack.c.b16 %v8622, %v8618
    %v8867 = vpack.c.b16 %v8623, %v8619
    %v8868 = vpack.c.b16 %v8624, %v8620
    %v8869 = vpack.c.b16 %v8625, %v8621
    %v8870 = vpack.c.b16 %v8630, %v8626
    %v8871 = vpack.c.b16 %v8631, %v8627
    %v8872 = vpack.c.b16 %v8632, %v8628
    %v8873 = vpack.c.b16 %v8633, %v8629
    %v8874 = vpack.c.b16 %v8638, %v8634
    %v8875 = vpack.c.b16 %v8639, %v8635
    %v8876 = vpack.c.b16 %v8640, %v8636
    %v8877 = vpack.c.b16 %v8641, %v8637
    %v8878 = vpack.c.b16 %v8646, %v8642
    %v8879 = vpack.c.b16 %v8647, %v8643
    %v8880 = vpack.c.b16 %v8648, %v8644
    %v8881 = vpack.c.b16 %v8649, %v8645
    %v8882 = vpack.c.b16 %v8654, %v8650
    %v8883 = vpack.c.b16 %v8655, %v8651
    %v8884 = vpack.c.b16 %v8656, %v8652
    %v8885 = vpack.c.b16 %v8657, %v8653
    %v8886 = vpack.c.b16 %v8662, %v8658
    %v8887 = vpack.c.b16 %v8663, %v8659
    %v8888 = vpack.c.b16 %v8664, %v8660
    %v8889 = vpack.c.b16 %v8665, %v8661
    %v8890 = vpack.c.b16 %v8670, %v8666
    %v8891 = vpack.c.b16 %v8671, %v8667
    %v8892 = vpack.c.b16 %v8672, %v8668
    %v8893 = vpack.c.b16 %v8673, %v8669
    %v8894 = vpack.c.b16 %v8678, %v8674
    %v8895 = vpack.c.b16 %v8679, %v8675
    %v8896 = vpack.c.b16 %v8680, %v8676
    %v8897 = vpack.c.b16 %v8681, %v8677
    %v8898 = vpack.c.b16 %v8686, %v8682
    %v8899 = vpack.c.b16 %v8687, %v8683
    %v8900 = vpack.c.b16 %v8688, %v8684
    %v8901 = vpack.c.b16 %v8689, %v8685
    %v8902 = vpack.c.b16 %v8694, %v8690
    %v8903 = vpack.c.b16 %v8695, %v8691
    %v8904 = vpack.c.b16 %v8696, %v8692
    %v8905 = vpack.c.b16 %v8697, %v8693
    %v8906 = vpack.c.b16 %v8702, %v8698
    %v8907 = vpack.c.b16 %v8703, %v8699
    %v8908 = vpack.c.b16 %v8704, %v8700
    %v8909 = vpack.c.b16 %v8705, %v8701
    %v8910 = vpack.c.b16 %v8710, %v8706
    %v8911 = vpack.c.b16 %v8711, %v8707
    %v8912 = vpack.c.b16 %v8712, %v8708
    %v8913 = vpack.c.b16 %v8713, %v8709
    %v8914 = vpack.c.b16 %v8718, %v8714
    %v8915 = vpack.c.b16 %v8719, %v8715
    %v8916 = vpack.c.b16 %v8720, %v8716
    %v8917 = vpack.c.b16 %v8721, %v8717
    %v8918 = vpack.c.b16 %v8726, %v8722
    %v8919 = vpack.c.b16 %v8727, %v8723
    %v8920 = vpack.c.b16 %v8728, %v8724
    %v8921 = vpack.c.b16 %v8729, %v8725
    %9114 = vmatprep.subr.bf16.mxu0 %v8731
    %9115 = vmatpush1.bf16.msra.mxu0 %v8730
    %9116 = vmatprep.subr.bf16.mxu0 %v8735
    %9117 = vmatpush1.bf16.msra.mxu0 %v8734
    %9118 = vmatprep.subr.bf16.mxu0 %v8739
    %9119 = vmatpush1.bf16.msra.mxu0 %v8738
    %9120 = vmatprep.subr.bf16.mxu0 %v8743
    %9121 = vmatpush1.bf16.msra.mxu0 %v8742
    %9122 = vmatprep.subr.bf16.mxu0 %v8747
    %9123 = vmatpush1.bf16.msra.mxu0 %v8746
    %9124 = vmatprep.subr.bf16.mxu0 %v8751
    %9125 = vmatpush1.bf16.msra.mxu0 %v8750
    %9126 = vmatprep.subr.bf16.mxu0 %v8755
    %9127 = vmatpush1.bf16.msra.mxu0 %v8754
    %9128 = vmatprep.subr.bf16.mxu0 %v8759
    %9129 = vmatpush1.bf16.msra.mxu0 %v8758
    %9130 = vmatprep.subr.bf16.mxu0 %v8763
    %9131 = vmatpush1.bf16.msra.mxu0 %v8762
    %9132 = vmatprep.subr.bf16.mxu0 %v8767
    %9133 = vmatpush1.bf16.msra.mxu0 %v8766
    %9134 = vmatprep.subr.bf16.mxu0 %v8771
    %9135 = vmatpush1.bf16.msra.mxu0 %v8770
    %9136 = vmatprep.subr.bf16.mxu0 %v8775
    %9137 = vmatpush1.bf16.msra.mxu0 %v8774
    %9138 = vmatprep.subr.bf16.mxu0 %v8779
    %9139 = vmatpush1.bf16.msra.mxu0 %v8778
    %9140 = vmatprep.subr.bf16.mxu0 %v8783
    %9141 = vmatpush1.bf16.msra.mxu0 %v8782
    %9142 = vmatprep.subr.bf16.mxu0 %v8787
    %9143 = vmatpush1.bf16.msra.mxu0 %v8786
    %9144 = vmatprep.subr.bf16.mxu0 %v8791
    %9145 = vmatpush1.bf16.msra.mxu0 %v8790
    %9146 = vmatprep.mubr.bf16.mxu0 %v7901
    %9147 = vmatmul.mubr.bf16.gmra.mrb[0].mxu0 %v7900
    %v9148 = vpop.f32.mrb[0].mxu0
    %v9149 = vadd.f32 %v8137, %v9148
    %v9150 = vpop.f32.mrb[0].mxu0
    %v9151 = vadd.f32 %v8141, %v9150
    %v9152 = vpop.f32.mrb[0].mxu0
    %v9153 = vpop.f32.mrb[0].mxu0
    %9154 = vdwg.mxu0
    %9155 = vmatprep.subr.bf16.mxu0 %v8795
    %9156 = vmatpush1.bf16.msra.mxu0 %v8794
    %9157 = vmatprep.subr.bf16.mxu0 %v8799
    %9158 = vmatpush1.bf16.msra.mxu0 %v8798
    %9159 = vmatprep.subr.bf16.mxu0 %v8803
    %9160 = vmatpush1.bf16.msra.mxu0 %v8802
    %9161 = vmatprep.subr.bf16.mxu0 %v8807
    %9162 = vmatpush1.bf16.msra.mxu0 %v8806
    %9163 = vmatprep.subr.bf16.mxu0 %v8811
    %9164 = vmatpush1.bf16.msra.mxu0 %v8810
    %9165 = vmatprep.subr.bf16.mxu0 %v8815
    %9166 = vmatpush1.bf16.msra.mxu0 %v8814
    %9167 = vmatprep.subr.bf16.mxu0 %v8819
    %9168 = vmatpush1.bf16.msra.mxu0 %v8818
    %9169 = vmatprep.subr.bf16.mxu0 %v8823
    %9170 = vmatpush1.bf16.msra.mxu0 %v8822
    %9171 = vmatprep.subr.bf16.mxu0 %v8827
    %9172 = vmatpush1.bf16.msra.mxu0 %v8826
    %9173 = vmatprep.subr.bf16.mxu0 %v8831
    %9174 = vmatpush1.bf16.msra.mxu0 %v8830
    %9175 = vmatprep.subr.bf16.mxu0 %v8835
    %9176 = vmatpush1.bf16.msra.mxu0 %v8834
    %9177 = vmatprep.subr.bf16.mxu0 %v8839
    %9178 = vmatpush1.bf16.msra.mxu0 %v8838
    %9179 = vmatprep.subr.bf16.mxu0 %v8843
    %9180 = vmatpush1.bf16.msra.mxu0 %v8842
    %9181 = vmatprep.subr.bf16.mxu0 %v8847
    %9182 = vmatpush1.bf16.msra.mxu0 %v8846
    %9183 = vmatprep.subr.bf16.mxu0 %v8851
    %9184 = vmatpush1.bf16.msra.mxu0 %v8850
    %9185 = vmatprep.subr.bf16.mxu0 %v8855
    %9186 = vmatpush1.bf16.msra.mxu0 %v8854
    %9187 = vmatprep.mubr.bf16.mxu0 %v7903
    %9188 = vmatmul.mubr.bf16.gmra.mrb[0].mxu0 %v7902
    %v9189 = vpop.f32.mrb[0].mxu0
    %v9190 = vadd.f32 %v9149, %v9189
    %v9191 = vpop.f32.mrb[0].mxu0
    %v9192 = vadd.f32 %v9151, %v9191
    %v9193 = vpop.f32.mrb[0].mxu0
    %v9194 = vpop.f32.mrb[0].mxu0
    %9195 = vdwg.mxu0
    %9196 = vmatprep.subr.bf16.mxu0 %v8859
    %9197 = vmatpush1.bf16.msra.mxu0 %v8858
    %9198 = vmatprep.subr.bf16.mxu0 %v8863
    %9199 = vmatpush1.bf16.msra.mxu0 %v8862
    %9200 = vmatprep.subr.bf16.mxu0 %v8867
    %9201 = vmatpush1.bf16.msra.mxu0 %v8866
    %9202 = vmatprep.subr.bf16.mxu0 %v8871
    %9203 = vmatpush1.bf16.msra.mxu0 %v8870
    %9204 = vmatprep.subr.bf16.mxu0 %v8875
    %9205 = vmatpush1.bf16.msra.mxu0 %v8874
    %9206 = vmatprep.subr.bf16.mxu0 %v8879
    %9207 = vmatpush1.bf16.msra.mxu0 %v8878
    %9208 = vmatprep.subr.bf16.mxu0 %v8883
    %9209 = vmatpush1.bf16.msra.mxu0 %v8882
    %9210 = vmatprep.subr.bf16.mxu0 %v8887
    %9211 = vmatpush1.bf16.msra.mxu0 %v8886
    %9212 = vmatprep.subr.bf16.mxu0 %v8891
    %9213 = vmatpush1.bf16.msra.mxu0 %v8890
    %9214 = vmatprep.subr.bf16.mxu0 %v8895
    %9215 = vmatpush1.bf16.msra.mxu0 %v8894
    %9216 = vmatprep.subr.bf16.mxu0 %v8899
    %9217 = vmatpush1.bf16.msra.mxu0 %v8898
    %9218 = vmatprep.subr.bf16.mxu0 %v8903
    %9219 = vmatpush1.bf16.msra.mxu0 %v8902
    %9220 = vmatprep.subr.bf16.mxu0 %v8907
    %9221 = vmatpush1.bf16.msra.mxu0 %v8906
    %9222 = vmatprep.subr.bf16.mxu0 %v8911
    %9223 = vmatpush1.bf16.msra.mxu0 %v8910
    %9224 = vmatprep.subr.bf16.mxu0 %v8915
    %9225 = vmatpush1.bf16.msra.mxu0 %v8914
    %9226 = vmatprep.subr.bf16.mxu0 %v8919
    %9227 = vmatpush1.bf16.msra.mxu0 %v8918
    %9228 = vmatprep.mubr.bf16.mxu0 %v7905
    %9229 = vmatmul.mubr.bf16.gmra.mrb[0].mxu0 %v7904
    %v9230 = vpop.f32.mrb[0].mxu0
    %v9231 = vadd.f32 %v9190, %v9230
    %v9232 = vpop.f32.mrb[0].mxu0
    %v9233 = vadd.f32 %v9192, %v9232
    %v9234 = vpop.f32.mrb[0].mxu0
    %v9235 = vpop.f32.mrb[0].mxu0
    %9236 = vdwg.mxu0
    %9237 = vmatprep.subr.bf16.mxu0 %v8733
    %9238 = vmatpush1.bf16.msra.mxu0 %v8732
    %9239 = vmatprep.subr.bf16.mxu0 %v8737
    %9240 = vmatpush1.bf16.msra.mxu0 %v8736
    %9241 = vmatprep.subr.bf16.mxu0 %v8741
    %9242 = vmatpush1.bf16.msra.mxu0 %v8740
    %9243 = vmatprep.subr.bf16.mxu0 %v8745
    %9244 = vmatpush1.bf16.msra.mxu0 %v8744
    %9245 = vmatprep.subr.bf16.mxu0 %v8749
    %9246 = vmatpush1.bf16.msra.mxu0 %v8748
    %9247 = vmatprep.subr.bf16.mxu0 %v8753
    %9248 = vmatpush1.bf16.msra.mxu0 %v8752
    %9249 = vmatprep.subr.bf16.mxu0 %v8757
    %9250 = vmatpush1.bf16.msra.mxu0 %v8756
    %9251 = vmatprep.subr.bf16.mxu0 %v8761
    %9252 = vmatpush1.bf16.msra.mxu0 %v8760
    %9253 = vmatprep.subr.bf16.mxu0 %v8765
    %9254 = vmatpush1.bf16.msra.mxu0 %v8764
    %9255 = vmatprep.subr.bf16.mxu0 %v8769
    %9256 = vmatpush1.bf16.msra.mxu0 %v8768
    %9257 = vmatprep.subr.bf16.mxu0 %v8773
    %9258 = vmatpush1.bf16.msra.mxu0 %v8772
    %9259 = vmatprep.subr.bf16.mxu0 %v8777
    %9260 = vmatpush1.bf16.msra.mxu0 %v8776
    %9261 = vmatprep.subr.bf16.mxu0 %v8781
    %9262 = vmatpush1.bf16.msra.mxu0 %v8780
    %9263 = vmatprep.subr.bf16.mxu0 %v8785
    %9264 = vmatpush1.bf16.msra.mxu0 %v8784
    %9265 = vmatprep.subr.bf16.mxu0 %v8789
    %9266 = vmatpush1.bf16.msra.mxu0 %v8788
    %9267 = vmatprep.subr.bf16.mxu0 %v8793
    %9268 = vmatpush1.bf16.msra.mxu0 %v8792
    %9269 = vmatprep.mubr.bf16.mxu0 %v7901
    %9270 = vmatmul.mubr.bf16.gmra.mrb[0].mxu0 %v7900
    %v9271 = vpop.f32.mrb[0].mxu0
    %v9272 = vadd.f32 %v8145, %v9271
    %v9273 = vpop.f32.mrb[0].mxu0
    %v9274 = vadd.f32 %v8149, %v9273
    %v9275 = vpop.f32.mrb[0].mxu0
    %v9276 = vpop.f32.mrb[0].mxu0
    %9277 = vdwg.mxu0
    %9278 = vmatprep.subr.bf16.mxu0 %v8797
    %9279 = vmatpush1.bf16.msra.mxu0 %v8796
    %9280 = vmatprep.subr.bf16.mxu0 %v8801
    %9281 = vmatpush1.bf16.msra.mxu0 %v8800
    %9282 = vmatprep.subr.bf16.mxu0 %v8805
    %9283 = vmatpush1.bf16.msra.mxu0 %v8804
    %9284 = vmatprep.subr.bf16.mxu0 %v8809
    %9285 = vmatpush1.bf16.msra.mxu0 %v8808
    %9286 = vmatprep.subr.bf16.mxu0 %v8813
    %9287 = vmatpush1.bf16.msra.mxu0 %v8812
    %9288 = vmatprep.subr.bf16.mxu0 %v8817
    %9289 = vmatpush1.bf16.msra.mxu0 %v8816
    %9290 = vmatprep.subr.bf16.mxu0 %v8821
    %9291 = vmatpush1.bf16.msra.mxu0 %v8820
    %9292 = vmatprep.subr.bf16.mxu0 %v8825
    %9293 = vmatpush1.bf16.msra.mxu0 %v8824
    %9294 = vmatprep.subr.bf16.mxu0 %v8829
    %9295 = vmatpush1.bf16.msra.mxu0 %v8828
    %9296 = vmatprep.subr.bf16.mxu0 %v8833
    %9297 = vmatpush1.bf16.msra.mxu0 %v8832
    %9298 = vmatprep.subr.bf16.mxu0 %v8837
    %9299 = vmatpush1.bf16.msra.mxu0 %v8836
    %9300 = vmatprep.subr.bf16.mxu0 %v8841
    %9301 = vmatpush1.bf16.msra.mxu0 %v8840
    %9302 = vmatprep.subr.bf16.mxu0 %v8845
    %9303 = vmatpush1.bf16.msra.mxu0 %v8844
    %9304 = vmatprep.subr.bf16.mxu0 %v8849
    %9305 = vmatpush1.bf16.msra.mxu0 %v8848
    %9306 = vmatprep.subr.bf16.mxu0 %v8853
    %9307 = vmatpush1.bf16.msra.mxu0 %v8852
    %9308 = vmatprep.subr.bf16.mxu0 %v8857
    %9309 = vmatpush1.bf16.msra.mxu0 %v8856
    %9310 = vmatprep.mubr.bf16.mxu0 %v7903
    %9311 = vmatmul.mubr.bf16.gmra.mrb[0].mxu0 %v7902
    %v9312 = vpop.f32.mrb[0].mxu0
    %v9313 = vadd.f32 %v9272, %v9312
    %v9314 = vpop.f32.mrb[0].mxu0
    %v9315 = vadd.f32 %v9274, %v9314
    %v9316 = vpop.f32.mrb[0].mxu0
    %v9317 = vpop.f32.mrb[0].mxu0
    %9318 = vdwg.mxu0
    %9319 = vmatprep.subr.bf16.mxu0 %v8861
    %9320 = vmatpush1.bf16.msra.mxu0 %v8860
    %9321 = vmatprep.subr.bf16.mxu0 %v8865
    %9322 = vmatpush1.bf16.msra.mxu0 %v8864
    %9323 = vmatprep.subr.bf16.mxu0 %v8869
    %9324 = vmatpush1.bf16.msra.mxu0 %v8868
    %9325 = vmatprep.subr.bf16.mxu0 %v8873
    %9326 = vmatpush1.bf16.msra.mxu0 %v8872
    %9327 = vmatprep.subr.bf16.mxu0 %v8877
    %9328 = vmatpush1.bf16.msra.mxu0 %v8876
    %9329 = vmatprep.subr.bf16.mxu0 %v8881
    %9330 = vmatpush1.bf16.msra.mxu0 %v8880
    %9331 = vmatprep.subr.bf16.mxu0 %v8885
    %9332 = vmatpush1.bf16.msra.mxu0 %v8884
    %9333 = vmatprep.subr.bf16.mxu0 %v8889
    %9334 = vmatpush1.bf16.msra.mxu0 %v8888
    %9335 = vmatprep.subr.bf16.mxu0 %v8893
    %9336 = vmatpush1.bf16.msra.mxu0 %v8892
    %9337 = vmatprep.subr.bf16.mxu0 %v8897
    %9338 = vmatpush1.bf16.msra.mxu0 %v8896
    %9339 = vmatprep.subr.bf16.mxu0 %v8901
    %9340 = vmatpush1.bf16.msra.mxu0 %v8900
    %9341 = vmatprep.subr.bf16.mxu0 %v8905
    %9342 = vmatpush1.bf16.msra.mxu0 %v8904
    %9343 = vmatprep.subr.bf16.mxu0 %v8909
    %9344 = vmatpush1.bf16.msra.mxu0 %v8908
    %9345 = vmatprep.subr.bf16.mxu0 %v8913
    %9346 = vmatpush1.bf16.msra.mxu0 %v8912
    %9347 = vmatprep.subr.bf16.mxu0 %v8917
    %9348 = vmatpush1.bf16.msra.mxu0 %v8916
    %9349 = vmatprep.subr.bf16.mxu0 %v8921
    %9350 = vmatpush1.bf16.msra.mxu0 %v8920
    %9351 = vmatprep.mubr.bf16.mxu0 %v7905
    %9352 = vmatmul.mubr.bf16.gmra.mrb[0].mxu0 %v7904
    %v9353 = vpop.f32.mrb[0].mxu0
    %v9354 = vadd.f32 %v9313, %v9353
    %v9355 = vpop.f32.mrb[0].mxu0
    %v9356 = vadd.f32 %v9315, %v9355
    %v9357 = vpop.f32.mrb[0].mxu0
    %v9358 = vpop.f32.mrb[0].mxu0
    %9359 = vdwg.mxu0
    %v9360 = vmax.f32 %v9231, 0.0
    %v9361 = vmax.f32 %v9233, 0.0
    %v9362 = vmax.f32 %v9354, 0.0
    %v9363 = vmax.f32 %v9356, 0.0
    %v9364 = vpack.c.bf16 %v9360, %v9360
    %v9365 = vpack.c.bf16 %v9361, %v9361
    %v9366 = vpack.c.bf16 %v9362, %v9362
    %v9367 = vpack.c.bf16 %v9363, %v9363
    %v9368 = vld [vmem:[#allocation11 + $0x400] sm:$0xff]
    %v9369 = vld [vmem:[#allocation11 + $0x408] sm:$0xff]
    %v9370 = vld [vmem:[#allocation11 + $0x410] sm:$0xff]
    %v9371 = vld [vmem:[#allocation11 + $0x418] sm:$0xff]
    %v9372 = vld [vmem:[#allocation11 + $0x420] sm:$0xff]
    %v9373 = vld [vmem:[#allocation11 + $0x428] sm:$0xff]
    %v9374 = vld [vmem:[#allocation11 + $0x430] sm:$0xff]
    %v9375 = vld [vmem:[#allocation11 + $0x438] sm:$0xff]
    %v9376 = vld [vmem:[#allocation11 + $0x440] sm:$0xff]
    %v9377 = vld [vmem:[#allocation11 + $0x448] sm:$0xff]
    %v9378 = vld [vmem:[#allocation11 + $0x450] sm:$0xff]
    %v9379 = vld [vmem:[#allocation11 + $0x458] sm:$0xff]
    %v9380 = vld [vmem:[#allocation11 + $0x460] sm:$0xff]
    %v9381 = vld [vmem:[#allocation11 + $0x468] sm:$0xff]
    %v9382 = vld [vmem:[#allocation11 + $0x470] sm:$0xff]
    %v9383 = vld [vmem:[#allocation11 + $0x478] sm:$0xff]
    %v9384 = vld [vmem:[#allocation11 + $0x480] sm:$0xff]
    %v9385 = vld [vmem:[#allocation11 + $0x488] sm:$0xff]
    %v9386 = vld [vmem:[#allocation11 + $0x490] sm:$0xff]
    %v9387 = vld [vmem:[#allocation11 + $0x498] sm:$0xff]
    %v9388 = vld [vmem:[#allocation11 + $0x4a0] sm:$0xff]
    %v9389 = vld [vmem:[#allocation11 + $0x4a8] sm:$0xff]
    %v9390 = vld [vmem:[#allocation11 + $0x4b0] sm:$0xff]
    %v9391 = vld [vmem:[#allocation11 + $0x4b8] sm:$0xff]
    %v9392 = vld [vmem:[#allocation11 + $0x4c0] sm:$0xff]
    %v9393 = vld [vmem:[#allocation11 + $0x4c8] sm:$0xff]
    %v9394 = vld [vmem:[#allocation11 + $0x4d0] sm:$0xff]
    %v9395 = vld [vmem:[#allocation11 + $0x4d8] sm:$0xff]
    %v9396 = vld [vmem:[#allocation11 + $0x4e0] sm:$0xff]
    %v9397 = vld [vmem:[#allocation11 + $0x4e8] sm:$0xff]
    %v9398 = vld [vmem:[#allocation11 + $0x4f0] sm:$0xff]
    %v9399 = vld [vmem:[#allocation11 + $0x4f8] sm:$0xff]
    %v9400 = vld [vmem:[#allocation11 + $0x500] sm:$0xff]
    %v9401 = vld [vmem:[#allocation11 + $0x508] sm:$0xff]
    %v9402 = vld [vmem:[#allocation11 + $0x510] sm:$0xff]
    %v9403 = vld [vmem:[#allocation11 + $0x518] sm:$0xff]
    %v9404 = vld [vmem:[#allocation11 + $0x520] sm:$0xff]
    %v9405 = vld [vmem:[#allocation11 + $0x528] sm:$0xff]
    %v9406 = vld [vmem:[#allocation11 + $0x530] sm:$0xff]
    %v9407 = vld [vmem:[#allocation11 + $0x538] sm:$0xff]
    %v9408 = vld [vmem:[#allocation11 + $0x540] sm:$0xff]
    %v9409 = vld [vmem:[#allocation11 + $0x548] sm:$0xff]
    %v9410 = vld [vmem:[#allocation11 + $0x550] sm:$0xff]
    %v9411 = vld [vmem:[#allocation11 + $0x558] sm:$0xff]
    %v9412 = vld [vmem:[#allocation11 + $0x560] sm:$0xff]
    %v9413 = vld [vmem:[#allocation11 + $0x568] sm:$0xff]
    %v9414 = vld [vmem:[#allocation11 + $0x570] sm:$0xff]
    %v9415 = vld [vmem:[#allocation11 + $0x578] sm:$0xff]
    %v9416 = vld [vmem:[#allocation11 + $0x580] sm:$0xff]
    %v9417 = vld [vmem:[#allocation11 + $0x588] sm:$0xff]
    %v9418 = vld [vmem:[#allocation11 + $0x590] sm:$0xff]
    %v9419 = vld [vmem:[#allocation11 + $0x598] sm:$0xff]
    %v9420 = vld [vmem:[#allocation11 + $0x5a0] sm:$0xff]
    %v9421 = vld [vmem:[#allocation11 + $0x5a8] sm:$0xff]
    %v9422 = vld [vmem:[#allocation11 + $0x5b0] sm:$0xff]
    %v9423 = vld [vmem:[#allocation11 + $0x5b8] sm:$0xff]
    %v9424 = vld [vmem:[#allocation11 + $0x5c0] sm:$0xff]
    %v9425 = vld [vmem:[#allocation11 + $0x5c8] sm:$0xff]
    %v9426 = vld [vmem:[#allocation11 + $0x5d0] sm:$0xff]
    %v9427 = vld [vmem:[#allocation11 + $0x5d8] sm:$0xff]
    %v9428 = vld [vmem:[#allocation11 + $0x5e0] sm:$0xff]
    %v9429 = vld [vmem:[#allocation11 + $0x5e8] sm:$0xff]
    %v9430 = vld [vmem:[#allocation11 + $0x5f0] sm:$0xff]
    %v9431 = vld [vmem:[#allocation11 + $0x5f8] sm:$0xff]
    %v9432 = vld [vmem:[#allocation14 + $0x2b] sm:$0x3]
    %v9434 = vlaneseq
    %v9435 = vshrl.u32 %v9434, 7
    %v9436 = vsub.s32 0, %v9435
    %v9437 = vrot.slane %v9432, %v9436
    %v9438 = vlaneseq
    %v9439 = vshrl.u32 %v9438, 7
    %v9440 = vsub.s32 1, %v9439
    %v9441 = vrot.slane %v9432, %v9440
    %v9508 = vunpack.c.l.b16 %v9368
    %v9509 = vunpack.c.h.b16 %v9368
    %v9510 = vunpack.c.l.b16 %v9369
    %v9511 = vunpack.c.h.b16 %v9369
    %v9512 = vunpack.c.l.b16 %v9370
    %v9513 = vunpack.c.h.b16 %v9370
    %v9514 = vunpack.c.l.b16 %v9371
    %v9515 = vunpack.c.h.b16 %v9371
    %v9516 = vunpack.c.l.b16 %v9372
    %v9517 = vunpack.c.h.b16 %v9372
    %v9518 = vunpack.c.l.b16 %v9373
    %v9519 = vunpack.c.h.b16 %v9373
    %v9520 = vunpack.c.l.b16 %v9374
    %v9521 = vunpack.c.h.b16 %v9374
    %v9522 = vunpack.c.l.b16 %v9375
    %v9523 = vunpack.c.h.b16 %v9375
    %v9524 = vunpack.c.l.b16 %v9376
    %v9525 = vunpack.c.h.b16 %v9376
    %v9526 = vunpack.c.l.b16 %v9377
    %v9527 = vunpack.c.h.b16 %v9377
    %v9528 = vunpack.c.l.b16 %v9378
    %v9529 = vunpack.c.h.b16 %v9378
    %v9530 = vunpack.c.l.b16 %v9379
    %v9531 = vunpack.c.h.b16 %v9379
    %v9532 = vunpack.c.l.b16 %v9380
    %v9533 = vunpack.c.h.b16 %v9380
    %v9534 = vunpack.c.l.b16 %v9381
    %v9535 = vunpack.c.h.b16 %v9381
    %v9536 = vunpack.c.l.b16 %v9382
    %v9537 = vunpack.c.h.b16 %v9382
    %v9538 = vunpack.c.l.b16 %v9383
    %v9539 = vunpack.c.h.b16 %v9383
    %v9540 = vunpack.c.l.b16 %v9384
    %v9541 = vunpack.c.h.b16 %v9384
    %v9542 = vunpack.c.l.b16 %v9385
    %v9543 = vunpack.c.h.b16 %v9385
    %v9544 = vunpack.c.l.b16 %v9386
    %v9545 = vunpack.c.h.b16 %v9386
    %v9546 = vunpack.c.l.b16 %v9387
    %v9547 = vunpack.c.h.b16 %v9387
    %v9548 = vunpack.c.l.b16 %v9388
    %v9549 = vunpack.c.h.b16 %v9388
    %v9550 = vunpack.c.l.b16 %v9389
    %v9551 = vunpack.c.h.b16 %v9389
    %v9552 = vunpack.c.l.b16 %v9390
    %v9553 = vunpack.c.h.b16 %v9390
    %v9554 = vunpack.c.l.b16 %v9391
    %v9555 = vunpack.c.h.b16 %v9391
    %v9556 = vunpack.c.l.b16 %v9392
    %v9557 = vunpack.c.h.b16 %v9392
    %v9558 = vunpack.c.l.b16 %v9393
    %v9559 = vunpack.c.h.b16 %v9393
    %v9560 = vunpack.c.l.b16 %v9394
    %v9561 = vunpack.c.h.b16 %v9394
    %v9562 = vunpack.c.l.b16 %v9395
    %v9563 = vunpack.c.h.b16 %v9395
    %v9564 = vunpack.c.l.b16 %v9396
    %v9565 = vunpack.c.h.b16 %v9396
    %v9566 = vunpack.c.l.b16 %v9397
    %v9567 = vunpack.c.h.b16 %v9397
    %v9568 = vunpack.c.l.b16 %v9398
    %v9569 = vunpack.c.h.b16 %v9398
    %v9570 = vunpack.c.l.b16 %v9399
    %v9571 = vunpack.c.h.b16 %v9399
    %v9572 = vunpack.c.l.b16 %v9400
    %v9573 = vunpack.c.h.b16 %v9400
    %v9574 = vunpack.c.l.b16 %v9401
    %v9575 = vunpack.c.h.b16 %v9401
    %v9576 = vunpack.c.l.b16 %v9402
    %v9577 = vunpack.c.h.b16 %v9402
    %v9578 = vunpack.c.l.b16 %v9403
    %v9579 = vunpack.c.h.b16 %v9403
    %v9580 = vunpack.c.l.b16 %v9404
    %v9581 = vunpack.c.h.b16 %v9404
    %v9582 = vunpack.c.l.b16 %v9405
    %v9583 = vunpack.c.h.b16 %v9405
    %v9584 = vunpack.c.l.b16 %v9406
    %v9585 = vunpack.c.h.b16 %v9406
    %v9586 = vunpack.c.l.b16 %v9407
    %v9587 = vunpack.c.h.b16 %v9407
    %v9588 = vunpack.c.l.b16 %v9408
    %v9589 = vunpack.c.h.b16 %v9408
    %v9590 = vunpack.c.l.b16 %v9409
    %v9591 = vunpack.c.h.b16 %v9409
    %v9592 = vunpack.c.l.b16 %v9410
    %v9593 = vunpack.c.h.b16 %v9410
    %v9594 = vunpack.c.l.b16 %v9411
    %v9595 = vunpack.c.h.b16 %v9411
    %v9596 = vunpack.c.l.b16 %v9412
    %v9597 = vunpack.c.h.b16 %v9412
    %v9598 = vunpack.c.l.b16 %v9413
    %v9599 = vunpack.c.h.b16 %v9413
    %v9600 = vunpack.c.l.b16 %v9414
    %v9601 = vunpack.c.h.b16 %v9414
    %v9602 = vunpack.c.l.b16 %v9415
    %v9603 = vunpack.c.h.b16 %v9415
    %v9604 = vunpack.c.l.b16 %v9416
    %v9605 = vunpack.c.h.b16 %v9416
    %v9606 = vunpack.c.l.b16 %v9417
    %v9607 = vunpack.c.h.b16 %v9417
    %v9608 = vunpack.c.l.b16 %v9418
    %v9609 = vunpack.c.h.b16 %v9418
    %v9610 = vunpack.c.l.b16 %v9419
    %v9611 = vunpack.c.h.b16 %v9419
    %v9612 = vunpack.c.l.b16 %v9420
    %v9613 = vunpack.c.h.b16 %v9420
    %v9614 = vunpack.c.l.b16 %v9421
    %v9615 = vunpack.c.h.b16 %v9421
    %v9616 = vunpack.c.l.b16 %v9422
    %v9617 = vunpack.c.h.b16 %v9422
    %v9618 = vunpack.c.l.b16 %v9423
    %v9619 = vunpack.c.h.b16 %v9423
    %v9620 = vunpack.c.l.b16 %v9424
    %v9621 = vunpack.c.h.b16 %v9424
    %v9622 = vunpack.c.l.b16 %v9425
    %v9623 = vunpack.c.h.b16 %v9425
    %v9624 = vunpack.c.l.b16 %v9426
    %v9625 = vunpack.c.h.b16 %v9426
    %v9626 = vunpack.c.l.b16 %v9427
    %v9627 = vunpack.c.h.b16 %v9427
    %v9628 = vunpack.c.l.b16 %v9428
    %v9629 = vunpack.c.h.b16 %v9428
    %v9630 = vunpack.c.l.b16 %v9429
    %v9631 = vunpack.c.h.b16 %v9429
    %v9632 = vunpack.c.l.b16 %v9430
    %v9633 = vunpack.c.h.b16 %v9430
    %v9634 = vunpack.c.l.b16 %v9431
    %v9635 = vunpack.c.h.b16 %v9431
    %v9636 = vpack.c.b16 %v9510, %v9508
    %v9637 = vpack.c.b16 %v9511, %v9509
    %v9638 = vpack.c.b16 %v9514, %v9512
    %v9639 = vpack.c.b16 %v9515, %v9513
    %v9640 = vpack.c.b16 %v9518, %v9516
    %v9641 = vpack.c.b16 %v9519, %v9517
    %v9642 = vpack.c.b16 %v9522, %v9520
    %v9643 = vpack.c.b16 %v9523, %v9521
    %v9644 = vpack.c.b16 %v9526, %v9524
    %v9645 = vpack.c.b16 %v9527, %v9525
    %v9646 = vpack.c.b16 %v9530, %v9528
    %v9647 = vpack.c.b16 %v9531, %v9529
    %v9648 = vpack.c.b16 %v9534, %v9532
    %v9649 = vpack.c.b16 %v9535, %v9533
    %v9650 = vpack.c.b16 %v9538, %v9536
    %v9651 = vpack.c.b16 %v9539, %v9537
    %v9652 = vpack.c.b16 %v9542, %v9540
    %v9653 = vpack.c.b16 %v9543, %v9541
    %v9654 = vpack.c.b16 %v9546, %v9544
    %v9655 = vpack.c.b16 %v9547, %v9545
    %v9656 = vpack.c.b16 %v9550, %v9548
    %v9657 = vpack.c.b16 %v9551, %v9549
    %v9658 = vpack.c.b16 %v9554, %v9552
    %v9659 = vpack.c.b16 %v9555, %v9553
    %v9660 = vpack.c.b16 %v9558, %v9556
    %v9661 = vpack.c.b16 %v9559, %v9557
    %v9662 = vpack.c.b16 %v9562, %v9560
    %v9663 = vpack.c.b16 %v9563, %v9561
    %v9664 = vpack.c.b16 %v9566, %v9564
    %v9665 = vpack.c.b16 %v9567, %v9565
    %v9666 = vpack.c.b16 %v9570, %v9568
    %v9667 = vpack.c.b16 %v9571, %v9569
    %v9668 = vpack.c.b16 %v9574, %v9572
    %v9669 = vpack.c.b16 %v9575, %v9573
    %v9670 = vpack.c.b16 %v9578, %v9576
    %v9671 = vpack.c.b16 %v9579, %v9577
    %v9672 = vpack.c.b16 %v9582, %v9580
    %v9673 = vpack.c.b16 %v9583, %v9581
    %v9674 = vpack.c.b16 %v9586, %v9584
    %v9675 = vpack.c.b16 %v9587, %v9585
    %v9676 = vpack.c.b16 %v9590, %v9588
    %v9677 = vpack.c.b16 %v9591, %v9589
    %v9678 = vpack.c.b16 %v9594, %v9592
    %v9679 = vpack.c.b16 %v9595, %v9593
    %v9680 = vpack.c.b16 %v9598, %v9596
    %v9681 = vpack.c.b16 %v9599, %v9597
    %v9682 = vpack.c.b16 %v9602, %v9600
    %v9683 = vpack.c.b16 %v9603, %v9601
    %v9684 = vpack.c.b16 %v9606, %v9604
    %v9685 = vpack.c.b16 %v9607, %v9605
    %v9686 = vpack.c.b16 %v9610, %v9608
    %v9687 = vpack.c.b16 %v9611, %v9609
    %v9688 = vpack.c.b16 %v9614, %v9612
    %v9689 = vpack.c.b16 %v9615, %v9613
    %v9690 = vpack.c.b16 %v9618, %v9616
    %v9691 = vpack.c.b16 %v9619, %v9617
    %v9692 = vpack.c.b16 %v9622, %v9620
    %v9693 = vpack.c.b16 %v9623, %v9621
    %v9694 = vpack.c.b16 %v9626, %v9624
    %v9695 = vpack.c.b16 %v9627, %v9625
    %v9696 = vpack.c.b16 %v9630, %v9628
    %v9697 = vpack.c.b16 %v9631, %v9629
    %v9698 = vpack.c.b16 %v9634, %v9632
    %v9699 = vpack.c.b16 %v9635, %v9633
    %9764 = vmatprep.subr.bf16.mxu0 %v9637
    %9765 = vmatpush1.bf16.msra.mxu0 %v9636
    %9766 = vmatprep.subr.bf16.mxu0 %v9639
    %9767 = vmatpush1.bf16.msra.mxu0 %v9638
    %9768 = vmatprep.subr.bf16.mxu0 %v9641
    %9769 = vmatpush1.bf16.msra.mxu0 %v9640
    %9770 = vmatprep.subr.bf16.mxu0 %v9643
    %9771 = vmatpush1.bf16.msra.mxu0 %v9642
    %9772 = vmatprep.subr.bf16.mxu0 %v9645
    %9773 = vmatpush1.bf16.msra.mxu0 %v9644
    %9774 = vmatprep.subr.bf16.mxu0 %v9647
    %9775 = vmatpush1.bf16.msra.mxu0 %v9646
    %9776 = vmatprep.subr.bf16.mxu0 %v9649
    %9777 = vmatpush1.bf16.msra.mxu0 %v9648
    %9778 = vmatprep.subr.bf16.mxu0 %v9651
    %9779 = vmatpush1.bf16.msra.mxu0 %v9650
    %9780 = vmatprep.subr.bf16.mxu0 %v9653
    %9781 = vmatpush1.bf16.msra.mxu0 %v9652
    %9782 = vmatprep.subr.bf16.mxu0 %v9655
    %9783 = vmatpush1.bf16.msra.mxu0 %v9654
    %9784 = vmatprep.subr.bf16.mxu0 %v9657
    %9785 = vmatpush1.bf16.msra.mxu0 %v9656
    %9786 = vmatprep.subr.bf16.mxu0 %v9659
    %9787 = vmatpush1.bf16.msra.mxu0 %v9658
    %9788 = vmatprep.subr.bf16.mxu0 %v9661
    %9789 = vmatpush1.bf16.msra.mxu0 %v9660
    %9790 = vmatprep.subr.bf16.mxu0 %v9663
    %9791 = vmatpush1.bf16.msra.mxu0 %v9662
    %9792 = vmatprep.subr.bf16.mxu0 %v9665
    %9793 = vmatpush1.bf16.msra.mxu0 %v9664
    %9794 = vmatprep.subr.bf16.mxu0 %v9667
    %9795 = vmatpush1.bf16.msra.mxu0 %v9666
    %9796 = vmatprep.mubr.bf16.mxu0 %v9365
    %9797 = vmatmul.mubr.bf16.gmra.mrb[0].mxu0 %v9364
    %v9798 = vpop.f32.mrb[0].mxu0
    %v9799 = vadd.f32 %v9437, %v9798
    %v9800 = vpop.f32.mrb[0].mxu0
    %v9801 = vadd.f32 %v9441, %v9800
    %v9802 = vpop.f32.mrb[0].mxu0
    %v9803 = vpop.f32.mrb[0].mxu0
    %9804 = vdwg.mxu0
    %9805 = vmatprep.subr.bf16.mxu0 %v9669
    %9806 = vmatpush1.bf16.msra.mxu0 %v9668
    %9807 = vmatprep.subr.bf16.mxu0 %v9671
    %9808 = vmatpush1.bf16.msra.mxu0 %v9670
    %9809 = vmatprep.subr.bf16.mxu0 %v9673
    %9810 = vmatpush1.bf16.msra.mxu0 %v9672
    %9811 = vmatprep.subr.bf16.mxu0 %v9675
    %9812 = vmatpush1.bf16.msra.mxu0 %v9674
    %9813 = vmatprep.subr.bf16.mxu0 %v9677
    %9814 = vmatpush1.bf16.msra.mxu0 %v9676
    %9815 = vmatprep.subr.bf16.mxu0 %v9679
    %9816 = vmatpush1.bf16.msra.mxu0 %v9678
    %9817 = vmatprep.subr.bf16.mxu0 %v9681
    %9818 = vmatpush1.bf16.msra.mxu0 %v9680
    %9819 = vmatprep.subr.bf16.mxu0 %v9683
    %9820 = vmatpush1.bf16.msra.mxu0 %v9682
    %9821 = vmatprep.subr.bf16.mxu0 %v9685
    %9822 = vmatpush1.bf16.msra.mxu0 %v9684
    %9823 = vmatprep.subr.bf16.mxu0 %v9687
    %9824 = vmatpush1.bf16.msra.mxu0 %v9686
    %9825 = vmatprep.subr.bf16.mxu0 %v9689
    %9826 = vmatpush1.bf16.msra.mxu0 %v9688
    %9827 = vmatprep.subr.bf16.mxu0 %v9691
    %9828 = vmatpush1.bf16.msra.mxu0 %v9690
    %9829 = vmatprep.subr.bf16.mxu0 %v9693
    %9830 = vmatpush1.bf16.msra.mxu0 %v9692
    %9831 = vmatprep.subr.bf16.mxu0 %v9695
    %9832 = vmatpush1.bf16.msra.mxu0 %v9694
    %9833 = vmatprep.subr.bf16.mxu0 %v9697
    %9834 = vmatpush1.bf16.msra.mxu0 %v9696
    %9835 = vmatprep.subr.bf16.mxu0 %v9699
    %9836 = vmatpush1.bf16.msra.mxu0 %v9698
    %9837 = vmatprep.mubr.bf16.mxu0 %v9367
    %9838 = vmatmul.mubr.bf16.gmra.mrb[0].mxu0 %v9366
    %v9839 = vpop.f32.mrb[0].mxu0
    %v9840 = vadd.f32 %v9799, %v9839
    %v9841 = vpop.f32.mrb[0].mxu0
    %v9842 = vadd.f32 %v9801, %v9841
    %v9843 = vpop.f32.mrb[0].mxu0
    %v9844 = vpop.f32.mrb[0].mxu0
    %9845 = vdwg.mxu0
    %v9846 = vpack.c.bf16 %v9840, %v9840
    %v9847 = vpack.c.bf16 %v9842, %v9842
    %v9848 = vld [vmem:[#allocation11 + $0x600] sm:$0xff]
    %v9849 = vld [vmem:[#allocation11 + $0x608] sm:$0xff]
    %v9850 = vld [vmem:[#allocation11 + $0x610] sm:$0xff]
    %v9851 = vld [vmem:[#allocation11 + $0x618] sm:$0xff]
    %v9852 = vld [vmem:[#allocation11 + $0x620] sm:$0xff]
    %v9853 = vld [vmem:[#allocation11 + $0x628] sm:$0xff]
    %v9854 = vld [vmem:[#allocation11 + $0x630] sm:$0xff]
    %v9855 = vld [vmem:[#allocation11 + $0x638] sm:$0xff]
    %v9856 = vld [vmem:[#allocation11 + $0x640] sm:$0xff]
    %v9857 = vld [vmem:[#allocation11 + $0x648] sm:$0xff]
    %v9858 = vld [vmem:[#allocation11 + $0x650] sm:$0xff]
    %v9859 = vld [vmem:[#allocation11 + $0x658] sm:$0xff]
    %v9860 = vld [vmem:[#allocation11 + $0x660] sm:$0xff]
    %v9861 = vld [vmem:[#allocation11 + $0x668] sm:$0xff]
    %v9862 = vld [vmem:[#allocation11 + $0x670] sm:$0xff]
    %v9863 = vld [vmem:[#allocation11 + $0x678] sm:$0xff]
    %v9864 = vld [vmem:[#allocation11 + $0x680] sm:$0xff]
    %v9865 = vld [vmem:[#allocation11 + $0x688] sm:$0xff]
    %v9866 = vld [vmem:[#allocation11 + $0x690] sm:$0xff]
    %v9867 = vld [vmem:[#allocation11 + $0x698] sm:$0xff]
    %v9868 = vld [vmem:[#allocation11 + $0x6a0] sm:$0xff]
    %v9869 = vld [vmem:[#allocation11 + $0x6a8] sm:$0xff]
    %v9870 = vld [vmem:[#allocation11 + $0x6b0] sm:$0xff]
    %v9871 = vld [vmem:[#allocation11 + $0x6b8] sm:$0xff]
    %v9872 = vld [vmem:[#allocation11 + $0x6c0] sm:$0xff]
    %v9873 = vld [vmem:[#allocation11 + $0x6c8] sm:$0xff]
    %v9874 = vld [vmem:[#allocation11 + $0x6d0] sm:$0xff]
    %v9875 = vld [vmem:[#allocation11 + $0x6d8] sm:$0xff]
    %v9876 = vld [vmem:[#allocation11 + $0x6e0] sm:$0xff]
    %v9877 = vld [vmem:[#allocation11 + $0x6e8] sm:$0xff]
    %v9878 = vld [vmem:[#allocation11 + $0x6f0] sm:$0xff]
    %v9879 = vld [vmem:[#allocation11 + $0x6f8] sm:$0xff]
    %v9912 = vunpack.c.l.b16 %v9848
    %v9913 = vunpack.c.h.b16 %v9848
    %v9914 = vunpack.c.l.b16 %v9849
    %v9915 = vunpack.c.h.b16 %v9849
    %v9916 = vunpack.c.l.b16 %v9850
    %v9917 = vunpack.c.h.b16 %v9850
    %v9918 = vunpack.c.l.b16 %v9851
    %v9919 = vunpack.c.h.b16 %v9851
    %v9920 = vunpack.c.l.b16 %v9852
    %v9921 = vunpack.c.h.b16 %v9852
    %v9922 = vunpack.c.l.b16 %v9853
    %v9923 = vunpack.c.h.b16 %v9853
    %v9924 = vunpack.c.l.b16 %v9854
    %v9925 = vunpack.c.h.b16 %v9854
    %v9926 = vunpack.c.l.b16 %v9855
    %v9927 = vunpack.c.h.b16 %v9855
    %v9928 = vunpack.c.l.b16 %v9856
    %v9929 = vunpack.c.h.b16 %v9856
    %v9930 = vunpack.c.l.b16 %v9857
    %v9931 = vunpack.c.h.b16 %v9857
    %v9932 = vunpack.c.l.b16 %v9858
    %v9933 = vunpack.c.h.b16 %v9858
    %v9934 = vunpack.c.l.b16 %v9859
    %v9935 = vunpack.c.h.b16 %v9859
    %v9936 = vunpack.c.l.b16 %v9860
    %v9937 = vunpack.c.h.b16 %v9860
    %v9938 = vunpack.c.l.b16 %v9861
    %v9939 = vunpack.c.h.b16 %v9861
    %v9940 = vunpack.c.l.b16 %v9862
    %v9941 = vunpack.c.h.b16 %v9862
    %v9942 = vunpack.c.l.b16 %v9863
    %v9943 = vunpack.c.h.b16 %v9863
    %v9944 = vunpack.c.l.b16 %v9864
    %v9945 = vunpack.c.h.b16 %v9864
    %v9946 = vunpack.c.l.b16 %v9865
    %v9947 = vunpack.c.h.b16 %v9865
    %v9948 = vunpack.c.l.b16 %v9866
    %v9949 = vunpack.c.h.b16 %v9866
    %v9950 = vunpack.c.l.b16 %v9867
    %v9951 = vunpack.c.h.b16 %v9867
    %v9952 = vunpack.c.l.b16 %v9868
    %v9953 = vunpack.c.h.b16 %v9868
    %v9954 = vunpack.c.l.b16 %v9869
    %v9955 = vunpack.c.h.b16 %v9869
    %v9956 = vunpack.c.l.b16 %v9870
    %v9957 = vunpack.c.h.b16 %v9870
    %v9958 = vunpack.c.l.b16 %v9871
    %v9959 = vunpack.c.h.b16 %v9871
    %v9960 = vunpack.c.l.b16 %v9872
    %v9961 = vunpack.c.h.b16 %v9872
    %v9962 = vunpack.c.l.b16 %v9873
    %v9963 = vunpack.c.h.b16 %v9873
    %v9964 = vunpack.c.l.b16 %v9874
    %v9965 = vunpack.c.h.b16 %v9874
    %v9966 = vunpack.c.l.b16 %v9875
    %v9967 = vunpack.c.h.b16 %v9875
    %v9968 = vunpack.c.l.b16 %v9876
    %v9969 = vunpack.c.h.b16 %v9876
    %v9970 = vunpack.c.l.b16 %v9877
    %v9971 = vunpack.c.h.b16 %v9877
    %v9972 = vunpack.c.l.b16 %v9878
    %v9973 = vunpack.c.h.b16 %v9878
    %v9974 = vunpack.c.l.b16 %v9879
    %v9975 = vunpack.c.h.b16 %v9879
    %v9976 = vpack.c.b16 %v9914, %v9912
    %v9977 = vpack.c.b16 %v9915, %v9913
    %v9978 = vpack.c.b16 %v9918, %v9916
    %v9979 = vpack.c.b16 %v9919, %v9917
    %v9980 = vpack.c.b16 %v9922, %v9920
    %v9981 = vpack.c.b16 %v9923, %v9921
    %v9982 = vpack.c.b16 %v9926, %v9924
    %v9983 = vpack.c.b16 %v9927, %v9925
    %v9984 = vpack.c.b16 %v9930, %v9928
    %v9985 = vpack.c.b16 %v9931, %v9929
    %v9986 = vpack.c.b16 %v9934, %v9932
    %v9987 = vpack.c.b16 %v9935, %v9933
    %v9988 = vpack.c.b16 %v9938, %v9936
    %v9989 = vpack.c.b16 %v9939, %v9937
    %v9990 = vpack.c.b16 %v9942, %v9940
    %v9991 = vpack.c.b16 %v9943, %v9941
    %v9992 = vpack.c.b16 %v9946, %v9944
    %v9993 = vpack.c.b16 %v9947, %v9945
    %v9994 = vpack.c.b16 %v9950, %v9948
    %v9995 = vpack.c.b16 %v9951, %v9949
    %v9996 = vpack.c.b16 %v9954, %v9952
    %v9997 = vpack.c.b16 %v9955, %v9953
    %v9998 = vpack.c.b16 %v9958, %v9956
    %v9999 = vpack.c.b16 %v9959, %v9957
    %v10000 = vpack.c.b16 %v9962, %v9960
    %v10001 = vpack.c.b16 %v9963, %v9961
    %v10002 = vpack.c.b16 %v9966, %v9964
    %v10003 = vpack.c.b16 %v9967, %v9965
    %v10004 = vpack.c.b16 %v9970, %v9968
    %v10005 = vpack.c.b16 %v9971, %v9969
    %v10006 = vpack.c.b16 %v9974, %v9972
    %v10007 = vpack.c.b16 %v9975, %v9973
    %10040 = vmatprep.subr.bf16.mxu0 %v9977
    %10041 = vmatpush1.bf16.msra.mxu0 %v9976
    %10042 = vmatprep.subr.bf16.mxu0 %v9979
    %10043 = vmatpush1.bf16.msra.mxu0 %v9978
    %10044 = vmatprep.subr.bf16.mxu0 %v9981
    %10045 = vmatpush1.bf16.msra.mxu0 %v9980
    %10046 = vmatprep.subr.bf16.mxu0 %v9983
    %10047 = vmatpush1.bf16.msra.mxu0 %v9982
    %10048 = vmatprep.subr.bf16.mxu0 %v9985
    %10049 = vmatpush1.bf16.msra.mxu0 %v9984
    %10050 = vmatprep.subr.bf16.mxu0 %v9987
    %10051 = vmatpush1.bf16.msra.mxu0 %v9986
    %10052 = vmatprep.subr.bf16.mxu0 %v9989
    %10053 = vmatpush1.bf16.msra.mxu0 %v9988
    %10054 = vmatprep.subr.bf16.mxu0 %v9991
    %10055 = vmatpush1.bf16.msra.mxu0 %v9990
    %10056 = vmatprep.subr.bf16.mxu0 %v9993
    %10057 = vmatpush1.bf16.msra.mxu0 %v9992
    %10058 = vmatprep.subr.bf16.mxu0 %v9995
    %10059 = vmatpush1.bf16.msra.mxu0 %v9994
    %10060 = vmatprep.subr.bf16.mxu0 %v9997
    %10061 = vmatpush1.bf16.msra.mxu0 %v9996
    %10062 = vmatprep.subr.bf16.mxu0 %v9999
    %10063 = vmatpush1.bf16.msra.mxu0 %v9998
    %10064 = vmatprep.subr.bf16.mxu0 %v10001
    %10065 = vmatpush1.bf16.msra.mxu0 %v10000
    %10066 = vmatprep.subr.bf16.mxu0 %v10003
    %10067 = vmatpush1.bf16.msra.mxu0 %v10002
    %10068 = vmatprep.subr.bf16.mxu0 %v10005
    %10069 = vmatpush1.bf16.msra.mxu0 %v10004
    %10070 = vmatprep.subr.bf16.mxu0 %v10007
    %10071 = vmatpush1.bf16.msra.mxu0 %v10006
    %10072 = vmatprep.mubr.bf16.mxu0 %v9847
    %10073 = vmatmul.mubr.bf16.gmra.mrb[0].mxu0 %v9846
    %v10074 = vpop.f32.mrb[0].mxu0
    %v10075 = vadd.f32 0.0, %v10074
    %v10076 = vpop.f32.mrb[0].mxu0
    %v10077 = vadd.f32 0.0, %v10076
    %v10078 = vpop.f32.mrb[0].mxu0
    %v10079 = vpop.f32.mrb[0].mxu0
    %10080 = vdwg.mxu0
    %v10081 = vld [vmem:[#allocation14 + $0x2d] sm:$0x1]
    %v10083 = vlaneseq
    %v10084 = vshrl.u32 %v10083, 7
    %v10085 = vsub.s32 0, %v10084
    %v10086 = vrot.slane %v10081, %v10085
    %v10088 = vadd.f32 %v10075, %v10086
    %v10089 = vmax.f32 %v10088, 0.0
    %v10090 = vpack.c.bf16 %v10089, %v10089
    %v10091 = vld [vmem:[#allocation13 + $0x200] sm:$0xf]
    %v10092 = vld [vmem:[#allocation13 + $0x204] sm:$0xf]
    %v10093 = vld [vmem:[#allocation13 + $0x208] sm:$0xf]
    %v10094 = vld [vmem:[#allocation13 + $0x20c] sm:$0xf]
    %v10095 = vld [vmem:[#allocation13 + $0x210] sm:$0xf]
    %v10096 = vld [vmem:[#allocation13 + $0x214] sm:$0xf]
    %v10097 = vld [vmem:[#allocation13 + $0x218] sm:$0xf]
    %v10098 = vld [vmem:[#allocation13 + $0x21c] sm:$0xf]
    %v10099 = vld [vmem:[#allocation13 + $0x220] sm:$0xf]
    %v10100 = vld [vmem:[#allocation13 + $0x224] sm:$0xf]
    %v10101 = vld [vmem:[#allocation13 + $0x228] sm:$0xf]
    %v10102 = vld [vmem:[#allocation13 + $0x22c] sm:$0xf]
    %v10103 = vld [vmem:[#allocation13 + $0x230] sm:$0xf]
    %v10104 = vld [vmem:[#allocation13 + $0x234] sm:$0xf]
    %v10105 = vld [vmem:[#allocation13 + $0x238] sm:$0xf]
    %v10106 = vld [vmem:[#allocation13 + $0x23c] sm:$0xf]
    %v10107 = vld [vmem:[#allocation14 + $0x2e] sm:$0x1]
    %v10109 = vlaneseq
    %v10110 = vshrl.u32 %v10109, 7
    %v10111 = vsub.s32 0, %v10110
    %v10112 = vrot.slane %v10107, %v10111
    %v10130 = vunpack.c.l.b16 %v10091
    %v10131 = vunpack.c.l.b16 %v10092
    %v10132 = vunpack.c.l.b16 %v10093
    %v10133 = vunpack.c.l.b16 %v10094
    %v10134 = vunpack.c.l.b16 %v10095
    %v10135 = vunpack.c.l.b16 %v10096
    %v10136 = vunpack.c.l.b16 %v10097
    %v10137 = vunpack.c.l.b16 %v10098
    %v10138 = vunpack.c.l.b16 %v10099
    %v10139 = vunpack.c.l.b16 %v10100
    %v10140 = vunpack.c.l.b16 %v10101
    %v10141 = vunpack.c.l.b16 %v10102
    %v10142 = vunpack.c.l.b16 %v10103
    %v10143 = vunpack.c.l.b16 %v10104
    %v10144 = vunpack.c.l.b16 %v10105
    %v10145 = vunpack.c.l.b16 %v10106
    %v10146 = vpack.c.b16 %v10131, %v10130
    %v10147 = vpack.c.b16 %v10133, %v10132
    %v10148 = vpack.c.b16 %v10135, %v10134
    %v10149 = vpack.c.b16 %v10137, %v10136
    %v10150 = vpack.c.b16 %v10139, %v10138
    %v10151 = vpack.c.b16 %v10141, %v10140
    %v10152 = vpack.c.b16 %v10143, %v10142
    %v10153 = vpack.c.b16 %v10145, %v10144
    %10162 = vmatprep.subr.bf16.mxu0 0
    %10163 = vmatpush1.bf16.msra.mxu0 %v10146
    %10164 = vmatprep.subr.bf16.mxu0 0
    %10165 = vmatpush1.bf16.msra.mxu0 %v10147
    %10166 = vmatprep.subr.bf16.mxu0 0
    %10167 = vmatpush1.bf16.msra.mxu0 %v10148
    %10168 = vmatprep.subr.bf16.mxu0 0
    %10169 = vmatpush1.bf16.msra.mxu0 %v10149
    %10170 = vmatprep.subr.bf16.mxu0 0
    %10171 = vmatpush1.bf16.msra.mxu0 %v10150
    %10172 = vmatprep.subr.bf16.mxu0 0
    %10173 = vmatpush1.bf16.msra.mxu0 %v10151
    %10174 = vmatprep.subr.bf16.mxu0 0
    %10175 = vmatpush1.bf16.msra.mxu0 %v10152
    %10176 = vmatprep.subr.bf16.mxu0 0
    %10177 = vmatpush1.bf16.msra.mxu0 %v10153
    %10178 = vmatprep.subr.bf16.mxu0 0
    %10179 = vmatpush1.bf16.msra.mxu0 0
    %10180 = vmatprep.subr.bf16.mxu0 0
    %10181 = vmatpush1.bf16.msra.mxu0 0
    %10182 = vmatprep.subr.bf16.mxu0 0
    %10183 = vmatpush1.bf16.msra.mxu0 0
    %10184 = vmatprep.subr.bf16.mxu0 0
    %10185 = vmatpush1.bf16.msra.mxu0 0
    %10186 = vmatprep.subr.bf16.mxu0 0
    %10187 = vmatpush1.bf16.msra.mxu0 0
    %10188 = vmatprep.subr.bf16.mxu0 0
    %10189 = vmatpush1.bf16.msra.mxu0 0
    %10190 = vmatprep.subr.bf16.mxu0 0
    %10191 = vmatpush1.bf16.msra.mxu0 0
    %10192 = vmatprep.subr.bf16.mxu0 0
    %10193 = vmatpush1.bf16.msra.mxu0 0
    %10194 = vmatprep.mubr.bf16.mxu0 0
    %10195 = vmatmul.mubr.bf16.gmra.mrb[0].mxu0 %v10090
    %v10196 = vpop.f32.mrb[0].mxu0
    %v10197 = vadd.f32 %v10112, %v10196
    %v10198 = vpop.f32.mrb[0].mxu0
    %v10199 = vpop.f32.mrb[0].mxu0
    %v10200 = vpop.f32.mrb[0].mxu0
    %10201 = vdwg.mxu0
    %v10202 = vmax.f32 %v10197, 0.0
    %v10203 = vpack.c.bf16 %v10202, %v10202
    %v10204 = vld [vmem:[#allocation11 + $0x700] sm:$0xff]
    %v10205 = vld [vmem:[#allocation11 + $0x708] sm:$0xff]
    %v10206 = vld [vmem:[#allocation11 + $0x710] sm:$0xff]
    %v10207 = vld [vmem:[#allocation11 + $0x718] sm:$0xff]
    %v10208 = vld [vmem:[#allocation11 + $0x720] sm:$0xff]
    %v10209 = vld [vmem:[#allocation11 + $0x728] sm:$0xff]
    %v10210 = vld [vmem:[#allocation11 + $0x730] sm:$0xff]
    %v10211 = vld [vmem:[#allocation11 + $0x738] sm:$0xff]
    %v10212 = vld [vmem:[#allocation11 + $0x740] sm:$0xff]
    %v10213 = vld [vmem:[#allocation11 + $0x748] sm:$0xff]
    %v10214 = vld [vmem:[#allocation11 + $0x750] sm:$0xff]
    %v10215 = vld [vmem:[#allocation11 + $0x758] sm:$0xff]
    %v10216 = vld [vmem:[#allocation11 + $0x760] sm:$0xff]
    %v10217 = vld [vmem:[#allocation11 + $0x768] sm:$0xff]
    %v10218 = vld [vmem:[#allocation11 + $0x770] sm:$0xff]
    %v10219 = vld [vmem:[#allocation11 + $0x778] sm:$0xff]
    %v10220 = vld [vmem:[#allocation11 + $0x780] sm:$0xff]
    %v10221 = vld [vmem:[#allocation11 + $0x788] sm:$0xff]
    %v10222 = vld [vmem:[#allocation11 + $0x790] sm:$0xff]
    %v10223 = vld [vmem:[#allocation11 + $0x798] sm:$0xff]
    %v10224 = vld [vmem:[#allocation11 + $0x7a0] sm:$0xff]
    %v10225 = vld [vmem:[#allocation11 + $0x7a8] sm:$0xff]
    %v10226 = vld [vmem:[#allocation11 + $0x7b0] sm:$0xff]
    %v10227 = vld [vmem:[#allocation11 + $0x7b8] sm:$0xff]
    %v10228 = vld [vmem:[#allocation11 + $0x7c0] sm:$0xff]
    %v10229 = vld [vmem:[#allocation11 + $0x7c8] sm:$0xff]
    %v10230 = vld [vmem:[#allocation11 + $0x7d0] sm:$0xff]
    %v10231 = vld [vmem:[#allocation11 + $0x7d8] sm:$0xff]
    %v10232 = vld [vmem:[#allocation11 + $0x7e0] sm:$0xff]
    %v10233 = vld [vmem:[#allocation11 + $0x7e8] sm:$0xff]
    %v10234 = vld [vmem:[#allocation11 + $0x7f0] sm:$0xff]
    %v10235 = vld [vmem:[#allocation11 + $0x7f8] sm:$0xff]
    %v10236 = vld [vmem:[#allocation11 + $0x800] sm:$0xff]
    %v10237 = vld [vmem:[#allocation11 + $0x808] sm:$0xff]
    %v10238 = vld [vmem:[#allocation11 + $0x810] sm:$0xff]
    %v10239 = vld [vmem:[#allocation11 + $0x818] sm:$0xff]
    %v10240 = vld [vmem:[#allocation11 + $0x820] sm:$0xff]
    %v10241 = vld [vmem:[#allocation11 + $0x828] sm:$0xff]
    %v10242 = vld [vmem:[#allocation11 + $0x830] sm:$0xff]
    %v10243 = vld [vmem:[#allocation11 + $0x838] sm:$0xff]
    %v10244 = vld [vmem:[#allocation11 + $0x840] sm:$0xff]
    %v10245 = vld [vmem:[#allocation11 + $0x848] sm:$0xff]
    %v10246 = vld [vmem:[#allocation11 + $0x850] sm:$0xff]
    %v10247 = vld [vmem:[#allocation11 + $0x858] sm:$0xff]
    %v10248 = vld [vmem:[#allocation11 + $0x860] sm:$0xff]
    %v10249 = vld [vmem:[#allocation11 + $0x868] sm:$0xff]
    %v10250 = vld [vmem:[#allocation11 + $0x870] sm:$0xff]
    %v10251 = vld [vmem:[#allocation11 + $0x878] sm:$0xff]
    %v10252 = vld [vmem:[#allocation11 + $0x880] sm:$0xff]
    %v10253 = vld [vmem:[#allocation11 + $0x888] sm:$0xff]
    %v10254 = vld [vmem:[#allocation11 + $0x890] sm:$0xff]
    %v10255 = vld [vmem:[#allocation11 + $0x898] sm:$0xff]
    %v10256 = vld [vmem:[#allocation11 + $0x8a0] sm:$0xff]
    %v10257 = vld [vmem:[#allocation11 + $0x8a8] sm:$0xff]
    %v10258 = vld [vmem:[#allocation11 + $0x8b0] sm:$0xff]
    %v10259 = vld [vmem:[#allocation11 + $0x8b8] sm:$0xff]
    %v10260 = vld [vmem:[#allocation11 + $0x8c0] sm:$0xff]
    %v10261 = vld [vmem:[#allocation11 + $0x8c8] sm:$0xff]
    %v10262 = vld [vmem:[#allocation11 + $0x8d0] sm:$0xff]
    %v10263 = vld [vmem:[#allocation11 + $0x8d8] sm:$0xff]
    %v10264 = vld [vmem:[#allocation11 + $0x8e0] sm:$0xff]
    %v10265 = vld [vmem:[#allocation11 + $0x8e8] sm:$0xff]
    %v10266 = vld [vmem:[#allocation11 + $0x8f0] sm:$0xff]
    %v10267 = vld [vmem:[#allocation11 + $0x8f8] sm:$0xff]
    %v10268 = vld [vmem:[#allocation14 + $0x2f] sm:$0x3]
    %v10270 = vlaneseq
    %v10271 = vshrl.u32 %v10270, 7
    %v10272 = vsub.s32 0, %v10271
    %v10273 = vrot.slane %v10268, %v10272
    %v10274 = vlaneseq
    %v10275 = vshrl.u32 %v10274, 7
    %v10276 = vsub.s32 1, %v10275
    %v10277 = vrot.slane %v10268, %v10276
    %v10344 = vunpack.c.l.b16 %v10204
    %v10345 = vunpack.c.h.b16 %v10204
    %v10346 = vunpack.c.l.b16 %v10205
    %v10347 = vunpack.c.h.b16 %v10205
    %v10348 = vunpack.c.l.b16 %v10206
    %v10349 = vunpack.c.h.b16 %v10206
    %v10350 = vunpack.c.l.b16 %v10207
    %v10351 = vunpack.c.h.b16 %v10207
    %v10352 = vunpack.c.l.b16 %v10208
    %v10353 = vunpack.c.h.b16 %v10208
    %v10354 = vunpack.c.l.b16 %v10209
    %v10355 = vunpack.c.h.b16 %v10209
    %v10356 = vunpack.c.l.b16 %v10210
    %v10357 = vunpack.c.h.b16 %v10210
    %v10358 = vunpack.c.l.b16 %v10211
    %v10359 = vunpack.c.h.b16 %v10211
    %v10360 = vunpack.c.l.b16 %v10212
    %v10361 = vunpack.c.h.b16 %v10212
    %v10362 = vunpack.c.l.b16 %v10213
    %v10363 = vunpack.c.h.b16 %v10213
    %v10364 = vunpack.c.l.b16 %v10214
    %v10365 = vunpack.c.h.b16 %v10214
    %v10366 = vunpack.c.l.b16 %v10215
    %v10367 = vunpack.c.h.b16 %v10215
    %v10368 = vunpack.c.l.b16 %v10216
    %v10369 = vunpack.c.h.b16 %v10216
    %v10370 = vunpack.c.l.b16 %v10217
    %v10371 = vunpack.c.h.b16 %v10217
    %v10372 = vunpack.c.l.b16 %v10218
    %v10373 = vunpack.c.h.b16 %v10218
    %v10374 = vunpack.c.l.b16 %v10219
    %v10375 = vunpack.c.h.b16 %v10219
    %v10376 = vunpack.c.l.b16 %v10220
    %v10377 = vunpack.c.h.b16 %v10220
    %v10378 = vunpack.c.l.b16 %v10221
    %v10379 = vunpack.c.h.b16 %v10221
    %v10380 = vunpack.c.l.b16 %v10222
    %v10381 = vunpack.c.h.b16 %v10222
    %v10382 = vunpack.c.l.b16 %v10223
    %v10383 = vunpack.c.h.b16 %v10223
    %v10384 = vunpack.c.l.b16 %v10224
    %v10385 = vunpack.c.h.b16 %v10224
    %v10386 = vunpack.c.l.b16 %v10225
    %v10387 = vunpack.c.h.b16 %v10225
    %v10388 = vunpack.c.l.b16 %v10226
    %v10389 = vunpack.c.h.b16 %v10226
    %v10390 = vunpack.c.l.b16 %v10227
    %v10391 = vunpack.c.h.b16 %v10227
    %v10392 = vunpack.c.l.b16 %v10228
    %v10393 = vunpack.c.h.b16 %v10228
    %v10394 = vunpack.c.l.b16 %v10229
    %v10395 = vunpack.c.h.b16 %v10229
    %v10396 = vunpack.c.l.b16 %v10230
    %v10397 = vunpack.c.h.b16 %v10230
    %v10398 = vunpack.c.l.b16 %v10231
    %v10399 = vunpack.c.h.b16 %v10231
    %v10400 = vunpack.c.l.b16 %v10232
    %v10401 = vunpack.c.h.b16 %v10232
    %v10402 = vunpack.c.l.b16 %v10233
    %v10403 = vunpack.c.h.b16 %v10233
    %v10404 = vunpack.c.l.b16 %v10234
    %v10405 = vunpack.c.h.b16 %v10234
    %v10406 = vunpack.c.l.b16 %v10235
    %v10407 = vunpack.c.h.b16 %v10235
    %v10408 = vunpack.c.l.b16 %v10236
    %v10409 = vunpack.c.h.b16 %v10236
    %v10410 = vunpack.c.l.b16 %v10237
    %v10411 = vunpack.c.h.b16 %v10237
    %v10412 = vunpack.c.l.b16 %v10238
    %v10413 = vunpack.c.h.b16 %v10238
    %v10414 = vunpack.c.l.b16 %v10239
    %v10415 = vunpack.c.h.b16 %v10239
    %v10416 = vunpack.c.l.b16 %v10240
    %v10417 = vunpack.c.h.b16 %v10240
    %v10418 = vunpack.c.l.b16 %v10241
    %v10419 = vunpack.c.h.b16 %v10241
    %v10420 = vunpack.c.l.b16 %v10242
    %v10421 = vunpack.c.h.b16 %v10242
    %v10422 = vunpack.c.l.b16 %v10243
    %v10423 = vunpack.c.h.b16 %v10243
    %v10424 = vunpack.c.l.b16 %v10244
    %v10425 = vunpack.c.h.b16 %v10244
    %v10426 = vunpack.c.l.b16 %v10245
    %v10427 = vunpack.c.h.b16 %v10245
    %v10428 = vunpack.c.l.b16 %v10246
    %v10429 = vunpack.c.h.b16 %v10246
    %v10430 = vunpack.c.l.b16 %v10247
    %v10431 = vunpack.c.h.b16 %v10247
    %v10432 = vunpack.c.l.b16 %v10248
    %v10433 = vunpack.c.h.b16 %v10248
    %v10434 = vunpack.c.l.b16 %v10249
    %v10435 = vunpack.c.h.b16 %v10249
    %v10436 = vunpack.c.l.b16 %v10250
    %v10437 = vunpack.c.h.b16 %v10250
    %v10438 = vunpack.c.l.b16 %v10251
    %v10439 = vunpack.c.h.b16 %v10251
    %v10440 = vunpack.c.l.b16 %v10252
    %v10441 = vunpack.c.h.b16 %v10252
    %v10442 = vunpack.c.l.b16 %v10253
    %v10443 = vunpack.c.h.b16 %v10253
    %v10444 = vunpack.c.l.b16 %v10254
    %v10445 = vunpack.c.h.b16 %v10254
    %v10446 = vunpack.c.l.b16 %v10255
    %v10447 = vunpack.c.h.b16 %v10255
    %v10448 = vunpack.c.l.b16 %v10256
    %v10449 = vunpack.c.h.b16 %v10256
    %v10450 = vunpack.c.l.b16 %v10257
    %v10451 = vunpack.c.h.b16 %v10257
    %v10452 = vunpack.c.l.b16 %v10258
    %v10453 = vunpack.c.h.b16 %v10258
    %v10454 = vunpack.c.l.b16 %v10259
    %v10455 = vunpack.c.h.b16 %v10259
    %v10456 = vunpack.c.l.b16 %v10260
    %v10457 = vunpack.c.h.b16 %v10260
    %v10458 = vunpack.c.l.b16 %v10261
    %v10459 = vunpack.c.h.b16 %v10261
    %v10460 = vunpack.c.l.b16 %v10262
    %v10461 = vunpack.c.h.b16 %v10262
    %v10462 = vunpack.c.l.b16 %v10263
    %v10463 = vunpack.c.h.b16 %v10263
    %v10464 = vunpack.c.l.b16 %v10264
    %v10465 = vunpack.c.h.b16 %v10264
    %v10466 = vunpack.c.l.b16 %v10265
    %v10467 = vunpack.c.h.b16 %v10265
    %v10468 = vunpack.c.l.b16 %v10266
    %v10469 = vunpack.c.h.b16 %v10266
    %v10470 = vunpack.c.l.b16 %v10267
    %v10471 = vunpack.c.h.b16 %v10267
    %v10472 = vpack.c.b16 %v10346, %v10344
    %v10473 = vpack.c.b16 %v10347, %v10345
    %v10474 = vpack.c.b16 %v10350, %v10348
    %v10475 = vpack.c.b16 %v10351, %v10349
    %v10476 = vpack.c.b16 %v10354, %v10352
    %v10477 = vpack.c.b16 %v10355, %v10353
    %v10478 = vpack.c.b16 %v10358, %v10356
    %v10479 = vpack.c.b16 %v10359, %v10357
    %v10480 = vpack.c.b16 %v10362, %v10360
    %v10481 = vpack.c.b16 %v10363, %v10361
    %v10482 = vpack.c.b16 %v10366, %v10364
    %v10483 = vpack.c.b16 %v10367, %v10365
    %v10484 = vpack.c.b16 %v10370, %v10368
    %v10485 = vpack.c.b16 %v10371, %v10369
    %v10486 = vpack.c.b16 %v10374, %v10372
    %v10487 = vpack.c.b16 %v10375, %v10373
    %v10488 = vpack.c.b16 %v10378, %v10376
    %v10489 = vpack.c.b16 %v10379, %v10377
    %v10490 = vpack.c.b16 %v10382, %v10380
    %v10491 = vpack.c.b16 %v10383, %v10381
    %v10492 = vpack.c.b16 %v10386, %v10384
    %v10493 = vpack.c.b16 %v10387, %v10385
    %v10494 = vpack.c.b16 %v10390, %v10388
    %v10495 = vpack.c.b16 %v10391, %v10389
    %v10496 = vpack.c.b16 %v10394, %v10392
    %v10497 = vpack.c.b16 %v10395, %v10393
    %v10498 = vpack.c.b16 %v10398, %v10396
    %v10499 = vpack.c.b16 %v10399, %v10397
    %v10500 = vpack.c.b16 %v10402, %v10400
    %v10501 = vpack.c.b16 %v10403, %v10401
    %v10502 = vpack.c.b16 %v10406, %v10404
    %v10503 = vpack.c.b16 %v10407, %v10405
    %v10504 = vpack.c.b16 %v10410, %v10408
    %v10505 = vpack.c.b16 %v10411, %v10409
    %v10506 = vpack.c.b16 %v10414, %v10412
    %v10507 = vpack.c.b16 %v10415, %v10413
    %v10508 = vpack.c.b16 %v10418, %v10416
    %v10509 = vpack.c.b16 %v10419, %v10417
    %v10510 = vpack.c.b16 %v10422, %v10420
    %v10511 = vpack.c.b16 %v10423, %v10421
    %v10512 = vpack.c.b16 %v10426, %v10424
    %v10513 = vpack.c.b16 %v10427, %v10425
    %v10514 = vpack.c.b16 %v10430, %v10428
    %v10515 = vpack.c.b16 %v10431, %v10429
    %v10516 = vpack.c.b16 %v10434, %v10432
    %v10517 = vpack.c.b16 %v10435, %v10433
    %v10518 = vpack.c.b16 %v10438, %v10436
    %v10519 = vpack.c.b16 %v10439, %v10437
    %v10520 = vpack.c.b16 %v10442, %v10440
    %v10521 = vpack.c.b16 %v10443, %v10441
    %v10522 = vpack.c.b16 %v10446, %v10444
    %v10523 = vpack.c.b16 %v10447, %v10445
    %v10524 = vpack.c.b16 %v10450, %v10448
    %v10525 = vpack.c.b16 %v10451, %v10449
    %v10526 = vpack.c.b16 %v10454, %v10452
    %v10527 = vpack.c.b16 %v10455, %v10453
    %v10528 = vpack.c.b16 %v10458, %v10456
    %v10529 = vpack.c.b16 %v10459, %v10457
    %v10530 = vpack.c.b16 %v10462, %v10460
    %v10531 = vpack.c.b16 %v10463, %v10461
    %v10532 = vpack.c.b16 %v10466, %v10464
    %v10533 = vpack.c.b16 %v10467, %v10465
    %v10534 = vpack.c.b16 %v10470, %v10468
    %v10535 = vpack.c.b16 %v10471, %v10469
    %10600 = vmatprep.subr.bf16.mxu0 %v10473
    %10601 = vmatpush1.bf16.msra.mxu0 %v10472
    %10602 = vmatprep.subr.bf16.mxu0 %v10475
    %10603 = vmatpush1.bf16.msra.mxu0 %v10474
    %10604 = vmatprep.subr.bf16.mxu0 %v10477
    %10605 = vmatpush1.bf16.msra.mxu0 %v10476
    %10606 = vmatprep.subr.bf16.mxu0 %v10479
    %10607 = vmatpush1.bf16.msra.mxu0 %v10478
    %10608 = vmatprep.subr.bf16.mxu0 %v10481
    %10609 = vmatpush1.bf16.msra.mxu0 %v10480
    %10610 = vmatprep.subr.bf16.mxu0 %v10483
    %10611 = vmatpush1.bf16.msra.mxu0 %v10482
    %10612 = vmatprep.subr.bf16.mxu0 %v10485
    %10613 = vmatpush1.bf16.msra.mxu0 %v10484
    %10614 = vmatprep.subr.bf16.mxu0 %v10487
    %10615 = vmatpush1.bf16.msra.mxu0 %v10486
    %10616 = vmatprep.subr.bf16.mxu0 %v10489
    %10617 = vmatpush1.bf16.msra.mxu0 %v10488
    %10618 = vmatprep.subr.bf16.mxu0 %v10491
    %10619 = vmatpush1.bf16.msra.mxu0 %v10490
    %10620 = vmatprep.subr.bf16.mxu0 %v10493
    %10621 = vmatpush1.bf16.msra.mxu0 %v10492
    %10622 = vmatprep.subr.bf16.mxu0 %v10495
    %10623 = vmatpush1.bf16.msra.mxu0 %v10494
    %10624 = vmatprep.subr.bf16.mxu0 %v10497
    %10625 = vmatpush1.bf16.msra.mxu0 %v10496
    %10626 = vmatprep.subr.bf16.mxu0 %v10499
    %10627 = vmatpush1.bf16.msra.mxu0 %v10498
    %10628 = vmatprep.subr.bf16.mxu0 %v10501
    %10629 = vmatpush1.bf16.msra.mxu0 %v10500
    %10630 = vmatprep.subr.bf16.mxu0 %v10503
    %10631 = vmatpush1.bf16.msra.mxu0 %v10502
    %10632 = vmatprep.mubr.bf16.mxu0 %v7937
    %10633 = vmatmul.mubr.bf16.gmra.mrb[0].mxu0 %v7936
    %v10634 = vpop.f32.mrb[0].mxu0
    %v10635 = vadd.f32 %v10273, %v10634
    %v10636 = vpop.f32.mrb[0].mxu0
    %v10637 = vadd.f32 %v10277, %v10636
    %v10638 = vpop.f32.mrb[0].mxu0
    %v10639 = vpop.f32.mrb[0].mxu0
    %10640 = vdwg.mxu0
    %10641 = vmatprep.subr.bf16.mxu0 %v10505
    %10642 = vmatpush1.bf16.msra.mxu0 %v10504
    %10643 = vmatprep.subr.bf16.mxu0 %v10507
    %10644 = vmatpush1.bf16.msra.mxu0 %v10506
    %10645 = vmatprep.subr.bf16.mxu0 %v10509
    %10646 = vmatpush1.bf16.msra.mxu0 %v10508
    %10647 = vmatprep.subr.bf16.mxu0 %v10511
    %10648 = vmatpush1.bf16.msra.mxu0 %v10510
    %10649 = vmatprep.subr.bf16.mxu0 %v10513
    %10650 = vmatpush1.bf16.msra.mxu0 %v10512
    %10651 = vmatprep.subr.bf16.mxu0 %v10515
    %10652 = vmatpush1.bf16.msra.mxu0 %v10514
    %10653 = vmatprep.subr.bf16.mxu0 %v10517
    %10654 = vmatpush1.bf16.msra.mxu0 %v10516
    %10655 = vmatprep.subr.bf16.mxu0 %v10519
    %10656 = vmatpush1.bf16.msra.mxu0 %v10518
    %10657 = vmatprep.subr.bf16.mxu0 %v10521
    %10658 = vmatpush1.bf16.msra.mxu0 %v10520
    %10659 = vmatprep.subr.bf16.mxu0 %v10523
    %10660 = vmatpush1.bf16.msra.mxu0 %v10522
    %10661 = vmatprep.subr.bf16.mxu0 %v10525
    %10662 = vmatpush1.bf16.msra.mxu0 %v10524
    %10663 = vmatprep.subr.bf16.mxu0 %v10527
    %10664 = vmatpush1.bf16.msra.mxu0 %v10526
    %10665 = vmatprep.subr.bf16.mxu0 %v10529
    %10666 = vmatpush1.bf16.msra.mxu0 %v10528
    %10667 = vmatprep.subr.bf16.mxu0 %v10531
    %10668 = vmatpush1.bf16.msra.mxu0 %v10530
    %10669 = vmatprep.subr.bf16.mxu0 %v10533
    %10670 = vmatpush1.bf16.msra.mxu0 %v10532
    %10671 = vmatprep.subr.bf16.mxu0 %v10535
    %10672 = vmatpush1.bf16.msra.mxu0 %v10534
    %10673 = vmatprep.mubr.bf16.mxu0 %v7939
    %10674 = vmatmul.mubr.bf16.gmra.mrb[0].mxu0 %v7938
    %v10675 = vpop.f32.mrb[0].mxu0
    %v10676 = vadd.f32 %v10635, %v10675
    %v10677 = vpop.f32.mrb[0].mxu0
    %v10678 = vadd.f32 %v10637, %v10677
    %v10679 = vpop.f32.mrb[0].mxu0
    %v10680 = vpop.f32.mrb[0].mxu0
    %10681 = vdwg.mxu0
    %v10682 = vmax.f32 %v10676, 0.0
    %v10683 = vmax.f32 %v10678, 0.0
    %v10684 = vpack.c.bf16 %v10682, %v10682
    %v10685 = vpack.c.bf16 %v10683, %v10683
    %v10686 = vld [vmem:[#allocation13 + $0x240] sm:$0xf]
    %v10687 = vld [vmem:[#allocation13 + $0x244] sm:$0xf]
    %v10688 = vld [vmem:[#allocation13 + $0x248] sm:$0xf]
    %v10689 = vld [vmem:[#allocation13 + $0x24c] sm:$0xf]
    %v10690 = vld [vmem:[#allocation13 + $0x250] sm:$0xf]
    %v10691 = vld [vmem:[#allocation13 + $0x254] sm:$0xf]
    %v10692 = vld [vmem:[#allocation13 + $0x258] sm:$0xf]
    %v10693 = vld [vmem:[#allocation13 + $0x25c] sm:$0xf]
    %v10694 = vld [vmem:[#allocation13 + $0x260] sm:$0xf]
    %v10695 = vld [vmem:[#allocation13 + $0x264] sm:$0xf]
    %v10696 = vld [vmem:[#allocation13 + $0x268] sm:$0xf]
    %v10697 = vld [vmem:[#allocation13 + $0x26c] sm:$0xf]
    %v10698 = vld [vmem:[#allocation13 + $0x270] sm:$0xf]
    %v10699 = vld [vmem:[#allocation13 + $0x274] sm:$0xf]
    %v10700 = vld [vmem:[#allocation13 + $0x278] sm:$0xf]
    %v10701 = vld [vmem:[#allocation13 + $0x27c] sm:$0xf]
    %v10702 = vld [vmem:[#allocation13 + $0x280] sm:$0xf]
    %v10703 = vld [vmem:[#allocation13 + $0x284] sm:$0xf]
    %v10704 = vld [vmem:[#allocation13 + $0x288] sm:$0xf]
    %v10705 = vld [vmem:[#allocation13 + $0x28c] sm:$0xf]
    %v10706 = vld [vmem:[#allocation13 + $0x290] sm:$0xf]
    %v10707 = vld [vmem:[#allocation13 + $0x294] sm:$0xf]
    %v10708 = vld [vmem:[#allocation13 + $0x298] sm:$0xf]
    %v10709 = vld [vmem:[#allocation13 + $0x29c] sm:$0xf]
    %v10710 = vld [vmem:[#allocation13 + $0x2a0] sm:$0xf]
    %v10711 = vld [vmem:[#allocation13 + $0x2a4] sm:$0xf]
    %v10712 = vld [vmem:[#allocation13 + $0x2a8] sm:$0xf]
    %v10713 = vld [vmem:[#allocation13 + $0x2ac] sm:$0xf]
    %v10714 = vld [vmem:[#allocation13 + $0x2b0] sm:$0xf]
    %v10715 = vld [vmem:[#allocation13 + $0x2b4] sm:$0xf]
    %v10716 = vld [vmem:[#allocation13 + $0x2b8] sm:$0xf]
    %v10717 = vld [vmem:[#allocation13 + $0x2bc] sm:$0xf]
    %v10718 = vld [vmem:[#allocation14 + $0x31] sm:$0x1]
    %v10720 = vlaneseq
    %v10721 = vshrl.u32 %v10720, 7
    %v10722 = vsub.s32 0, %v10721
    %v10723 = vrot.slane %v10718, %v10722
    %v10757 = vunpack.c.l.b16 %v10686
    %v10758 = vunpack.c.l.b16 %v10687
    %v10759 = vunpack.c.l.b16 %v10688
    %v10760 = vunpack.c.l.b16 %v10689
    %v10761 = vunpack.c.l.b16 %v10690
    %v10762 = vunpack.c.l.b16 %v10691
    %v10763 = vunpack.c.l.b16 %v10692
    %v10764 = vunpack.c.l.b16 %v10693
    %v10765 = vunpack.c.l.b16 %v10694
    %v10766 = vunpack.c.l.b16 %v10695
    %v10767 = vunpack.c.l.b16 %v10696
    %v10768 = vunpack.c.l.b16 %v10697
    %v10769 = vunpack.c.l.b16 %v10698
    %v10770 = vunpack.c.l.b16 %v10699
    %v10771 = vunpack.c.l.b16 %v10700
    %v10772 = vunpack.c.l.b16 %v10701
    %v10773 = vunpack.c.l.b16 %v10702
    %v10774 = vunpack.c.l.b16 %v10703
    %v10775 = vunpack.c.l.b16 %v10704
    %v10776 = vunpack.c.l.b16 %v10705
    %v10777 = vunpack.c.l.b16 %v10706
    %v10778 = vunpack.c.l.b16 %v10707
    %v10779 = vunpack.c.l.b16 %v10708
    %v10780 = vunpack.c.l.b16 %v10709
    %v10781 = vunpack.c.l.b16 %v10710
    %v10782 = vunpack.c.l.b16 %v10711
    %v10783 = vunpack.c.l.b16 %v10712
    %v10784 = vunpack.c.l.b16 %v10713
    %v10785 = vunpack.c.l.b16 %v10714
    %v10786 = vunpack.c.l.b16 %v10715
    %v10787 = vunpack.c.l.b16 %v10716
    %v10788 = vunpack.c.l.b16 %v10717
    %v10789 = vpack.c.b16 %v10758, %v10757
    %v10790 = vpack.c.b16 %v10760, %v10759
    %v10791 = vpack.c.b16 %v10762, %v10761
    %v10792 = vpack.c.b16 %v10764, %v10763
    %v10793 = vpack.c.b16 %v10766, %v10765
    %v10794 = vpack.c.b16 %v10768, %v10767
    %v10795 = vpack.c.b16 %v10770, %v10769
    %v10796 = vpack.c.b16 %v10772, %v10771
    %v10797 = vpack.c.b16 %v10774, %v10773
    %v10798 = vpack.c.b16 %v10776, %v10775
    %v10799 = vpack.c.b16 %v10778, %v10777
    %v10800 = vpack.c.b16 %v10780, %v10779
    %v10801 = vpack.c.b16 %v10782, %v10781
    %v10802 = vpack.c.b16 %v10784, %v10783
    %v10803 = vpack.c.b16 %v10786, %v10785
    %v10804 = vpack.c.b16 %v10788, %v10787
    %10821 = vmatprep.subr.bf16.mxu0 0
    %10822 = vmatpush1.bf16.msra.mxu0 %v10789
    %10823 = vmatprep.subr.bf16.mxu0 0
    %10824 = vmatpush1.bf16.msra.mxu0 %v10790
    %10825 = vmatprep.subr.bf16.mxu0 0
    %10826 = vmatpush1.bf16.msra.mxu0 %v10791
    %10827 = vmatprep.subr.bf16.mxu0 0
    %10828 = vmatpush1.bf16.msra.mxu0 %v10792
    %10829 = vmatprep.subr.bf16.mxu0 0
    %10830 = vmatpush1.bf16.msra.mxu0 %v10793
    %10831 = vmatprep.subr.bf16.mxu0 0
    %10832 = vmatpush1.bf16.msra.mxu0 %v10794
    %10833 = vmatprep.subr.bf16.mxu0 0
    %10834 = vmatpush1.bf16.msra.mxu0 %v10795
    %10835 = vmatprep.subr.bf16.mxu0 0
    %10836 = vmatpush1.bf16.msra.mxu0 %v10796
    %10837 = vmatprep.subr.bf16.mxu0 0
    %10838 = vmatpush1.bf16.msra.mxu0 %v10797
    %10839 = vmatprep.subr.bf16.mxu0 0
    %10840 = vmatpush1.bf16.msra.mxu0 %v10798
    %10841 = vmatprep.subr.bf16.mxu0 0
    %10842 = vmatpush1.bf16.msra.mxu0 %v10799
    %10843 = vmatprep.subr.bf16.mxu0 0
    %10844 = vmatpush1.bf16.msra.mxu0 %v10800
    %10845 = vmatprep.subr.bf16.mxu0 0
    %10846 = vmatpush1.bf16.msra.mxu0 %v10801
    %10847 = vmatprep.subr.bf16.mxu0 0
    %10848 = vmatpush1.bf16.msra.mxu0 %v10802
    %10849 = vmatprep.subr.bf16.mxu0 0
    %10850 = vmatpush1.bf16.msra.mxu0 %v10803
    %10851 = vmatprep.subr.bf16.mxu0 0
    %10852 = vmatpush1.bf16.msra.mxu0 %v10804
    %10853 = vmatprep.mubr.bf16.mxu0 %v2031
    %10854 = vmatmul.mubr.bf16.gmra.mrb[0].mxu0 %v2030
    %v10855 = vpop.f32.mrb[0].mxu0
    %v10856 = vadd.f32 %v10723, %v10855
    %v10857 = vpop.f32.mrb[0].mxu0
    %v10858 = vpop.f32.mrb[0].mxu0
    %v10859 = vpop.f32.mrb[0].mxu0
    %10860 = vdwg.mxu0
    %v10861 = vmax.f32 %v10856, 0.0
    %v10862 = vpack.c.bf16 %v10861, %v10861
    %v10863 = vld [vmem:[#allocation13 + $0x2c0] sm:$0xf]
    %v10864 = vld [vmem:[#allocation13 + $0x2c4] sm:$0xf]
    %v10865 = vld [vmem:[#allocation13 + $0x2c8] sm:$0xf]
    %v10866 = vld [vmem:[#allocation13 + $0x2cc] sm:$0xf]
    %v10867 = vld [vmem:[#allocation13 + $0x2d0] sm:$0xf]
    %v10868 = vld [vmem:[#allocation13 + $0x2d4] sm:$0xf]
    %v10869 = vld [vmem:[#allocation13 + $0x2d8] sm:$0xf]
    %v10870 = vld [vmem:[#allocation13 + $0x2dc] sm:$0xf]
    %v10871 = vld [vmem:[#allocation13 + $0x2e0] sm:$0xf]
    %v10872 = vld [vmem:[#allocation13 + $0x2e4] sm:$0xf]
    %v10873 = vld [vmem:[#allocation13 + $0x2e8] sm:$0xf]
    %v10874 = vld [vmem:[#allocation13 + $0x2ec] sm:$0xf]
    %v10875 = vld [vmem:[#allocation13 + $0x2f0] sm:$0xf]
    %v10876 = vld [vmem:[#allocation13 + $0x2f4] sm:$0xf]
    %v10877 = vld [vmem:[#allocation13 + $0x2f8] sm:$0xf]
    %v10878 = vld [vmem:[#allocation13 + $0x2fc] sm:$0xf]
    %v10879 = vld [vmem:[#allocation13 + $0x300] sm:$0xf]
    %v10880 = vld [vmem:[#allocation13 + $0x304] sm:$0xf]
    %v10881 = vld [vmem:[#allocation13 + $0x308] sm:$0xf]
    %v10882 = vld [vmem:[#allocation13 + $0x30c] sm:$0xf]
    %v10883 = vld [vmem:[#allocation13 + $0x310] sm:$0xf]
    %v10884 = vld [vmem:[#allocation13 + $0x314] sm:$0xf]
    %v10885 = vld [vmem:[#allocation13 + $0x318] sm:$0xf]
    %v10886 = vld [vmem:[#allocation13 + $0x31c] sm:$0xf]
    %v10887 = vld [vmem:[#allocation13 + $0x320] sm:$0xf]
    %v10888 = vld [vmem:[#allocation13 + $0x324] sm:$0xf]
    %v10889 = vld [vmem:[#allocation13 + $0x328] sm:$0xf]
    %v10890 = vld [vmem:[#allocation13 + $0x32c] sm:$0xf]
    %v10891 = vld [vmem:[#allocation13 + $0x330] sm:$0xf]
    %v10892 = vld [vmem:[#allocation13 + $0x334] sm:$0xf]
    %v10893 = vld [vmem:[#allocation13 + $0x338] sm:$0xf]
    %v10894 = vld [vmem:[#allocation13 + $0x33c] sm:$0xf]
    %v10895 = vld [vmem:[#allocation13 + $0x340] sm:$0xf]
    %v10896 = vld [vmem:[#allocation13 + $0x344] sm:$0xf]
    %v10897 = vld [vmem:[#allocation13 + $0x348] sm:$0xf]
    %v10898 = vld [vmem:[#allocation13 + $0x34c] sm:$0xf]
    %v10899 = vld [vmem:[#allocation13 + $0x350] sm:$0xf]
    %v10900 = vld [vmem:[#allocation13 + $0x354] sm:$0xf]
    %v10901 = vld [vmem:[#allocation13 + $0x358] sm:$0xf]
    %v10902 = vld [vmem:[#allocation13 + $0x35c] sm:$0xf]
    %v10903 = vld [vmem:[#allocation13 + $0x360] sm:$0xf]
    %v10904 = vld [vmem:[#allocation13 + $0x364] sm:$0xf]
    %v10905 = vld [vmem:[#allocation13 + $0x368] sm:$0xf]
    %v10906 = vld [vmem:[#allocation13 + $0x36c] sm:$0xf]
    %v10907 = vld [vmem:[#allocation13 + $0x370] sm:$0xf]
    %v10908 = vld [vmem:[#allocation13 + $0x374] sm:$0xf]
    %v10909 = vld [vmem:[#allocation13 + $0x378] sm:$0xf]
    %v10910 = vld [vmem:[#allocation13 + $0x37c] sm:$0xf]
    %v10943 = vunpack.c.l.b16 %v10879
    %v10944 = vunpack.c.l.b16 %v10880
    %v10945 = vunpack.c.l.b16 %v10881
    %v10946 = vunpack.c.l.b16 %v10882
    %v10947 = vunpack.c.l.b16 %v10883
    %v10948 = vunpack.c.l.b16 %v10884
    %v10949 = vunpack.c.l.b16 %v10885
    %v10950 = vunpack.c.l.b16 %v10886
    %v10951 = vunpack.c.l.b16 %v10887
    %v10952 = vunpack.c.l.b16 %v10888
    %v10953 = vunpack.c.l.b16 %v10889
    %v10954 = vunpack.c.l.b16 %v10890
    %v10955 = vunpack.c.l.b16 %v10891
    %v10956 = vunpack.c.l.b16 %v10892
    %v10957 = vunpack.c.l.b16 %v10893
    %v10958 = vunpack.c.l.b16 %v10894
    %v10959 = vunpack.c.l.b16 %v10895
    %v10960 = vunpack.c.l.b16 %v10896
    %v10961 = vunpack.c.l.b16 %v10897
    %v10962 = vunpack.c.l.b16 %v10898
    %v10963 = vunpack.c.l.b16 %v10899
    %v10964 = vunpack.c.l.b16 %v10900
    %v10965 = vunpack.c.l.b16 %v10901
    %v10966 = vunpack.c.l.b16 %v10902
    %v10967 = vunpack.c.l.b16 %v10903
    %v10968 = vunpack.c.l.b16 %v10904
    %v10969 = vunpack.c.l.b16 %v10905
    %v10970 = vunpack.c.l.b16 %v10906
    %v10971 = vunpack.c.l.b16 %v10907
    %v10972 = vunpack.c.l.b16 %v10908
    %v10973 = vunpack.c.l.b16 %v10909
    %v10974 = vunpack.c.l.b16 %v10910
    %v10975 = vpack.c.b16 %v10944, %v10943
    %v10976 = vpack.c.b16 %v10946, %v10945
    %v10977 = vpack.c.b16 %v10948, %v10947
    %v10978 = vpack.c.b16 %v10950, %v10949
    %v10979 = vpack.c.b16 %v10952, %v10951
    %v10980 = vpack.c.b16 %v10954, %v10953
    %v10981 = vpack.c.b16 %v10956, %v10955
    %v10982 = vpack.c.b16 %v10958, %v10957
    %v10983 = vpack.c.b16 %v10960, %v10959
    %v10984 = vpack.c.b16 %v10962, %v10961
    %v10985 = vpack.c.b16 %v10964, %v10963
    %v10986 = vpack.c.b16 %v10966, %v10965
    %v10987 = vpack.c.b16 %v10968, %v10967
    %v10988 = vpack.c.b16 %v10970, %v10969
    %v10989 = vpack.c.b16 %v10972, %v10971
    %v10990 = vpack.c.b16 %v10974, %v10973
    %11007 = vmatprep.subr.bf16.mxu0 0
    %11008 = vmatpush1.bf16.msra.mxu0 %v10975
    %11009 = vmatprep.subr.bf16.mxu0 0
    %11010 = vmatpush1.bf16.msra.mxu0 %v10976
    %11011 = vmatprep.subr.bf16.mxu0 0
    %11012 = vmatpush1.bf16.msra.mxu0 %v10977
    %11013 = vmatprep.subr.bf16.mxu0 0
    %11014 = vmatpush1.bf16.msra.mxu0 %v10978
    %11015 = vmatprep.subr.bf16.mxu0 0
    %11016 = vmatpush1.bf16.msra.mxu0 %v10979
    %11017 = vmatprep.subr.bf16.mxu0 0
    %11018 = vmatpush1.bf16.msra.mxu0 %v10980
    %11019 = vmatprep.subr.bf16.mxu0 0
    %11020 = vmatpush1.bf16.msra.mxu0 %v10981
    %11021 = vmatprep.subr.bf16.mxu0 0
    %11022 = vmatpush1.bf16.msra.mxu0 %v10982
    %11023 = vmatprep.subr.bf16.mxu0 0
    %11024 = vmatpush1.bf16.msra.mxu0 %v10983
    %11025 = vmatprep.subr.bf16.mxu0 0
    %11026 = vmatpush1.bf16.msra.mxu0 %v10984
    %11027 = vmatprep.subr.bf16.mxu0 0
    %11028 = vmatpush1.bf16.msra.mxu0 %v10985
    %11029 = vmatprep.subr.bf16.mxu0 0
    %11030 = vmatpush1.bf16.msra.mxu0 %v10986
    %11031 = vmatprep.subr.bf16.mxu0 0
    %11032 = vmatpush1.bf16.msra.mxu0 %v10987
    %11033 = vmatprep.subr.bf16.mxu0 0
    %11034 = vmatpush1.bf16.msra.mxu0 %v10988
    %11035 = vmatprep.subr.bf16.mxu0 0
    %11036 = vmatpush1.bf16.msra.mxu0 %v10989
    %11037 = vmatprep.subr.bf16.mxu0 0
    %11038 = vmatpush1.bf16.msra.mxu0 %v10990
    %11039 = vmatprep.mubr.bf16.mxu0 %v10685
    %11040 = vmatmul.mubr.bf16.gmra.mrb[0].mxu0 %v10684
    %v11041 = vpop.f32.mrb[0].mxu0
    %v11042 = vadd.f32 0.0, %v11041
    %v11043 = vpop.f32.mrb[0].mxu0
    %v11044 = vpop.f32.mrb[0].mxu0
    %v11045 = vpop.f32.mrb[0].mxu0
    %11046 = vdwg.mxu0
    %v11063 = vunpack.c.l.b16 %v10863
    %v11064 = vunpack.c.l.b16 %v10864
    %v11065 = vunpack.c.l.b16 %v10865
    %v11066 = vunpack.c.l.b16 %v10866
    %v11067 = vunpack.c.l.b16 %v10867
    %v11068 = vunpack.c.l.b16 %v10868
    %v11069 = vunpack.c.l.b16 %v10869
    %v11070 = vunpack.c.l.b16 %v10870
    %v11071 = vunpack.c.l.b16 %v10871
    %v11072 = vunpack.c.l.b16 %v10872
    %v11073 = vunpack.c.l.b16 %v10873
    %v11074 = vunpack.c.l.b16 %v10874
    %v11075 = vunpack.c.l.b16 %v10875
    %v11076 = vunpack.c.l.b16 %v10876
    %v11077 = vunpack.c.l.b16 %v10877
    %v11078 = vunpack.c.l.b16 %v10878
    %v11079 = vpack.c.b16 %v11064, %v11063
    %v11080 = vpack.c.b16 %v11066, %v11065
    %v11081 = vpack.c.b16 %v11068, %v11067
    %v11082 = vpack.c.b16 %v11070, %v11069
    %v11083 = vpack.c.b16 %v11072, %v11071
    %v11084 = vpack.c.b16 %v11074, %v11073
    %v11085 = vpack.c.b16 %v11076, %v11075
    %v11086 = vpack.c.b16 %v11078, %v11077
    %11095 = vmatprep.subr.bf16.mxu0 0
    %11096 = vmatpush1.bf16.msra.mxu0 %v11079
    %11097 = vmatprep.subr.bf16.mxu0 0
    %11098 = vmatpush1.bf16.msra.mxu0 %v11080
    %11099 = vmatprep.subr.bf16.mxu0 0
    %11100 = vmatpush1.bf16.msra.mxu0 %v11081
    %11101 = vmatprep.subr.bf16.mxu0 0
    %11102 = vmatpush1.bf16.msra.mxu0 %v11082
    %11103 = vmatprep.subr.bf16.mxu0 0
    %11104 = vmatpush1.bf16.msra.mxu0 %v11083
    %11105 = vmatprep.subr.bf16.mxu0 0
    %11106 = vmatpush1.bf16.msra.mxu0 %v11084
    %11107 = vmatprep.subr.bf16.mxu0 0
    %11108 = vmatpush1.bf16.msra.mxu0 %v11085
    %11109 = vmatprep.subr.bf16.mxu0 0
    %11110 = vmatpush1.bf16.msra.mxu0 %v11086
    %11111 = vmatprep.subr.bf16.mxu0 0
    %11112 = vmatpush1.bf16.msra.mxu0 0
    %11113 = vmatprep.subr.bf16.mxu0 0
    %11114 = vmatpush1.bf16.msra.mxu0 0
    %11115 = vmatprep.subr.bf16.mxu0 0
    %11116 = vmatpush1.bf16.msra.mxu0 0
    %11117 = vmatprep.subr.bf16.mxu0 0
    %11118 = vmatpush1.bf16.msra.mxu0 0
    %11119 = vmatprep.subr.bf16.mxu0 0
    %11120 = vmatpush1.bf16.msra.mxu0 0
    %11121 = vmatprep.subr.bf16.mxu0 0
    %11122 = vmatpush1.bf16.msra.mxu0 0
    %11123 = vmatprep.subr.bf16.mxu0 0
    %11124 = vmatpush1.bf16.msra.mxu0 0
    %11125 = vmatprep.subr.bf16.mxu0 0
    %11126 = vmatpush1.bf16.msra.mxu0 0
    %11127 = vmatprep.mubr.bf16.mxu0 0
    %11128 = vmatmul.mubr.bf16.gmra.mrb[0].mxu0 %v10203
    %v11129 = vpop.f32.mrb[0].mxu0
    %v11130 = vadd.f32 %v11042, %v11129
    %v11131 = vpop.f32.mrb[0].mxu0
    %v11132 = vpop.f32.mrb[0].mxu0
    %v11133 = vpop.f32.mrb[0].mxu0
    %11134 = vdwg.mxu0
    %v11135 = vld [vmem:[#allocation13 + $0x380] sm:$0xf]
    %v11136 = vld [vmem:[#allocation13 + $0x384] sm:$0xf]
    %v11137 = vld [vmem:[#allocation13 + $0x388] sm:$0xf]
    %v11138 = vld [vmem:[#allocation13 + $0x38c] sm:$0xf]
    %v11139 = vld [vmem:[#allocation13 + $0x390] sm:$0xf]
    %v11140 = vld [vmem:[#allocation13 + $0x394] sm:$0xf]
    %v11141 = vld [vmem:[#allocation13 + $0x398] sm:$0xf]
    %v11142 = vld [vmem:[#allocation13 + $0x39c] sm:$0xf]
    %v11143 = vld [vmem:[#allocation13 + $0x3a0] sm:$0xf]
    %v11144 = vld [vmem:[#allocation13 + $0x3a4] sm:$0xf]
    %v11145 = vld [vmem:[#allocation13 + $0x3a8] sm:$0xf]
    %v11146 = vld [vmem:[#allocation13 + $0x3ac] sm:$0xf]
    %v11147 = vld [vmem:[#allocation13 + $0x3b0] sm:$0xf]
    %v11148 = vld [vmem:[#allocation13 + $0x3b4] sm:$0xf]
    %v11149 = vld [vmem:[#allocation13 + $0x3b8] sm:$0xf]
    %v11150 = vld [vmem:[#allocation13 + $0x3bc] sm:$0xf]
    %v11167 = vunpack.c.l.b16 %v11135
    %v11168 = vunpack.c.l.b16 %v11136
    %v11169 = vunpack.c.l.b16 %v11137
    %v11170 = vunpack.c.l.b16 %v11138
    %v11171 = vunpack.c.l.b16 %v11139
    %v11172 = vunpack.c.l.b16 %v11140
    %v11173 = vunpack.c.l.b16 %v11141
    %v11174 = vunpack.c.l.b16 %v11142
    %v11175 = vunpack.c.l.b16 %v11143
    %v11176 = vunpack.c.l.b16 %v11144
    %v11177 = vunpack.c.l.b16 %v11145
    %v11178 = vunpack.c.l.b16 %v11146
    %v11179 = vunpack.c.l.b16 %v11147
    %v11180 = vunpack.c.l.b16 %v11148
    %v11181 = vunpack.c.l.b16 %v11149
    %v11182 = vunpack.c.l.b16 %v11150
    %v11183 = vpack.c.b16 %v11168, %v11167
    %v11184 = vpack.c.b16 %v11170, %v11169
    %v11185 = vpack.c.b16 %v11172, %v11171
    %v11186 = vpack.c.b16 %v11174, %v11173
    %v11187 = vpack.c.b16 %v11176, %v11175
    %v11188 = vpack.c.b16 %v11178, %v11177
    %v11189 = vpack.c.b16 %v11180, %v11179
    %v11190 = vpack.c.b16 %v11182, %v11181
    %11199 = vmatprep.subr.bf16.mxu0 0
    %11200 = vmatpush1.bf16.msra.mxu0 %v11183
    %11201 = vmatprep.subr.bf16.mxu0 0
    %11202 = vmatpush1.bf16.msra.mxu0 %v11184
    %11203 = vmatprep.subr.bf16.mxu0 0
    %11204 = vmatpush1.bf16.msra.mxu0 %v11185
    %11205 = vmatprep.subr.bf16.mxu0 0
    %11206 = vmatpush1.bf16.msra.mxu0 %v11186
    %11207 = vmatprep.subr.bf16.mxu0 0
    %11208 = vmatpush1.bf16.msra.mxu0 %v11187
    %11209 = vmatprep.subr.bf16.mxu0 0
    %11210 = vmatpush1.bf16.msra.mxu0 %v11188
    %11211 = vmatprep.subr.bf16.mxu0 0
    %11212 = vmatpush1.bf16.msra.mxu0 %v11189
    %11213 = vmatprep.subr.bf16.mxu0 0
    %11214 = vmatpush1.bf16.msra.mxu0 %v11190
    %11215 = vmatprep.subr.bf16.mxu0 0
    %11216 = vmatpush1.bf16.msra.mxu0 0
    %11217 = vmatprep.subr.bf16.mxu0 0
    %11218 = vmatpush1.bf16.msra.mxu0 0
    %11219 = vmatprep.subr.bf16.mxu0 0
    %11220 = vmatpush1.bf16.msra.mxu0 0
    %11221 = vmatprep.subr.bf16.mxu0 0
    %11222 = vmatpush1.bf16.msra.mxu0 0
    %11223 = vmatprep.subr.bf16.mxu0 0
    %11224 = vmatpush1.bf16.msra.mxu0 0
    %11225 = vmatprep.subr.bf16.mxu0 0
    %11226 = vmatpush1.bf16.msra.mxu0 0
    %11227 = vmatprep.subr.bf16.mxu0 0
    %11228 = vmatpush1.bf16.msra.mxu0 0
    %11229 = vmatprep.subr.bf16.mxu0 0
    %11230 = vmatpush1.bf16.msra.mxu0 0
    %11231 = vmatprep.mubr.bf16.mxu0 0
    %11232 = vmatmul.mubr.bf16.gmra.mrb[0].mxu0 %v10862
    %v11233 = vpop.f32.mrb[0].mxu0
    %v11234 = vadd.f32 0.0, %v11233
    %v11235 = vpop.f32.mrb[0].mxu0
    %v11236 = vpop.f32.mrb[0].mxu0
    %v11237 = vpop.f32.mrb[0].mxu0
    %11238 = vdwg.mxu0
    %v11239 = vadd.f32 %v11130, %v11234
    %v11240 = vld [vmem:[#allocation14 + $0x32] sm:$0x1]
    %v11242 = vlaneseq
    %v11243 = vshrl.u32 %v11242, 7
    %v11244 = vsub.s32 0, %v11243
    %v11245 = vrot.slane %v11240, %v11244
    %v11247 = vadd.f32 %v11239, %v11245
    %v11248 = vlaneseq
    %v11249 = vand.u32 %v11248, 127
    %vm11250 = vcmp.ge.s32.totalorder %v11249, 5
    %vm11251 = vcmp.lt.s32.totalorder %v11249, 15
    %vm11252 = vmand %vm11250, %vm11251
    %v11253 = vsel %vm11252, %v11247, -1e+30
    %11254 = vmax.xlane.f32.xlu0 %v11253
    %v11255 = vpop.xlane.xlu0 %11254
    %v11256 = vsub.f32 %v11253, %v11255
    %v11257 = vmul.f32 %v11256, 1.442695
    %v11258 = vpow.pop %v11257
    %v11259 = vsel %vm11252, %v11258, 0.0
    %11260 = vadd.xlane.f32.xlu0 %v11259
    %v11261 = vpop.xlane.xlu0 %11260
    %v11262 = vrcp.pop %v11261
    %v11263 = vmul.f32 %v11259, %v11262
    %v11264 = vxor.u32 %v11247, 2147483648
    %v11265 = vmul.f32 %v11264, 1.442695
    %v11266 = vpow.pop %v11265
    %v11267 = vadd.f32 %v11266, 1.0
    %v11268 = vrcp.pop %v11267
    %v11269 = vmul.f32 1.0, %v11268
    %v11270 = vsel %vm11252, %v11263, %v11269
    %vm11271 = vcmp.lt.s32.totalorder %v11249, 16
    %v11272 = vsel %vm11271, %v11270, 0.0
    %v11273 = vpack.c.bf16 %v11272, %v11272
    %v11274 = vld [vmem:[#allocation13 + $0x3c0] sm:$0xf]
    %v11275 = vld [vmem:[#allocation13 + $0x3c4] sm:$0xf]
    %v11276 = vld [vmem:[#allocation13 + $0x3c8] sm:$0xf]
    %v11277 = vld [vmem:[#allocation13 + $0x3cc] sm:$0xf]
    %v11278 = vld [vmem:[#allocation13 + $0x3d0] sm:$0xf]
    %v11279 = vld [vmem:[#allocation13 + $0x3d4] sm:$0xf]
    %v11280 = vld [vmem:[#allocation13 + $0x3d8] sm:$0xf]
    %v11281 = vld [vmem:[#allocation13 + $0x3dc] sm:$0xf]
    %v11282 = vld [vmem:[#allocation13 + $0x3e0] sm:$0xf]
    %v11283 = vld [vmem:[#allocation13 + $0x3e4] sm:$0xf]
    %v11284 = vld [vmem:[#allocation13 + $0x3e8] sm:$0xf]
    %v11285 = vld [vmem:[#allocation13 + $0x3ec] sm:$0xf]
    %v11286 = vld [vmem:[#allocation13 + $0x3f0] sm:$0xf]
    %v11287 = vld [vmem:[#allocation13 + $0x3f4] sm:$0xf]
    %v11288 = vld [vmem:[#allocation13 + $0x3f8] sm:$0xf]
    %v11289 = vld [vmem:[#allocation13 + $0x3fc] sm:$0xf]
    %v11306 = vunpack.c.l.b16 %v11274
    %v11307 = vunpack.c.l.b16 %v11275
    %v11308 = vunpack.c.l.b16 %v11276
    %v11309 = vunpack.c.l.b16 %v11277
    %v11310 = vunpack.c.l.b16 %v11278
    %v11311 = vunpack.c.l.b16 %v11279
    %v11312 = vunpack.c.l.b16 %v11280
    %v11313 = vunpack.c.l.b16 %v11281
    %v11314 = vunpack.c.l.b16 %v11282
    %v11315 = vunpack.c.l.b16 %v11283
    %v11316 = vunpack.c.l.b16 %v11284
    %v11317 = vunpack.c.l.b16 %v11285
    %v11318 = vunpack.c.l.b16 %v11286
    %v11319 = vunpack.c.l.b16 %v11287
    %v11320 = vunpack.c.l.b16 %v11288
    %v11321 = vunpack.c.l.b16 %v11289
    %v11322 = vpack.c.b16 %v11307, %v11306
    %v11323 = vpack.c.b16 %v11309, %v11308
    %v11324 = vpack.c.b16 %v11311, %v11310
    %v11325 = vpack.c.b16 %v11313, %v11312
    %v11326 = vpack.c.b16 %v11315, %v11314
    %v11327 = vpack.c.b16 %v11317, %v11316
    %v11328 = vpack.c.b16 %v11319, %v11318
    %v11329 = vpack.c.b16 %v11321, %v11320
    %11338 = vmatprep.subr.bf16.mxu0 0
    %11339 = vmatpush1.bf16.msra.mxu0 %v11322
    %11340 = vmatprep.subr.bf16.mxu0 0
    %11341 = vmatpush1.bf16.msra.mxu0 %v11323
    %11342 = vmatprep.subr.bf16.mxu0 0
    %11343 = vmatpush1.bf16.msra.mxu0 %v11324
    %11344 = vmatprep.subr.bf16.mxu0 0
    %11345 = vmatpush1.bf16.msra.mxu0 %v11325
    %11346 = vmatprep.subr.bf16.mxu0 0
    %11347 = vmatpush1.bf16.msra.mxu0 %v11326
    %11348 = vmatprep.subr.bf16.mxu0 0
    %11349 = vmatpush1.bf16.msra.mxu0 %v11327
    %11350 = vmatprep.subr.bf16.mxu0 0
    %11351 = vmatpush1.bf16.msra.mxu0 %v11328
    %11352 = vmatprep.subr.bf16.mxu0 0
    %11353 = vmatpush1.bf16.msra.mxu0 %v11329
    %11354 = vmatprep.subr.bf16.mxu0 0
    %11355 = vmatpush1.bf16.msra.mxu0 0
    %11356 = vmatprep.subr.bf16.mxu0 0
    %11357 = vmatpush1.bf16.msra.mxu0 0
    %11358 = vmatprep.subr.bf16.mxu0 0
    %11359 = vmatpush1.bf16.msra.mxu0 0
    %11360 = vmatprep.subr.bf16.mxu0 0
    %11361 = vmatpush1.bf16.msra.mxu0 0
    %11362 = vmatprep.subr.bf16.mxu0 0
    %11363 = vmatpush1.bf16.msra.mxu0 0
    %11364 = vmatprep.subr.bf16.mxu0 0
    %11365 = vmatpush1.bf16.msra.mxu0 0
    %11366 = vmatprep.subr.bf16.mxu0 0
    %11367 = vmatpush1.bf16.msra.mxu0 0
    %11368 = vmatprep.subr.bf16.mxu0 0
    %11369 = vmatpush1.bf16.msra.mxu0 0
    %11370 = vmatprep.mubr.bf16.mxu0 0
    %11371 = vmatmul.mubr.bf16.gmra.mrb[0].mxu0 %v11273
    %v11372 = vpop.f32.mrb[0].mxu0
    %v11373 = vadd.f32 0.0, %v11372
    %v11374 = vpop.f32.mrb[0].mxu0
    %v11375 = vpop.f32.mrb[0].mxu0
    %v11376 = vpop.f32.mrb[0].mxu0
    %11377 = vdwg.mxu0
    %v11378 = vadd.f32 %v10077, %v11373
    %v11379 = vld [vmem:[#allocation14 + $0x33] sm:$0x1]
    %v11381 = vlaneseq
    %v11382 = vshrl.u32 %v11381, 7
    %v11383 = vsub.s32 0, %v11382
    %v11384 = vrot.slane %v11379, %v11383
    %v11386 = vadd.f32 %v11378, %v11384
    %v11387 = vmax.f32 %v11386, 0.0
    %v11388 = vpack.c.bf16 %v11387, %v11387
    %v11389 = vld [vmem:[#allocation13 + $0x400] sm:$0xf]
    %v11390 = vld [vmem:[#allocation13 + $0x404] sm:$0xf]
    %v11391 = vld [vmem:[#allocation13 + $0x408] sm:$0xf]
    %v11392 = vld [vmem:[#allocation13 + $0x40c] sm:$0xf]
    %v11393 = vld [vmem:[#allocation13 + $0x410] sm:$0xf]
    %v11394 = vld [vmem:[#allocation13 + $0x414] sm:$0xf]
    %v11395 = vld [vmem:[#allocation13 + $0x418] sm:$0xf]
    %v11396 = vld [vmem:[#allocation13 + $0x41c] sm:$0xf]
    %v11397 = vld [vmem:[#allocation13 + $0x420] sm:$0xf]
    %v11398 = vld [vmem:[#allocation13 + $0x424] sm:$0xf]
    %v11399 = vld [vmem:[#allocation13 + $0x428] sm:$0xf]
    %v11400 = vld [vmem:[#allocation13 + $0x42c] sm:$0xf]
    %v11401 = vld [vmem:[#allocation13 + $0x430] sm:$0xf]
    %v11402 = vld [vmem:[#allocation13 + $0x434] sm:$0xf]
    %v11403 = vld [vmem:[#allocation13 + $0x438] sm:$0xf]
    %v11404 = vld [vmem:[#allocation13 + $0x43c] sm:$0xf]
    %v11405 = vld [vmem:[#allocation14 + $0x34] sm:$0x1]
    %v11407 = vlaneseq
    %v11408 = vshrl.u32 %v11407, 7
    %v11409 = vsub.s32 0, %v11408
    %v11410 = vrot.slane %v11405, %v11409
    %v11428 = vunpack.c.l.b16 %v11389
    %v11429 = vunpack.c.l.b16 %v11390
    %v11430 = vunpack.c.l.b16 %v11391
    %v11431 = vunpack.c.l.b16 %v11392
    %v11432 = vunpack.c.l.b16 %v11393
    %v11433 = vunpack.c.l.b16 %v11394
    %v11434 = vunpack.c.l.b16 %v11395
    %v11435 = vunpack.c.l.b16 %v11396
    %v11436 = vunpack.c.l.b16 %v11397
    %v11437 = vunpack.c.l.b16 %v11398
    %v11438 = vunpack.c.l.b16 %v11399
    %v11439 = vunpack.c.l.b16 %v11400
    %v11440 = vunpack.c.l.b16 %v11401
    %v11441 = vunpack.c.l.b16 %v11402
    %v11442 = vunpack.c.l.b16 %v11403
    %v11443 = vunpack.c.l.b16 %v11404
    %v11444 = vpack.c.b16 %v11429, %v11428
    %v11445 = vpack.c.b16 %v11431, %v11430
    %v11446 = vpack.c.b16 %v11433, %v11432
    %v11447 = vpack.c.b16 %v11435, %v11434
    %v11448 = vpack.c.b16 %v11437, %v11436
    %v11449 = vpack.c.b16 %v11439, %v11438
    %v11450 = vpack.c.b16 %v11441, %v11440
    %v11451 = vpack.c.b16 %v11443, %v11442
    %11460 = vmatprep.subr.bf16.mxu0 0
    %11461 = vmatpush1.bf16.msra.mxu0 %v11444
    %11462 = vmatprep.subr.bf16.mxu0 0
    %11463 = vmatpush1.bf16.msra.mxu0 %v11445
    %11464 = vmatprep.subr.bf16.mxu0 0
    %11465 = vmatpush1.bf16.msra.mxu0 %v11446
    %11466 = vmatprep.subr.bf16.mxu0 0
    %11467 = vmatpush1.bf16.msra.mxu0 %v11447
    %11468 = vmatprep.subr.bf16.mxu0 0
    %11469 = vmatpush1.bf16.msra.mxu0 %v11448
    %11470 = vmatprep.subr.bf16.mxu0 0
    %11471 = vmatpush1.bf16.msra.mxu0 %v11449
    %11472 = vmatprep.subr.bf16.mxu0 0
    %11473 = vmatpush1.bf16.msra.mxu0 %v11450
    %11474 = vmatprep.subr.bf16.mxu0 0
    %11475 = vmatpush1.bf16.msra.mxu0 %v11451
    %11476 = vmatprep.subr.bf16.mxu0 0
    %11477 = vmatpush1.bf16.msra.mxu0 0
    %11478 = vmatprep.subr.bf16.mxu0 0
    %11479 = vmatpush1.bf16.msra.mxu0 0
    %11480 = vmatprep.subr.bf16.mxu0 0
    %11481 = vmatpush1.bf16.msra.mxu0 0
    %11482 = vmatprep.subr.bf16.mxu0 0
    %11483 = vmatpush1.bf16.msra.mxu0 0
    %11484 = vmatprep.subr.bf16.mxu0 0
    %11485 = vmatpush1.bf16.msra.mxu0 0
    %11486 = vmatprep.subr.bf16.mxu0 0
    %11487 = vmatpush1.bf16.msra.mxu0 0
    %11488 = vmatprep.subr.bf16.mxu0 0
    %11489 = vmatpush1.bf16.msra.mxu0 0
    %11490 = vmatprep.subr.bf16.mxu0 0
    %11491 = vmatpush1.bf16.msra.mxu0 0
    %11492 = vmatprep.mubr.bf16.mxu0 0
    %11493 = vmatmul.mubr.bf16.gmra.mrb[0].mxu0 %v11388
    %v11494 = vpop.f32.mrb[0].mxu0
    %v11495 = vadd.f32 %v11410, %v11494
    %v11496 = vpop.f32.mrb[0].mxu0
    %v11497 = vpop.f32.mrb[0].mxu0
    %v11498 = vpop.f32.mrb[0].mxu0
    %11499 = vdwg.mxu0
    %v11500 = vtanh.pop %v11495
    %11501 = vst [vmem:[#allocation16] sm:$0xff] %v4264
    %11502 = vst [vmem:[#allocation17] sm:$0xff] %v5514
    %11503 = vst [vmem:[#allocation19] sm:$0xff] %v6485
    %11504 = vst [vmem:[#allocation20] sm:$0xff] %v9840
    %11505 = vst [vmem:[#allocation20 + $0x8] sm:$0xff] %v9842
    %11506 = vst [vmem:[#allocation22] sm:$0xff] %v11500
    %11507 = vst [vmem:[%s14] sm:$0xff] %v11272
    // Predicated region
    $region70: #{metacognition_forward.1} parent=1 // pred_check
      _
    $region71: #{metacognition_forward.1} parent=1 // pred_check_branch
      %11509 = sbr.rel (0) target = $region73
    $region72: #{metacognition_forward.1} parent=1 // pred_region
      %s11511 = ssub.s32 128, 128
      %11512 = vsyncadd [#allocation4], %s11511
      %s11514 = sshll.u32 [#allocation16], 4
      %s11515 = int_to_ptr.vmem [resolvable:$true] %s11514
      %11517 = dma.vmem_to_hbm [thread:$0]  %s11515, 128, %s9, [#allocation4]
    $region73: #{metacognition_forward.1} parent=1 // pred_fallthru
      _
    // Predicated region
    $region74: #{metacognition_forward.1} parent=1 // pred_check
      _
    $region75: #{metacognition_forward.1} parent=1 // pred_check_branch
      %11519 = sbr.rel (0) target = $region77
    $region76: #{metacognition_forward.1} parent=1 // pred_region
      %s11521 = ssub.s32 128, 128
      %11522 = vsyncadd [#allocation18], %s11521
      %s11524 = sshll.u32 [#allocation17], 4
      %s11525 = int_to_ptr.vmem [resolvable:$true] %s11524
      %11527 = dma.vmem_to_hbm [thread:$0]  %s11525, 128, %s10, [#allocation18]
    $region77: #{metacognition_forward.1} parent=1 // pred_fallthru
      _
    // Predicated region
    $region78: #{metacognition_forward.1} parent=1 // pred_check
      _
    $region79: #{metacognition_forward.1} parent=1 // pred_check_branch
      %11529 = sbr.rel (0) target = $region81
    $region80: #{metacognition_forward.1} parent=1 // pred_region
      %s11531 = ssub.s32 128, 128
      %11532 = vsyncadd [#allocation18], %s11531
      %s11534 = sshll.u32 [#allocation19], 4
      %s11535 = int_to_ptr.vmem [resolvable:$true] %s11534
      %11537 = dma.vmem_to_hbm [thread:$0]  %s11535, 128, %s11, [#allocation18]
    $region81: #{metacognition_forward.1} parent=1 // pred_fallthru
      _
    // Predicated region
    $region82: #{metacognition_forward.1} parent=1 // pred_check
      _
    $region83: #{metacognition_forward.1} parent=1 // pred_check_branch
      %11539 = sbr.rel (0) target = $region85
    $region84: #{metacognition_forward.1} parent=1 // pred_region
      %s11541 = ssub.s32 256, 256
      %11542 = vsyncadd [#allocation21], %s11541
      %s11544 = sshll.u32 [#allocation20], 4
      %s11545 = int_to_ptr.vmem [resolvable:$true] %s11544
      %11547 = dma.vmem_to_hbm [thread:$0]  %s11545, 256, %s12, [#allocation21]
    $region85: #{metacognition_forward.1} parent=1 // pred_fallthru
      _
    // Predicated region
    $region86: #{metacognition_forward.1} parent=1 // pred_check
      _
    $region87: #{metacognition_forward.1} parent=1 // pred_check_branch
      %11549 = sbr.rel (0) target = $region89
    $region88: #{metacognition_forward.1} parent=1 // pred_region
      %s11551 = ssub.s32 128, 128
      %11552 = vsyncadd [#allocation21], %s11551
      %s11554 = sshll.u32 [#allocation22], 4
      %s11555 = int_to_ptr.vmem [resolvable:$true] %s11554
      %11557 = dma.vmem_to_hbm [thread:$0]  %s11555, 128, %s13, [#allocation21]
    $region89: #{metacognition_forward.1} parent=1 // pred_fallthru
      _
    // Predicated region
    $region90: #{metacognition_forward.1} parent=1 // pred_check
      _
    $region91: #{metacognition_forward.1} parent=1 // pred_check_branch
      %11559 = sbr.rel (0) target = $region93
    $region92: #{metacognition_forward.1} parent=1 // pred_region
      _
    $region93: #{metacognition_forward.1} parent=1 // pred_fallthru
      _
    // Predicated region
    $region94: #{metacognition_forward.1} parent=1 // pred_check
      _
    $region95: #{metacognition_forward.1} parent=1 // pred_check_branch
      %11561 = sbr.rel (0) target = $region97
    $region96: #{metacognition_forward.1} parent=1 // pred_region
      %11562 = dma.done [#allocation4], 128
    $region97: #{metacognition_forward.1} parent=1 // pred_fallthru
      _
    // Predicated region
    $region98: #{metacognition_forward.1} parent=1 // pred_check
      _
    $region99: #{metacognition_forward.1} parent=1 // pred_check_branch
      %11564 = sbr.rel (0) target = $region101
    $region100: #{metacognition_forward.1} parent=1 // pred_region
      %11565 = dma.done [#allocation18], 128
    $region101: #{metacognition_forward.1} parent=1 // pred_fallthru
      _
    // Predicated region
    $region102: #{metacognition_forward.1} parent=1 // pred_check
      _
    $region103: #{metacognition_forward.1} parent=1 // pred_check_branch
      %11567 = sbr.rel (0) target = $region105
    $region104: #{metacognition_forward.1} parent=1 // pred_region
      %11568 = dma.done [#allocation18], 128
    $region105: #{metacognition_forward.1} parent=1 // pred_fallthru
      _
    // Predicated region
    $region106: #{metacognition_forward.1} parent=1 // pred_check
      _
    $region107: #{metacognition_forward.1} parent=1 // pred_check_branch
      %11570 = sbr.rel (0) target = $region109
    $region108: #{metacognition_forward.1} parent=1 // pred_region
      %11571 = dma.done [#allocation21], 256
    $region109: #{metacognition_forward.1} parent=1 // pred_fallthru
      _
    // Predicated region
    $region110: #{metacognition_forward.1} parent=1 // pred_check
      _
    $region111: #{metacognition_forward.1} parent=1 // pred_check_branch
      %11573 = sbr.rel (0) target = $region113
    $region112: #{metacognition_forward.1} parent=1 // pred_region
      %11574 = dma.done [#allocation21], 128
    $region113: #{metacognition_forward.1} parent=1 // pred_fallthru
      _
    // Predicated region
    $region114: #{metacognition_forward.1} parent=1 // pred_check
      _
    $region115: #{metacognition_forward.1} parent=1 // pred_check_branch
      %11576 = sbr.rel (0) target = $region117
    $region116: #{metacognition_forward.1} parent=1 // pred_region
      _
    $region117: #{metacognition_forward.1} parent=1 // pred_fallthru
      _
    %11577 = vsyncpa [#allocation3], 1
    %11578 = vsyncpa [#allocation6], 1
    %11579 = vsyncpa [#allocation9], 1
    %11580 = vsyncpa [#allocation12], 1
    %11581 = vsyncpa [#allocation15], 1
    %11582 = vsyncpa [#allocation4], 1
    %11583 = vsyncpa [#allocation18], 1
    %11584 = vsyncpa [#allocation21], 1

</llo_original>
